<compile_context>
chip_gen: v6e
topology: v6e:2x2x1
jax: 0.10.0
libtpu: 0.0.40
codegen_flags: <defaults>
</compile_context>

<pallas_src>
import functools

import jax
import jax.numpy as jnp
from jax import lax
from jax.experimental import pallas as pl
from jax.experimental.pallas import tpu as pltpu

EPS = 1e-5        # PyTorch GroupNorm default eps
LANE = 128        # channels are zero-padded to a multiple of the lane width


def _silu(x):
    return x * jax.nn.sigmoid(x)


def _round_up(n, m):
    return (n + m - 1) // m * m


# ----------------------------------------------------------------------------
# Pallas kernel: one batch element per grid step
# ----------------------------------------------------------------------------
def _resnet_block_kernel(
    x_ref,        # (1, HWp, cin_p)       input, row-major (y, x) over the padded width
    scale_ref,    # (1, 1, cout_p)        time-MLP scale (computed in wrapper)
    shift_ref,    # (1, 1, cout_p)        time-MLP shift
    w1f_ref,      # (3, 3*cin_p, cout_p)  block1 conv weight, kw folded into K
    b1_ref,       # (1, cout_p)
    g1_ref,       # (1, cout_p)           block1 GroupNorm gamma
    be1_ref,      # (1, cout_p)           block1 GroupNorm beta
    w2f_ref,      # (3, 3*cout_p, cout_p) block2 conv weight, kw folded into K
    b2_ref,       # (1, cout_p)
    g2_ref,       # (1, cout_p)
    be2_ref,      # (1, cout_p)
    wres_ref,     # (cin_p, cout_p)       1x1 residual conv weight
    bres_ref,     # (1, cout_p)
    p_ref,        # (cout_p, cout_p)      GroupNorm group-averaging projector
    out_ref,      # (1, HWp, cout_p)
    epad_ref,     # scratch VMEM (HWp + 2*Wp, 3*max(cin_p, cout_p)) in mxu dtype
    *, w_pad, w_real,
):
    HW = x_ref.shape[1]          # H * Wp (padded width)
    cin_p = x_ref.shape[2]
    cout_p = out_ref.shape[2]
    Wp = w_pad
    has_wpad = w_pad != w_real
    f32 = jnp.float32

    # Column index of each flattened pixel (over the PADDED width).
    col = lax.broadcasted_iota(jnp.int32, (HW, 1), 0) % Wp
    valid = (col < w_real).astype(f32)            # real (non-pad) pixel
    m_left = (col != Wp - 1).astype(f32)          # source may serve as an x-1 neighbour
    m_right = (col != 0).astype(f32)              # source may serve as an x+1 neighbour
    if has_wpad:
        m_left = m_left * valid
        m_right = m_right * valid

    # Zero only the dh halo (top/bottom Wp rows) of the persistent scratch.
    # Re-done every grid step (tiny) so the kernel stays correct when the batch
    # axis is sharded across TensorCores with "parallel" semantics.
    lanes = epad_ref.shape[1]
    epad_ref[0:Wp, :] = jnp.zeros((Wp, lanes), epad_ref.dtype)
    epad_ref[Wp + HW:2 * Wp + HW, :] = jnp.zeros((Wp, lanes), epad_ref.dtype)

    def conv3x3(a32, wf_ref, b_ref, c):
        """3x3 'same' conv of a (HW, c) f32 activation -> (HW, cout_p) f32.

        kw taps folded into the contraction dim via three lane blocks
        (x-1 / x / x+1); the +/-1 pixel shifts are pltpu.roll (XLU) followed by
        full sublane-aligned stores (the masks zero the wrap-around row, so no
        extra single-cell writes are needed).  kh taps are the three
        sublane-aligned row offsets 0 / Wp / 2Wp into the same scratch, so the
        conv is 3 MXU matmuls of (HW, 3c) x (3c, cout_p).
        """
        center = a32 * valid if has_wpad else a32
        left = pltpu.roll(a32 * m_left, shift=1, axis=0)        # value of pixel x-1
        right = pltpu.roll(a32 * m_right, shift=HW - 1, axis=0)  # == roll by -1: pixel x+1
        epad_ref[Wp:Wp + HW, 0:c] = left.astype(epad_ref.dtype)
        epad_ref[Wp:Wp + HW, c:2 * c] = center.astype(epad_ref.dtype)
        epad_ref[Wp:Wp + HW, 2 * c:3 * c] = right.astype(epad_ref.dtype)

        acc = jnp.zeros((HW, cout_p), f32)
        for dh in range(3):       # row offsets 0, Wp, 2Wp -> sublane-aligned reads
            acc = acc + jnp.dot(
                epad_ref[dh * Wp:dh * Wp + HW, 0:3 * c],
                wf_ref[dh],
                preferred_element_type=f32,
            )
        return acc + b_ref[...]

    def group_norm(h, g_ref, be_ref):
        """GroupNorm over (HW, cout_p): two-pass mean/var; the group averaging
        is a (1,C)x(C,C) matmul with the precomputed projector (divides by the
        REAL pixel count, padded pixels are masked out of the sums)."""
        hm = h * valid if has_wpad else h
        mean_c = jnp.dot(jnp.sum(hm, axis=0, keepdims=True), p_ref[...],
                         preferred_element_type=f32)
        d = h - mean_c
        dsq = d * d
        if has_wpad:
            dsq = dsq * valid
        var_c = jnp.dot(jnp.sum(dsq, axis=0, keepdims=True), p_ref[...],
                        preferred_element_type=f32)
        inv = lax.rsqrt(var_c + EPS)
        return d * (inv * g_ref[...]) + be_ref[...]

    x = x_ref[0]                                              # (HW, cin_p), mxu dtype

    # ---- block 1: conv3x3 -> GroupNorm -> h*(scale+1)+shift -> SiLU ----
    h = conv3x3(x.astype(f32), w1f_ref, b1_ref, cin_p)
    h = group_norm(h, g1_ref, be1_ref)
    h = h * (scale_ref[0] + 1.0) + shift_ref[0]
    h = _silu(h)

    # ---- block 2: conv3x3 -> GroupNorm -> SiLU ----
    h2 = conv3x3(h, w2f_ref, b2_ref, cout_p)
    h2 = group_norm(h2, g2_ref, be2_ref)
    h2 = _silu(h2)

    # ---- 1x1 residual conv, recomputed late to avoid a long (HW, C) live range
    res = jnp.dot(x, wres_ref[...], preferred_element_type=f32) + bres_ref[...]
    out_ref[0] = (h2 + res).astype(out_ref.dtype)


# ----------------------------------------------------------------------------
# Wrapper
# ----------------------------------------------------------------------------
def resnet_block_forward(x_nchw, time_emb, params, *, groups,
                         mxu_dtype=jnp.float32, out_dtype=jnp.float32):
    """Fused ResnetBlock forward.  x_nchw: (B, Cin, H, W); time_emb: (B, T).

    mxu_dtype: dtype of the matmul operands (conv scratch + conv/residual
    weights).  float32 is exact; on v6e/v7x pass jnp.bfloat16 to halve VMEM/DMA
    bytes and use the native bf16 MXU (accumulation, GroupNorm, SiLU stay f32).
    out_dtype: kernel output / HBM writeback dtype (bf16 halves writeback).
    """
    x_nchw = x_nchw.astype(jnp.float32)
    B, Cin, H, W = x_nchw.shape
    Cout = params["b1"].shape[-1]
    assert Cout % groups == 0

    mxu_bytes = jnp.dtype(mxu_dtype).itemsize
    sublane = 32 // mxu_bytes                   # 8 rows (f32) / 16 rows (bf16)
    Wp = _round_up(W, sublane)                  # pad width so 0/Wp/2Wp offsets stay aligned
    HWp = H * Wp
    cin_p = _round_up(Cin, LANE)
    cout_p = _round_up(Cout, LANE)
    cmax = max(cin_p, cout_p)

    # ---- layout plumbing (wrapper-side glue) ----
    # NCHW -> NHWC, zero-pad W to the sublane tile and channels to the lane tile.
    x_nhwc = jnp.transpose(x_nchw, (0, 2, 3, 1))
    x_nhwc = jnp.pad(x_nhwc, ((0, 0), (0, 0), (0, Wp - W), (0, cin_p - Cin)))
    x_p = x_nhwc.reshape(B, HWp, cin_p).astype(mxu_dtype)

    # time-embedding MLP hoisted out of the kernel as one batched matmul
    t = _silu(time_emb.astype(jnp.float32))
    ts = jnp.dot(t, params["w_mlp"], precision=lax.Precision.HIGHEST) + params["b_mlp"]
    scale = jnp.pad(ts[:, :Cout], ((0, 0), (0, cout_p - Cout))).reshape(B, 1, cout_p)
    shift = jnp.pad(ts[:, Cout:], ((0, 0), (0, cout_p - Cout))).reshape(B, 1, cout_p)

    def fold_conv_weight(w):              # (3, 3, ci, co) -> (3, 3*ci_p, co_p)
        ci, co = w.shape[2], w.shape[3]
        ci_p, co_p = _round_up(ci, LANE), _round_up(co, LANE)
        wp = jnp.pad(w, ((0, 0), (0, 0), (0, ci_p - ci), (0, co_p - co)))
        return wp.reshape(3, 3 * ci_p, co_p).astype(mxu_dtype)

    w1f = fold_conv_weight(params["w1"])
    w2f = fold_conv_weight(params["w2"])
    wres = jnp.pad(params["wres"],
                   ((0, cin_p - Cin), (0, cout_p - Cout))).astype(mxu_dtype)

    def pad_vec(v):                       # (Cout,) -> (1, cout_p) f32
        return jnp.pad(v.astype(jnp.float32).reshape(1, -1),
                       ((0, 0), (0, cout_p - Cout)))

    b1, g1, be1 = pad_vec(params["b1"]), pad_vec(params["g1"]), pad_vec(params["be1"])
    b2, g2, be2 = pad_vec(params["b2"]), pad_vec(params["g2"]), pad_vec(params["be2"])
    bres = pad_vec(params["bres"])

    # GroupNorm group-averaging projector; divisor uses the REAL pixel count and
    # padded channels stay exactly zero through the whole kernel.
    cs = Cout // groups
    ch = jnp.arange(cout_p)
    same_group = (ch[:, None] // cs == ch[None, :] // cs) \
        & (ch[:, None] < Cout) & (ch[None, :] < Cout)
    proj = same_group.astype(jnp.float32) / float(H * W * cs)

    # ---- explicit scoped-VMEM budget ----
    out_bytes = jnp.dtype(out_dtype).itemsize
    blocks = (2 * HWp * cin_p * mxu_bytes           # x block, double-buffered
              + 2 * HWp * cout_p * out_bytes        # out block, double-buffered
              + (HWp + 2 * Wp) * 3 * cmax * mxu_bytes)   # conv scratch
    weights = ((3 * 3 * cin_p + 3 * 3 * cout_p + cin_p) * cout_p * mxu_bytes
               + cout_p * cout_p * 4 + 16 * cout_p * 4)  # single-buffered (Buffered(1))
    live = 3 * HWp * cout_p * 4                     # h / h2 / matmul temporaries (f32)
    vmem_bytes = int(1.25 * (blocks + weights + live)) + (2 << 20)
    vmem_bytes = min(max(vmem_bytes, 32 << 20), 100 << 20)
    # TODO(synk): on v7x (64 MiB VMEM) large H*W*C needs the row-tile grid axis
    # mentioned in the header; this single-image kernel targets <= ~mid sizes.

    def const_spec(shape):
        # Grid-invariant operand: constant index_map + single pipeline buffer.
        n = len(shape)
        return pl.BlockSpec(shape, lambda b, n=n: (0,) * n,
                            pipeline_mode=pl.Buffered(1))

    out_p = pl.pallas_call(
        functools.partial(_resnet_block_kernel, w_pad=Wp, w_real=W),
        out_shape=jax.ShapeDtypeStruct((B, HWp, cout_p), out_dtype),
        grid=(B,),
        in_specs=[
            pl.BlockSpec((1, HWp, cin_p), lambda b: (b, 0, 0)),     # x
            pl.BlockSpec((1, 1, cout_p), lambda b: (b, 0, 0)),      # scale
            pl.BlockSpec((1, 1, cout_p), lambda b: (b, 0, 0)),      # shift
            const_spec((3, 3 * cin_p, cout_p)),                     # w1 (folded)
            const_spec((1, cout_p)), const_spec((1, cout_p)), const_spec((1, cout_p)),
            const_spec((3, 3 * cout_p, cout_p)),                    # w2 (folded)
            const_spec((1, cout_p)), const_spec((1, cout_p)), const_spec((1, cout_p)),
            const_spec((cin_p, cout_p)), const_spec((1, cout_p)),   # wres, bres
            const_spec((cout_p, cout_p)),                           # GroupNorm projector
        ],
        out_specs=pl.BlockSpec((1, HWp, cout_p), lambda b: (b, 0, 0)),
        scratch_shapes=[pltpu.VMEM((HWp + 2 * Wp, 3 * cmax), mxu_dtype)],
        compiler_params=pltpu.CompilerParams(
            dimension_semantics=("parallel",),
            vmem_limit_bytes=vmem_bytes),
    )(x_p, scale, shift, w1f, b1, g1, be1, w2f, b2, g2, be2, wres, bres, proj)

    out = out_p.reshape(B, H, Wp, cout_p)[:, :, :W, :Cout]
    return jnp.transpose(out, (0, 3, 1, 2))                         # NHWC -> NCHW


# ----------------------------------------------------------------------------
# Pure-JAX reference (Precision.HIGHEST so f32 comparison can be tight)
# ----------------------------------------------------------------------------
def resnet_block_reference(x_nchw, time_emb, params, *, groups):
    hp = lax.Precision.HIGHEST
    x = jnp.transpose(x_nchw, (0, 2, 3, 1)).astype(jnp.float32)

    def conv(h, w, b):
        return lax.conv_general_dilated(
            h, w, (1, 1), "SAME",
            dimension_numbers=("NHWC", "HWIO", "NHWC"), precision=hp) + b

    def gn(h, gamma, beta):
        B, H, W, C = h.shape
        cs = C // groups
        hr = h.reshape(B, H, W, groups, cs)
        mean = hr.mean(axis=(1, 2, 4), keepdims=True)
        var = ((hr - mean) ** 2).mean(axis=(1, 2, 4), keepdims=True)
        hn = ((hr - mean) / jnp.sqrt(var + EPS)).reshape(B, H, W, C)
        return hn * gamma + beta

    t = _silu(time_emb.astype(jnp.float32))
    ts = jnp.dot(t, params["w_mlp"], precision=hp) + params["b_mlp"]
    Cout = params["b1"].shape[-1]
    scale, shift = ts[:, :Cout], ts[:, Cout:]

    h = conv(x, params["w1"], params["b1"])
    h = gn(h, params["g1"], params["be1"])
    h = h * (scale[:, None, None, :] + 1.0) + shift[:, None, None, :]
    h = _silu(h)
    h = conv(h, params["w2"], params["b2"])
    h = gn(h, params["g2"], params["be2"])
    h = _silu(h)
    res = jnp.einsum("bhwi,io->bhwo", x, params["wres"], precision=hp) + params["bres"]
    return jnp.transpose(h + res, (0, 3, 1, 2))


# ----------------------------------------------------------------------------
# Main
# ----------------------------------------------------------------------------
if __name__ == "__main__":
    B, dim, dim_out, H, W = 2, 4, 8, 16, 16
    time_emb_dim, groups = 32, 8

    key = jax.random.PRNGKey(0)
    ks = jax.random.split(key, 11)

    def n(k, shape, s=0.1):
        return (s * jax.random.normal(k, shape)).astype(jnp.float32)

    params = {
        # time-embedding MLP: SiLU -> Linear(T, 2*dim_out)
        "w_mlp": n(ks[0], (time_emb_dim, 2 * dim_out)),
        "b_mlp": n(ks[1], (2 * dim_out,)),
        # block1
        "w1": n(ks[2], (3, 3, dim, dim_out)),           # HWIO
        "b1": n(ks[3], (dim_out,)),
        "g1": jnp.ones((dim_out,), jnp.float32),
        "be1": jnp.zeros((dim_out,), jnp.float32),
        # block2
        "w2": n(ks[4], (3, 3, dim_out, dim_out)),
        "b2": n(ks[5], (dim_out,)),
        "g2": jnp.ones((dim_out,), jnp.float32),
        "be2": jnp.zeros((dim_out,), jnp.float32),
        # 1x1 residual conv (dim != dim_out)
        "wres": n(ks[6], (dim, dim_out)),
        "bres": n(ks[7], (dim_out,)),
    }

    x = jax.random.normal(ks[8], (B, dim, H, W), jnp.float32)          # NCHW
    time_emb = jax.random.normal(ks[9], (B, time_emb_dim), jnp.float32)

    # ---- f32 (exact) path, tightened tolerance ----
    fwd_f32 = jax.jit(functools.partial(resnet_block_forward, groups=groups,
                                        mxu_dtype=jnp.float32))
    out = jax.block_until_ready(fwd_f32(x, time_emb, params))
    ref = resnet_block_reference(x, time_emb, params, groups=groups)
    assert out.shape == (B, dim_out, H, W)
    assert jnp.allclose(out, ref, rtol=2e-4, atol=2e-4), (
        f"f32 max abs err {jnp.max(jnp.abs(out - ref))}"
    )

    # ---- f32 path with W not a multiple of the sublane tile (spatial padding) ----
    x_odd = jax.random.normal(ks[10], (B, dim, 10, 12), jnp.float32)
    out_odd = jax.block_until_ready(fwd_f32(x_odd, time_emb, params))
    ref_odd = resnet_block_reference(x_odd, time_emb, params, groups=groups)
    assert out_odd.shape == (B, dim_out, 10, 12)
    assert jnp.allclose(out_odd, ref_odd, rtol=2e-4, atol=2e-4), (
        f"odd-W f32 max abs err {jnp.max(jnp.abs(out_odd - ref_odd))}"
    )

    # ---- bf16 MXU-operand / bf16-output fast path (v6e/v7x), loose tolerance ----
    fwd_bf16 = jax.jit(functools.partial(resnet_block_forward, groups=groups,
                                         mxu_dtype=jnp.bfloat16,
                                         out_dtype=jnp.bfloat16))
    out_bf = jax.block_until_ready(fwd_bf16(x, time_emb, params)).astype(jnp.float32)
    assert out_bf.shape == (B, dim_out, H, W)
    assert jnp.allclose(out_bf, ref, rtol=1e-1, atol=1e-1), (
        f"bf16 max abs err {jnp.max(jnp.abs(out_bf - ref))}"
    )

    print("KERNEL_OK")
</pallas_src>

<mosaic_0001>
module attributes {stable_mosaic.version = 11 : i64} {
  func.func @_resnet_block_kernel(%arg0: i32, %arg1: memref<1x256x128xf32, #tpu.memory_space<vmem>>, %arg2: memref<1x1x128xf32, #tpu.memory_space<vmem>>, %arg3: memref<1x1x128xf32, #tpu.memory_space<vmem>>, %arg4: memref<3x384x128xf32, #tpu.memory_space<vmem>>, %arg5: memref<1x128xf32, #tpu.memory_space<vmem>>, %arg6: memref<1x128xf32, #tpu.memory_space<vmem>>, %arg7: memref<1x128xf32, #tpu.memory_space<vmem>>, %arg8: memref<3x384x128xf32, #tpu.memory_space<vmem>>, %arg9: memref<1x128xf32, #tpu.memory_space<vmem>>, %arg10: memref<1x128xf32, #tpu.memory_space<vmem>>, %arg11: memref<1x128xf32, #tpu.memory_space<vmem>>, %arg12: memref<128x128xf32, #tpu.memory_space<vmem>>, %arg13: memref<1x128xf32, #tpu.memory_space<vmem>>, %arg14: memref<128x128xf32, #tpu.memory_space<vmem>>, %arg15: memref<1x256x128xf32, #tpu.memory_space<vmem>>, %arg16: memref<288x384xf32, #tpu.memory_space<vmem>>) attributes {dimension_semantics = [#tpu.dimension_semantics<parallel>], iteration_bounds = array<i64: 2>, scalar_prefetch = 0 : i64, scratch_operands = 1 : i64, tpu.core_type = #tpu.core_type<tc>, window_params = [{transform_indices = @transform_0, window_bounds = array<i64: 1, 256, 128>}, {transform_indices = @transform_1, window_bounds = array<i64: 1, 1, 128>}, {transform_indices = @transform_2, window_bounds = array<i64: 1, 1, 128>}, {pipeline_mode = #tpu.pipeline_mode<synchronous>, transform_indices = @transform_3, window_bounds = array<i64: 3, 384, 128>}, {pipeline_mode = #tpu.pipeline_mode<synchronous>, transform_indices = @transform_4, window_bounds = array<i64: 1, 128>}, {pipeline_mode = #tpu.pipeline_mode<synchronous>, transform_indices = @transform_5, window_bounds = array<i64: 1, 128>}, {pipeline_mode = #tpu.pipeline_mode<synchronous>, transform_indices = @transform_6, window_bounds = array<i64: 1, 128>}, {pipeline_mode = #tpu.pipeline_mode<synchronous>, transform_indices = @transform_7, window_bounds = array<i64: 3, 384, 128>}, {pipeline_mode = #tpu.pipeline_mode<synchronous>, transform_indices = @transform_8, window_bounds = array<i64: 1, 128>}, {pipeline_mode = #tpu.pipeline_mode<synchronous>, transform_indices = @transform_9, window_bounds = array<i64: 1, 128>}, {pipeline_mode = #tpu.pipeline_mode<synchronous>, transform_indices = @transform_10, window_bounds = array<i64: 1, 128>}, {pipeline_mode = #tpu.pipeline_mode<synchronous>, transform_indices = @transform_11, window_bounds = array<i64: 128, 128>}, {pipeline_mode = #tpu.pipeline_mode<synchronous>, transform_indices = @transform_12, window_bounds = array<i64: 1, 128>}, {pipeline_mode = #tpu.pipeline_mode<synchronous>, transform_indices = @transform_13, window_bounds = array<i64: 128, 128>}, {transform_indices = @transform_14, window_bounds = array<i64: 1, 256, 128>}]} {
    %0 = tpu.iota {dimensions = array<i32: 0>} : vector<256x1xi32>
    %c16_i32 = arith.constant 16 : i32
    %c0_i32 = arith.constant 0 : i32
    %1 = arith.cmpi eq, %c16_i32, %c0_i32 : i32
    %c1_i32 = arith.constant 1 : i32
    %2 = arith.select %1, %c1_i32, %c16_i32 : i32
    %3 = vector.broadcast %2 : i32 to vector<256x1xi32>
    %4 = arith.remsi %0, %3 : vector<256x1xi32>
    %c0_i32_0 = arith.constant 0 : i32
    %5 = vector.broadcast %c0_i32_0 : i32 to vector<256x1xi32>
    %6 = arith.cmpi ne, %4, %5 : vector<256x1xi32>
    %c0_i32_1 = arith.constant 0 : i32
    %7 = vector.broadcast %c0_i32_1 : i32 to vector<256x1xi32>
    %8 = arith.cmpi slt, %4, %7 : vector<256x1xi32>
    %c0_i32_2 = arith.constant 0 : i32
    %9 = arith.cmpi slt, %2, %c0_i32_2 : i32
    %10 = vector.broadcast %9 : i1 to vector<256x1xi1>
    %11 = vector.broadcast %10 : vector<256x1xi1> to vector<256x1xi1>
    %12 = arith.xori %8, %11 : vector<256x1xi1>
    %13 = arith.andi %12, %6 : vector<256x1xi1>
    %14 = vector.broadcast %2 : i32 to vector<256x1xi32>
    %15 = arith.addi %4, %14 : vector<256x1xi32>
    %16 = arith.select %13, %15, %4 : vector<256x1xi1>, vector<256x1xi32>
    %c15_i32 = arith.constant 15 : i32
    %17 = vector.broadcast %c15_i32 : i32 to vector<256x1xi32>
    %18 = arith.cmpi ne, %16, %17 : vector<256x1xi32>
    %19 = arith.extui %18 : vector<256x1xi1> to vector<256x1xi32>
    %20 = arith.sitofp %19 : vector<256x1xi32> to vector<256x1xf32>
    %c0_i32_3 = arith.constant 0 : i32
    %21 = vector.broadcast %c0_i32_3 : i32 to vector<256x1xi32>
    %22 = arith.cmpi ne, %16, %21 : vector<256x1xi32>
    %23 = arith.extui %22 : vector<256x1xi1> to vector<256x1xi32>
    %24 = arith.sitofp %23 : vector<256x1xi32> to vector<256x1xf32>
    %cst = arith.constant 0.000000e+00 : f32
    %25 = vector.broadcast %cst : f32 to vector<16x384xf32>
    %c0 = arith.constant 0 : index
    %c0_4 = arith.constant 0 : index
    %26 = vector.load %arg16[%c0, %c0_4] : memref<288x384xf32, #tpu.memory_space<vmem>>, vector<16x384xf32>
    tpu.vector_store %arg16[%c0, %c0_4], %25 {strides = array<i32>} : memref<288x384xf32, #tpu.memory_space<vmem>>, vector<16x384xf32>,
    %cst_5 = arith.constant 0.000000e+00 : f32
    %27 = vector.broadcast %cst_5 : f32 to vector<16x384xf32>
    %c272 = arith.constant 272 : index
    %c0_6 = arith.constant 0 : index
    %28 = vector.load %arg16[%c272, %c0_6] : memref<288x384xf32, #tpu.memory_space<vmem>>, vector<16x384xf32>
    tpu.vector_store %arg16[%c272, %c0_6], %27 {strides = array<i32>} : memref<288x384xf32, #tpu.memory_space<vmem>>, vector<16x384xf32>,
    %c0_7 = arith.constant 0 : index
    %c0_8 = arith.constant 0 : index
    %c0_9 = arith.constant 0 : index
    %29 = vector.load %arg1[%c0_7, %c0_8, %c0_9] : memref<1x256x128xf32, #tpu.memory_space<vmem>>, vector<1x256x128xf32>
    %30 = vector.shape_cast %29 : vector<1x256x128xf32> to vector<256x128xf32>
    %31 = vector.broadcast %20 : vector<256x1xf32> to vector<256x128xf32>
    %32 = arith.mulf %30, %31 : vector<256x128xf32>
    %c1_i32_10 = arith.constant 1 : i32
    %33 = tpu.dynamic_rotate %32 by %c1_i32_10 dim 0 : vector<256x128xf32>, i32 -> vector<256x128xf32>
    %34 = vector.broadcast %24 : vector<256x1xf32> to vector<256x128xf32>
    %35 = arith.mulf %30, %34 : vector<256x128xf32>
    %c255_i32 = arith.constant 255 : i32
    %36 = tpu.dynamic_rotate %35 by %c255_i32 dim 0 : vector<256x128xf32>, i32 -> vector<256x128xf32>
    %c16 = arith.constant 16 : index
    %c0_11 = arith.constant 0 : index
    %37 = vector.load %arg16[%c16, %c0_11] : memref<288x384xf32, #tpu.memory_space<vmem>>, vector<256x128xf32>
    tpu.vector_store %arg16[%c16, %c0_11], %33 {strides = array<i32>} : memref<288x384xf32, #tpu.memory_space<vmem>>, vector<256x128xf32>,
    %c16_12 = arith.constant 16 : index
    %c128 = arith.constant 128 : index
    %38 = vector.load %arg16[%c16_12, %c128] : memref<288x384xf32, #tpu.memory_space<vmem>>, vector<256x128xf32>
    tpu.vector_store %arg16[%c16_12, %c128], %30 {strides = array<i32>} : memref<288x384xf32, #tpu.memory_space<vmem>>, vector<256x128xf32>,
    %c16_13 = arith.constant 16 : index
    %c256 = arith.constant 256 : index
    %39 = vector.load %arg16[%c16_13, %c256] : memref<288x384xf32, #tpu.memory_space<vmem>>, vector<256x128xf32>
    tpu.vector_store %arg16[%c16_13, %c256], %36 {strides = array<i32>} : memref<288x384xf32, #tpu.memory_space<vmem>>, vector<256x128xf32>,
    %cst_14 = arith.constant 0.000000e+00 : f32
    %40 = vector.broadcast %cst_14 : f32 to vector<256x128xf32>
    %c0_15 = arith.constant 0 : index
    %c0_16 = arith.constant 0 : index
    %41 = vector.load %arg16[%c0_15, %c0_16] : memref<288x384xf32, #tpu.memory_space<vmem>>, vector<256x384xf32>
    %c0_17 = arith.constant 0 : index
    %c0_18 = arith.constant 0 : index
    %c0_19 = arith.constant 0 : index
    %42 = vector.load %arg4[%c0_17, %c0_18, %c0_19] : memref<3x384x128xf32, #tpu.memory_space<vmem>>, vector<1x384x128xf32>
    %43 = vector.shape_cast %42 : vector<1x384x128xf32> to vector<384x128xf32>
    %cst_20 = arith.constant dense<0.000000e+00> : vector<256x128xf32>
    %44 = tpu.matmul %41, %43, %cst_20 {dimension_numbers = #tpu.dot_dimension_numbers<[1], [0], [0], [1], [0, 0, 1, 1], [], []>} : vector<256x384xf32>, vector<384x128xf32>, vector<256x128xf32> -> vector<256x128xf32>
    %45 = arith.addf %40, %44 : vector<256x128xf32>
    %c16_21 = arith.constant 16 : index
    %c0_22 = arith.constant 0 : index
    %46 = vector.load %arg16[%c16_21, %c0_22] : memref<288x384xf32, #tpu.memory_space<vmem>>, vector<256x384xf32>
    %c1 = arith.constant 1 : index
    %c0_23 = arith.constant 0 : index
    %c0_24 = arith.constant 0 : index
    %47 = vector.load %arg4[%c1, %c0_23, %c0_24] : memref<3x384x128xf32, #tpu.memory_space<vmem>>, vector<1x384x128xf32>
    %48 = vector.shape_cast %47 : vector<1x384x128xf32> to vector<384x128xf32>
    %cst_25 = arith.constant dense<0.000000e+00> : vector<256x128xf32>
    %49 = tpu.matmul %46, %48, %cst_25 {dimension_numbers = #tpu.dot_dimension_numbers<[1], [0], [0], [1], [0, 0, 1, 1], [], []>} : vector<256x384xf32>, vector<384x128xf32>, vector<256x128xf32> -> vector<256x128xf32>
    %50 = arith.addf %45, %49 : vector<256x128xf32>
    %c32 = arith.constant 32 : index
    %c0_26 = arith.constant 0 : index
    %51 = vector.load %arg16[%c32, %c0_26] : memref<288x384xf32, #tpu.memory_space<vmem>>, vector<256x384xf32>
    %c2 = arith.constant 2 : index
    %c0_27 = arith.constant 0 : index
    %c0_28 = arith.constant 0 : index
    %52 = vector.load %arg4[%c2, %c0_27, %c0_28] : memref<3x384x128xf32, #tpu.memory_space<vmem>>, vector<1x384x128xf32>
    %53 = vector.shape_cast %52 : vector<1x384x128xf32> to vector<384x128xf32>
    %cst_29 = arith.constant dense<0.000000e+00> : vector<256x128xf32>
    %54 = tpu.matmul %51, %53, %cst_29 {dimension_numbers = #tpu.dot_dimension_numbers<[1], [0], [0], [1], [0, 0, 1, 1], [], []>} : vector<256x384xf32>, vector<384x128xf32>, vector<256x128xf32> -> vector<256x128xf32>
    %55 = arith.addf %50, %54 : vector<256x128xf32>
    %c0_30 = arith.constant 0 : index
    %c0_31 = arith.constant 0 : index
    %56 = vector.load %arg5[%c0_30, %c0_31] : memref<1x128xf32, #tpu.memory_space<vmem>>, vector<1x128xf32>
    %57 = vector.broadcast %56 : vector<1x128xf32> to vector<256x128xf32>
    %58 = arith.addf %55, %57 : vector<256x128xf32>
    %cst_32 = arith.constant dense<0.000000e+00> : vector<128xf32>
    %59 = vector.multi_reduction <add>, %58, %cst_32 [0] : vector<256x128xf32> to vector<128xf32>
    %60 = vector.shape_cast %59 : vector<128xf32> to vector<1x128xf32>
    %c0_33 = arith.constant 0 : index
    %c0_34 = arith.constant 0 : index
    %61 = vector.load %arg14[%c0_33, %c0_34] : memref<128x128xf32, #tpu.memory_space<vmem>>, vector<128x128xf32>
    %cst_35 = arith.constant dense<0.000000e+00> : vector<1x128xf32>
    %62 = tpu.matmul %60, %61, %cst_35 {dimension_numbers = #tpu.dot_dimension_numbers<[1], [0], [0], [1], [0, 0, 1, 1], [], []>} : vector<1x128xf32>, vector<128x128xf32>, vector<1x128xf32> -> vector<1x128xf32>
    %63 = vector.broadcast %62 : vector<1x128xf32> to vector<256x128xf32>
    %64 = arith.subf %58, %63 : vector<256x128xf32>
    %65 = arith.mulf %64, %64 : vector<256x128xf32>
    %cst_36 = arith.constant dense<0.000000e+00> : vector<128xf32>
    %66 = vector.multi_reduction <add>, %65, %cst_36 [0] : vector<256x128xf32> to vector<128xf32>
    %67 = vector.shape_cast %66 : vector<128xf32> to vector<1x128xf32>
    %c0_37 = arith.constant 0 : index
    %c0_38 = arith.constant 0 : index
    %68 = vector.load %arg14[%c0_37, %c0_38] : memref<128x128xf32, #tpu.memory_space<vmem>>, vector<128x128xf32>
    %cst_39 = arith.constant dense<0.000000e+00> : vector<1x128xf32>
    %69 = tpu.matmul %67, %68, %cst_39 {dimension_numbers = #tpu.dot_dimension_numbers<[1], [0], [0], [1], [0, 0, 1, 1], [], []>} : vector<1x128xf32>, vector<128x128xf32>, vector<1x128xf32> -> vector<1x128xf32>
    %cst_40 = arith.constant 9.99999974E-6 : f32
    %70 = vector.broadcast %cst_40 : f32 to vector<1x128xf32>
    %71 = arith.addf %69, %70 : vector<1x128xf32>
    %72 = math.rsqrt %71 : vector<1x128xf32>
    %c0_41 = arith.constant 0 : index
    %c0_42 = arith.constant 0 : index
    %73 = vector.load %arg6[%c0_41, %c0_42] : memref<1x128xf32, #tpu.memory_space<vmem>>, vector<1x128xf32>
    %74 = arith.mulf %72, %73 : vector<1x128xf32>
    %75 = vector.broadcast %74 : vector<1x128xf32> to vector<256x128xf32>
    %76 = arith.mulf %64, %75 : vector<256x128xf32>
    %c0_43 = arith.constant 0 : index
    %c0_44 = arith.constant 0 : index
    %77 = vector.load %arg7[%c0_43, %c0_44] : memref<1x128xf32, #tpu.memory_space<vmem>>, vector<1x128xf32>
    %78 = vector.broadcast %77 : vector<1x128xf32> to vector<256x128xf32>
    %79 = arith.addf %76, %78 : vector<256x128xf32>
    %c0_45 = arith.constant 0 : index
    %c0_46 = arith.constant 0 : index
    %c0_47 = arith.constant 0 : index
    %80 = vector.load %arg2[%c0_45, %c0_46, %c0_47] : memref<1x1x128xf32, #tpu.memory_space<vmem>>, vector<1x1x128xf32>
    %81 = vector.shape_cast %80 : vector<1x1x128xf32> to vector<1x128xf32>
    %cst_48 = arith.constant 1.000000e+00 : f32
    %82 = vector.broadcast %cst_48 : f32 to vector<1x128xf32>
    %83 = arith.addf %81, %82 : vector<1x128xf32>
    %84 = vector.broadcast %83 : vector<1x128xf32> to vector<256x128xf32>
    %85 = arith.mulf %79, %84 : vector<256x128xf32>
    %c0_49 = arith.constant 0 : index
    %c0_50 = arith.constant 0 : index
    %c0_51 = arith.constant 0 : index
    %86 = vector.load %arg3[%c0_49, %c0_50, %c0_51] : memref<1x1x128xf32, #tpu.memory_space<vmem>>, vector<1x1x128xf32>
    %87 = vector.shape_cast %86 : vector<1x1x128xf32> to vector<1x128xf32>
    %88 = vector.broadcast %87 : vector<1x128xf32> to vector<256x128xf32>
    %89 = arith.addf %85, %88 : vector<256x128xf32>
    %90 = arith.negf %89 : vector<256x128xf32>
    %91 = math.exp %90 : vector<256x128xf32>
    %cst_52 = arith.constant 1.000000e+00 : f32
    %92 = vector.broadcast %cst_52 : f32 to vector<256x128xf32>
    %93 = arith.addf %92, %91 : vector<256x128xf32>
    %94 = arith.divf %92, %93 : vector<256x128xf32>
    %95 = arith.mulf %89, %94 : vector<256x128xf32>
    %96 = vector.broadcast %20 : vector<256x1xf32> to vector<256x128xf32>
    %97 = arith.mulf %95, %96 : vector<256x128xf32>
    %c1_i32_53 = arith.constant 1 : i32
    %98 = tpu.dynamic_rotate %97 by %c1_i32_53 dim 0 : vector<256x128xf32>, i32 -> vector<256x128xf32>
    %99 = vector.broadcast %24 : vector<256x1xf32> to vector<256x128xf32>
    %100 = arith.mulf %95, %99 : vector<256x128xf32>
    %c255_i32_54 = arith.constant 255 : i32
    %101 = tpu.dynamic_rotate %100 by %c255_i32_54 dim 0 : vector<256x128xf32>, i32 -> vector<256x128xf32>
    %c16_55 = arith.constant 16 : index
    %c0_56 = arith.constant 0 : index
    %102 = vector.load %arg16[%c16_55, %c0_56] : memref<288x384xf32, #tpu.memory_space<vmem>>, vector<256x128xf32>
    tpu.vector_store %arg16[%c16_55, %c0_56], %98 {strides = array<i32>} : memref<288x384xf32, #tpu.memory_space<vmem>>, vector<256x128xf32>,
    %c16_57 = arith.constant 16 : index
    %c128_58 = arith.constant 128 : index
    %103 = vector.load %arg16[%c16_57, %c128_58] : memref<288x384xf32, #tpu.memory_space<vmem>>, vector<256x128xf32>
    tpu.vector_store %arg16[%c16_57, %c128_58], %95 {strides = array<i32>} : memref<288x384xf32, #tpu.memory_space<vmem>>, vector<256x128xf32>,
    %c16_59 = arith.constant 16 : index
    %c256_60 = arith.constant 256 : index
    %104 = vector.load %arg16[%c16_59, %c256_60] : memref<288x384xf32, #tpu.memory_space<vmem>>, vector<256x128xf32>
    tpu.vector_store %arg16[%c16_59, %c256_60], %101 {strides = array<i32>} : memref<288x384xf32, #tpu.memory_space<vmem>>, vector<256x128xf32>,
    %cst_61 = arith.constant 0.000000e+00 : f32
    %105 = vector.broadcast %cst_61 : f32 to vector<256x128xf32>
    %c0_62 = arith.constant 0 : index
    %c0_63 = arith.constant 0 : index
    %106 = vector.load %arg16[%c0_62, %c0_63] : memref<288x384xf32, #tpu.memory_space<vmem>>, vector<256x384xf32>
    %c0_64 = arith.constant 0 : index
    %c0_65 = arith.constant 0 : index
    %c0_66 = arith.constant 0 : index
    %107 = vector.load %arg8[%c0_64, %c0_65, %c0_66] : memref<3x384x128xf32, #tpu.memory_space<vmem>>, vector<1x384x128xf32>
    %108 = vector.shape_cast %107 : vector<1x384x128xf32> to vector<384x128xf32>
    %cst_67 = arith.constant dense<0.000000e+00> : vector<256x128xf32>
    %109 = tpu.matmul %106, %108, %cst_67 {dimension_numbers = #tpu.dot_dimension_numbers<[1], [0], [0], [1], [0, 0, 1, 1], [], []>} : vector<256x384xf32>, vector<384x128xf32>, vector<256x128xf32> -> vector<256x128xf32>
    %110 = arith.addf %105, %109 : vector<256x128xf32>
    %c16_68 = arith.constant 16 : index
    %c0_69 = arith.constant 0 : index
    %111 = vector.load %arg16[%c16_68, %c0_69] : memref<288x384xf32, #tpu.memory_space<vmem>>, vector<256x384xf32>
    %c1_70 = arith.constant 1 : index
    %c0_71 = arith.constant 0 : index
    %c0_72 = arith.constant 0 : index
    %112 = vector.load %arg8[%c1_70, %c0_71, %c0_72] : memref<3x384x128xf32, #tpu.memory_space<vmem>>, vector<1x384x128xf32>
    %113 = vector.shape_cast %112 : vector<1x384x128xf32> to vector<384x128xf32>
    %cst_73 = arith.constant dense<0.000000e+00> : vector<256x128xf32>
    %114 = tpu.matmul %111, %113, %cst_73 {dimension_numbers = #tpu.dot_dimension_numbers<[1], [0], [0], [1], [0, 0, 1, 1], [], []>} : vector<256x384xf32>, vector<384x128xf32>, vector<256x128xf32> -> vector<256x128xf32>
    %115 = arith.addf %110, %114 : vector<256x128xf32>
    %c32_74 = arith.constant 32 : index
    %c0_75 = arith.constant 0 : index
    %116 = vector.load %arg16[%c32_74, %c0_75] : memref<288x384xf32, #tpu.memory_space<vmem>>, vector<256x384xf32>
    %c2_76 = arith.constant 2 : index
    %c0_77 = arith.constant 0 : index
    %c0_78 = arith.constant 0 : index
    %117 = vector.load %arg8[%c2_76, %c0_77, %c0_78] : memref<3x384x128xf32, #tpu.memory_space<vmem>>, vector<1x384x128xf32>
    %118 = vector.shape_cast %117 : vector<1x384x128xf32> to vector<384x128xf32>
    %cst_79 = arith.constant dense<0.000000e+00> : vector<256x128xf32>
    %119 = tpu.matmul %116, %118, %cst_79 {dimension_numbers = #tpu.dot_dimension_numbers<[1], [0], [0], [1], [0, 0, 1, 1], [], []>} : vector<256x384xf32>, vector<384x128xf32>, vector<256x128xf32> -> vector<256x128xf32>
    %120 = arith.addf %115, %119 : vector<256x128xf32>
    %c0_80 = arith.constant 0 : index
    %c0_81 = arith.constant 0 : index
    %121 = vector.load %arg9[%c0_80, %c0_81] : memref<1x128xf32, #tpu.memory_space<vmem>>, vector<1x128xf32>
    %122 = vector.broadcast %121 : vector<1x128xf32> to vector<256x128xf32>
    %123 = arith.addf %120, %122 : vector<256x128xf32>
    %cst_82 = arith.constant dense<0.000000e+00> : vector<128xf32>
    %124 = vector.multi_reduction <add>, %123, %cst_82 [0] : vector<256x128xf32> to vector<128xf32>
    %125 = vector.shape_cast %124 : vector<128xf32> to vector<1x128xf32>
    %c0_83 = arith.constant 0 : index
    %c0_84 = arith.constant 0 : index
    %126 = vector.load %arg14[%c0_83, %c0_84] : memref<128x128xf32, #tpu.memory_space<vmem>>, vector<128x128xf32>
    %cst_85 = arith.constant dense<0.000000e+00> : vector<1x128xf32>
    %127 = tpu.matmul %125, %126, %cst_85 {dimension_numbers = #tpu.dot_dimension_numbers<[1], [0], [0], [1], [0, 0, 1, 1], [], []>} : vector<1x128xf32>, vector<128x128xf32>, vector<1x128xf32> -> vector<1x128xf32>
    %128 = vector.broadcast %127 : vector<1x128xf32> to vector<256x128xf32>
    %129 = arith.subf %123, %128 : vector<256x128xf32>
    %130 = arith.mulf %129, %129 : vector<256x128xf32>
    %cst_86 = arith.constant dense<0.000000e+00> : vector<128xf32>
    %131 = vector.multi_reduction <add>, %130, %cst_86 [0] : vector<256x128xf32> to vector<128xf32>
    %132 = vector.shape_cast %131 : vector<128xf32> to vector<1x128xf32>
    %c0_87 = arith.constant 0 : index
    %c0_88 = arith.constant 0 : index
    %133 = vector.load %arg14[%c0_87, %c0_88] : memref<128x128xf32, #tpu.memory_space<vmem>>, vector<128x128xf32>
    %cst_89 = arith.constant dense<0.000000e+00> : vector<1x128xf32>
    %134 = tpu.matmul %132, %133, %cst_89 {dimension_numbers = #tpu.dot_dimension_numbers<[1], [0], [0], [1], [0, 0, 1, 1], [], []>} : vector<1x128xf32>, vector<128x128xf32>, vector<1x128xf32> -> vector<1x128xf32>
    %cst_90 = arith.constant 9.99999974E-6 : f32
    %135 = vector.broadcast %cst_90 : f32 to vector<1x128xf32>
    %136 = arith.addf %134, %135 : vector<1x128xf32>
    %137 = math.rsqrt %136 : vector<1x128xf32>
    %c0_91 = arith.constant 0 : index
    %c0_92 = arith.constant 0 : index
    %138 = vector.load %arg10[%c0_91, %c0_92] : memref<1x128xf32, #tpu.memory_space<vmem>>, vector<1x128xf32>
    %139 = arith.mulf %137, %138 : vector<1x128xf32>
    %140 = vector.broadcast %139 : vector<1x128xf32> to vector<256x128xf32>
    %141 = arith.mulf %129, %140 : vector<256x128xf32>
    %c0_93 = arith.constant 0 : index
    %c0_94 = arith.constant 0 : index
    %142 = vector.load %arg11[%c0_93, %c0_94] : memref<1x128xf32, #tpu.memory_space<vmem>>, vector<1x128xf32>
    %143 = vector.broadcast %142 : vector<1x128xf32> to vector<256x128xf32>
    %144 = arith.addf %141, %143 : vector<256x128xf32>
    %145 = arith.negf %144 : vector<256x128xf32>
    %146 = math.exp %145 : vector<256x128xf32>
    %cst_95 = arith.constant 1.000000e+00 : f32
    %147 = vector.broadcast %cst_95 : f32 to vector<256x128xf32>
    %148 = arith.addf %147, %146 : vector<256x128xf32>
    %149 = arith.divf %147, %148 : vector<256x128xf32>
    %150 = arith.mulf %144, %149 : vector<256x128xf32>
    %c0_96 = arith.constant 0 : index
    %c0_97 = arith.constant 0 : index
    %151 = vector.load %arg12[%c0_96, %c0_97] : memref<128x128xf32, #tpu.memory_space<vmem>>, vector<128x128xf32>
    %cst_98 = arith.constant dense<0.000000e+00> : vector<256x128xf32>
    %152 = tpu.matmul %30, %151, %cst_98 {dimension_numbers = #tpu.dot_dimension_numbers<[1], [0], [0], [1], [0, 0, 1, 1], [], []>} : vector<256x128xf32>, vector<128x128xf32>, vector<256x128xf32> -> vector<256x128xf32>
    %c0_99 = arith.constant 0 : index
    %c0_100 = arith.constant 0 : index
    %153 = vector.load %arg13[%c0_99, %c0_100] : memref<1x128xf32, #tpu.memory_space<vmem>>, vector<1x128xf32>
    %154 = vector.broadcast %153 : vector<1x128xf32> to vector<256x128xf32>
    %155 = arith.addf %152, %154 : vector<256x128xf32>
    %156 = arith.addf %150, %155 : vector<256x128xf32>
    %c0_101 = arith.constant 0 : index
    %c0_102 = arith.constant 0 : index
    %c0_103 = arith.constant 0 : index
    %157 = vector.load %arg15[%c0_101, %c0_102, %c0_103] : memref<1x256x128xf32, #tpu.memory_space<vmem>>, vector<1x256x128xf32>
    %158 = vector.shape_cast %157 : vector<1x256x128xf32> to vector<256x128xf32>
    %159 = vector.shape_cast %156 : vector<256x128xf32> to vector<1x256x128xf32>
    tpu.vector_store %arg15[%c0_101, %c0_102, %c0_103], %159 {strides = array<i32>} : memref<1x256x128xf32, #tpu.memory_space<vmem>>, vector<1x256x128xf32>,
    return
  }
  func.func @transform_0(%arg0: i32) -> (i32, i32, i32) {
    %c0_i32 = arith.constant 0 : i32
    %c0_i32_0 = arith.constant 0 : i32
    %c0_i32_1 = arith.constant 0 : i32
    return %arg0, %c0_i32, %c0_i32_0 : i32, i32, i32
  }
  func.func @transform_1(%arg0: i32) -> (i32, i32, i32) {
    %c0_i32 = arith.constant 0 : i32
    %c0_i32_0 = arith.constant 0 : i32
    %c0_i32_1 = arith.constant 0 : i32
    return %arg0, %c0_i32, %c0_i32_0 : i32, i32, i32
  }
  func.func @transform_2(%arg0: i32) -> (i32, i32, i32) {
    %c0_i32 = arith.constant 0 : i32
    %c0_i32_0 = arith.constant 0 : i32
    %c0_i32_1 = arith.constant 0 : i32
    return %arg0, %c0_i32, %c0_i32_0 : i32, i32, i32
  }
  func.func @transform_3(%arg0: i32) -> (i32, i32, i32) {
    %c0_i32 = arith.constant 0 : i32
    %c0_i32_0 = arith.constant 0 : i32
    %c0_i32_1 = arith.constant 0 : i32
    %c0_i32_2 = arith.constant 0 : i32
    return %c0_i32, %c0_i32_0, %c0_i32_1 : i32, i32, i32
  }
  func.func @transform_4(%arg0: i32) -> (i32, i32) {
    %c0_i32 = arith.constant 0 : i32
    %c0_i32_0 = arith.constant 0 : i32
    %c0_i32_1 = arith.constant 0 : i32
    return %c0_i32, %c0_i32_0 : i32, i32
  }
  func.func @transform_5(%arg0: i32) -> (i32, i32) {
    %c0_i32 = arith.constant 0 : i32
    %c0_i32_0 = arith.constant 0 : i32
    %c0_i32_1 = arith.constant 0 : i32
    return %c0_i32, %c0_i32_0 : i32, i32
  }
  func.func @transform_6(%arg0: i32) -> (i32, i32) {
    %c0_i32 = arith.constant 0 : i32
    %c0_i32_0 = arith.constant 0 : i32
    %c0_i32_1 = arith.constant 0 : i32
    return %c0_i32, %c0_i32_0 : i32, i32
  }
  func.func @transform_7(%arg0: i32) -> (i32, i32, i32) {
    %c0_i32 = arith.constant 0 : i32
    %c0_i32_0 = arith.constant 0 : i32
    %c0_i32_1 = arith.constant 0 : i32
    %c0_i32_2 = arith.constant 0 : i32
    return %c0_i32, %c0_i32_0, %c0_i32_1 : i32, i32, i32
  }
  func.func @transform_8(%arg0: i32) -> (i32, i32) {
    %c0_i32 = arith.constant 0 : i32
    %c0_i32_0 = arith.constant 0 : i32
    %c0_i32_1 = arith.constant 0 : i32
    return %c0_i32, %c0_i32_0 : i32, i32
  }
  func.func @transform_9(%arg0: i32) -> (i32, i32) {
    %c0_i32 = arith.constant 0 : i32
    %c0_i32_0 = arith.constant 0 : i32
    %c0_i32_1 = arith.constant 0 : i32
    return %c0_i32, %c0_i32_0 : i32, i32
  }
  func.func @transform_10(%arg0: i32) -> (i32, i32) {
    %c0_i32 = arith.constant 0 : i32
    %c0_i32_0 = arith.constant 0 : i32
    %c0_i32_1 = arith.constant 0 : i32
    return %c0_i32, %c0_i32_0 : i32, i32
  }
  func.func @transform_11(%arg0: i32) -> (i32, i32) {
    %c0_i32 = arith.constant 0 : i32
    %c0_i32_0 = arith.constant 0 : i32
    %c0_i32_1 = arith.constant 0 : i32
    return %c0_i32, %c0_i32_0 : i32, i32
  }
  func.func @transform_12(%arg0: i32) -> (i32, i32) {
    %c0_i32 = arith.constant 0 : i32
    %c0_i32_0 = arith.constant 0 : i32
    %c0_i32_1 = arith.constant 0 : i32
    return %c0_i32, %c0_i32_0 : i32, i32
  }
  func.func @transform_13(%arg0: i32) -> (i32, i32) {
    %c0_i32 = arith.constant 0 : i32
    %c0_i32_0 = arith.constant 0 : i32
    %c0_i32_1 = arith.constant 0 : i32
    return %c0_i32, %c0_i32_0 : i32, i32
  }
  func.func @transform_14(%arg0: i32) -> (i32, i32, i32) {
    %c0_i32 = arith.constant 0 : i32
    %c0_i32_0 = arith.constant 0 : i32
    %c0_i32_1 = arith.constant 0 : i32
    return %arg0, %c0_i32, %c0_i32_0 : i32, i32, i32
  }
}

</mosaic_0001>

<llo_original>
// kernel: resnet_block_forward.1
$region0: #{resnet_block_forward.1}
  #allocation0 [shape = 'u32[]', space=smem, size = 0x4, offset = 0x4, fixed_abs, tag = 'smem constant byte address 0x4 - core index']
  #allocation1 [shape = 'u32[144,128]{1,0:T(1,128)}', space=vmem, size = 0x12000, scoped, tag = 'internal scratch']
  #allocation2 [shape = 'f32[288,384]{1,0:T(8,128)}', space=vmem, size = 0x6c000, scoped, tag = 'scratch operand']
  %s0 = inlined_call_operand.vmem [shape: f32[2,256,128], index: 0, kind: input, shape index: {}]
  %s1 = inlined_call_operand.vmem [shape: f32[2,1,128], index: 1, kind: input, shape index: {}]
  %s2 = inlined_call_operand.vmem [shape: f32[2,1,128], index: 2, kind: input, shape index: {}]
  %s3 = inlined_call_operand.vmem [shape: f32[3,384,128], index: 3, kind: input, shape index: {}]
  %s4 = inlined_call_operand.vmem [shape: f32[1,128], index: 4, kind: input, shape index: {}]
  %s5 = inlined_call_operand.vmem [shape: f32[1,128], index: 5, kind: input, shape index: {}]
  %s6 = inlined_call_operand.vmem [shape: f32[1,128], index: 6, kind: input, shape index: {}]
  %s7 = inlined_call_operand.vmem [shape: f32[3,384,128], index: 7, kind: input, shape index: {}]
  %s8 = inlined_call_operand.vmem [shape: f32[1,128], index: 8, kind: input, shape index: {}]
  %s9 = inlined_call_operand.vmem [shape: f32[1,128], index: 9, kind: input, shape index: {}]
  %s10 = inlined_call_operand.vmem [shape: f32[1,128], index: 10, kind: input, shape index: {}]
  %s11 = inlined_call_operand.vmem [shape: f32[128,128], index: 11, kind: input, shape index: {}]
  %s12 = inlined_call_operand.vmem [shape: f32[1,128], index: 12, kind: input, shape index: {}]
  %s13 = inlined_call_operand.vmem [shape: f32[128,128], index: 13, kind: input, shape index: {}]
  %s14 = inlined_call_operand.vmem [shape: f32[2,256,128], index: 14, kind: output, shape index: {}]
  %s15 = sld [smem:[#allocation0]]
  $region89: #{resnet_block_forward.1} parent=0
    _
  %s17 = ssub.s32 1, %s15
  %s18 = scalar_select 0, %s17, %s15
  loop: start=0, step=1, limit=4
  $region2: #{resnet_block_forward.1} parent=0 // loop_pre_header
    _
  $region3: #{resnet_block_forward.1} parent=0 // loop_header
    %s20 = sphi 0, %s24
    %p21 = scmp.ge.s32.totalorder %s20, 4
    %s30 = sphi 0, %s32
    %s33 = sphi 0, %s30
    %s34 = sphi 0, %s33
    %s50 = sphi 0, %s34
    %s56 = sphi 0, %s58
    %s59 = sphi 0, %s56
    %s60 = sphi 0, %s59
    %s76 = sphi 0, %s60
    %s82 = sphi 0, %s84
    %s85 = sphi 0, %s82
    %s86 = sphi 0, %s85
    %s102 = sphi 0, %s86
    %s106 = sphi 0, %s106
    %s108 = sphi 0, %s106
    %s109 = sphi 0, %s108
    %s123 = sphi 0, %s109
    %s127 = sphi 0, %s127
    %s129 = sphi 0, %s127
    %s130 = sphi 0, %s129
    %s144 = sphi 0, %s130
    %s148 = sphi 0, %s148
    %s150 = sphi 0, %s148
    %s151 = sphi 0, %s150
    %s165 = sphi 0, %s151
    %s169 = sphi 0, %s169
    %s171 = sphi 0, %s169
    %s172 = sphi 0, %s171
    %s186 = sphi 0, %s172
    %s190 = sphi 0, %s190
    %s192 = sphi 0, %s190
    %s193 = sphi 0, %s192
    %s207 = sphi 0, %s193
    %s211 = sphi 0, %s211
    %s213 = sphi 0, %s211
    %s214 = sphi 0, %s213
    %s228 = sphi 0, %s214
    %s232 = sphi 0, %s232
    %s234 = sphi 0, %s232
    %s235 = sphi 0, %s234
    %s249 = sphi 0, %s235
    %s253 = sphi 0, %s253
    %s255 = sphi 0, %s253
    %s256 = sphi 0, %s255
    %s270 = sphi 0, %s256
    %s274 = sphi 0, %s274
    %s276 = sphi 0, %s274
    %s277 = sphi 0, %s276
    %s291 = sphi 0, %s277
    %s295 = sphi 0, %s295
    %s297 = sphi 0, %s295
    %s298 = sphi 0, %s297
    %s312 = sphi 0, %s298
    %s316 = sphi 0, %s316
    %s318 = sphi 0, %s316
    %s319 = sphi 0, %s318
    %s333 = sphi 0, %s319
    %s339 = sphi 0, %s341
    %s342 = sphi 0, %s339
    %s343 = sphi 0, %s342
    %s359 = sphi 0, %s343
  $region4: #{resnet_block_forward.1} parent=0 // loop_header_branch
    %23 = sbr.rel (%p21) target = $region8
  $region5: #{resnet_block_forward.1} parent=0 // loop_body
    %s25 = ssub.s32 %s20, 1
    %s26 = ssub.s32 %s20, 2
    %s27 = sadd.s32 %s20, 1
    %s28 = ssub.s32 %s20, %s27
    %p29 = scmp.eq.s32.totalorder %s28, 0
    %s31 = sadd.s32 %s30, 1
    %s32 = scalar_select %p29, %s30, %s31
    %p35 = pneg %p29
    %p36 = scmp.eq.s32.totalorder %s20, 1
    %p37 = por %p35, %p36
    %p38 = scmp.ne.s32.totalorder %s30, %s33
    %p39 = scmp.eq.s32.totalorder %s20, 0
    %p40 = por %p38, %p39
    %p41 = scmp.ne.s32.totalorder %s30, %s33
    %p42 = scmp.eq.s32.totalorder %s25, 1
    %p43 = por %p41, %p42
    %p44 = scmp.ne.s32.totalorder %s33, %s34
    %p45 = scmp.eq.s32.totalorder %s25, 0
    %p46 = por %p44, %p45
    %p47 = scmp.ne.s32.totalorder %s33, %s34
    %p48 = scmp.eq.s32.totalorder %s26, 1
    %p49 = por %p47, %p48
    %p51 = scmp.ne.s32.totalorder %s34, %s50
    %p52 = scmp.eq.s32.totalorder %s26, 0
    %p53 = por %p51, %p52
    %s54 = ssub.s32 %s20, %s27
    %p55 = scmp.eq.s32.totalorder %s54, 0
    %s57 = sadd.s32 %s56, 1
    %s58 = scalar_select %p55, %s56, %s57
    %p61 = pneg %p55
    %p62 = scmp.eq.s32.totalorder %s20, 1
    %p63 = por %p61, %p62
    %p64 = scmp.ne.s32.totalorder %s56, %s59
    %p65 = scmp.eq.s32.totalorder %s20, 0
    %p66 = por %p64, %p65
    %p67 = scmp.ne.s32.totalorder %s56, %s59
    %p68 = scmp.eq.s32.totalorder %s25, 1
    %p69 = por %p67, %p68
    %p70 = scmp.ne.s32.totalorder %s59, %s60
    %p71 = scmp.eq.s32.totalorder %s25, 0
    %p72 = por %p70, %p71
    %p73 = scmp.ne.s32.totalorder %s59, %s60
    %p74 = scmp.eq.s32.totalorder %s26, 1
    %p75 = por %p73, %p74
    %p77 = scmp.ne.s32.totalorder %s60, %s76
    %p78 = scmp.eq.s32.totalorder %s26, 0
    %p79 = por %p77, %p78
    %s80 = ssub.s32 %s20, %s27
    %p81 = scmp.eq.s32.totalorder %s80, 0
    %s83 = sadd.s32 %s82, 1
    %s84 = scalar_select %p81, %s82, %s83
    %p87 = pneg %p81
    %p88 = scmp.eq.s32.totalorder %s20, 1
    %p89 = por %p87, %p88
    %p90 = scmp.ne.s32.totalorder %s82, %s85
    %p91 = scmp.eq.s32.totalorder %s20, 0
    %p92 = por %p90, %p91
    %p93 = scmp.ne.s32.totalorder %s82, %s85
    %p94 = scmp.eq.s32.totalorder %s25, 1
    %p95 = por %p93, %p94
    %p96 = scmp.ne.s32.totalorder %s85, %s86
    %p97 = scmp.eq.s32.totalorder %s25, 0
    %p98 = por %p96, %p97
    %p99 = scmp.ne.s32.totalorder %s85, %s86
    %p100 = scmp.eq.s32.totalorder %s26, 1
    %p101 = por %p99, %p100
    %p103 = scmp.ne.s32.totalorder %s86, %s102
    %p104 = scmp.eq.s32.totalorder %s26, 0
    %p105 = por %p103, %p104
    %s107 = sadd.s32 %s106, 1
    %p110 = scmp.eq.s32.totalorder %s20, 1
    %p111 = scmp.ne.s32.totalorder %s106, %s108
    %p112 = scmp.eq.s32.totalorder %s20, 0
    %p113 = por %p111, %p112
    %p114 = scmp.ne.s32.totalorder %s106, %s108
    %p115 = scmp.eq.s32.totalorder %s25, 1
    %p116 = por %p114, %p115
    %p117 = scmp.ne.s32.totalorder %s108, %s109
    %p118 = scmp.eq.s32.totalorder %s25, 0
    %p119 = por %p117, %p118
    %p120 = scmp.ne.s32.totalorder %s108, %s109
    %p121 = scmp.eq.s32.totalorder %s26, 1
    %p122 = por %p120, %p121
    %p124 = scmp.ne.s32.totalorder %s109, %s123
    %p125 = scmp.eq.s32.totalorder %s26, 0
    %p126 = por %p124, %p125
    %s128 = sadd.s32 %s127, 1
    %p131 = scmp.eq.s32.totalorder %s20, 1
    %p132 = scmp.ne.s32.totalorder %s127, %s129
    %p133 = scmp.eq.s32.totalorder %s20, 0
    %p134 = por %p132, %p133
    %p135 = scmp.ne.s32.totalorder %s127, %s129
    %p136 = scmp.eq.s32.totalorder %s25, 1
    %p137 = por %p135, %p136
    %p138 = scmp.ne.s32.totalorder %s129, %s130
    %p139 = scmp.eq.s32.totalorder %s25, 0
    %p140 = por %p138, %p139
    %p141 = scmp.ne.s32.totalorder %s129, %s130
    %p142 = scmp.eq.s32.totalorder %s26, 1
    %p143 = por %p141, %p142
    %p145 = scmp.ne.s32.totalorder %s130, %s144
    %p146 = scmp.eq.s32.totalorder %s26, 0
    %p147 = por %p145, %p146
    %s149 = sadd.s32 %s148, 1
    %p152 = scmp.eq.s32.totalorder %s20, 1
    %p153 = scmp.ne.s32.totalorder %s148, %s150
    %p154 = scmp.eq.s32.totalorder %s20, 0
    %p155 = por %p153, %p154
    %p156 = scmp.ne.s32.totalorder %s148, %s150
    %p157 = scmp.eq.s32.totalorder %s25, 1
    %p158 = por %p156, %p157
    %p159 = scmp.ne.s32.totalorder %s150, %s151
    %p160 = scmp.eq.s32.totalorder %s25, 0
    %p161 = por %p159, %p160
    %p162 = scmp.ne.s32.totalorder %s150, %s151
    %p163 = scmp.eq.s32.totalorder %s26, 1
    %p164 = por %p162, %p163
    %p166 = scmp.ne.s32.totalorder %s151, %s165
    %p167 = scmp.eq.s32.totalorder %s26, 0
    %p168 = por %p166, %p167
    %s170 = sadd.s32 %s169, 1
    %p173 = scmp.eq.s32.totalorder %s20, 1
    %p174 = scmp.ne.s32.totalorder %s169, %s171
    %p175 = scmp.eq.s32.totalorder %s20, 0
    %p176 = por %p174, %p175
    %p177 = scmp.ne.s32.totalorder %s169, %s171
    %p178 = scmp.eq.s32.totalorder %s25, 1
    %p179 = por %p177, %p178
    %p180 = scmp.ne.s32.totalorder %s171, %s172
    %p181 = scmp.eq.s32.totalorder %s25, 0
    %p182 = por %p180, %p181
    %p183 = scmp.ne.s32.totalorder %s171, %s172
    %p184 = scmp.eq.s32.totalorder %s26, 1
    %p185 = por %p183, %p184
    %p187 = scmp.ne.s32.totalorder %s172, %s186
    %p188 = scmp.eq.s32.totalorder %s26, 0
    %p189 = por %p187, %p188
    %s191 = sadd.s32 %s190, 1
    %p194 = scmp.eq.s32.totalorder %s20, 1
    %p195 = scmp.ne.s32.totalorder %s190, %s192
    %p196 = scmp.eq.s32.totalorder %s20, 0
    %p197 = por %p195, %p196
    %p198 = scmp.ne.s32.totalorder %s190, %s192
    %p199 = scmp.eq.s32.totalorder %s25, 1
    %p200 = por %p198, %p199
    %p201 = scmp.ne.s32.totalorder %s192, %s193
    %p202 = scmp.eq.s32.totalorder %s25, 0
    %p203 = por %p201, %p202
    %p204 = scmp.ne.s32.totalorder %s192, %s193
    %p205 = scmp.eq.s32.totalorder %s26, 1
    %p206 = por %p204, %p205
    %p208 = scmp.ne.s32.totalorder %s193, %s207
    %p209 = scmp.eq.s32.totalorder %s26, 0
    %p210 = por %p208, %p209
    %s212 = sadd.s32 %s211, 1
    %p215 = scmp.eq.s32.totalorder %s20, 1
    %p216 = scmp.ne.s32.totalorder %s211, %s213
    %p217 = scmp.eq.s32.totalorder %s20, 0
    %p218 = por %p216, %p217
    %p219 = scmp.ne.s32.totalorder %s211, %s213
    %p220 = scmp.eq.s32.totalorder %s25, 1
    %p221 = por %p219, %p220
    %p222 = scmp.ne.s32.totalorder %s213, %s214
    %p223 = scmp.eq.s32.totalorder %s25, 0
    %p224 = por %p222, %p223
    %p225 = scmp.ne.s32.totalorder %s213, %s214
    %p226 = scmp.eq.s32.totalorder %s26, 1
    %p227 = por %p225, %p226
    %p229 = scmp.ne.s32.totalorder %s214, %s228
    %p230 = scmp.eq.s32.totalorder %s26, 0
    %p231 = por %p229, %p230
    %s233 = sadd.s32 %s232, 1
    %p236 = scmp.eq.s32.totalorder %s20, 1
    %p237 = scmp.ne.s32.totalorder %s232, %s234
    %p238 = scmp.eq.s32.totalorder %s20, 0
    %p239 = por %p237, %p238
    %p240 = scmp.ne.s32.totalorder %s232, %s234
    %p241 = scmp.eq.s32.totalorder %s25, 1
    %p242 = por %p240, %p241
    %p243 = scmp.ne.s32.totalorder %s234, %s235
    %p244 = scmp.eq.s32.totalorder %s25, 0
    %p245 = por %p243, %p244
    %p246 = scmp.ne.s32.totalorder %s234, %s235
    %p247 = scmp.eq.s32.totalorder %s26, 1
    %p248 = por %p246, %p247
    %p250 = scmp.ne.s32.totalorder %s235, %s249
    %p251 = scmp.eq.s32.totalorder %s26, 0
    %p252 = por %p250, %p251
    %s254 = sadd.s32 %s253, 1
    %p257 = scmp.eq.s32.totalorder %s20, 1
    %p258 = scmp.ne.s32.totalorder %s253, %s255
    %p259 = scmp.eq.s32.totalorder %s20, 0
    %p260 = por %p258, %p259
    %p261 = scmp.ne.s32.totalorder %s253, %s255
    %p262 = scmp.eq.s32.totalorder %s25, 1
    %p263 = por %p261, %p262
    %p264 = scmp.ne.s32.totalorder %s255, %s256
    %p265 = scmp.eq.s32.totalorder %s25, 0
    %p266 = por %p264, %p265
    %p267 = scmp.ne.s32.totalorder %s255, %s256
    %p268 = scmp.eq.s32.totalorder %s26, 1
    %p269 = por %p267, %p268
    %p271 = scmp.ne.s32.totalorder %s256, %s270
    %p272 = scmp.eq.s32.totalorder %s26, 0
    %p273 = por %p271, %p272
    %s275 = sadd.s32 %s274, 1
    %p278 = scmp.eq.s32.totalorder %s20, 1
    %p279 = scmp.ne.s32.totalorder %s274, %s276
    %p280 = scmp.eq.s32.totalorder %s20, 0
    %p281 = por %p279, %p280
    %p282 = scmp.ne.s32.totalorder %s274, %s276
    %p283 = scmp.eq.s32.totalorder %s25, 1
    %p284 = por %p282, %p283
    %p285 = scmp.ne.s32.totalorder %s276, %s277
    %p286 = scmp.eq.s32.totalorder %s25, 0
    %p287 = por %p285, %p286
    %p288 = scmp.ne.s32.totalorder %s276, %s277
    %p289 = scmp.eq.s32.totalorder %s26, 1
    %p290 = por %p288, %p289
    %p292 = scmp.ne.s32.totalorder %s277, %s291
    %p293 = scmp.eq.s32.totalorder %s26, 0
    %p294 = por %p292, %p293
    %s296 = sadd.s32 %s295, 1
    %p299 = scmp.eq.s32.totalorder %s20, 1
    %p300 = scmp.ne.s32.totalorder %s295, %s297
    %p301 = scmp.eq.s32.totalorder %s20, 0
    %p302 = por %p300, %p301
    %p303 = scmp.ne.s32.totalorder %s295, %s297
    %p304 = scmp.eq.s32.totalorder %s25, 1
    %p305 = por %p303, %p304
    %p306 = scmp.ne.s32.totalorder %s297, %s298
    %p307 = scmp.eq.s32.totalorder %s25, 0
    %p308 = por %p306, %p307
    %p309 = scmp.ne.s32.totalorder %s297, %s298
    %p310 = scmp.eq.s32.totalorder %s26, 1
    %p311 = por %p309, %p310
    %p313 = scmp.ne.s32.totalorder %s298, %s312
    %p314 = scmp.eq.s32.totalorder %s26, 0
    %p315 = por %p313, %p314
    %s317 = sadd.s32 %s316, 1
    %p320 = scmp.eq.s32.totalorder %s20, 1
    %p321 = scmp.ne.s32.totalorder %s316, %s318
    %p322 = scmp.eq.s32.totalorder %s20, 0
    %p323 = por %p321, %p322
    %p324 = scmp.ne.s32.totalorder %s316, %s318
    %p325 = scmp.eq.s32.totalorder %s25, 1
    %p326 = por %p324, %p325
    %p327 = scmp.ne.s32.totalorder %s318, %s319
    %p328 = scmp.eq.s32.totalorder %s25, 0
    %p329 = por %p327, %p328
    %p330 = scmp.ne.s32.totalorder %s318, %s319
    %p331 = scmp.eq.s32.totalorder %s26, 1
    %p332 = por %p330, %p331
    %p334 = scmp.ne.s32.totalorder %s319, %s333
    %p335 = scmp.eq.s32.totalorder %s26, 0
    %p336 = por %p334, %p335
    %s337 = ssub.s32 %s20, %s27
    %p338 = scmp.eq.s32.totalorder %s337, 0
    %s340 = sadd.s32 %s339, 1
    %s341 = scalar_select %p338, %s339, %s340
    %p344 = pneg %p338
    %p345 = scmp.eq.s32.totalorder %s20, 1
    %p346 = por %p344, %p345
    %p347 = scmp.ne.s32.totalorder %s339, %s342
    %p348 = scmp.eq.s32.totalorder %s20, 0
    %p349 = por %p347, %p348
    %p350 = scmp.ne.s32.totalorder %s339, %s342
    %p351 = scmp.eq.s32.totalorder %s25, 1
    %p352 = por %p350, %p351
    %p353 = scmp.ne.s32.totalorder %s342, %s343
    %p354 = scmp.eq.s32.totalorder %s25, 0
    %p355 = por %p353, %p354
    %p356 = scmp.ne.s32.totalorder %s342, %s343
    %p357 = scmp.eq.s32.totalorder %s26, 1
    %p358 = por %p356, %p357
    %p360 = scmp.ne.s32.totalorder %s343, %s359
    %p361 = scmp.eq.s32.totalorder %s26, 0
    %p362 = por %p360, %p361
    %p363 = scmp.le.s32.totalorder 1, %s20
    %p364 = scmp.lt.s32.totalorder %s20, 3
    %p365 = pnand %p363, %p364
    %p366 = pneg %p365
    // Predicated region
    $region9: #{resnet_block_forward.1} parent=5 // pred_check
      _
    $region10: #{resnet_block_forward.1} parent=5 // pred_check_branch
      %368 = sbr.rel (%p365) target = $region12
    $region11: #{resnet_block_forward.1} parent=5 // pred_region
      %s369 = ssub.s32 %s20, 1
      // Predicated region
      $region13: #{resnet_block_forward.1} parent=11 // pred_check
        %p370 = pneg %p119
      $region14: #{resnet_block_forward.1} parent=11 // pred_check_branch
        %372 = sbr.rel (%p370) target = $region16
      $region15: #{resnet_block_forward.1} parent=11 // pred_region
        _
      $region16: #{resnet_block_forward.1} parent=11 // pred_fallthru
        _
      // Predicated region
      $region17: #{resnet_block_forward.1} parent=11 // pred_check
        %p373 = pneg %p140
      $region18: #{resnet_block_forward.1} parent=11 // pred_check_branch
        %375 = sbr.rel (%p373) target = $region20
      $region19: #{resnet_block_forward.1} parent=11 // pred_region
        _
      $region20: #{resnet_block_forward.1} parent=11 // pred_fallthru
        _
      // Predicated region
      $region21: #{resnet_block_forward.1} parent=11 // pred_check
        %p376 = pneg %p161
      $region22: #{resnet_block_forward.1} parent=11 // pred_check_branch
        %378 = sbr.rel (%p376) target = $region24
      $region23: #{resnet_block_forward.1} parent=11 // pred_region
        _
      $region24: #{resnet_block_forward.1} parent=11 // pred_fallthru
        _
      // Predicated region
      $region25: #{resnet_block_forward.1} parent=11 // pred_check
        %p379 = pneg %p182
      $region26: #{resnet_block_forward.1} parent=11 // pred_check_branch
        %381 = sbr.rel (%p379) target = $region28
      $region27: #{resnet_block_forward.1} parent=11 // pred_region
        _
      $region28: #{resnet_block_forward.1} parent=11 // pred_fallthru
        _
      // Predicated region
      $region29: #{resnet_block_forward.1} parent=11 // pred_check
        %p382 = pneg %p203
      $region30: #{resnet_block_forward.1} parent=11 // pred_check_branch
        %384 = sbr.rel (%p382) target = $region32
      $region31: #{resnet_block_forward.1} parent=11 // pred_region
        _
      $region32: #{resnet_block_forward.1} parent=11 // pred_fallthru
        _
      // Predicated region
      $region33: #{resnet_block_forward.1} parent=11 // pred_check
        %p385 = pneg %p224
      $region34: #{resnet_block_forward.1} parent=11 // pred_check_branch
        %387 = sbr.rel (%p385) target = $region36
      $region35: #{resnet_block_forward.1} parent=11 // pred_region
        _
      $region36: #{resnet_block_forward.1} parent=11 // pred_fallthru
        _
      // Predicated region
      $region37: #{resnet_block_forward.1} parent=11 // pred_check
        %p388 = pneg %p245
      $region38: #{resnet_block_forward.1} parent=11 // pred_check_branch
        %390 = sbr.rel (%p388) target = $region40
      $region39: #{resnet_block_forward.1} parent=11 // pred_region
        _
      $region40: #{resnet_block_forward.1} parent=11 // pred_fallthru
        _
      // Predicated region
      $region41: #{resnet_block_forward.1} parent=11 // pred_check
        %p391 = pneg %p266
      $region42: #{resnet_block_forward.1} parent=11 // pred_check_branch
        %393 = sbr.rel (%p391) target = $region44
      $region43: #{resnet_block_forward.1} parent=11 // pred_region
        _
      $region44: #{resnet_block_forward.1} parent=11 // pred_fallthru
        _
      // Predicated region
      $region45: #{resnet_block_forward.1} parent=11 // pred_check
        %p394 = pneg %p287
      $region46: #{resnet_block_forward.1} parent=11 // pred_check_branch
        %396 = sbr.rel (%p394) target = $region48
      $region47: #{resnet_block_forward.1} parent=11 // pred_region
        _
      $region48: #{resnet_block_forward.1} parent=11 // pred_fallthru
        _
      // Predicated region
      $region49: #{resnet_block_forward.1} parent=11 // pred_check
        %p397 = pneg %p308
      $region50: #{resnet_block_forward.1} parent=11 // pred_check_branch
        %399 = sbr.rel (%p397) target = $region52
      $region51: #{resnet_block_forward.1} parent=11 // pred_region
        _
      $region52: #{resnet_block_forward.1} parent=11 // pred_fallthru
        _
      // Predicated region
      $region53: #{resnet_block_forward.1} parent=11 // pred_check
        %p400 = pneg %p329
      $region54: #{resnet_block_forward.1} parent=11 // pred_check_branch
        %402 = sbr.rel (%p400) target = $region56
      $region55: #{resnet_block_forward.1} parent=11 // pred_region
        _
      $region56: #{resnet_block_forward.1} parent=11 // pred_fallthru
        _
    $region12: #{resnet_block_forward.1} parent=5 // pred_fallthru
      _
    %p403 = scmp.lt.s32.totalorder %s20, 2
    // Predicated region
    $region57: #{resnet_block_forward.1} parent=5 // pred_check
      %p404 = pneg %p403
    $region58: #{resnet_block_forward.1} parent=5 // pred_check_branch
      %406 = sbr.rel (%p404) target = $region60
    $region59: #{resnet_block_forward.1} parent=5 // pred_region
      // Predicated region
      $region61: #{resnet_block_forward.1} parent=59 // pred_check
        %p407 = pneg %p40
      $region62: #{resnet_block_forward.1} parent=59 // pred_check_branch
        %409 = sbr.rel (%p407) target = $region64
      $region63: #{resnet_block_forward.1} parent=59 // pred_region
        %p410 = scmp.lt.s32.totalorder %s20, 1
        %s411 = scalar_select %p410, %s20, 1
        %s412 = smul.addr %s411, 32
        %s413 = smul.addr %s412, 8
        %s414 = scalar_lea.vmem %s0, %s413
      $region64: #{resnet_block_forward.1} parent=59 // pred_fallthru
        _
      // Predicated region
      $region65: #{resnet_block_forward.1} parent=59 // pred_check
        %p415 = pneg %p66
      $region66: #{resnet_block_forward.1} parent=59 // pred_check_branch
        %417 = sbr.rel (%p415) target = $region68
      $region67: #{resnet_block_forward.1} parent=59 // pred_region
        %p418 = scmp.lt.s32.totalorder %s20, 1
        %s419 = scalar_select %p418, %s20, 1
        %s420 = scalar_lea.vmem %s1, %s419
      $region68: #{resnet_block_forward.1} parent=59 // pred_fallthru
        _
      // Predicated region
      $region69: #{resnet_block_forward.1} parent=59 // pred_check
        %p421 = pneg %p92
      $region70: #{resnet_block_forward.1} parent=59 // pred_check_branch
        %423 = sbr.rel (%p421) target = $region72
      $region71: #{resnet_block_forward.1} parent=59 // pred_region
        %p424 = scmp.lt.s32.totalorder %s20, 1
        %s425 = scalar_select %p424, %s20, 1
        %s426 = scalar_lea.vmem %s2, %s425
      $region72: #{resnet_block_forward.1} parent=59 // pred_fallthru
        _
    $region60: #{resnet_block_forward.1} parent=5 // pred_fallthru
      _
    %p427 = scmp.le.s32.totalorder 1, %s20
    %p428 = scmp.lt.s32.totalorder %s20, 3
    %p429 = pnand %p427, %p428
    %p430 = pneg %p429
    // Predicated region
    $region73: #{resnet_block_forward.1} parent=5 // pred_check
      _
    $region74: #{resnet_block_forward.1} parent=5 // pred_check_branch
      %432 = sbr.rel (%p429) target = $region76
    $region75: #{resnet_block_forward.1} parent=5 // pred_region
      %s433 = ssub.s32 %s20, 1
      %p434 = scmp.lt.s32.totalorder %s25, 1
      %s435 = scalar_select %p434, %s25, 1
      %s436 = smul.addr %s435, 32
      %s437 = smul.addr %s436, 8
      %s438 = scalar_lea.vmem %s0, %s437
      %p439 = pneg %p46
      %p440 = pneg %p43
      %p441 = scmp.lt.s32.totalorder %s25, 1
      %s442 = scalar_select %p441, %s25, 1
      %s443 = scalar_lea.vmem %s1, %s442
      %p444 = pneg %p72
      %p445 = pneg %p69
      %p446 = scmp.lt.s32.totalorder %s25, 1
      %s447 = scalar_select %p446, %s25, 1
      %s448 = scalar_lea.vmem %s2, %s447
      %p449 = pneg %p98
      %p450 = pneg %p95
      %p451 = pneg %p119
      %p452 = pneg %p116
      %p453 = pneg %p140
      %p454 = pneg %p137
      %p455 = pneg %p161
      %p456 = pneg %p158
      %p457 = pneg %p182
      %p458 = pneg %p179
      %p459 = pneg %p203
      %p460 = pneg %p200
      %p461 = pneg %p224
      %p462 = pneg %p221
      %p463 = pneg %p245
      %p464 = pneg %p242
      %p465 = pneg %p266
      %p466 = pneg %p263
      %p467 = pneg %p287
      %p468 = pneg %p284
      %p469 = pneg %p308
      %p470 = pneg %p305
      %p471 = pneg %p329
      %p472 = pneg %p326
      %p473 = pneg %p355
      %p474 = pneg %p352
      %p475 = scmp.lt.s32.totalorder %s25, 1
      %s476 = scalar_select %p475, %s25, 1
      %s477 = smul.addr %s476, 32
      %s478 = smul.addr %s477, 8
      %s479 = scalar_lea.vmem %s14, %s478
      %p480 = scmp.lt.s32.totalorder %s25, 1
      %s481 = scalar_select %p480, %s25, 1
      %s482 = smul.addr %s481, 32
      %s483 = smul.addr %s482, 8
      %s484 = scalar_lea.vmem %s0, %s483
      %p485 = scmp.lt.s32.totalorder %s25, 1
      %s486 = scalar_select %p485, %s25, 1
      %s487 = scalar_lea.vmem %s1, %s486
      %p488 = scmp.lt.s32.totalorder %s25, 1
      %s489 = scalar_select %p488, %s25, 1
      %s490 = scalar_lea.vmem %s2, %s489
      %p491 = scmp.lt.s32.totalorder %s25, 1
      %s492 = scalar_select %p491, %s25, 1
      %s493 = smul.addr %s492, 32
      %s494 = smul.addr %s493, 8
      %s495 = scalar_lea.vmem %s14, %s494
      %v496 = vlaneseq
      %v497 = vshrl.u32 %v496, 7
      %v498 = vadd.s32 %v497, 8
      %v499 = vadd.s32 %v497, 16
      %v500 = vadd.s32 %v497, 24
      %v501 = vadd.s32 %v497, 32
      %v502 = vadd.s32 %v497, 40
      %v503 = vadd.s32 %v497, 48
      %v504 = vadd.s32 %v497, 56
      %v505 = vadd.s32 %v497, 64
      %v506 = vadd.s32 %v497, 72
      %v507 = vadd.s32 %v497, 80
      %v508 = vadd.s32 %v497, 88
      %v509 = vadd.s32 %v497, 96
      %v510 = vadd.s32 %v497, 104
      %v511 = vadd.s32 %v497, 112
      %v512 = vadd.s32 %v497, 120
      %v513 = vadd.s32 %v497, 128
      %v514 = vadd.s32 %v497, 136
      %v515 = vadd.s32 %v497, 144
      %v516 = vadd.s32 %v497, 152
      %v517 = vadd.s32 %v497, 160
      %v518 = vadd.s32 %v497, 168
      %v519 = vadd.s32 %v497, 176
      %v520 = vadd.s32 %v497, 184
      %v521 = vadd.s32 %v497, 192
      %v522 = vadd.s32 %v497, 200
      %v523 = vadd.s32 %v497, 208
      %v524 = vadd.s32 %v497, 216
      %v525 = vadd.s32 %v497, 224
      %v526 = vadd.s32 %v497, 232
      %v527 = vadd.s32 %v497, 240
      %v528 = vadd.s32 %v497, 248
      %vm529 = vcmp.lt.s32.totalorder %v497, 0
      %v530 = vsub.s32 0, %v497
      %v531 = vsel %vm529, %v530, %v497
      %v532 = vshrl.u32 %v531, 4
      %v533 = vand.u32 %v531, 15
      %v534 = vsub.s32 0, %v533
      %v535 = vsel %vm529, %v534, %v533
      %vm536 = vcmp.lt.s32.totalorder %v498, 0
      %v537 = vsub.s32 0, %v498
      %v538 = vsel %vm536, %v537, %v498
      %v539 = vshrl.u32 %v538, 4
      %v540 = vand.u32 %v538, 15
      %v541 = vsub.s32 0, %v540
      %v542 = vsel %vm536, %v541, %v540
      %vm543 = vcmp.lt.s32.totalorder %v499, 0
      %v544 = vsub.s32 0, %v499
      %v545 = vsel %vm543, %v544, %v499
      %v546 = vshrl.u32 %v545, 4
      %v547 = vand.u32 %v545, 15
      %v548 = vsub.s32 0, %v547
      %v549 = vsel %vm543, %v548, %v547
      %vm550 = vcmp.lt.s32.totalorder %v500, 0
      %v551 = vsub.s32 0, %v500
      %v552 = vsel %vm550, %v551, %v500
      %v553 = vshrl.u32 %v552, 4
      %v554 = vand.u32 %v552, 15
      %v555 = vsub.s32 0, %v554
      %v556 = vsel %vm550, %v555, %v554
      %vm557 = vcmp.lt.s32.totalorder %v501, 0
      %v558 = vsub.s32 0, %v501
      %v559 = vsel %vm557, %v558, %v501
      %v560 = vshrl.u32 %v559, 4
      %v561 = vand.u32 %v559, 15
      %v562 = vsub.s32 0, %v561
      %v563 = vsel %vm557, %v562, %v561
      %vm564 = vcmp.lt.s32.totalorder %v502, 0
      %v565 = vsub.s32 0, %v502
      %v566 = vsel %vm564, %v565, %v502
      %v567 = vshrl.u32 %v566, 4
      %v568 = vand.u32 %v566, 15
      %v569 = vsub.s32 0, %v568
      %v570 = vsel %vm564, %v569, %v568
      %vm571 = vcmp.lt.s32.totalorder %v503, 0
      %v572 = vsub.s32 0, %v503
      %v573 = vsel %vm571, %v572, %v503
      %v574 = vshrl.u32 %v573, 4
      %v575 = vand.u32 %v573, 15
      %v576 = vsub.s32 0, %v575
      %v577 = vsel %vm571, %v576, %v575
      %vm578 = vcmp.lt.s32.totalorder %v504, 0
      %v579 = vsub.s32 0, %v504
      %v580 = vsel %vm578, %v579, %v504
      %v581 = vshrl.u32 %v580, 4
      %v582 = vand.u32 %v580, 15
      %v583 = vsub.s32 0, %v582
      %v584 = vsel %vm578, %v583, %v582
      %vm585 = vcmp.lt.s32.totalorder %v505, 0
      %v586 = vsub.s32 0, %v505
      %v587 = vsel %vm585, %v586, %v505
      %v588 = vshrl.u32 %v587, 4
      %v589 = vand.u32 %v587, 15
      %v590 = vsub.s32 0, %v589
      %v591 = vsel %vm585, %v590, %v589
      %vm592 = vcmp.lt.s32.totalorder %v506, 0
      %v593 = vsub.s32 0, %v506
      %v594 = vsel %vm592, %v593, %v506
      %v595 = vshrl.u32 %v594, 4
      %v596 = vand.u32 %v594, 15
      %v597 = vsub.s32 0, %v596
      %v598 = vsel %vm592, %v597, %v596
      %vm599 = vcmp.lt.s32.totalorder %v507, 0
      %v600 = vsub.s32 0, %v507
      %v601 = vsel %vm599, %v600, %v507
      %v602 = vshrl.u32 %v601, 4
      %v603 = vand.u32 %v601, 15
      %v604 = vsub.s32 0, %v603
      %v605 = vsel %vm599, %v604, %v603
      %vm606 = vcmp.lt.s32.totalorder %v508, 0
      %v607 = vsub.s32 0, %v508
      %v608 = vsel %vm606, %v607, %v508
      %v609 = vshrl.u32 %v608, 4
      %v610 = vand.u32 %v608, 15
      %v611 = vsub.s32 0, %v610
      %v612 = vsel %vm606, %v611, %v610
      %vm613 = vcmp.lt.s32.totalorder %v509, 0
      %v614 = vsub.s32 0, %v509
      %v615 = vsel %vm613, %v614, %v509
      %v616 = vshrl.u32 %v615, 4
      %v617 = vand.u32 %v615, 15
      %v618 = vsub.s32 0, %v617
      %v619 = vsel %vm613, %v618, %v617
      %vm620 = vcmp.lt.s32.totalorder %v510, 0
      %v621 = vsub.s32 0, %v510
      %v622 = vsel %vm620, %v621, %v510
      %v623 = vshrl.u32 %v622, 4
      %v624 = vand.u32 %v622, 15
      %v625 = vsub.s32 0, %v624
      %v626 = vsel %vm620, %v625, %v624
      %vm627 = vcmp.lt.s32.totalorder %v511, 0
      %v628 = vsub.s32 0, %v511
      %v629 = vsel %vm627, %v628, %v511
      %v630 = vshrl.u32 %v629, 4
      %v631 = vand.u32 %v629, 15
      %v632 = vsub.s32 0, %v631
      %v633 = vsel %vm627, %v632, %v631
      %vm634 = vcmp.lt.s32.totalorder %v512, 0
      %v635 = vsub.s32 0, %v512
      %v636 = vsel %vm634, %v635, %v512
      %v637 = vshrl.u32 %v636, 4
      %v638 = vand.u32 %v636, 15
      %v639 = vsub.s32 0, %v638
      %v640 = vsel %vm634, %v639, %v638
      %vm641 = vcmp.lt.s32.totalorder %v513, 0
      %v642 = vsub.s32 0, %v513
      %v643 = vsel %vm641, %v642, %v513
      %v644 = vshrl.u32 %v643, 4
      %v645 = vand.u32 %v643, 15
      %v646 = vsub.s32 0, %v645
      %v647 = vsel %vm641, %v646, %v645
      %vm648 = vcmp.lt.s32.totalorder %v514, 0
      %v649 = vsub.s32 0, %v514
      %v650 = vsel %vm648, %v649, %v514
      %v651 = vshrl.u32 %v650, 4
      %v652 = vand.u32 %v650, 15
      %v653 = vsub.s32 0, %v652
      %v654 = vsel %vm648, %v653, %v652
      %vm655 = vcmp.lt.s32.totalorder %v515, 0
      %v656 = vsub.s32 0, %v515
      %v657 = vsel %vm655, %v656, %v515
      %v658 = vshrl.u32 %v657, 4
      %v659 = vand.u32 %v657, 15
      %v660 = vsub.s32 0, %v659
      %v661 = vsel %vm655, %v660, %v659
      %vm662 = vcmp.lt.s32.totalorder %v516, 0
      %v663 = vsub.s32 0, %v516
      %v664 = vsel %vm662, %v663, %v516
      %v665 = vshrl.u32 %v664, 4
      %v666 = vand.u32 %v664, 15
      %v667 = vsub.s32 0, %v666
      %v668 = vsel %vm662, %v667, %v666
      %vm669 = vcmp.lt.s32.totalorder %v517, 0
      %v670 = vsub.s32 0, %v517
      %v671 = vsel %vm669, %v670, %v517
      %v672 = vshrl.u32 %v671, 4
      %v673 = vand.u32 %v671, 15
      %v674 = vsub.s32 0, %v673
      %v675 = vsel %vm669, %v674, %v673
      %vm676 = vcmp.lt.s32.totalorder %v518, 0
      %v677 = vsub.s32 0, %v518
      %v678 = vsel %vm676, %v677, %v518
      %v679 = vshrl.u32 %v678, 4
      %v680 = vand.u32 %v678, 15
      %v681 = vsub.s32 0, %v680
      %v682 = vsel %vm676, %v681, %v680
      %vm683 = vcmp.lt.s32.totalorder %v519, 0
      %v684 = vsub.s32 0, %v519
      %v685 = vsel %vm683, %v684, %v519
      %v686 = vshrl.u32 %v685, 4
      %v687 = vand.u32 %v685, 15
      %v688 = vsub.s32 0, %v687
      %v689 = vsel %vm683, %v688, %v687
      %vm690 = vcmp.lt.s32.totalorder %v520, 0
      %v691 = vsub.s32 0, %v520
      %v692 = vsel %vm690, %v691, %v520
      %v693 = vshrl.u32 %v692, 4
      %v694 = vand.u32 %v692, 15
      %v695 = vsub.s32 0, %v694
      %v696 = vsel %vm690, %v695, %v694
      %vm697 = vcmp.lt.s32.totalorder %v521, 0
      %v698 = vsub.s32 0, %v521
      %v699 = vsel %vm697, %v698, %v521
      %v700 = vshrl.u32 %v699, 4
      %v701 = vand.u32 %v699, 15
      %v702 = vsub.s32 0, %v701
      %v703 = vsel %vm697, %v702, %v701
      %vm704 = vcmp.lt.s32.totalorder %v522, 0
      %v705 = vsub.s32 0, %v522
      %v706 = vsel %vm704, %v705, %v522
      %v707 = vshrl.u32 %v706, 4
      %v708 = vand.u32 %v706, 15
      %v709 = vsub.s32 0, %v708
      %v710 = vsel %vm704, %v709, %v708
      %vm711 = vcmp.lt.s32.totalorder %v523, 0
      %v712 = vsub.s32 0, %v523
      %v713 = vsel %vm711, %v712, %v523
      %v714 = vshrl.u32 %v713, 4
      %v715 = vand.u32 %v713, 15
      %v716 = vsub.s32 0, %v715
      %v717 = vsel %vm711, %v716, %v715
      %vm718 = vcmp.lt.s32.totalorder %v524, 0
      %v719 = vsub.s32 0, %v524
      %v720 = vsel %vm718, %v719, %v524
      %v721 = vshrl.u32 %v720, 4
      %v722 = vand.u32 %v720, 15
      %v723 = vsub.s32 0, %v722
      %v724 = vsel %vm718, %v723, %v722
      %vm725 = vcmp.lt.s32.totalorder %v525, 0
      %v726 = vsub.s32 0, %v525
      %v727 = vsel %vm725, %v726, %v525
      %v728 = vshrl.u32 %v727, 4
      %v729 = vand.u32 %v727, 15
      %v730 = vsub.s32 0, %v729
      %v731 = vsel %vm725, %v730, %v729
      %vm732 = vcmp.lt.s32.totalorder %v526, 0
      %v733 = vsub.s32 0, %v526
      %v734 = vsel %vm732, %v733, %v526
      %v735 = vshrl.u32 %v734, 4
      %v736 = vand.u32 %v734, 15
      %v737 = vsub.s32 0, %v736
      %v738 = vsel %vm732, %v737, %v736
      %vm739 = vcmp.lt.s32.totalorder %v527, 0
      %v740 = vsub.s32 0, %v527
      %v741 = vsel %vm739, %v740, %v527
      %v742 = vshrl.u32 %v741, 4
      %v743 = vand.u32 %v741, 15
      %v744 = vsub.s32 0, %v743
      %v745 = vsel %vm739, %v744, %v743
      %vm746 = vcmp.lt.s32.totalorder %v528, 0
      %v747 = vsub.s32 0, %v528
      %v748 = vsel %vm746, %v747, %v528
      %v749 = vshrl.u32 %v748, 4
      %v750 = vand.u32 %v748, 15
      %v751 = vsub.s32 0, %v750
      %v752 = vsel %vm746, %v751, %v750
      %vm753 = vcmp.ne.s32.totalorder %v535, 0
      %vm754 = vcmp.ne.s32.totalorder %v542, 0
      %vm755 = vcmp.ne.s32.totalorder %v549, 0
      %vm756 = vcmp.ne.s32.totalorder %v556, 0
      %vm757 = vcmp.ne.s32.totalorder %v563, 0
      %vm758 = vcmp.ne.s32.totalorder %v570, 0
      %vm759 = vcmp.ne.s32.totalorder %v577, 0
      %vm760 = vcmp.ne.s32.totalorder %v584, 0
      %vm761 = vcmp.ne.s32.totalorder %v591, 0
      %vm762 = vcmp.ne.s32.totalorder %v598, 0
      %vm763 = vcmp.ne.s32.totalorder %v605, 0
      %vm764 = vcmp.ne.s32.totalorder %v612, 0
      %vm765 = vcmp.ne.s32.totalorder %v619, 0
      %vm766 = vcmp.ne.s32.totalorder %v626, 0
      %vm767 = vcmp.ne.s32.totalorder %v633, 0
      %vm768 = vcmp.ne.s32.totalorder %v640, 0
      %vm769 = vcmp.ne.s32.totalorder %v647, 0
      %vm770 = vcmp.ne.s32.totalorder %v654, 0
      %vm771 = vcmp.ne.s32.totalorder %v661, 0
      %vm772 = vcmp.ne.s32.totalorder %v668, 0
      %vm773 = vcmp.ne.s32.totalorder %v675, 0
      %vm774 = vcmp.ne.s32.totalorder %v682, 0
      %vm775 = vcmp.ne.s32.totalorder %v689, 0
      %vm776 = vcmp.ne.s32.totalorder %v696, 0
      %vm777 = vcmp.ne.s32.totalorder %v703, 0
      %vm778 = vcmp.ne.s32.totalorder %v710, 0
      %vm779 = vcmp.ne.s32.totalorder %v717, 0
      %vm780 = vcmp.ne.s32.totalorder %v724, 0
      %vm781 = vcmp.ne.s32.totalorder %v731, 0
      %vm782 = vcmp.ne.s32.totalorder %v738, 0
      %vm783 = vcmp.ne.s32.totalorder %v745, 0
      %vm784 = vcmp.ne.s32.totalorder %v752, 0
      %vm785 = vcmp.lt.s32.totalorder %v535, 0
      %vm786 = vcmp.lt.s32.totalorder %v542, 0
      %vm787 = vcmp.lt.s32.totalorder %v549, 0
      %vm788 = vcmp.lt.s32.totalorder %v556, 0
      %vm789 = vcmp.lt.s32.totalorder %v563, 0
      %vm790 = vcmp.lt.s32.totalorder %v570, 0
      %vm791 = vcmp.lt.s32.totalorder %v577, 0
      %vm792 = vcmp.lt.s32.totalorder %v584, 0
      %vm793 = vcmp.lt.s32.totalorder %v591, 0
      %vm794 = vcmp.lt.s32.totalorder %v598, 0
      %vm795 = vcmp.lt.s32.totalorder %v605, 0
      %vm796 = vcmp.lt.s32.totalorder %v612, 0
      %vm797 = vcmp.lt.s32.totalorder %v619, 0
      %vm798 = vcmp.lt.s32.totalorder %v626, 0
      %vm799 = vcmp.lt.s32.totalorder %v633, 0
      %vm800 = vcmp.lt.s32.totalorder %v640, 0
      %vm801 = vcmp.lt.s32.totalorder %v647, 0
      %vm802 = vcmp.lt.s32.totalorder %v654, 0
      %vm803 = vcmp.lt.s32.totalorder %v661, 0
      %vm804 = vcmp.lt.s32.totalorder %v668, 0
      %vm805 = vcmp.lt.s32.totalorder %v675, 0
      %vm806 = vcmp.lt.s32.totalorder %v682, 0
      %vm807 = vcmp.lt.s32.totalorder %v689, 0
      %vm808 = vcmp.lt.s32.totalorder %v696, 0
      %vm809 = vcmp.lt.s32.totalorder %v703, 0
      %vm810 = vcmp.lt.s32.totalorder %v710, 0
      %vm811 = vcmp.lt.s32.totalorder %v717, 0
      %vm812 = vcmp.lt.s32.totalorder %v724, 0
      %vm813 = vcmp.lt.s32.totalorder %v731, 0
      %vm814 = vcmp.lt.s32.totalorder %v738, 0
      %vm815 = vcmp.lt.s32.totalorder %v745, 0
      %vm816 = vcmp.lt.s32.totalorder %v752, 0
      %vm817 = vmand %vm785, %vm753
      %vm818 = vmand %vm786, %vm754
      %vm819 = vmand %vm787, %vm755
      %vm820 = vmand %vm788, %vm756
      %vm821 = vmand %vm789, %vm757
      %vm822 = vmand %vm790, %vm758
      %vm823 = vmand %vm791, %vm759
      %vm824 = vmand %vm792, %vm760
      %vm825 = vmand %vm793, %vm761
      %vm826 = vmand %vm794, %vm762
      %vm827 = vmand %vm795, %vm763
      %vm828 = vmand %vm796, %vm764
      %vm829 = vmand %vm797, %vm765
      %vm830 = vmand %vm798, %vm766
      %vm831 = vmand %vm799, %vm767
      %vm832 = vmand %vm800, %vm768
      %vm833 = vmand %vm801, %vm769
      %vm834 = vmand %vm802, %vm770
      %vm835 = vmand %vm803, %vm771
      %vm836 = vmand %vm804, %vm772
      %vm837 = vmand %vm805, %vm773
      %vm838 = vmand %vm806, %vm774
      %vm839 = vmand %vm807, %vm775
      %vm840 = vmand %vm808, %vm776
      %vm841 = vmand %vm809, %vm777
      %vm842 = vmand %vm810, %vm778
      %vm843 = vmand %vm811, %vm779
      %vm844 = vmand %vm812, %vm780
      %vm845 = vmand %vm813, %vm781
      %vm846 = vmand %vm814, %vm782
      %vm847 = vmand %vm815, %vm783
      %vm848 = vmand %vm816, %vm784
      %v849 = vadd.s32 %v535, 16
      %v850 = vadd.s32 %v542, 16
      %v851 = vadd.s32 %v549, 16
      %v852 = vadd.s32 %v556, 16
      %v853 = vadd.s32 %v563, 16
      %v854 = vadd.s32 %v570, 16
      %v855 = vadd.s32 %v577, 16
      %v856 = vadd.s32 %v584, 16
      %v857 = vadd.s32 %v591, 16
      %v858 = vadd.s32 %v598, 16
      %v859 = vadd.s32 %v605, 16
      %v860 = vadd.s32 %v612, 16
      %v861 = vadd.s32 %v619, 16
      %v862 = vadd.s32 %v626, 16
      %v863 = vadd.s32 %v633, 16
      %v864 = vadd.s32 %v640, 16
      %v865 = vadd.s32 %v647, 16
      %v866 = vadd.s32 %v654, 16
      %v867 = vadd.s32 %v661, 16
      %v868 = vadd.s32 %v668, 16
      %v869 = vadd.s32 %v675, 16
      %v870 = vadd.s32 %v682, 16
      %v871 = vadd.s32 %v689, 16
      %v872 = vadd.s32 %v696, 16
      %v873 = vadd.s32 %v703, 16
      %v874 = vadd.s32 %v710, 16
      %v875 = vadd.s32 %v717, 16
      %v876 = vadd.s32 %v724, 16
      %v877 = vadd.s32 %v731, 16
      %v878 = vadd.s32 %v738, 16
      %v879 = vadd.s32 %v745, 16
      %v880 = vadd.s32 %v752, 16
      %v881 = vsel %vm817, %v849, %v535
      %v882 = vsel %vm818, %v850, %v542
      %v883 = vsel %vm819, %v851, %v549
      %v884 = vsel %vm820, %v852, %v556
      %v885 = vsel %vm821, %v853, %v563
      %v886 = vsel %vm822, %v854, %v570
      %v887 = vsel %vm823, %v855, %v577
      %v888 = vsel %vm824, %v856, %v584
      %v889 = vsel %vm825, %v857, %v591
      %v890 = vsel %vm826, %v858, %v598
      %v891 = vsel %vm827, %v859, %v605
      %v892 = vsel %vm828, %v860, %v612
      %v893 = vsel %vm829, %v861, %v619
      %v894 = vsel %vm830, %v862, %v626
      %v895 = vsel %vm831, %v863, %v633
      %v896 = vsel %vm832, %v864, %v640
      %v897 = vsel %vm833, %v865, %v647
      %v898 = vsel %vm834, %v866, %v654
      %v899 = vsel %vm835, %v867, %v661
      %v900 = vsel %vm836, %v868, %v668
      %v901 = vsel %vm837, %v869, %v675
      %v902 = vsel %vm838, %v870, %v682
      %v903 = vsel %vm839, %v871, %v689
      %v904 = vsel %vm840, %v872, %v696
      %v905 = vsel %vm841, %v873, %v703
      %v906 = vsel %vm842, %v874, %v710
      %v907 = vsel %vm843, %v875, %v717
      %v908 = vsel %vm844, %v876, %v724
      %v909 = vsel %vm845, %v877, %v731
      %v910 = vsel %vm846, %v878, %v738
      %v911 = vsel %vm847, %v879, %v745
      %v912 = vsel %vm848, %v880, %v752
      %vm913 = vcmp.ne.s32.totalorder %v881, 15
      %vm914 = vcmp.ne.s32.totalorder %v882, 15
      %vm915 = vcmp.ne.s32.totalorder %v883, 15
      %vm916 = vcmp.ne.s32.totalorder %v884, 15
      %vm917 = vcmp.ne.s32.totalorder %v885, 15
      %vm918 = vcmp.ne.s32.totalorder %v886, 15
      %vm919 = vcmp.ne.s32.totalorder %v887, 15
      %vm920 = vcmp.ne.s32.totalorder %v888, 15
      %vm921 = vcmp.ne.s32.totalorder %v889, 15
      %vm922 = vcmp.ne.s32.totalorder %v890, 15
      %vm923 = vcmp.ne.s32.totalorder %v891, 15
      %vm924 = vcmp.ne.s32.totalorder %v892, 15
      %vm925 = vcmp.ne.s32.totalorder %v893, 15
      %vm926 = vcmp.ne.s32.totalorder %v894, 15
      %vm927 = vcmp.ne.s32.totalorder %v895, 15
      %vm928 = vcmp.ne.s32.totalorder %v896, 15
      %vm929 = vcmp.ne.s32.totalorder %v897, 15
      %vm930 = vcmp.ne.s32.totalorder %v898, 15
      %vm931 = vcmp.ne.s32.totalorder %v899, 15
      %vm932 = vcmp.ne.s32.totalorder %v900, 15
      %vm933 = vcmp.ne.s32.totalorder %v901, 15
      %vm934 = vcmp.ne.s32.totalorder %v902, 15
      %vm935 = vcmp.ne.s32.totalorder %v903, 15
      %vm936 = vcmp.ne.s32.totalorder %v904, 15
      %vm937 = vcmp.ne.s32.totalorder %v905, 15
      %vm938 = vcmp.ne.s32.totalorder %v906, 15
      %vm939 = vcmp.ne.s32.totalorder %v907, 15
      %vm940 = vcmp.ne.s32.totalorder %v908, 15
      %vm941 = vcmp.ne.s32.totalorder %v909, 15
      %vm942 = vcmp.ne.s32.totalorder %v910, 15
      %vm943 = vcmp.ne.s32.totalorder %v911, 15
      %vm944 = vcmp.ne.s32.totalorder %v912, 15
      %v945 = vsel %vm913, 1, 0
      %v946 = vsel %vm914, 1, 0
      %v947 = vsel %vm915, 1, 0
      %v948 = vsel %vm916, 1, 0
      %v949 = vsel %vm917, 1, 0
      %v950 = vsel %vm918, 1, 0
      %v951 = vsel %vm919, 1, 0
      %v952 = vsel %vm920, 1, 0
      %v953 = vsel %vm921, 1, 0
      %v954 = vsel %vm922, 1, 0
      %v955 = vsel %vm923, 1, 0
      %v956 = vsel %vm924, 1, 0
      %v957 = vsel %vm925, 1, 0
      %v958 = vsel %vm926, 1, 0
      %v959 = vsel %vm927, 1, 0
      %v960 = vsel %vm928, 1, 0
      %v961 = vsel %vm929, 1, 0
      %v962 = vsel %vm930, 1, 0
      %v963 = vsel %vm931, 1, 0
      %v964 = vsel %vm932, 1, 0
      %v965 = vsel %vm933, 1, 0
      %v966 = vsel %vm934, 1, 0
      %v967 = vsel %vm935, 1, 0
      %v968 = vsel %vm936, 1, 0
      %v969 = vsel %vm937, 1, 0
      %v970 = vsel %vm938, 1, 0
      %v971 = vsel %vm939, 1, 0
      %v972 = vsel %vm940, 1, 0
      %v973 = vsel %vm941, 1, 0
      %v974 = vsel %vm942, 1, 0
      %v975 = vsel %vm943, 1, 0
      %v976 = vsel %vm944, 1, 0
      %v977 = vcvt.s32.f32 %v945
      %v978 = vcvt.s32.f32 %v946
      %v979 = vcvt.s32.f32 %v947
      %v980 = vcvt.s32.f32 %v948
      %v981 = vcvt.s32.f32 %v949
      %v982 = vcvt.s32.f32 %v950
      %v983 = vcvt.s32.f32 %v951
      %v984 = vcvt.s32.f32 %v952
      %v985 = vcvt.s32.f32 %v953
      %v986 = vcvt.s32.f32 %v954
      %v987 = vcvt.s32.f32 %v955
      %v988 = vcvt.s32.f32 %v956
      %v989 = vcvt.s32.f32 %v957
      %v990 = vcvt.s32.f32 %v958
      %v991 = vcvt.s32.f32 %v959
      %v992 = vcvt.s32.f32 %v960
      %v993 = vcvt.s32.f32 %v961
      %v994 = vcvt.s32.f32 %v962
      %v995 = vcvt.s32.f32 %v963
      %v996 = vcvt.s32.f32 %v964
      %v997 = vcvt.s32.f32 %v965
      %v998 = vcvt.s32.f32 %v966
      %v999 = vcvt.s32.f32 %v967
      %v1000 = vcvt.s32.f32 %v968
      %v1001 = vcvt.s32.f32 %v969
      %v1002 = vcvt.s32.f32 %v970
      %v1003 = vcvt.s32.f32 %v971
      %v1004 = vcvt.s32.f32 %v972
      %v1005 = vcvt.s32.f32 %v973
      %v1006 = vcvt.s32.f32 %v974
      %v1007 = vcvt.s32.f32 %v975
      %v1008 = vcvt.s32.f32 %v976
      %vm1009 = vcmp.ne.s32.totalorder %v881, 0
      %vm1010 = vcmp.ne.s32.totalorder %v882, 0
      %vm1011 = vcmp.ne.s32.totalorder %v883, 0
      %vm1012 = vcmp.ne.s32.totalorder %v884, 0
      %vm1013 = vcmp.ne.s32.totalorder %v885, 0
      %vm1014 = vcmp.ne.s32.totalorder %v886, 0
      %vm1015 = vcmp.ne.s32.totalorder %v887, 0
      %vm1016 = vcmp.ne.s32.totalorder %v888, 0
      %vm1017 = vcmp.ne.s32.totalorder %v889, 0
      %vm1018 = vcmp.ne.s32.totalorder %v890, 0
      %vm1019 = vcmp.ne.s32.totalorder %v891, 0
      %vm1020 = vcmp.ne.s32.totalorder %v892, 0
      %vm1021 = vcmp.ne.s32.totalorder %v893, 0
      %vm1022 = vcmp.ne.s32.totalorder %v894, 0
      %vm1023 = vcmp.ne.s32.totalorder %v895, 0
      %vm1024 = vcmp.ne.s32.totalorder %v896, 0
      %vm1025 = vcmp.ne.s32.totalorder %v897, 0
      %vm1026 = vcmp.ne.s32.totalorder %v898, 0
      %vm1027 = vcmp.ne.s32.totalorder %v899, 0
      %vm1028 = vcmp.ne.s32.totalorder %v900, 0
      %vm1029 = vcmp.ne.s32.totalorder %v901, 0
      %vm1030 = vcmp.ne.s32.totalorder %v902, 0
      %vm1031 = vcmp.ne.s32.totalorder %v903, 0
      %vm1032 = vcmp.ne.s32.totalorder %v904, 0
      %vm1033 = vcmp.ne.s32.totalorder %v905, 0
      %vm1034 = vcmp.ne.s32.totalorder %v906, 0
      %vm1035 = vcmp.ne.s32.totalorder %v907, 0
      %vm1036 = vcmp.ne.s32.totalorder %v908, 0
      %vm1037 = vcmp.ne.s32.totalorder %v909, 0
      %vm1038 = vcmp.ne.s32.totalorder %v910, 0
      %vm1039 = vcmp.ne.s32.totalorder %v911, 0
      %vm1040 = vcmp.ne.s32.totalorder %v912, 0
      %v1041 = vsel %vm1009, 1, 0
      %v1042 = vsel %vm1010, 1, 0
      %v1043 = vsel %vm1011, 1, 0
      %v1044 = vsel %vm1012, 1, 0
      %v1045 = vsel %vm1013, 1, 0
      %v1046 = vsel %vm1014, 1, 0
      %v1047 = vsel %vm1015, 1, 0
      %v1048 = vsel %vm1016, 1, 0
      %v1049 = vsel %vm1017, 1, 0
      %v1050 = vsel %vm1018, 1, 0
      %v1051 = vsel %vm1019, 1, 0
      %v1052 = vsel %vm1020, 1, 0
      %v1053 = vsel %vm1021, 1, 0
      %v1054 = vsel %vm1022, 1, 0
      %v1055 = vsel %vm1023, 1, 0
      %v1056 = vsel %vm1024, 1, 0
      %v1057 = vsel %vm1025, 1, 0
      %v1058 = vsel %vm1026, 1, 0
      %v1059 = vsel %vm1027, 1, 0
      %v1060 = vsel %vm1028, 1, 0
      %v1061 = vsel %vm1029, 1, 0
      %v1062 = vsel %vm1030, 1, 0
      %v1063 = vsel %vm1031, 1, 0
      %v1064 = vsel %vm1032, 1, 0
      %v1065 = vsel %vm1033, 1, 0
      %v1066 = vsel %vm1034, 1, 0
      %v1067 = vsel %vm1035, 1, 0
      %v1068 = vsel %vm1036, 1, 0
      %v1069 = vsel %vm1037, 1, 0
      %v1070 = vsel %vm1038, 1, 0
      %v1071 = vsel %vm1039, 1, 0
      %v1072 = vsel %vm1040, 1, 0
      %v1073 = vcvt.s32.f32 %v1041
      %v1074 = vcvt.s32.f32 %v1042
      %v1075 = vcvt.s32.f32 %v1043
      %v1076 = vcvt.s32.f32 %v1044
      %v1077 = vcvt.s32.f32 %v1045
      %v1078 = vcvt.s32.f32 %v1046
      %v1079 = vcvt.s32.f32 %v1047
      %v1080 = vcvt.s32.f32 %v1048
      %v1081 = vcvt.s32.f32 %v1049
      %v1082 = vcvt.s32.f32 %v1050
      %v1083 = vcvt.s32.f32 %v1051
      %v1084 = vcvt.s32.f32 %v1052
      %v1085 = vcvt.s32.f32 %v1053
      %v1086 = vcvt.s32.f32 %v1054
      %v1087 = vcvt.s32.f32 %v1055
      %v1088 = vcvt.s32.f32 %v1056
      %v1089 = vcvt.s32.f32 %v1057
      %v1090 = vcvt.s32.f32 %v1058
      %v1091 = vcvt.s32.f32 %v1059
      %v1092 = vcvt.s32.f32 %v1060
      %v1093 = vcvt.s32.f32 %v1061
      %v1094 = vcvt.s32.f32 %v1062
      %v1095 = vcvt.s32.f32 %v1063
      %v1096 = vcvt.s32.f32 %v1064
      %v1097 = vcvt.s32.f32 %v1065
      %v1098 = vcvt.s32.f32 %v1066
      %v1099 = vcvt.s32.f32 %v1067
      %v1100 = vcvt.s32.f32 %v1068
      %v1101 = vcvt.s32.f32 %v1069
      %v1102 = vcvt.s32.f32 %v1070
      %v1103 = vcvt.s32.f32 %v1071
      %v1104 = vcvt.s32.f32 %v1072
      %1105 = vst [vmem:[#allocation2] sm:$0xff] 0.0
      %1106 = vst [vmem:[#allocation2 + $0x8] sm:$0xff] 0.0
      %1107 = vst [vmem:[#allocation2 + $0x10] sm:$0xff] 0.0
      %1108 = vst [vmem:[#allocation2 + $0x18] sm:$0xff] 0.0
      %1109 = vst [vmem:[#allocation2 + $0x20] sm:$0xff] 0.0
      %1110 = vst [vmem:[#allocation2 + $0x28] sm:$0xff] 0.0
      %1111 = vst [vmem:[#allocation2 + $0x330] sm:$0xff] 0.0
      %1112 = vst [vmem:[#allocation2 + $0x338] sm:$0xff] 0.0
      %1113 = vst [vmem:[#allocation2 + $0x340] sm:$0xff] 0.0
      %1114 = vst [vmem:[#allocation2 + $0x348] sm:$0xff] 0.0
      %1115 = vst [vmem:[#allocation2 + $0x350] sm:$0xff] 0.0
      %1116 = vst [vmem:[#allocation2 + $0x358] sm:$0xff] 0.0
      %v1117 = vld [vmem:[%s484] sm:$0xff]
      %v1118 = vld [vmem:[%s484 + $0x8] sm:$0xff]
      %v1119 = vld [vmem:[%s484 + $0x10] sm:$0xff]
      %v1120 = vld [vmem:[%s484 + $0x18] sm:$0xff]
      %v1121 = vld [vmem:[%s484 + $0x20] sm:$0xff]
      %v1122 = vld [vmem:[%s484 + $0x28] sm:$0xff]
      %v1123 = vld [vmem:[%s484 + $0x30] sm:$0xff]
      %v1124 = vld [vmem:[%s484 + $0x38] sm:$0xff]
      %v1125 = vld [vmem:[%s484 + $0x40] sm:$0xff]
      %v1126 = vld [vmem:[%s484 + $0x48] sm:$0xff]
      %v1127 = vld [vmem:[%s484 + $0x50] sm:$0xff]
      %v1128 = vld [vmem:[%s484 + $0x58] sm:$0xff]
      %v1129 = vld [vmem:[%s484 + $0x60] sm:$0xff]
      %v1130 = vld [vmem:[%s484 + $0x68] sm:$0xff]
      %v1131 = vld [vmem:[%s484 + $0x70] sm:$0xff]
      %v1132 = vld [vmem:[%s484 + $0x78] sm:$0xff]
      %v1133 = vld [vmem:[%s484 + $0x80] sm:$0xff]
      %v1134 = vld [vmem:[%s484 + $0x88] sm:$0xff]
      %v1135 = vld [vmem:[%s484 + $0x90] sm:$0xff]
      %v1136 = vld [vmem:[%s484 + $0x98] sm:$0xff]
      %v1137 = vld [vmem:[%s484 + $0xa0] sm:$0xff]
      %v1138 = vld [vmem:[%s484 + $0xa8] sm:$0xff]
      %v1139 = vld [vmem:[%s484 + $0xb0] sm:$0xff]
      %v1140 = vld [vmem:[%s484 + $0xb8] sm:$0xff]
      %v1141 = vld [vmem:[%s484 + $0xc0] sm:$0xff]
      %v1142 = vld [vmem:[%s484 + $0xc8] sm:$0xff]
      %v1143 = vld [vmem:[%s484 + $0xd0] sm:$0xff]
      %v1144 = vld [vmem:[%s484 + $0xd8] sm:$0xff]
      %v1145 = vld [vmem:[%s484 + $0xe0] sm:$0xff]
      %v1146 = vld [vmem:[%s484 + $0xe8] sm:$0xff]
      %v1147 = vld [vmem:[%s484 + $0xf0] sm:$0xff]
      %v1148 = vld [vmem:[%s484 + $0xf8] sm:$0xff]
      %v1149 = vmul.f32 %v1117, %v977
      %v1150 = vmul.f32 %v1118, %v978
      %v1151 = vmul.f32 %v1119, %v979
      %v1152 = vmul.f32 %v1120, %v980
      %v1153 = vmul.f32 %v1121, %v981
      %v1154 = vmul.f32 %v1122, %v982
      %v1155 = vmul.f32 %v1123, %v983
      %v1156 = vmul.f32 %v1124, %v984
      %v1157 = vmul.f32 %v1125, %v985
      %v1158 = vmul.f32 %v1126, %v986
      %v1159 = vmul.f32 %v1127, %v987
      %v1160 = vmul.f32 %v1128, %v988
      %v1161 = vmul.f32 %v1129, %v989
      %v1162 = vmul.f32 %v1130, %v990
      %v1163 = vmul.f32 %v1131, %v991
      %v1164 = vmul.f32 %v1132, %v992
      %v1165 = vmul.f32 %v1133, %v993
      %v1166 = vmul.f32 %v1134, %v994
      %v1167 = vmul.f32 %v1135, %v995
      %v1168 = vmul.f32 %v1136, %v996
      %v1169 = vmul.f32 %v1137, %v997
      %v1170 = vmul.f32 %v1138, %v998
      %v1171 = vmul.f32 %v1139, %v999
      %v1172 = vmul.f32 %v1140, %v1000
      %v1173 = vmul.f32 %v1141, %v1001
      %v1174 = vmul.f32 %v1142, %v1002
      %v1175 = vmul.f32 %v1143, %v1003
      %v1176 = vmul.f32 %v1144, %v1004
      %v1177 = vmul.f32 %v1145, %v1005
      %v1178 = vmul.f32 %v1146, %v1006
      %v1179 = vmul.f32 %v1147, %v1007
      %v1180 = vmul.f32 %v1148, %v1008
      %v1181 = vrot.slane %v1149, 7
      %v1182 = vrot.slane %v1150, 7
      %v1183 = vrot.slane %v1151, 7
      %v1184 = vrot.slane %v1152, 7
      %v1185 = vrot.slane %v1153, 7
      %v1186 = vrot.slane %v1154, 7
      %v1187 = vrot.slane %v1155, 7
      %v1188 = vrot.slane %v1156, 7
      %v1189 = vrot.slane %v1157, 7
      %v1190 = vrot.slane %v1158, 7
      %v1191 = vrot.slane %v1159, 7
      %v1192 = vrot.slane %v1160, 7
      %v1193 = vrot.slane %v1161, 7
      %v1194 = vrot.slane %v1162, 7
      %v1195 = vrot.slane %v1163, 7
      %v1196 = vrot.slane %v1164, 7
      %v1197 = vrot.slane %v1165, 7
      %v1198 = vrot.slane %v1166, 7
      %v1199 = vrot.slane %v1167, 7
      %v1200 = vrot.slane %v1168, 7
      %v1201 = vrot.slane %v1169, 7
      %v1202 = vrot.slane %v1170, 7
      %v1203 = vrot.slane %v1171, 7
      %v1204 = vrot.slane %v1172, 7
      %v1205 = vrot.slane %v1173, 7
      %v1206 = vrot.slane %v1174, 7
      %v1207 = vrot.slane %v1175, 7
      %v1208 = vrot.slane %v1176, 7
      %v1209 = vrot.slane %v1177, 7
      %v1210 = vrot.slane %v1178, 7
      %v1211 = vrot.slane %v1179, 7
      %v1212 = vrot.slane %v1180, 7
      %vm1213 = vcmp.lt.s32.totalorder %v497, 1
      %v1214 = vsel %vm1213, %v1211, %v1212
      %v1215 = vsel %vm1213, %v1210, %v1211
      %v1216 = vsel %vm1213, %v1209, %v1210
      %v1217 = vsel %vm1213, %v1208, %v1209
      %v1218 = vsel %vm1213, %v1207, %v1208
      %v1219 = vsel %vm1213, %v1206, %v1207
      %v1220 = vsel %vm1213, %v1205, %v1206
      %v1221 = vsel %vm1213, %v1204, %v1205
      %v1222 = vsel %vm1213, %v1203, %v1204
      %v1223 = vsel %vm1213, %v1202, %v1203
      %v1224 = vsel %vm1213, %v1201, %v1202
      %v1225 = vsel %vm1213, %v1200, %v1201
      %v1226 = vsel %vm1213, %v1199, %v1200
      %v1227 = vsel %vm1213, %v1198, %v1199
      %v1228 = vsel %vm1213, %v1197, %v1198
      %v1229 = vsel %vm1213, %v1196, %v1197
      %v1230 = vsel %vm1213, %v1195, %v1196
      %v1231 = vsel %vm1213, %v1194, %v1195
      %v1232 = vsel %vm1213, %v1193, %v1194
      %v1233 = vsel %vm1213, %v1192, %v1193
      %v1234 = vsel %vm1213, %v1191, %v1192
      %v1235 = vsel %vm1213, %v1190, %v1191
      %v1236 = vsel %vm1213, %v1189, %v1190
      %v1237 = vsel %vm1213, %v1188, %v1189
      %v1238 = vsel %vm1213, %v1187, %v1188
      %v1239 = vsel %vm1213, %v1186, %v1187
      %v1240 = vsel %vm1213, %v1185, %v1186
      %v1241 = vsel %vm1213, %v1184, %v1185
      %v1242 = vsel %vm1213, %v1183, %v1184
      %v1243 = vsel %vm1213, %v1182, %v1183
      %v1244 = vsel %vm1213, %v1181, %v1182
      %v1245 = vsel %vm1213, %v1212, %v1181
      %v1246 = vmul.f32 %v1117, %v1073
      %v1247 = vmul.f32 %v1118, %v1074
      %v1248 = vmul.f32 %v1119, %v1075
      %v1249 = vmul.f32 %v1120, %v1076
      %v1250 = vmul.f32 %v1121, %v1077
      %v1251 = vmul.f32 %v1122, %v1078
      %v1252 = vmul.f32 %v1123, %v1079
      %v1253 = vmul.f32 %v1124, %v1080
      %v1254 = vmul.f32 %v1125, %v1081
      %v1255 = vmul.f32 %v1126, %v1082
      %v1256 = vmul.f32 %v1127, %v1083
      %v1257 = vmul.f32 %v1128, %v1084
      %v1258 = vmul.f32 %v1129, %v1085
      %v1259 = vmul.f32 %v1130, %v1086
      %v1260 = vmul.f32 %v1131, %v1087
      %v1261 = vmul.f32 %v1132, %v1088
      %v1262 = vmul.f32 %v1133, %v1089
      %v1263 = vmul.f32 %v1134, %v1090
      %v1264 = vmul.f32 %v1135, %v1091
      %v1265 = vmul.f32 %v1136, %v1092
      %v1266 = vmul.f32 %v1137, %v1093
      %v1267 = vmul.f32 %v1138, %v1094
      %v1268 = vmul.f32 %v1139, %v1095
      %v1269 = vmul.f32 %v1140, %v1096
      %v1270 = vmul.f32 %v1141, %v1097
      %v1271 = vmul.f32 %v1142, %v1098
      %v1272 = vmul.f32 %v1143, %v1099
      %v1273 = vmul.f32 %v1144, %v1100
      %v1274 = vmul.f32 %v1145, %v1101
      %v1275 = vmul.f32 %v1146, %v1102
      %v1276 = vmul.f32 %v1147, %v1103
      %v1277 = vmul.f32 %v1148, %v1104
      %v1278 = vrot.slane %v1246, 1
      %v1279 = vrot.slane %v1247, 1
      %v1280 = vrot.slane %v1248, 1
      %v1281 = vrot.slane %v1249, 1
      %v1282 = vrot.slane %v1250, 1
      %v1283 = vrot.slane %v1251, 1
      %v1284 = vrot.slane %v1252, 1
      %v1285 = vrot.slane %v1253, 1
      %v1286 = vrot.slane %v1254, 1
      %v1287 = vrot.slane %v1255, 1
      %v1288 = vrot.slane %v1256, 1
      %v1289 = vrot.slane %v1257, 1
      %v1290 = vrot.slane %v1258, 1
      %v1291 = vrot.slane %v1259, 1
      %v1292 = vrot.slane %v1260, 1
      %v1293 = vrot.slane %v1261, 1
      %v1294 = vrot.slane %v1262, 1
      %v1295 = vrot.slane %v1263, 1
      %v1296 = vrot.slane %v1264, 1
      %v1297 = vrot.slane %v1265, 1
      %v1298 = vrot.slane %v1266, 1
      %v1299 = vrot.slane %v1267, 1
      %v1300 = vrot.slane %v1268, 1
      %v1301 = vrot.slane %v1269, 1
      %v1302 = vrot.slane %v1270, 1
      %v1303 = vrot.slane %v1271, 1
      %v1304 = vrot.slane %v1272, 1
      %v1305 = vrot.slane %v1273, 1
      %v1306 = vrot.slane %v1274, 1
      %v1307 = vrot.slane %v1275, 1
      %v1308 = vrot.slane %v1276, 1
      %v1309 = vrot.slane %v1277, 1
      %vm1310 = vcmp.lt.s32.totalorder %v497, 7
      %v1311 = vsel %vm1310, %v1308, %v1309
      %v1312 = vsel %vm1310, %v1307, %v1308
      %v1313 = vsel %vm1310, %v1306, %v1307
      %v1314 = vsel %vm1310, %v1305, %v1306
      %v1315 = vsel %vm1310, %v1304, %v1305
      %v1316 = vsel %vm1310, %v1303, %v1304
      %v1317 = vsel %vm1310, %v1302, %v1303
      %v1318 = vsel %vm1310, %v1301, %v1302
      %v1319 = vsel %vm1310, %v1300, %v1301
      %v1320 = vsel %vm1310, %v1299, %v1300
      %v1321 = vsel %vm1310, %v1298, %v1299
      %v1322 = vsel %vm1310, %v1297, %v1298
      %v1323 = vsel %vm1310, %v1296, %v1297
      %v1324 = vsel %vm1310, %v1295, %v1296
      %v1325 = vsel %vm1310, %v1294, %v1295
      %v1326 = vsel %vm1310, %v1293, %v1294
      %v1327 = vsel %vm1310, %v1292, %v1293
      %v1328 = vsel %vm1310, %v1291, %v1292
      %v1329 = vsel %vm1310, %v1290, %v1291
      %v1330 = vsel %vm1310, %v1289, %v1290
      %v1331 = vsel %vm1310, %v1288, %v1289
      %v1332 = vsel %vm1310, %v1287, %v1288
      %v1333 = vsel %vm1310, %v1286, %v1287
      %v1334 = vsel %vm1310, %v1285, %v1286
      %v1335 = vsel %vm1310, %v1284, %v1285
      %v1336 = vsel %vm1310, %v1283, %v1284
      %v1337 = vsel %vm1310, %v1282, %v1283
      %v1338 = vsel %vm1310, %v1281, %v1282
      %v1339 = vsel %vm1310, %v1280, %v1281
      %v1340 = vsel %vm1310, %v1279, %v1280
      %v1341 = vsel %vm1310, %v1278, %v1279
      %v1342 = vsel %vm1310, %v1309, %v1278
      %1343 = vst [vmem:[#allocation2 + $0x30] sm:$0xff] %v1245
      %1344 = vst [vmem:[#allocation2 + $0x48] sm:$0xff] %v1244
      %1345 = vst [vmem:[#allocation2 + $0x60] sm:$0xff] %v1243
      %1346 = vst [vmem:[#allocation2 + $0x78] sm:$0xff] %v1242
      %1347 = vst [vmem:[#allocation2 + $0x90] sm:$0xff] %v1241
      %1348 = vst [vmem:[#allocation2 + $0xa8] sm:$0xff] %v1240
      %1349 = vst [vmem:[#allocation2 + $0xc0] sm:$0xff] %v1239
      %1350 = vst [vmem:[#allocation2 + $0xd8] sm:$0xff] %v1238
      %1351 = vst [vmem:[#allocation2 + $0xf0] sm:$0xff] %v1237
      %1352 = vst [vmem:[#allocation2 + $0x108] sm:$0xff] %v1236
      %1353 = vst [vmem:[#allocation2 + $0x120] sm:$0xff] %v1235
      %1354 = vst [vmem:[#allocation2 + $0x138] sm:$0xff] %v1234
      %1355 = vst [vmem:[#allocation2 + $0x150] sm:$0xff] %v1233
      %1356 = vst [vmem:[#allocation2 + $0x168] sm:$0xff] %v1232
      %1357 = vst [vmem:[#allocation2 + $0x180] sm:$0xff] %v1231
      %1358 = vst [vmem:[#allocation2 + $0x198] sm:$0xff] %v1230
      %1359 = vst [vmem:[#allocation2 + $0x1b0] sm:$0xff] %v1229
      %1360 = vst [vmem:[#allocation2 + $0x1c8] sm:$0xff] %v1228
      %1361 = vst [vmem:[#allocation2 + $0x1e0] sm:$0xff] %v1227
      %1362 = vst [vmem:[#allocation2 + $0x1f8] sm:$0xff] %v1226
      %1363 = vst [vmem:[#allocation2 + $0x210] sm:$0xff] %v1225
      %1364 = vst [vmem:[#allocation2 + $0x228] sm:$0xff] %v1224
      %1365 = vst [vmem:[#allocation2 + $0x240] sm:$0xff] %v1223
      %1366 = vst [vmem:[#allocation2 + $0x258] sm:$0xff] %v1222
      %1367 = vst [vmem:[#allocation2 + $0x270] sm:$0xff] %v1221
      %1368 = vst [vmem:[#allocation2 + $0x288] sm:$0xff] %v1220
      %1369 = vst [vmem:[#allocation2 + $0x2a0] sm:$0xff] %v1219
      %1370 = vst [vmem:[#allocation2 + $0x2b8] sm:$0xff] %v1218
      %1371 = vst [vmem:[#allocation2 + $0x2d0] sm:$0xff] %v1217
      %1372 = vst [vmem:[#allocation2 + $0x2e8] sm:$0xff] %v1216
      %1373 = vst [vmem:[#allocation2 + $0x300] sm:$0xff] %v1215
      %1374 = vst [vmem:[#allocation2 + $0x318] sm:$0xff] %v1214
      %1375 = vst [vmem:[#allocation2 + $0x38] sm:$0xff] %v1117
      %1376 = vst [vmem:[#allocation2 + $0x50] sm:$0xff] %v1118
      %1377 = vst [vmem:[#allocation2 + $0x68] sm:$0xff] %v1119
      %1378 = vst [vmem:[#allocation2 + $0x80] sm:$0xff] %v1120
      %1379 = vst [vmem:[#allocation2 + $0x98] sm:$0xff] %v1121
      %1380 = vst [vmem:[#allocation2 + $0xb0] sm:$0xff] %v1122
      %1381 = vst [vmem:[#allocation2 + $0xc8] sm:$0xff] %v1123
      %1382 = vst [vmem:[#allocation2 + $0xe0] sm:$0xff] %v1124
      %1383 = vst [vmem:[#allocation2 + $0xf8] sm:$0xff] %v1125
      %1384 = vst [vmem:[#allocation2 + $0x110] sm:$0xff] %v1126
      %1385 = vst [vmem:[#allocation2 + $0x128] sm:$0xff] %v1127
      %1386 = vst [vmem:[#allocation2 + $0x140] sm:$0xff] %v1128
      %1387 = vst [vmem:[#allocation2 + $0x158] sm:$0xff] %v1129
      %1388 = vst [vmem:[#allocation2 + $0x170] sm:$0xff] %v1130
      %1389 = vst [vmem:[#allocation2 + $0x188] sm:$0xff] %v1131
      %1390 = vst [vmem:[#allocation2 + $0x1a0] sm:$0xff] %v1132
      %1391 = vst [vmem:[#allocation2 + $0x1b8] sm:$0xff] %v1133
      %1392 = vst [vmem:[#allocation2 + $0x1d0] sm:$0xff] %v1134
      %1393 = vst [vmem:[#allocation2 + $0x1e8] sm:$0xff] %v1135
      %1394 = vst [vmem:[#allocation2 + $0x200] sm:$0xff] %v1136
      %1395 = vst [vmem:[#allocation2 + $0x218] sm:$0xff] %v1137
      %1396 = vst [vmem:[#allocation2 + $0x230] sm:$0xff] %v1138
      %1397 = vst [vmem:[#allocation2 + $0x248] sm:$0xff] %v1139
      %1398 = vst [vmem:[#allocation2 + $0x260] sm:$0xff] %v1140
      %1399 = vst [vmem:[#allocation2 + $0x278] sm:$0xff] %v1141
      %1400 = vst [vmem:[#allocation2 + $0x290] sm:$0xff] %v1142
      %1401 = vst [vmem:[#allocation2 + $0x2a8] sm:$0xff] %v1143
      %1402 = vst [vmem:[#allocation2 + $0x2c0] sm:$0xff] %v1144
      %1403 = vst [vmem:[#allocation2 + $0x2d8] sm:$0xff] %v1145
      %1404 = vst [vmem:[#allocation2 + $0x2f0] sm:$0xff] %v1146
      %1405 = vst [vmem:[#allocation2 + $0x308] sm:$0xff] %v1147
      %1406 = vst [vmem:[#allocation2 + $0x320] sm:$0xff] %v1148
      %1407 = vst [vmem:[#allocation2 + $0x40] sm:$0xff] %v1341
      %1408 = vst [vmem:[#allocation2 + $0x58] sm:$0xff] %v1340
      %1409 = vst [vmem:[#allocation2 + $0x70] sm:$0xff] %v1339
      %1410 = vst [vmem:[#allocation2 + $0x88] sm:$0xff] %v1338
      %1411 = vst [vmem:[#allocation2 + $0xa0] sm:$0xff] %v1337
      %1412 = vst [vmem:[#allocation2 + $0xb8] sm:$0xff] %v1336
      %1413 = vst [vmem:[#allocation2 + $0xd0] sm:$0xff] %v1335
      %1414 = vst [vmem:[#allocation2 + $0xe8] sm:$0xff] %v1334
      %1415 = vst [vmem:[#allocation2 + $0x100] sm:$0xff] %v1333
      %1416 = vst [vmem:[#allocation2 + $0x118] sm:$0xff] %v1332
      %1417 = vst [vmem:[#allocation2 + $0x130] sm:$0xff] %v1331
      %1418 = vst [vmem:[#allocation2 + $0x148] sm:$0xff] %v1330
      %1419 = vst [vmem:[#allocation2 + $0x160] sm:$0xff] %v1329
      %1420 = vst [vmem:[#allocation2 + $0x178] sm:$0xff] %v1328
      %1421 = vst [vmem:[#allocation2 + $0x190] sm:$0xff] %v1327
      %1422 = vst [vmem:[#allocation2 + $0x1a8] sm:$0xff] %v1326
      %1423 = vst [vmem:[#allocation2 + $0x1c0] sm:$0xff] %v1325
      %1424 = vst [vmem:[#allocation2 + $0x1d8] sm:$0xff] %v1324
      %1425 = vst [vmem:[#allocation2 + $0x1f0] sm:$0xff] %v1323
      %1426 = vst [vmem:[#allocation2 + $0x208] sm:$0xff] %v1322
      %1427 = vst [vmem:[#allocation2 + $0x220] sm:$0xff] %v1321
      %1428 = vst [vmem:[#allocation2 + $0x238] sm:$0xff] %v1320
      %1429 = vst [vmem:[#allocation2 + $0x250] sm:$0xff] %v1319
      %1430 = vst [vmem:[#allocation2 + $0x268] sm:$0xff] %v1318
      %1431 = vst [vmem:[#allocation2 + $0x280] sm:$0xff] %v1317
      %1432 = vst [vmem:[#allocation2 + $0x298] sm:$0xff] %v1316
      %1433 = vst [vmem:[#allocation2 + $0x2b0] sm:$0xff] %v1315
      %1434 = vst [vmem:[#allocation2 + $0x2c8] sm:$0xff] %v1314
      %1435 = vst [vmem:[#allocation2 + $0x2e0] sm:$0xff] %v1313
      %1436 = vst [vmem:[#allocation2 + $0x2f8] sm:$0xff] %v1312
      %1437 = vst [vmem:[#allocation2 + $0x310] sm:$0xff] %v1311
      %1438 = vst [vmem:[#allocation2 + $0x328] sm:$0xff] %v1342
      %v1439 = vld [vmem:[#allocation2] sm:$0xff]
      %v1440 = vld [vmem:[#allocation2 + $0x8] sm:$0xff]
      %v1441 = vld [vmem:[#allocation2 + $0x10] sm:$0xff]
      %v1442 = vld [vmem:[#allocation2 + $0x18] sm:$0xff]
      %v1443 = vld [vmem:[#allocation2 + $0x20] sm:$0xff]
      %v1444 = vld [vmem:[#allocation2 + $0x28] sm:$0xff]
      %v1445 = vld [vmem:[#allocation2 + $0x30] sm:$0xff]
      %v1446 = vld [vmem:[#allocation2 + $0x38] sm:$0xff]
      %v1447 = vld [vmem:[#allocation2 + $0x40] sm:$0xff]
      %v1448 = vld [vmem:[#allocation2 + $0x48] sm:$0xff]
      %v1449 = vld [vmem:[#allocation2 + $0x50] sm:$0xff]
      %v1450 = vld [vmem:[#allocation2 + $0x58] sm:$0xff]
      %v1451 = vld [vmem:[#allocation2 + $0x60] sm:$0xff]
      %v1452 = vld [vmem:[#allocation2 + $0x68] sm:$0xff]
      %v1453 = vld [vmem:[#allocation2 + $0x70] sm:$0xff]
      %v1454 = vld [vmem:[#allocation2 + $0x78] sm:$0xff]
      %v1455 = vld [vmem:[#allocation2 + $0x80] sm:$0xff]
      %v1456 = vld [vmem:[#allocation2 + $0x88] sm:$0xff]
      %v1457 = vld [vmem:[#allocation2 + $0x90] sm:$0xff]
      %v1458 = vld [vmem:[#allocation2 + $0x98] sm:$0xff]
      %v1459 = vld [vmem:[#allocation2 + $0xa0] sm:$0xff]
      %v1460 = vld [vmem:[#allocation2 + $0xa8] sm:$0xff]
      %v1461 = vld [vmem:[#allocation2 + $0xb0] sm:$0xff]
      %v1462 = vld [vmem:[#allocation2 + $0xb8] sm:$0xff]
      %v1463 = vld [vmem:[#allocation2 + $0xc0] sm:$0xff]
      %v1464 = vld [vmem:[#allocation2 + $0xc8] sm:$0xff]
      %v1465 = vld [vmem:[#allocation2 + $0xd0] sm:$0xff]
      %v1466 = vld [vmem:[#allocation2 + $0xd8] sm:$0xff]
      %v1467 = vld [vmem:[#allocation2 + $0xe0] sm:$0xff]
      %v1468 = vld [vmem:[#allocation2 + $0xe8] sm:$0xff]
      %v1469 = vld [vmem:[#allocation2 + $0xf0] sm:$0xff]
      %v1470 = vld [vmem:[#allocation2 + $0xf8] sm:$0xff]
      %v1471 = vld [vmem:[#allocation2 + $0x100] sm:$0xff]
      %v1472 = vld [vmem:[#allocation2 + $0x108] sm:$0xff]
      %v1473 = vld [vmem:[#allocation2 + $0x110] sm:$0xff]
      %v1474 = vld [vmem:[#allocation2 + $0x118] sm:$0xff]
      %v1475 = vld [vmem:[#allocation2 + $0x120] sm:$0xff]
      %v1476 = vld [vmem:[#allocation2 + $0x128] sm:$0xff]
      %v1477 = vld [vmem:[#allocation2 + $0x130] sm:$0xff]
      %v1478 = vld [vmem:[#allocation2 + $0x138] sm:$0xff]
      %v1479 = vld [vmem:[#allocation2 + $0x140] sm:$0xff]
      %v1480 = vld [vmem:[#allocation2 + $0x148] sm:$0xff]
      %v1481 = vld [vmem:[#allocation2 + $0x150] sm:$0xff]
      %v1482 = vld [vmem:[#allocation2 + $0x158] sm:$0xff]
      %v1483 = vld [vmem:[#allocation2 + $0x160] sm:$0xff]
      %v1484 = vld [vmem:[#allocation2 + $0x168] sm:$0xff]
      %v1485 = vld [vmem:[#allocation2 + $0x170] sm:$0xff]
      %v1486 = vld [vmem:[#allocation2 + $0x178] sm:$0xff]
      %v1487 = vld [vmem:[#allocation2 + $0x180] sm:$0xff]
      %v1488 = vld [vmem:[#allocation2 + $0x188] sm:$0xff]
      %v1489 = vld [vmem:[#allocation2 + $0x190] sm:$0xff]
      %v1490 = vld [vmem:[#allocation2 + $0x198] sm:$0xff]
      %v1491 = vld [vmem:[#allocation2 + $0x1a0] sm:$0xff]
      %v1492 = vld [vmem:[#allocation2 + $0x1a8] sm:$0xff]
      %v1493 = vld [vmem:[#allocation2 + $0x1b0] sm:$0xff]
      %v1494 = vld [vmem:[#allocation2 + $0x1b8] sm:$0xff]
      %v1495 = vld [vmem:[#allocation2 + $0x1c0] sm:$0xff]
      %v1496 = vld [vmem:[#allocation2 + $0x1c8] sm:$0xff]
      %v1497 = vld [vmem:[#allocation2 + $0x1d0] sm:$0xff]
      %v1498 = vld [vmem:[#allocation2 + $0x1d8] sm:$0xff]
      %v1499 = vld [vmem:[#allocation2 + $0x1e0] sm:$0xff]
      %v1500 = vld [vmem:[#allocation2 + $0x1e8] sm:$0xff]
      %v1501 = vld [vmem:[#allocation2 + $0x1f0] sm:$0xff]
      %v1502 = vld [vmem:[#allocation2 + $0x1f8] sm:$0xff]
      %v1503 = vld [vmem:[#allocation2 + $0x200] sm:$0xff]
      %v1504 = vld [vmem:[#allocation2 + $0x208] sm:$0xff]
      %v1505 = vld [vmem:[#allocation2 + $0x210] sm:$0xff]
      %v1506 = vld [vmem:[#allocation2 + $0x218] sm:$0xff]
      %v1507 = vld [vmem:[#allocation2 + $0x220] sm:$0xff]
      %v1508 = vld [vmem:[#allocation2 + $0x228] sm:$0xff]
      %v1509 = vld [vmem:[#allocation2 + $0x230] sm:$0xff]
      %v1510 = vld [vmem:[#allocation2 + $0x238] sm:$0xff]
      %v1511 = vld [vmem:[#allocation2 + $0x240] sm:$0xff]
      %v1512 = vld [vmem:[#allocation2 + $0x248] sm:$0xff]
      %v1513 = vld [vmem:[#allocation2 + $0x250] sm:$0xff]
      %v1514 = vld [vmem:[#allocation2 + $0x258] sm:$0xff]
      %v1515 = vld [vmem:[#allocation2 + $0x260] sm:$0xff]
      %v1516 = vld [vmem:[#allocation2 + $0x268] sm:$0xff]
      %v1517 = vld [vmem:[#allocation2 + $0x270] sm:$0xff]
      %v1518 = vld [vmem:[#allocation2 + $0x278] sm:$0xff]
      %v1519 = vld [vmem:[#allocation2 + $0x280] sm:$0xff]
      %v1520 = vld [vmem:[#allocation2 + $0x288] sm:$0xff]
      %v1521 = vld [vmem:[#allocation2 + $0x290] sm:$0xff]
      %v1522 = vld [vmem:[#allocation2 + $0x298] sm:$0xff]
      %v1523 = vld [vmem:[#allocation2 + $0x2a0] sm:$0xff]
      %v1524 = vld [vmem:[#allocation2 + $0x2a8] sm:$0xff]
      %v1525 = vld [vmem:[#allocation2 + $0x2b0] sm:$0xff]
      %v1526 = vld [vmem:[#allocation2 + $0x2b8] sm:$0xff]
      %v1527 = vld [vmem:[#allocation2 + $0x2c0] sm:$0xff]
      %v1528 = vld [vmem:[#allocation2 + $0x2c8] sm:$0xff]
      %v1529 = vld [vmem:[#allocation2 + $0x2d0] sm:$0xff]
      %v1530 = vld [vmem:[#allocation2 + $0x2d8] sm:$0xff]
      %v1531 = vld [vmem:[#allocation2 + $0x2e0] sm:$0xff]
      %v1532 = vld [vmem:[#allocation2 + $0x2e8] sm:$0xff]
      %v1533 = vld [vmem:[#allocation2 + $0x2f0] sm:$0xff]
      %v1534 = vld [vmem:[#allocation2 + $0x2f8] sm:$0xff]
      %v1535 = vld [vmem:[%s3] sm:$0xff]
      %v1536 = vld [vmem:[%s3 + $0x8] sm:$0xff]
      %v1537 = vld [vmem:[%s3 + $0x10] sm:$0xff]
      %v1538 = vld [vmem:[%s3 + $0x18] sm:$0xff]
      %v1539 = vld [vmem:[%s3 + $0x20] sm:$0xff]
      %v1540 = vld [vmem:[%s3 + $0x28] sm:$0xff]
      %v1541 = vld [vmem:[%s3 + $0x30] sm:$0xff]
      %v1542 = vld [vmem:[%s3 + $0x38] sm:$0xff]
      %v1543 = vld [vmem:[%s3 + $0x40] sm:$0xff]
      %v1544 = vld [vmem:[%s3 + $0x48] sm:$0xff]
      %v1545 = vld [vmem:[%s3 + $0x50] sm:$0xff]
      %v1546 = vld [vmem:[%s3 + $0x58] sm:$0xff]
      %v1547 = vld [vmem:[%s3 + $0x60] sm:$0xff]
      %v1548 = vld [vmem:[%s3 + $0x68] sm:$0xff]
      %v1549 = vld [vmem:[%s3 + $0x70] sm:$0xff]
      %v1550 = vld [vmem:[%s3 + $0x78] sm:$0xff]
      %v1551 = vld [vmem:[%s3 + $0x80] sm:$0xff]
      %v1552 = vld [vmem:[%s3 + $0x88] sm:$0xff]
      %v1553 = vld [vmem:[%s3 + $0x90] sm:$0xff]
      %v1554 = vld [vmem:[%s3 + $0x98] sm:$0xff]
      %v1555 = vld [vmem:[%s3 + $0xa0] sm:$0xff]
      %v1556 = vld [vmem:[%s3 + $0xa8] sm:$0xff]
      %v1557 = vld [vmem:[%s3 + $0xb0] sm:$0xff]
      %v1558 = vld [vmem:[%s3 + $0xb8] sm:$0xff]
      %v1559 = vld [vmem:[%s3 + $0xc0] sm:$0xff]
      %v1560 = vld [vmem:[%s3 + $0xc8] sm:$0xff]
      %v1561 = vld [vmem:[%s3 + $0xd0] sm:$0xff]
      %v1562 = vld [vmem:[%s3 + $0xd8] sm:$0xff]
      %v1563 = vld [vmem:[%s3 + $0xe0] sm:$0xff]
      %v1564 = vld [vmem:[%s3 + $0xe8] sm:$0xff]
      %v1565 = vld [vmem:[%s3 + $0xf0] sm:$0xff]
      %v1566 = vld [vmem:[%s3 + $0xf8] sm:$0xff]
      %v1567 = vld [vmem:[%s3 + $0x100] sm:$0xff]
      %v1568 = vld [vmem:[%s3 + $0x108] sm:$0xff]
      %v1569 = vld [vmem:[%s3 + $0x110] sm:$0xff]
      %v1570 = vld [vmem:[%s3 + $0x118] sm:$0xff]
      %v1571 = vld [vmem:[%s3 + $0x120] sm:$0xff]
      %v1572 = vld [vmem:[%s3 + $0x128] sm:$0xff]
      %v1573 = vld [vmem:[%s3 + $0x130] sm:$0xff]
      %v1574 = vld [vmem:[%s3 + $0x138] sm:$0xff]
      %v1575 = vld [vmem:[%s3 + $0x140] sm:$0xff]
      %v1576 = vld [vmem:[%s3 + $0x148] sm:$0xff]
      %v1577 = vld [vmem:[%s3 + $0x150] sm:$0xff]
      %v1578 = vld [vmem:[%s3 + $0x158] sm:$0xff]
      %v1579 = vld [vmem:[%s3 + $0x160] sm:$0xff]
      %v1580 = vld [vmem:[%s3 + $0x168] sm:$0xff]
      %v1581 = vld [vmem:[%s3 + $0x170] sm:$0xff]
      %v1582 = vld [vmem:[%s3 + $0x178] sm:$0xff]
      %v1583 = vld [vmem:[#allocation2 + $0x300] sm:$0xff]
      %v1584 = vld [vmem:[#allocation2 + $0x308] sm:$0xff]
      %v1585 = vld [vmem:[#allocation2 + $0x310] sm:$0xff]
      %v1586 = vld [vmem:[#allocation2 + $0x318] sm:$0xff]
      %v1587 = vld [vmem:[#allocation2 + $0x320] sm:$0xff]
      %v1588 = vld [vmem:[#allocation2 + $0x328] sm:$0xff]
      %s1589 = scalar_lea.vmem %s3, 384
      %v1590 = vld [vmem:[%s1589] sm:$0xff]
      %v1591 = vld [vmem:[%s1589 + $0x8] sm:$0xff]
      %v1592 = vld [vmem:[%s1589 + $0x10] sm:$0xff]
      %v1593 = vld [vmem:[%s1589 + $0x18] sm:$0xff]
      %v1594 = vld [vmem:[%s1589 + $0x20] sm:$0xff]
      %v1595 = vld [vmem:[%s1589 + $0x28] sm:$0xff]
      %v1596 = vld [vmem:[%s1589 + $0x30] sm:$0xff]
      %v1597 = vld [vmem:[%s1589 + $0x38] sm:$0xff]
      %v1598 = vld [vmem:[%s1589 + $0x40] sm:$0xff]
      %v1599 = vld [vmem:[%s1589 + $0x48] sm:$0xff]
      %v1600 = vld [vmem:[%s1589 + $0x50] sm:$0xff]
      %v1601 = vld [vmem:[%s1589 + $0x58] sm:$0xff]
      %v1602 = vld [vmem:[%s1589 + $0x60] sm:$0xff]
      %v1603 = vld [vmem:[%s1589 + $0x68] sm:$0xff]
      %v1604 = vld [vmem:[%s1589 + $0x70] sm:$0xff]
      %v1605 = vld [vmem:[%s1589 + $0x78] sm:$0xff]
      %v1606 = vld [vmem:[%s1589 + $0x80] sm:$0xff]
      %v1607 = vld [vmem:[%s1589 + $0x88] sm:$0xff]
      %v1608 = vld [vmem:[%s1589 + $0x90] sm:$0xff]
      %v1609 = vld [vmem:[%s1589 + $0x98] sm:$0xff]
      %v1610 = vld [vmem:[%s1589 + $0xa0] sm:$0xff]
      %v1611 = vld [vmem:[%s1589 + $0xa8] sm:$0xff]
      %v1612 = vld [vmem:[%s1589 + $0xb0] sm:$0xff]
      %v1613 = vld [vmem:[%s1589 + $0xb8] sm:$0xff]
      %v1614 = vld [vmem:[%s1589 + $0xc0] sm:$0xff]
      %v1615 = vld [vmem:[%s1589 + $0xc8] sm:$0xff]
      %v1616 = vld [vmem:[%s1589 + $0xd0] sm:$0xff]
      %v1617 = vld [vmem:[%s1589 + $0xd8] sm:$0xff]
      %v1618 = vld [vmem:[%s1589 + $0xe0] sm:$0xff]
      %v1619 = vld [vmem:[%s1589 + $0xe8] sm:$0xff]
      %v1620 = vld [vmem:[%s1589 + $0xf0] sm:$0xff]
      %v1621 = vld [vmem:[%s1589 + $0xf8] sm:$0xff]
      %v1622 = vld [vmem:[%s1589 + $0x100] sm:$0xff]
      %v1623 = vld [vmem:[%s1589 + $0x108] sm:$0xff]
      %v1624 = vld [vmem:[%s1589 + $0x110] sm:$0xff]
      %v1625 = vld [vmem:[%s1589 + $0x118] sm:$0xff]
      %v1626 = vld [vmem:[%s1589 + $0x120] sm:$0xff]
      %v1627 = vld [vmem:[%s1589 + $0x128] sm:$0xff]
      %v1628 = vld [vmem:[%s1589 + $0x130] sm:$0xff]
      %v1629 = vld [vmem:[%s1589 + $0x138] sm:$0xff]
      %v1630 = vld [vmem:[%s1589 + $0x140] sm:$0xff]
      %v1631 = vld [vmem:[%s1589 + $0x148] sm:$0xff]
      %v1632 = vld [vmem:[%s1589 + $0x150] sm:$0xff]
      %v1633 = vld [vmem:[%s1589 + $0x158] sm:$0xff]
      %v1634 = vld [vmem:[%s1589 + $0x160] sm:$0xff]
      %v1635 = vld [vmem:[%s1589 + $0x168] sm:$0xff]
      %v1636 = vld [vmem:[%s1589 + $0x170] sm:$0xff]
      %v1637 = vld [vmem:[%s1589 + $0x178] sm:$0xff]
      %1638 = vmatprep.subr.mxu0 0.0
      %1639 = vmatpush1.msra.mxu0 %v1605
      %1640 = vmatprep.subr.mxu0 0.0
      %1641 = vmatpush1.msra.mxu0 %v1604
      %1642 = vmatprep.subr.mxu0 0.0
      %1643 = vmatpush1.msra.mxu0 %v1603
      %1644 = vmatprep.subr.mxu0 0.0
      %1645 = vmatpush1.msra.mxu0 %v1602
      %1646 = vmatprep.subr.mxu0 0.0
      %1647 = vmatpush1.msra.mxu0 %v1601
      %1648 = vmatprep.subr.mxu0 0.0
      %1649 = vmatpush1.msra.mxu0 %v1600
      %1650 = vmatprep.subr.mxu0 0.0
      %1651 = vmatpush1.msra.mxu0 %v1599
      %1652 = vmatprep.subr.mxu0 0.0
      %1653 = vmatpush1.msra.mxu0 %v1598
      %1654 = vmatprep.subr.mxu0 0.0
      %1655 = vmatpush1.msra.mxu0 %v1597
      %1656 = vmatprep.subr.mxu0 0.0
      %1657 = vmatpush1.msra.mxu0 %v1596
      %1658 = vmatprep.subr.mxu0 0.0
      %1659 = vmatpush1.msra.mxu0 %v1595
      %1660 = vmatprep.subr.mxu0 0.0
      %1661 = vmatpush1.msra.mxu0 %v1594
      %1662 = vmatprep.subr.mxu0 0.0
      %1663 = vmatpush1.msra.mxu0 %v1593
      %1664 = vmatprep.subr.mxu0 0.0
      %1665 = vmatpush1.msra.mxu0 %v1592
      %1666 = vmatprep.subr.mxu0 0.0
      %1667 = vmatpush1.msra.mxu0 %v1591
      %1668 = vmatprep.subr.mxu0 0.0
      %1669 = vmatpush1.msra.mxu0 %v1590
      %1670 = vmatprep.subr.mxu0 0.0
      %1671 = vmatpush2.msra.mxu0 %v1621
      %1672 = vmatprep.subr.mxu0 0.0
      %1673 = vmatpush2.msra.mxu0 %v1620
      %1674 = vmatprep.subr.mxu0 0.0
      %1675 = vmatpush2.msra.mxu0 %v1619
      %1676 = vmatprep.subr.mxu0 0.0
      %1677 = vmatpush2.msra.mxu0 %v1618
      %1678 = vmatprep.subr.mxu0 0.0
      %1679 = vmatpush2.msra.mxu0 %v1617
      %1680 = vmatprep.subr.mxu0 0.0
      %1681 = vmatpush2.msra.mxu0 %v1616
      %1682 = vmatprep.subr.mxu0 0.0
      %1683 = vmatpush2.msra.mxu0 %v1615
      %1684 = vmatprep.subr.mxu0 0.0
      %1685 = vmatpush2.msra.mxu0 %v1614
      %1686 = vmatprep.subr.mxu0 0.0
      %1687 = vmatpush2.msra.mxu0 %v1613
      %1688 = vmatprep.subr.mxu0 0.0
      %1689 = vmatpush2.msra.mxu0 %v1612
      %1690 = vmatprep.subr.mxu0 0.0
      %1691 = vmatpush2.msra.mxu0 %v1611
      %1692 = vmatprep.subr.mxu0 0.0
      %1693 = vmatpush2.msra.mxu0 %v1610
      %1694 = vmatprep.subr.mxu0 0.0
      %1695 = vmatpush2.msra.mxu0 %v1609
      %1696 = vmatprep.subr.mxu0 0.0
      %1697 = vmatpush2.msra.mxu0 %v1608
      %1698 = vmatprep.subr.mxu0 0.0
      %1699 = vmatpush2.msra.mxu0 %v1607
      %1700 = vmatprep.subr.mxu0 0.0
      %1701 = vmatpush2.msra.mxu0 %v1606
      %1702 = vmatprep.mubr.f32.mxu0 %v1446
      %1703 = vmatmul.mubr.f32.gmra.mxu0 %v1445
      %v1704 = vpop.f32.mrf.mxu0
      %v1705 = vadd.f32 0.0, %v1704
      %v1706 = vpop.f32.mrf.mxu0
      %1707 = vmatprep.mubr.f32.mxu0 %v1449
      %1708 = vmatmul.mubr.f32.gmra.mxu0 %v1448
      %v1709 = vpop.f32.mrf.mxu0
      %v1710 = vadd.f32 0.0, %v1709
      %v1711 = vpop.f32.mrf.mxu0
      %1712 = vmatprep.mubr.f32.mxu0 %v1452
      %1713 = vmatmul.mubr.f32.gmra.mxu0 %v1451
      %v1714 = vpop.f32.mrf.mxu0
      %v1715 = vadd.f32 0.0, %v1714
      %v1716 = vpop.f32.mrf.mxu0
      %1717 = vmatprep.mubr.f32.mxu0 %v1455
      %1718 = vmatmul.mubr.f32.gmra.mxu0 %v1454
      %v1719 = vpop.f32.mrf.mxu0
      %v1720 = vadd.f32 0.0, %v1719
      %v1721 = vpop.f32.mrf.mxu0
      %1722 = vmatprep.mubr.f32.mxu0 %v1458
      %1723 = vmatmul.mubr.f32.gmra.mxu0 %v1457
      %v1724 = vpop.f32.mrf.mxu0
      %v1725 = vadd.f32 0.0, %v1724
      %v1726 = vpop.f32.mrf.mxu0
      %1727 = vmatprep.mubr.f32.mxu0 %v1461
      %1728 = vmatmul.mubr.f32.gmra.mxu0 %v1460
      %v1729 = vpop.f32.mrf.mxu0
      %v1730 = vadd.f32 0.0, %v1729
      %v1731 = vpop.f32.mrf.mxu0
      %1732 = vmatprep.mubr.f32.mxu0 %v1464
      %1733 = vmatmul.mubr.f32.gmra.mxu0 %v1463
      %v1734 = vpop.f32.mrf.mxu0
      %v1735 = vadd.f32 0.0, %v1734
      %v1736 = vpop.f32.mrf.mxu0
      %1737 = vmatprep.mubr.f32.mxu0 %v1467
      %1738 = vmatmul.mubr.f32.gmra.mxu0 %v1466
      %v1739 = vpop.f32.mrf.mxu0
      %v1740 = vadd.f32 0.0, %v1739
      %v1741 = vpop.f32.mrf.mxu0
      %1742 = vmatprep.mubr.f32.mxu0 %v1470
      %1743 = vmatmul.mubr.f32.gmra.mxu0 %v1469
      %v1744 = vpop.f32.mrf.mxu0
      %v1745 = vadd.f32 0.0, %v1744
      %v1746 = vpop.f32.mrf.mxu0
      %1747 = vmatprep.mubr.f32.mxu0 %v1473
      %1748 = vmatmul.mubr.f32.gmra.mxu0 %v1472
      %v1749 = vpop.f32.mrf.mxu0
      %v1750 = vadd.f32 0.0, %v1749
      %v1751 = vpop.f32.mrf.mxu0
      %1752 = vmatprep.mubr.f32.mxu0 %v1476
      %1753 = vmatmul.mubr.f32.gmra.mxu0 %v1475
      %v1754 = vpop.f32.mrf.mxu0
      %v1755 = vadd.f32 0.0, %v1754
      %v1756 = vpop.f32.mrf.mxu0
      %1757 = vmatprep.mubr.f32.mxu0 %v1479
      %1758 = vmatmul.mubr.f32.gmra.mxu0 %v1478
      %v1759 = vpop.f32.mrf.mxu0
      %v1760 = vadd.f32 0.0, %v1759
      %v1761 = vpop.f32.mrf.mxu0
      %1762 = vmatprep.mubr.f32.mxu0 %v1482
      %1763 = vmatmul.mubr.f32.gmra.mxu0 %v1481
      %v1764 = vpop.f32.mrf.mxu0
      %v1765 = vadd.f32 0.0, %v1764
      %v1766 = vpop.f32.mrf.mxu0
      %1767 = vmatprep.mubr.f32.mxu0 %v1485
      %1768 = vmatmul.mubr.f32.gmra.mxu0 %v1484
      %v1769 = vpop.f32.mrf.mxu0
      %v1770 = vadd.f32 0.0, %v1769
      %v1771 = vpop.f32.mrf.mxu0
      %1772 = vmatprep.mubr.f32.mxu0 %v1488
      %1773 = vmatmul.mubr.f32.gmra.mxu0 %v1487
      %v1774 = vpop.f32.mrf.mxu0
      %v1775 = vadd.f32 0.0, %v1774
      %v1776 = vpop.f32.mrf.mxu0
      %1777 = vmatprep.mubr.f32.mxu0 %v1491
      %1778 = vmatmul.mubr.f32.gmra.mxu0 %v1490
      %v1779 = vpop.f32.mrf.mxu0
      %v1780 = vadd.f32 0.0, %v1779
      %v1781 = vpop.f32.mrf.mxu0
      %1782 = vmatprep.mubr.f32.mxu0 %v1494
      %1783 = vmatmul.mubr.f32.gmra.mxu0 %v1493
      %v1784 = vpop.f32.mrf.mxu0
      %v1785 = vadd.f32 0.0, %v1784
      %v1786 = vpop.f32.mrf.mxu0
      %1787 = vmatprep.mubr.f32.mxu0 %v1497
      %1788 = vmatmul.mubr.f32.gmra.mxu0 %v1496
      %v1789 = vpop.f32.mrf.mxu0
      %v1790 = vadd.f32 0.0, %v1789
      %v1791 = vpop.f32.mrf.mxu0
      %1792 = vmatprep.mubr.f32.mxu0 %v1500
      %1793 = vmatmul.mubr.f32.gmra.mxu0 %v1499
      %v1794 = vpop.f32.mrf.mxu0
      %v1795 = vadd.f32 0.0, %v1794
      %v1796 = vpop.f32.mrf.mxu0
      %1797 = vmatprep.mubr.f32.mxu0 %v1503
      %1798 = vmatmul.mubr.f32.gmra.mxu0 %v1502
      %v1799 = vpop.f32.mrf.mxu0
      %v1800 = vadd.f32 0.0, %v1799
      %v1801 = vpop.f32.mrf.mxu0
      %1802 = vmatprep.mubr.f32.mxu0 %v1506
      %1803 = vmatmul.mubr.f32.gmra.mxu0 %v1505
      %v1804 = vpop.f32.mrf.mxu0
      %v1805 = vadd.f32 0.0, %v1804
      %v1806 = vpop.f32.mrf.mxu0
      %1807 = vmatprep.mubr.f32.mxu0 %v1509
      %1808 = vmatmul.mubr.f32.gmra.mxu0 %v1508
      %v1809 = vpop.f32.mrf.mxu0
      %v1810 = vadd.f32 0.0, %v1809
      %v1811 = vpop.f32.mrf.mxu0
      %1812 = vmatprep.mubr.f32.mxu0 %v1512
      %1813 = vmatmul.mubr.f32.gmra.mxu0 %v1511
      %v1814 = vpop.f32.mrf.mxu0
      %v1815 = vadd.f32 0.0, %v1814
      %v1816 = vpop.f32.mrf.mxu0
      %1817 = vmatprep.mubr.f32.mxu0 %v1515
      %1818 = vmatmul.mubr.f32.gmra.mxu0 %v1514
      %v1819 = vpop.f32.mrf.mxu0
      %v1820 = vadd.f32 0.0, %v1819
      %v1821 = vpop.f32.mrf.mxu0
      %1822 = vmatprep.mubr.f32.mxu0 %v1518
      %1823 = vmatmul.mubr.f32.gmra.mxu0 %v1517
      %v1824 = vpop.f32.mrf.mxu0
      %v1825 = vadd.f32 0.0, %v1824
      %v1826 = vpop.f32.mrf.mxu0
      %1827 = vmatprep.mubr.f32.mxu0 %v1521
      %1828 = vmatmul.mubr.f32.gmra.mxu0 %v1520
      %v1829 = vpop.f32.mrf.mxu0
      %v1830 = vadd.f32 0.0, %v1829
      %v1831 = vpop.f32.mrf.mxu0
      %1832 = vmatprep.mubr.f32.mxu0 %v1524
      %1833 = vmatmul.mubr.f32.gmra.mxu0 %v1523
      %v1834 = vpop.f32.mrf.mxu0
      %v1835 = vadd.f32 0.0, %v1834
      %v1836 = vpop.f32.mrf.mxu0
      %1837 = vmatprep.mubr.f32.mxu0 %v1527
      %1838 = vmatmul.mubr.f32.gmra.mxu0 %v1526
      %v1839 = vpop.f32.mrf.mxu0
      %v1840 = vadd.f32 0.0, %v1839
      %v1841 = vpop.f32.mrf.mxu0
      %1842 = vmatprep.mubr.f32.mxu0 %v1530
      %1843 = vmatmul.mubr.f32.gmra.mxu0 %v1529
      %v1844 = vpop.f32.mrf.mxu0
      %v1845 = vadd.f32 0.0, %v1844
      %v1846 = vpop.f32.mrf.mxu0
      %1847 = vmatprep.mubr.f32.mxu0 %v1533
      %1848 = vmatmul.mubr.f32.gmra.mxu0 %v1532
      %v1849 = vpop.f32.mrf.mxu0
      %v1850 = vadd.f32 0.0, %v1849
      %v1851 = vpop.f32.mrf.mxu0
      %1852 = vmatprep.mubr.f32.mxu0 %v1584
      %1853 = vmatmul.mubr.f32.gmra.mxu0 %v1583
      %v1854 = vpop.f32.mrf.mxu0
      %v1855 = vadd.f32 0.0, %v1854
      %v1856 = vpop.f32.mrf.mxu0
      %1857 = vmatprep.mubr.f32.mxu0 %v1587
      %1858 = vmatmul.mubr.f32.gmra.mxu0 %v1586
      %v1859 = vpop.f32.mrf.mxu0
      %v1860 = vadd.f32 0.0, %v1859
      %v1861 = vpop.f32.mrf.mxu0
      %1862 = vdwg.mxu0
      %1863 = vmatprep.subr.mxu0 0.0
      %1864 = vmatpush1.msra.mxu0 %v1637
      %1865 = vmatprep.subr.mxu0 0.0
      %1866 = vmatpush1.msra.mxu0 %v1636
      %1867 = vmatprep.subr.mxu0 0.0
      %1868 = vmatpush1.msra.mxu0 %v1635
      %1869 = vmatprep.subr.mxu0 0.0
      %1870 = vmatpush1.msra.mxu0 %v1634
      %1871 = vmatprep.subr.mxu0 0.0
      %1872 = vmatpush1.msra.mxu0 %v1633
      %1873 = vmatprep.subr.mxu0 0.0
      %1874 = vmatpush1.msra.mxu0 %v1632
      %1875 = vmatprep.subr.mxu0 0.0
      %1876 = vmatpush1.msra.mxu0 %v1631
      %1877 = vmatprep.subr.mxu0 0.0
      %1878 = vmatpush1.msra.mxu0 %v1630
      %1879 = vmatprep.subr.mxu0 0.0
      %1880 = vmatpush1.msra.mxu0 %v1629
      %1881 = vmatprep.subr.mxu0 0.0
      %1882 = vmatpush1.msra.mxu0 %v1628
      %1883 = vmatprep.subr.mxu0 0.0
      %1884 = vmatpush1.msra.mxu0 %v1627
      %1885 = vmatprep.subr.mxu0 0.0
      %1886 = vmatpush1.msra.mxu0 %v1626
      %1887 = vmatprep.subr.mxu0 0.0
      %1888 = vmatpush1.msra.mxu0 %v1625
      %1889 = vmatprep.subr.mxu0 0.0
      %1890 = vmatpush1.msra.mxu0 %v1624
      %1891 = vmatprep.subr.mxu0 0.0
      %1892 = vmatpush1.msra.mxu0 %v1623
      %1893 = vmatprep.subr.mxu0 0.0
      %1894 = vmatpush1.msra.mxu0 %v1622
      %1895 = vmatprep.subr.mxu0 0.0
      %1896 = vmatpush2.msra.mxu0 0.0
      %1897 = vmatprep.subr.mxu0 0.0
      %1898 = vmatpush2.msra.mxu0 0.0
      %1899 = vmatprep.subr.mxu0 0.0
      %1900 = vmatpush2.msra.mxu0 0.0
      %1901 = vmatprep.subr.mxu0 0.0
      %1902 = vmatpush2.msra.mxu0 0.0
      %1903 = vmatprep.subr.mxu0 0.0
      %1904 = vmatpush2.msra.mxu0 0.0
      %1905 = vmatprep.subr.mxu0 0.0
      %1906 = vmatpush2.msra.mxu0 0.0
      %1907 = vmatprep.subr.mxu0 0.0
      %1908 = vmatpush2.msra.mxu0 0.0
      %1909 = vmatprep.subr.mxu0 0.0
      %1910 = vmatpush2.msra.mxu0 0.0
      %1911 = vmatprep.subr.mxu0 0.0
      %1912 = vmatpush2.msra.mxu0 0.0
      %1913 = vmatprep.subr.mxu0 0.0
      %1914 = vmatpush2.msra.mxu0 0.0
      %1915 = vmatprep.subr.mxu0 0.0
      %1916 = vmatpush2.msra.mxu0 0.0
      %1917 = vmatprep.subr.mxu0 0.0
      %1918 = vmatpush2.msra.mxu0 0.0
      %1919 = vmatprep.subr.mxu0 0.0
      %1920 = vmatpush2.msra.mxu0 0.0
      %1921 = vmatprep.subr.mxu0 0.0
      %1922 = vmatpush2.msra.mxu0 0.0
      %1923 = vmatprep.subr.mxu0 0.0
      %1924 = vmatpush2.msra.mxu0 0.0
      %1925 = vmatprep.subr.mxu0 0.0
      %1926 = vmatpush2.msra.mxu0 0.0
      %1927 = vmatprep.mubr.f32.mxu0 0.0
      %1928 = vmatmul.mubr.f32.gmra.mxu0 %v1447
      %v1929 = vpop.f32.mrf.mxu0
      %v1930 = vadd.f32 %v1705, %v1929
      %v1931 = vpop.f32.mrf.mxu0
      %1932 = vmatprep.mubr.f32.mxu0 0.0
      %1933 = vmatmul.mubr.f32.gmra.mxu0 %v1450
      %v1934 = vpop.f32.mrf.mxu0
      %v1935 = vadd.f32 %v1710, %v1934
      %v1936 = vpop.f32.mrf.mxu0
      %1937 = vmatprep.mubr.f32.mxu0 0.0
      %1938 = vmatmul.mubr.f32.gmra.mxu0 %v1453
      %v1939 = vpop.f32.mrf.mxu0
      %v1940 = vadd.f32 %v1715, %v1939
      %v1941 = vpop.f32.mrf.mxu0
      %1942 = vmatprep.mubr.f32.mxu0 0.0
      %1943 = vmatmul.mubr.f32.gmra.mxu0 %v1456
      %v1944 = vpop.f32.mrf.mxu0
      %v1945 = vadd.f32 %v1720, %v1944
      %v1946 = vpop.f32.mrf.mxu0
      %1947 = vmatprep.mubr.f32.mxu0 0.0
      %1948 = vmatmul.mubr.f32.gmra.mxu0 %v1459
      %v1949 = vpop.f32.mrf.mxu0
      %v1950 = vadd.f32 %v1725, %v1949
      %v1951 = vpop.f32.mrf.mxu0
      %1952 = vmatprep.mubr.f32.mxu0 0.0
      %1953 = vmatmul.mubr.f32.gmra.mxu0 %v1462
      %v1954 = vpop.f32.mrf.mxu0
      %v1955 = vadd.f32 %v1730, %v1954
      %v1956 = vpop.f32.mrf.mxu0
      %1957 = vmatprep.mubr.f32.mxu0 0.0
      %1958 = vmatmul.mubr.f32.gmra.mxu0 %v1465
      %v1959 = vpop.f32.mrf.mxu0
      %v1960 = vadd.f32 %v1735, %v1959
      %v1961 = vpop.f32.mrf.mxu0
      %1962 = vmatprep.mubr.f32.mxu0 0.0
      %1963 = vmatmul.mubr.f32.gmra.mxu0 %v1468
      %v1964 = vpop.f32.mrf.mxu0
      %v1965 = vadd.f32 %v1740, %v1964
      %v1966 = vpop.f32.mrf.mxu0
      %1967 = vmatprep.mubr.f32.mxu0 0.0
      %1968 = vmatmul.mubr.f32.gmra.mxu0 %v1471
      %v1969 = vpop.f32.mrf.mxu0
      %v1970 = vadd.f32 %v1745, %v1969
      %v1971 = vpop.f32.mrf.mxu0
      %1972 = vmatprep.mubr.f32.mxu0 0.0
      %1973 = vmatmul.mubr.f32.gmra.mxu0 %v1474
      %v1974 = vpop.f32.mrf.mxu0
      %v1975 = vadd.f32 %v1750, %v1974
      %v1976 = vpop.f32.mrf.mxu0
      %1977 = vmatprep.mubr.f32.mxu0 0.0
      %1978 = vmatmul.mubr.f32.gmra.mxu0 %v1477
      %v1979 = vpop.f32.mrf.mxu0
      %v1980 = vadd.f32 %v1755, %v1979
      %v1981 = vpop.f32.mrf.mxu0
      %1982 = vmatprep.mubr.f32.mxu0 0.0
      %1983 = vmatmul.mubr.f32.gmra.mxu0 %v1480
      %v1984 = vpop.f32.mrf.mxu0
      %v1985 = vadd.f32 %v1760, %v1984
      %v1986 = vpop.f32.mrf.mxu0
      %1987 = vmatprep.mubr.f32.mxu0 0.0
      %1988 = vmatmul.mubr.f32.gmra.mxu0 %v1483
      %v1989 = vpop.f32.mrf.mxu0
      %v1990 = vadd.f32 %v1765, %v1989
      %v1991 = vpop.f32.mrf.mxu0
      %1992 = vmatprep.mubr.f32.mxu0 0.0
      %1993 = vmatmul.mubr.f32.gmra.mxu0 %v1486
      %v1994 = vpop.f32.mrf.mxu0
      %v1995 = vadd.f32 %v1770, %v1994
      %v1996 = vpop.f32.mrf.mxu0
      %1997 = vmatprep.mubr.f32.mxu0 0.0
      %1998 = vmatmul.mubr.f32.gmra.mxu0 %v1489
      %v1999 = vpop.f32.mrf.mxu0
      %v2000 = vadd.f32 %v1775, %v1999
      %v2001 = vpop.f32.mrf.mxu0
      %2002 = vmatprep.mubr.f32.mxu0 0.0
      %2003 = vmatmul.mubr.f32.gmra.mxu0 %v1492
      %v2004 = vpop.f32.mrf.mxu0
      %v2005 = vadd.f32 %v1780, %v2004
      %v2006 = vpop.f32.mrf.mxu0
      %2007 = vmatprep.mubr.f32.mxu0 0.0
      %2008 = vmatmul.mubr.f32.gmra.mxu0 %v1495
      %v2009 = vpop.f32.mrf.mxu0
      %v2010 = vadd.f32 %v1785, %v2009
      %v2011 = vpop.f32.mrf.mxu0
      %2012 = vmatprep.mubr.f32.mxu0 0.0
      %2013 = vmatmul.mubr.f32.gmra.mxu0 %v1498
      %v2014 = vpop.f32.mrf.mxu0
      %v2015 = vadd.f32 %v1790, %v2014
      %v2016 = vpop.f32.mrf.mxu0
      %2017 = vmatprep.mubr.f32.mxu0 0.0
      %2018 = vmatmul.mubr.f32.gmra.mxu0 %v1501
      %v2019 = vpop.f32.mrf.mxu0
      %v2020 = vadd.f32 %v1795, %v2019
      %v2021 = vpop.f32.mrf.mxu0
      %2022 = vmatprep.mubr.f32.mxu0 0.0
      %2023 = vmatmul.mubr.f32.gmra.mxu0 %v1504
      %v2024 = vpop.f32.mrf.mxu0
      %v2025 = vadd.f32 %v1800, %v2024
      %v2026 = vpop.f32.mrf.mxu0
      %2027 = vmatprep.mubr.f32.mxu0 0.0
      %2028 = vmatmul.mubr.f32.gmra.mxu0 %v1507
      %v2029 = vpop.f32.mrf.mxu0
      %v2030 = vadd.f32 %v1805, %v2029
      %v2031 = vpop.f32.mrf.mxu0
      %2032 = vmatprep.mubr.f32.mxu0 0.0
      %2033 = vmatmul.mubr.f32.gmra.mxu0 %v1510
      %v2034 = vpop.f32.mrf.mxu0
      %v2035 = vadd.f32 %v1810, %v2034
      %v2036 = vpop.f32.mrf.mxu0
      %2037 = vmatprep.mubr.f32.mxu0 0.0
      %2038 = vmatmul.mubr.f32.gmra.mxu0 %v1513
      %v2039 = vpop.f32.mrf.mxu0
      %v2040 = vadd.f32 %v1815, %v2039
      %v2041 = vpop.f32.mrf.mxu0
      %2042 = vmatprep.mubr.f32.mxu0 0.0
      %2043 = vmatmul.mubr.f32.gmra.mxu0 %v1516
      %v2044 = vpop.f32.mrf.mxu0
      %v2045 = vadd.f32 %v1820, %v2044
      %v2046 = vpop.f32.mrf.mxu0
      %2047 = vmatprep.mubr.f32.mxu0 0.0
      %2048 = vmatmul.mubr.f32.gmra.mxu0 %v1519
      %v2049 = vpop.f32.mrf.mxu0
      %v2050 = vadd.f32 %v1825, %v2049
      %v2051 = vpop.f32.mrf.mxu0
      %2052 = vmatprep.mubr.f32.mxu0 0.0
      %2053 = vmatmul.mubr.f32.gmra.mxu0 %v1522
      %v2054 = vpop.f32.mrf.mxu0
      %v2055 = vadd.f32 %v1830, %v2054
      %v2056 = vpop.f32.mrf.mxu0
      %2057 = vmatprep.mubr.f32.mxu0 0.0
      %2058 = vmatmul.mubr.f32.gmra.mxu0 %v1525
      %v2059 = vpop.f32.mrf.mxu0
      %v2060 = vadd.f32 %v1835, %v2059
      %v2061 = vpop.f32.mrf.mxu0
      %2062 = vmatprep.mubr.f32.mxu0 0.0
      %2063 = vmatmul.mubr.f32.gmra.mxu0 %v1528
      %v2064 = vpop.f32.mrf.mxu0
      %v2065 = vadd.f32 %v1840, %v2064
      %v2066 = vpop.f32.mrf.mxu0
      %2067 = vmatprep.mubr.f32.mxu0 0.0
      %2068 = vmatmul.mubr.f32.gmra.mxu0 %v1531
      %v2069 = vpop.f32.mrf.mxu0
      %v2070 = vadd.f32 %v1845, %v2069
      %v2071 = vpop.f32.mrf.mxu0
      %2072 = vmatprep.mubr.f32.mxu0 0.0
      %2073 = vmatmul.mubr.f32.gmra.mxu0 %v1534
      %v2074 = vpop.f32.mrf.mxu0
      %v2075 = vadd.f32 %v1850, %v2074
      %v2076 = vpop.f32.mrf.mxu0
      %2077 = vmatprep.mubr.f32.mxu0 0.0
      %2078 = vmatmul.mubr.f32.gmra.mxu0 %v1585
      %v2079 = vpop.f32.mrf.mxu0
      %v2080 = vadd.f32 %v1855, %v2079
      %v2081 = vpop.f32.mrf.mxu0
      %2082 = vmatprep.mubr.f32.mxu0 0.0
      %2083 = vmatmul.mubr.f32.gmra.mxu0 %v1588
      %v2084 = vpop.f32.mrf.mxu0
      %v2085 = vadd.f32 %v1860, %v2084
      %v2086 = vpop.f32.mrf.mxu0
      %2087 = vdwg.mxu0
      %2088 = vmatprep.subr.mxu0 0.0
      %2089 = vmatpush1.msra.mxu0 %v1550
      %2090 = vmatprep.subr.mxu0 0.0
      %2091 = vmatpush1.msra.mxu0 %v1549
      %2092 = vmatprep.subr.mxu0 0.0
      %2093 = vmatpush1.msra.mxu0 %v1548
      %2094 = vmatprep.subr.mxu0 0.0
      %2095 = vmatpush1.msra.mxu0 %v1547
      %2096 = vmatprep.subr.mxu0 0.0
      %2097 = vmatpush1.msra.mxu0 %v1546
      %2098 = vmatprep.subr.mxu0 0.0
      %2099 = vmatpush1.msra.mxu0 %v1545
      %2100 = vmatprep.subr.mxu0 0.0
      %2101 = vmatpush1.msra.mxu0 %v1544
      %2102 = vmatprep.subr.mxu0 0.0
      %2103 = vmatpush1.msra.mxu0 %v1543
      %2104 = vmatprep.subr.mxu0 0.0
      %2105 = vmatpush1.msra.mxu0 %v1542
      %2106 = vmatprep.subr.mxu0 0.0
      %2107 = vmatpush1.msra.mxu0 %v1541
      %2108 = vmatprep.subr.mxu0 0.0
      %2109 = vmatpush1.msra.mxu0 %v1540
      %2110 = vmatprep.subr.mxu0 0.0
      %2111 = vmatpush1.msra.mxu0 %v1539
      %2112 = vmatprep.subr.mxu0 0.0
      %2113 = vmatpush1.msra.mxu0 %v1538
      %2114 = vmatprep.subr.mxu0 0.0
      %2115 = vmatpush1.msra.mxu0 %v1537
      %2116 = vmatprep.subr.mxu0 0.0
      %2117 = vmatpush1.msra.mxu0 %v1536
      %2118 = vmatprep.subr.mxu0 0.0
      %2119 = vmatpush1.msra.mxu0 %v1535
      %2120 = vmatprep.subr.mxu0 0.0
      %2121 = vmatpush2.msra.mxu0 %v1566
      %2122 = vmatprep.subr.mxu0 0.0
      %2123 = vmatpush2.msra.mxu0 %v1565
      %2124 = vmatprep.subr.mxu0 0.0
      %2125 = vmatpush2.msra.mxu0 %v1564
      %2126 = vmatprep.subr.mxu0 0.0
      %2127 = vmatpush2.msra.mxu0 %v1563
      %2128 = vmatprep.subr.mxu0 0.0
      %2129 = vmatpush2.msra.mxu0 %v1562
      %2130 = vmatprep.subr.mxu0 0.0
      %2131 = vmatpush2.msra.mxu0 %v1561
      %2132 = vmatprep.subr.mxu0 0.0
      %2133 = vmatpush2.msra.mxu0 %v1560
      %2134 = vmatprep.subr.mxu0 0.0
      %2135 = vmatpush2.msra.mxu0 %v1559
      %2136 = vmatprep.subr.mxu0 0.0
      %2137 = vmatpush2.msra.mxu0 %v1558
      %2138 = vmatprep.subr.mxu0 0.0
      %2139 = vmatpush2.msra.mxu0 %v1557
      %2140 = vmatprep.subr.mxu0 0.0
      %2141 = vmatpush2.msra.mxu0 %v1556
      %2142 = vmatprep.subr.mxu0 0.0
      %2143 = vmatpush2.msra.mxu0 %v1555
      %2144 = vmatprep.subr.mxu0 0.0
      %2145 = vmatpush2.msra.mxu0 %v1554
      %2146 = vmatprep.subr.mxu0 0.0
      %2147 = vmatpush2.msra.mxu0 %v1553
      %2148 = vmatprep.subr.mxu0 0.0
      %2149 = vmatpush2.msra.mxu0 %v1552
      %2150 = vmatprep.subr.mxu0 0.0
      %2151 = vmatpush2.msra.mxu0 %v1551
      %2152 = vmatprep.mubr.f32.mxu0 %v1440
      %2153 = vmatmul.mubr.f32.gmra.mxu0 %v1439
      %v2154 = vpop.f32.mrf.mxu0
      %v2155 = vadd.f32 %v1930, %v2154
      %v2156 = vpop.f32.mrf.mxu0
      %2157 = vmatprep.mubr.f32.mxu0 %v1443
      %2158 = vmatmul.mubr.f32.gmra.mxu0 %v1442
      %v2159 = vpop.f32.mrf.mxu0
      %v2160 = vadd.f32 %v1935, %v2159
      %v2161 = vpop.f32.mrf.mxu0
      %2162 = vmatprep.mubr.f32.mxu0 %v1446
      %2163 = vmatmul.mubr.f32.gmra.mxu0 %v1445
      %v2164 = vpop.f32.mrf.mxu0
      %v2165 = vadd.f32 %v1940, %v2164
      %v2166 = vpop.f32.mrf.mxu0
      %2167 = vmatprep.mubr.f32.mxu0 %v1449
      %2168 = vmatmul.mubr.f32.gmra.mxu0 %v1448
      %v2169 = vpop.f32.mrf.mxu0
      %v2170 = vadd.f32 %v1945, %v2169
      %v2171 = vpop.f32.mrf.mxu0
      %2172 = vmatprep.mubr.f32.mxu0 %v1452
      %2173 = vmatmul.mubr.f32.gmra.mxu0 %v1451
      %v2174 = vpop.f32.mrf.mxu0
      %v2175 = vadd.f32 %v1950, %v2174
      %v2176 = vpop.f32.mrf.mxu0
      %2177 = vmatprep.mubr.f32.mxu0 %v1455
      %2178 = vmatmul.mubr.f32.gmra.mxu0 %v1454
      %v2179 = vpop.f32.mrf.mxu0
      %v2180 = vadd.f32 %v1955, %v2179
      %v2181 = vpop.f32.mrf.mxu0
      %2182 = vmatprep.mubr.f32.mxu0 %v1458
      %2183 = vmatmul.mubr.f32.gmra.mxu0 %v1457
      %v2184 = vpop.f32.mrf.mxu0
      %v2185 = vadd.f32 %v1960, %v2184
      %v2186 = vpop.f32.mrf.mxu0
      %2187 = vmatprep.mubr.f32.mxu0 %v1461
      %2188 = vmatmul.mubr.f32.gmra.mxu0 %v1460
      %v2189 = vpop.f32.mrf.mxu0
      %v2190 = vadd.f32 %v1965, %v2189
      %v2191 = vpop.f32.mrf.mxu0
      %2192 = vmatprep.mubr.f32.mxu0 %v1464
      %2193 = vmatmul.mubr.f32.gmra.mxu0 %v1463
      %v2194 = vpop.f32.mrf.mxu0
      %v2195 = vadd.f32 %v1970, %v2194
      %v2196 = vpop.f32.mrf.mxu0
      %2197 = vmatprep.mubr.f32.mxu0 %v1467
      %2198 = vmatmul.mubr.f32.gmra.mxu0 %v1466
      %v2199 = vpop.f32.mrf.mxu0
      %v2200 = vadd.f32 %v1975, %v2199
      %v2201 = vpop.f32.mrf.mxu0
      %2202 = vmatprep.mubr.f32.mxu0 %v1470
      %2203 = vmatmul.mubr.f32.gmra.mxu0 %v1469
      %v2204 = vpop.f32.mrf.mxu0
      %v2205 = vadd.f32 %v1980, %v2204
      %v2206 = vpop.f32.mrf.mxu0
      %2207 = vmatprep.mubr.f32.mxu0 %v1473
      %2208 = vmatmul.mubr.f32.gmra.mxu0 %v1472
      %v2209 = vpop.f32.mrf.mxu0
      %v2210 = vadd.f32 %v1985, %v2209
      %v2211 = vpop.f32.mrf.mxu0
      %2212 = vmatprep.mubr.f32.mxu0 %v1476
      %2213 = vmatmul.mubr.f32.gmra.mxu0 %v1475
      %v2214 = vpop.f32.mrf.mxu0
      %v2215 = vadd.f32 %v1990, %v2214
      %v2216 = vpop.f32.mrf.mxu0
      %2217 = vmatprep.mubr.f32.mxu0 %v1479
      %2218 = vmatmul.mubr.f32.gmra.mxu0 %v1478
      %v2219 = vpop.f32.mrf.mxu0
      %v2220 = vadd.f32 %v1995, %v2219
      %v2221 = vpop.f32.mrf.mxu0
      %2222 = vmatprep.mubr.f32.mxu0 %v1482
      %2223 = vmatmul.mubr.f32.gmra.mxu0 %v1481
      %v2224 = vpop.f32.mrf.mxu0
      %v2225 = vadd.f32 %v2000, %v2224
      %v2226 = vpop.f32.mrf.mxu0
      %2227 = vmatprep.mubr.f32.mxu0 %v1485
      %2228 = vmatmul.mubr.f32.gmra.mxu0 %v1484
      %v2229 = vpop.f32.mrf.mxu0
      %v2230 = vadd.f32 %v2005, %v2229
      %v2231 = vpop.f32.mrf.mxu0
      %2232 = vmatprep.mubr.f32.mxu0 %v1488
      %2233 = vmatmul.mubr.f32.gmra.mxu0 %v1487
      %v2234 = vpop.f32.mrf.mxu0
      %v2235 = vadd.f32 %v2010, %v2234
      %v2236 = vpop.f32.mrf.mxu0
      %2237 = vmatprep.mubr.f32.mxu0 %v1491
      %2238 = vmatmul.mubr.f32.gmra.mxu0 %v1490
      %v2239 = vpop.f32.mrf.mxu0
      %v2240 = vadd.f32 %v2015, %v2239
      %v2241 = vpop.f32.mrf.mxu0
      %2242 = vmatprep.mubr.f32.mxu0 %v1494
      %2243 = vmatmul.mubr.f32.gmra.mxu0 %v1493
      %v2244 = vpop.f32.mrf.mxu0
      %v2245 = vadd.f32 %v2020, %v2244
      %v2246 = vpop.f32.mrf.mxu0
      %2247 = vmatprep.mubr.f32.mxu0 %v1497
      %2248 = vmatmul.mubr.f32.gmra.mxu0 %v1496
      %v2249 = vpop.f32.mrf.mxu0
      %v2250 = vadd.f32 %v2025, %v2249
      %v2251 = vpop.f32.mrf.mxu0
      %2252 = vmatprep.mubr.f32.mxu0 %v1500
      %2253 = vmatmul.mubr.f32.gmra.mxu0 %v1499
      %v2254 = vpop.f32.mrf.mxu0
      %v2255 = vadd.f32 %v2030, %v2254
      %v2256 = vpop.f32.mrf.mxu0
      %2257 = vmatprep.mubr.f32.mxu0 %v1503
      %2258 = vmatmul.mubr.f32.gmra.mxu0 %v1502
      %v2259 = vpop.f32.mrf.mxu0
      %v2260 = vadd.f32 %v2035, %v2259
      %v2261 = vpop.f32.mrf.mxu0
      %2262 = vmatprep.mubr.f32.mxu0 %v1506
      %2263 = vmatmul.mubr.f32.gmra.mxu0 %v1505
      %v2264 = vpop.f32.mrf.mxu0
      %v2265 = vadd.f32 %v2040, %v2264
      %v2266 = vpop.f32.mrf.mxu0
      %2267 = vmatprep.mubr.f32.mxu0 %v1509
      %2268 = vmatmul.mubr.f32.gmra.mxu0 %v1508
      %v2269 = vpop.f32.mrf.mxu0
      %v2270 = vadd.f32 %v2045, %v2269
      %v2271 = vpop.f32.mrf.mxu0
      %2272 = vmatprep.mubr.f32.mxu0 %v1512
      %2273 = vmatmul.mubr.f32.gmra.mxu0 %v1511
      %v2274 = vpop.f32.mrf.mxu0
      %v2275 = vadd.f32 %v2050, %v2274
      %v2276 = vpop.f32.mrf.mxu0
      %2277 = vmatprep.mubr.f32.mxu0 %v1515
      %2278 = vmatmul.mubr.f32.gmra.mxu0 %v1514
      %v2279 = vpop.f32.mrf.mxu0
      %v2280 = vadd.f32 %v2055, %v2279
      %v2281 = vpop.f32.mrf.mxu0
      %2282 = vmatprep.mubr.f32.mxu0 %v1518
      %2283 = vmatmul.mubr.f32.gmra.mxu0 %v1517
      %v2284 = vpop.f32.mrf.mxu0
      %v2285 = vadd.f32 %v2060, %v2284
      %v2286 = vpop.f32.mrf.mxu0
      %2287 = vmatprep.mubr.f32.mxu0 %v1521
      %2288 = vmatmul.mubr.f32.gmra.mxu0 %v1520
      %v2289 = vpop.f32.mrf.mxu0
      %v2290 = vadd.f32 %v2065, %v2289
      %v2291 = vpop.f32.mrf.mxu0
      %2292 = vmatprep.mubr.f32.mxu0 %v1524
      %2293 = vmatmul.mubr.f32.gmra.mxu0 %v1523
      %v2294 = vpop.f32.mrf.mxu0
      %v2295 = vadd.f32 %v2070, %v2294
      %v2296 = vpop.f32.mrf.mxu0
      %2297 = vmatprep.mubr.f32.mxu0 %v1527
      %2298 = vmatmul.mubr.f32.gmra.mxu0 %v1526
      %v2299 = vpop.f32.mrf.mxu0
      %v2300 = vadd.f32 %v2075, %v2299
      %v2301 = vpop.f32.mrf.mxu0
      %2302 = vmatprep.mubr.f32.mxu0 %v1530
      %2303 = vmatmul.mubr.f32.gmra.mxu0 %v1529
      %v2304 = vpop.f32.mrf.mxu0
      %v2305 = vadd.f32 %v2080, %v2304
      %v2306 = vpop.f32.mrf.mxu0
      %2307 = vmatprep.mubr.f32.mxu0 %v1533
      %2308 = vmatmul.mubr.f32.gmra.mxu0 %v1532
      %v2309 = vpop.f32.mrf.mxu0
      %v2310 = vadd.f32 %v2085, %v2309
      %v2311 = vpop.f32.mrf.mxu0
      %2312 = vdwg.mxu0
      %2313 = vmatprep.subr.mxu0 0.0
      %2314 = vmatpush1.msra.mxu0 %v1582
      %2315 = vmatprep.subr.mxu0 0.0
      %2316 = vmatpush1.msra.mxu0 %v1581
      %2317 = vmatprep.subr.mxu0 0.0
      %2318 = vmatpush1.msra.mxu0 %v1580
      %2319 = vmatprep.subr.mxu0 0.0
      %2320 = vmatpush1.msra.mxu0 %v1579
      %2321 = vmatprep.subr.mxu0 0.0
      %2322 = vmatpush1.msra.mxu0 %v1578
      %2323 = vmatprep.subr.mxu0 0.0
      %2324 = vmatpush1.msra.mxu0 %v1577
      %2325 = vmatprep.subr.mxu0 0.0
      %2326 = vmatpush1.msra.mxu0 %v1576
      %2327 = vmatprep.subr.mxu0 0.0
      %2328 = vmatpush1.msra.mxu0 %v1575
      %2329 = vmatprep.subr.mxu0 0.0
      %2330 = vmatpush1.msra.mxu0 %v1574
      %2331 = vmatprep.subr.mxu0 0.0
      %2332 = vmatpush1.msra.mxu0 %v1573
      %2333 = vmatprep.subr.mxu0 0.0
      %2334 = vmatpush1.msra.mxu0 %v1572
      %2335 = vmatprep.subr.mxu0 0.0
      %2336 = vmatpush1.msra.mxu0 %v1571
      %2337 = vmatprep.subr.mxu0 0.0
      %2338 = vmatpush1.msra.mxu0 %v1570
      %2339 = vmatprep.subr.mxu0 0.0
      %2340 = vmatpush1.msra.mxu0 %v1569
      %2341 = vmatprep.subr.mxu0 0.0
      %2342 = vmatpush1.msra.mxu0 %v1568
      %2343 = vmatprep.subr.mxu0 0.0
      %2344 = vmatpush1.msra.mxu0 %v1567
      %2345 = vmatprep.subr.mxu0 0.0
      %2346 = vmatpush2.msra.mxu0 0.0
      %2347 = vmatprep.subr.mxu0 0.0
      %2348 = vmatpush2.msra.mxu0 0.0
      %2349 = vmatprep.subr.mxu0 0.0
      %2350 = vmatpush2.msra.mxu0 0.0
      %2351 = vmatprep.subr.mxu0 0.0
      %2352 = vmatpush2.msra.mxu0 0.0
      %2353 = vmatprep.subr.mxu0 0.0
      %2354 = vmatpush2.msra.mxu0 0.0
      %2355 = vmatprep.subr.mxu0 0.0
      %2356 = vmatpush2.msra.mxu0 0.0
      %2357 = vmatprep.subr.mxu0 0.0
      %2358 = vmatpush2.msra.mxu0 0.0
      %2359 = vmatprep.subr.mxu0 0.0
      %2360 = vmatpush2.msra.mxu0 0.0
      %2361 = vmatprep.subr.mxu0 0.0
      %2362 = vmatpush2.msra.mxu0 0.0
      %2363 = vmatprep.subr.mxu0 0.0
      %2364 = vmatpush2.msra.mxu0 0.0
      %2365 = vmatprep.subr.mxu0 0.0
      %2366 = vmatpush2.msra.mxu0 0.0
      %2367 = vmatprep.subr.mxu0 0.0
      %2368 = vmatpush2.msra.mxu0 0.0
      %2369 = vmatprep.subr.mxu0 0.0
      %2370 = vmatpush2.msra.mxu0 0.0
      %2371 = vmatprep.subr.mxu0 0.0
      %2372 = vmatpush2.msra.mxu0 0.0
      %2373 = vmatprep.subr.mxu0 0.0
      %2374 = vmatpush2.msra.mxu0 0.0
      %2375 = vmatprep.subr.mxu0 0.0
      %2376 = vmatpush2.msra.mxu0 0.0
      %2377 = vmatprep.mubr.f32.mxu0 0.0
      %2378 = vmatmul.mubr.f32.gmra.mxu0 %v1441
      %v2379 = vpop.f32.mrf.mxu0
      %v2380 = vadd.f32 %v2155, %v2379
      %v2381 = vpop.f32.mrf.mxu0
      %2382 = vmatprep.mubr.f32.mxu0 0.0
      %2383 = vmatmul.mubr.f32.gmra.mxu0 %v1444
      %v2384 = vpop.f32.mrf.mxu0
      %v2385 = vadd.f32 %v2160, %v2384
      %v2386 = vpop.f32.mrf.mxu0
      %2387 = vmatprep.mubr.f32.mxu0 0.0
      %2388 = vmatmul.mubr.f32.gmra.mxu0 %v1447
      %v2389 = vpop.f32.mrf.mxu0
      %v2390 = vadd.f32 %v2165, %v2389
      %v2391 = vpop.f32.mrf.mxu0
      %2392 = vmatprep.mubr.f32.mxu0 0.0
      %2393 = vmatmul.mubr.f32.gmra.mxu0 %v1450
      %v2394 = vpop.f32.mrf.mxu0
      %v2395 = vadd.f32 %v2170, %v2394
      %v2396 = vpop.f32.mrf.mxu0
      %2397 = vmatprep.mubr.f32.mxu0 0.0
      %2398 = vmatmul.mubr.f32.gmra.mxu0 %v1453
      %v2399 = vpop.f32.mrf.mxu0
      %v2400 = vadd.f32 %v2175, %v2399
      %v2401 = vpop.f32.mrf.mxu0
      %2402 = vmatprep.mubr.f32.mxu0 0.0
      %2403 = vmatmul.mubr.f32.gmra.mxu0 %v1456
      %v2404 = vpop.f32.mrf.mxu0
      %v2405 = vadd.f32 %v2180, %v2404
      %v2406 = vpop.f32.mrf.mxu0
      %2407 = vmatprep.mubr.f32.mxu0 0.0
      %2408 = vmatmul.mubr.f32.gmra.mxu0 %v1459
      %v2409 = vpop.f32.mrf.mxu0
      %v2410 = vadd.f32 %v2185, %v2409
      %v2411 = vpop.f32.mrf.mxu0
      %2412 = vmatprep.mubr.f32.mxu0 0.0
      %2413 = vmatmul.mubr.f32.gmra.mxu0 %v1462
      %v2414 = vpop.f32.mrf.mxu0
      %v2415 = vadd.f32 %v2190, %v2414
      %v2416 = vpop.f32.mrf.mxu0
      %2417 = vmatprep.mubr.f32.mxu0 0.0
      %2418 = vmatmul.mubr.f32.gmra.mxu0 %v1465
      %v2419 = vpop.f32.mrf.mxu0
      %v2420 = vadd.f32 %v2195, %v2419
      %v2421 = vpop.f32.mrf.mxu0
      %2422 = vmatprep.mubr.f32.mxu0 0.0
      %2423 = vmatmul.mubr.f32.gmra.mxu0 %v1468
      %v2424 = vpop.f32.mrf.mxu0
      %v2425 = vadd.f32 %v2200, %v2424
      %v2426 = vpop.f32.mrf.mxu0
      %2427 = vmatprep.mubr.f32.mxu0 0.0
      %2428 = vmatmul.mubr.f32.gmra.mxu0 %v1471
      %v2429 = vpop.f32.mrf.mxu0
      %v2430 = vadd.f32 %v2205, %v2429
      %v2431 = vpop.f32.mrf.mxu0
      %2432 = vmatprep.mubr.f32.mxu0 0.0
      %2433 = vmatmul.mubr.f32.gmra.mxu0 %v1474
      %v2434 = vpop.f32.mrf.mxu0
      %v2435 = vadd.f32 %v2210, %v2434
      %v2436 = vpop.f32.mrf.mxu0
      %2437 = vmatprep.mubr.f32.mxu0 0.0
      %2438 = vmatmul.mubr.f32.gmra.mxu0 %v1477
      %v2439 = vpop.f32.mrf.mxu0
      %v2440 = vadd.f32 %v2215, %v2439
      %v2441 = vpop.f32.mrf.mxu0
      %2442 = vmatprep.mubr.f32.mxu0 0.0
      %2443 = vmatmul.mubr.f32.gmra.mxu0 %v1480
      %v2444 = vpop.f32.mrf.mxu0
      %v2445 = vadd.f32 %v2220, %v2444
      %v2446 = vpop.f32.mrf.mxu0
      %2447 = vmatprep.mubr.f32.mxu0 0.0
      %2448 = vmatmul.mubr.f32.gmra.mxu0 %v1483
      %v2449 = vpop.f32.mrf.mxu0
      %v2450 = vadd.f32 %v2225, %v2449
      %v2451 = vpop.f32.mrf.mxu0
      %2452 = vmatprep.mubr.f32.mxu0 0.0
      %2453 = vmatmul.mubr.f32.gmra.mxu0 %v1486
      %v2454 = vpop.f32.mrf.mxu0
      %v2455 = vadd.f32 %v2230, %v2454
      %v2456 = vpop.f32.mrf.mxu0
      %2457 = vmatprep.mubr.f32.mxu0 0.0
      %2458 = vmatmul.mubr.f32.gmra.mxu0 %v1489
      %v2459 = vpop.f32.mrf.mxu0
      %v2460 = vadd.f32 %v2235, %v2459
      %v2461 = vpop.f32.mrf.mxu0
      %2462 = vmatprep.mubr.f32.mxu0 0.0
      %2463 = vmatmul.mubr.f32.gmra.mxu0 %v1492
      %v2464 = vpop.f32.mrf.mxu0
      %v2465 = vadd.f32 %v2240, %v2464
      %v2466 = vpop.f32.mrf.mxu0
      %2467 = vmatprep.mubr.f32.mxu0 0.0
      %2468 = vmatmul.mubr.f32.gmra.mxu0 %v1495
      %v2469 = vpop.f32.mrf.mxu0
      %v2470 = vadd.f32 %v2245, %v2469
      %v2471 = vpop.f32.mrf.mxu0
      %2472 = vmatprep.mubr.f32.mxu0 0.0
      %2473 = vmatmul.mubr.f32.gmra.mxu0 %v1498
      %v2474 = vpop.f32.mrf.mxu0
      %v2475 = vadd.f32 %v2250, %v2474
      %v2476 = vpop.f32.mrf.mxu0
      %2477 = vmatprep.mubr.f32.mxu0 0.0
      %2478 = vmatmul.mubr.f32.gmra.mxu0 %v1501
      %v2479 = vpop.f32.mrf.mxu0
      %v2480 = vadd.f32 %v2255, %v2479
      %v2481 = vpop.f32.mrf.mxu0
      %2482 = vmatprep.mubr.f32.mxu0 0.0
      %2483 = vmatmul.mubr.f32.gmra.mxu0 %v1504
      %v2484 = vpop.f32.mrf.mxu0
      %v2485 = vadd.f32 %v2260, %v2484
      %v2486 = vpop.f32.mrf.mxu0
      %2487 = vmatprep.mubr.f32.mxu0 0.0
      %2488 = vmatmul.mubr.f32.gmra.mxu0 %v1507
      %v2489 = vpop.f32.mrf.mxu0
      %v2490 = vadd.f32 %v2265, %v2489
      %v2491 = vpop.f32.mrf.mxu0
      %2492 = vmatprep.mubr.f32.mxu0 0.0
      %2493 = vmatmul.mubr.f32.gmra.mxu0 %v1510
      %v2494 = vpop.f32.mrf.mxu0
      %v2495 = vadd.f32 %v2270, %v2494
      %v2496 = vpop.f32.mrf.mxu0
      %2497 = vmatprep.mubr.f32.mxu0 0.0
      %2498 = vmatmul.mubr.f32.gmra.mxu0 %v1513
      %v2499 = vpop.f32.mrf.mxu0
      %v2500 = vadd.f32 %v2275, %v2499
      %v2501 = vpop.f32.mrf.mxu0
      %2502 = vmatprep.mubr.f32.mxu0 0.0
      %2503 = vmatmul.mubr.f32.gmra.mxu0 %v1516
      %v2504 = vpop.f32.mrf.mxu0
      %v2505 = vadd.f32 %v2280, %v2504
      %v2506 = vpop.f32.mrf.mxu0
      %2507 = vmatprep.mubr.f32.mxu0 0.0
      %2508 = vmatmul.mubr.f32.gmra.mxu0 %v1519
      %v2509 = vpop.f32.mrf.mxu0
      %v2510 = vadd.f32 %v2285, %v2509
      %v2511 = vpop.f32.mrf.mxu0
      %2512 = vmatprep.mubr.f32.mxu0 0.0
      %2513 = vmatmul.mubr.f32.gmra.mxu0 %v1522
      %v2514 = vpop.f32.mrf.mxu0
      %v2515 = vadd.f32 %v2290, %v2514
      %v2516 = vpop.f32.mrf.mxu0
      %2517 = vmatprep.mubr.f32.mxu0 0.0
      %2518 = vmatmul.mubr.f32.gmra.mxu0 %v1525
      %v2519 = vpop.f32.mrf.mxu0
      %v2520 = vadd.f32 %v2295, %v2519
      %v2521 = vpop.f32.mrf.mxu0
      %2522 = vmatprep.mubr.f32.mxu0 0.0
      %2523 = vmatmul.mubr.f32.gmra.mxu0 %v1528
      %v2524 = vpop.f32.mrf.mxu0
      %v2525 = vadd.f32 %v2300, %v2524
      %v2526 = vpop.f32.mrf.mxu0
      %2527 = vmatprep.mubr.f32.mxu0 0.0
      %2528 = vmatmul.mubr.f32.gmra.mxu0 %v1531
      %v2529 = vpop.f32.mrf.mxu0
      %v2530 = vadd.f32 %v2305, %v2529
      %v2531 = vpop.f32.mrf.mxu0
      %2532 = vmatprep.mubr.f32.mxu0 0.0
      %2533 = vmatmul.mubr.f32.gmra.mxu0 %v1534
      %v2534 = vpop.f32.mrf.mxu0
      %v2535 = vadd.f32 %v2310, %v2534
      %v2536 = vpop.f32.mrf.mxu0
      %2537 = vdwg.mxu0
      %v2538 = vld [vmem:[#allocation2 + $0x60] sm:$0xff]
      %v2539 = vld [vmem:[#allocation2 + $0x68] sm:$0xff]
      %v2540 = vld [vmem:[#allocation2 + $0x70] sm:$0xff]
      %v2541 = vld [vmem:[#allocation2 + $0x78] sm:$0xff]
      %v2542 = vld [vmem:[#allocation2 + $0x80] sm:$0xff]
      %v2543 = vld [vmem:[#allocation2 + $0x88] sm:$0xff]
      %v2544 = vld [vmem:[#allocation2 + $0x90] sm:$0xff]
      %v2545 = vld [vmem:[#allocation2 + $0x98] sm:$0xff]
      %v2546 = vld [vmem:[#allocation2 + $0xa0] sm:$0xff]
      %v2547 = vld [vmem:[#allocation2 + $0xa8] sm:$0xff]
      %v2548 = vld [vmem:[#allocation2 + $0xb0] sm:$0xff]
      %v2549 = vld [vmem:[#allocation2 + $0xb8] sm:$0xff]
      %v2550 = vld [vmem:[#allocation2 + $0xc0] sm:$0xff]
      %v2551 = vld [vmem:[#allocation2 + $0xc8] sm:$0xff]
      %v2552 = vld [vmem:[#allocation2 + $0xd0] sm:$0xff]
      %v2553 = vld [vmem:[#allocation2 + $0xd8] sm:$0xff]
      %v2554 = vld [vmem:[#allocation2 + $0xe0] sm:$0xff]
      %v2555 = vld [vmem:[#allocation2 + $0xe8] sm:$0xff]
      %v2556 = vld [vmem:[#allocation2 + $0xf0] sm:$0xff]
      %v2557 = vld [vmem:[#allocation2 + $0xf8] sm:$0xff]
      %v2558 = vld [vmem:[#allocation2 + $0x100] sm:$0xff]
      %v2559 = vld [vmem:[#allocation2 + $0x108] sm:$0xff]
      %v2560 = vld [vmem:[#allocation2 + $0x110] sm:$0xff]
      %v2561 = vld [vmem:[#allocation2 + $0x118] sm:$0xff]
      %v2562 = vld [vmem:[#allocation2 + $0x120] sm:$0xff]
      %v2563 = vld [vmem:[#allocation2 + $0x128] sm:$0xff]
      %v2564 = vld [vmem:[#allocation2 + $0x130] sm:$0xff]
      %v2565 = vld [vmem:[#allocation2 + $0x138] sm:$0xff]
      %v2566 = vld [vmem:[#allocation2 + $0x140] sm:$0xff]
      %v2567 = vld [vmem:[#allocation2 + $0x148] sm:$0xff]
      %v2568 = vld [vmem:[#allocation2 + $0x150] sm:$0xff]
      %v2569 = vld [vmem:[#allocation2 + $0x158] sm:$0xff]
      %v2570 = vld [vmem:[#allocation2 + $0x160] sm:$0xff]
      %v2571 = vld [vmem:[#allocation2 + $0x168] sm:$0xff]
      %v2572 = vld [vmem:[#allocation2 + $0x170] sm:$0xff]
      %v2573 = vld [vmem:[#allocation2 + $0x178] sm:$0xff]
      %v2574 = vld [vmem:[#allocation2 + $0x180] sm:$0xff]
      %v2575 = vld [vmem:[#allocation2 + $0x188] sm:$0xff]
      %v2576 = vld [vmem:[#allocation2 + $0x190] sm:$0xff]
      %v2577 = vld [vmem:[#allocation2 + $0x198] sm:$0xff]
      %v2578 = vld [vmem:[#allocation2 + $0x1a0] sm:$0xff]
      %v2579 = vld [vmem:[#allocation2 + $0x1a8] sm:$0xff]
      %v2580 = vld [vmem:[#allocation2 + $0x1b0] sm:$0xff]
      %v2581 = vld [vmem:[#allocation2 + $0x1b8] sm:$0xff]
      %v2582 = vld [vmem:[#allocation2 + $0x1c0] sm:$0xff]
      %v2583 = vld [vmem:[#allocation2 + $0x1c8] sm:$0xff]
      %v2584 = vld [vmem:[#allocation2 + $0x1d0] sm:$0xff]
      %v2585 = vld [vmem:[#allocation2 + $0x1d8] sm:$0xff]
      %v2586 = vld [vmem:[#allocation2 + $0x1e0] sm:$0xff]
      %v2587 = vld [vmem:[#allocation2 + $0x1e8] sm:$0xff]
      %v2588 = vld [vmem:[#allocation2 + $0x1f0] sm:$0xff]
      %v2589 = vld [vmem:[#allocation2 + $0x1f8] sm:$0xff]
      %v2590 = vld [vmem:[#allocation2 + $0x200] sm:$0xff]
      %v2591 = vld [vmem:[#allocation2 + $0x208] sm:$0xff]
      %v2592 = vld [vmem:[#allocation2 + $0x210] sm:$0xff]
      %v2593 = vld [vmem:[#allocation2 + $0x218] sm:$0xff]
      %v2594 = vld [vmem:[#allocation2 + $0x220] sm:$0xff]
      %v2595 = vld [vmem:[#allocation2 + $0x228] sm:$0xff]
      %v2596 = vld [vmem:[#allocation2 + $0x230] sm:$0xff]
      %v2597 = vld [vmem:[#allocation2 + $0x238] sm:$0xff]
      %v2598 = vld [vmem:[#allocation2 + $0x240] sm:$0xff]
      %v2599 = vld [vmem:[#allocation2 + $0x248] sm:$0xff]
      %v2600 = vld [vmem:[#allocation2 + $0x250] sm:$0xff]
      %v2601 = vld [vmem:[#allocation2 + $0x258] sm:$0xff]
      %v2602 = vld [vmem:[#allocation2 + $0x260] sm:$0xff]
      %v2603 = vld [vmem:[#allocation2 + $0x268] sm:$0xff]
      %v2604 = vld [vmem:[#allocation2 + $0x270] sm:$0xff]
      %v2605 = vld [vmem:[#allocation2 + $0x278] sm:$0xff]
      %v2606 = vld [vmem:[#allocation2 + $0x280] sm:$0xff]
      %v2607 = vld [vmem:[#allocation2 + $0x288] sm:$0xff]
      %v2608 = vld [vmem:[#allocation2 + $0x290] sm:$0xff]
      %v2609 = vld [vmem:[#allocation2 + $0x298] sm:$0xff]
      %v2610 = vld [vmem:[#allocation2 + $0x2a0] sm:$0xff]
      %v2611 = vld [vmem:[#allocation2 + $0x2a8] sm:$0xff]
      %v2612 = vld [vmem:[#allocation2 + $0x2b0] sm:$0xff]
      %v2613 = vld [vmem:[#allocation2 + $0x2b8] sm:$0xff]
      %v2614 = vld [vmem:[#allocation2 + $0x2c0] sm:$0xff]
      %v2615 = vld [vmem:[#allocation2 + $0x2c8] sm:$0xff]
      %v2616 = vld [vmem:[#allocation2 + $0x2d0] sm:$0xff]
      %v2617 = vld [vmem:[#allocation2 + $0x2d8] sm:$0xff]
      %v2618 = vld [vmem:[#allocation2 + $0x2e0] sm:$0xff]
      %v2619 = vld [vmem:[#allocation2 + $0x2e8] sm:$0xff]
      %v2620 = vld [vmem:[#allocation2 + $0x2f0] sm:$0xff]
      %v2621 = vld [vmem:[#allocation2 + $0x2f8] sm:$0xff]
      %v2622 = vld [vmem:[#allocation2 + $0x300] sm:$0xff]
      %v2623 = vld [vmem:[#allocation2 + $0x308] sm:$0xff]
      %v2624 = vld [vmem:[#allocation2 + $0x310] sm:$0xff]
      %v2625 = vld [vmem:[#allocation2 + $0x318] sm:$0xff]
      %v2626 = vld [vmem:[#allocation2 + $0x320] sm:$0xff]
      %v2627 = vld [vmem:[#allocation2 + $0x328] sm:$0xff]
      %v2628 = vld [vmem:[#allocation2 + $0x330] sm:$0xff]
      %v2629 = vld [vmem:[#allocation2 + $0x338] sm:$0xff]
      %v2630 = vld [vmem:[#allocation2 + $0x340] sm:$0xff]
      %v2631 = vld [vmem:[#allocation2 + $0x348] sm:$0xff]
      %v2632 = vld [vmem:[#allocation2 + $0x350] sm:$0xff]
      %v2633 = vld [vmem:[#allocation2 + $0x358] sm:$0xff]
      %s2634 = scalar_lea.vmem %s3, 768
      %v2635 = vld [vmem:[%s2634] sm:$0xff]
      %v2636 = vld [vmem:[%s2634 + $0x8] sm:$0xff]
      %v2637 = vld [vmem:[%s2634 + $0x10] sm:$0xff]
      %v2638 = vld [vmem:[%s2634 + $0x18] sm:$0xff]
      %v2639 = vld [vmem:[%s2634 + $0x20] sm:$0xff]
      %v2640 = vld [vmem:[%s2634 + $0x28] sm:$0xff]
      %v2641 = vld [vmem:[%s2634 + $0x30] sm:$0xff]
      %v2642 = vld [vmem:[%s2634 + $0x38] sm:$0xff]
      %v2643 = vld [vmem:[%s2634 + $0x40] sm:$0xff]
      %v2644 = vld [vmem:[%s2634 + $0x48] sm:$0xff]
      %v2645 = vld [vmem:[%s2634 + $0x50] sm:$0xff]
      %v2646 = vld [vmem:[%s2634 + $0x58] sm:$0xff]
      %v2647 = vld [vmem:[%s2634 + $0x60] sm:$0xff]
      %v2648 = vld [vmem:[%s2634 + $0x68] sm:$0xff]
      %v2649 = vld [vmem:[%s2634 + $0x70] sm:$0xff]
      %v2650 = vld [vmem:[%s2634 + $0x78] sm:$0xff]
      %v2651 = vld [vmem:[%s2634 + $0x80] sm:$0xff]
      %v2652 = vld [vmem:[%s2634 + $0x88] sm:$0xff]
      %v2653 = vld [vmem:[%s2634 + $0x90] sm:$0xff]
      %v2654 = vld [vmem:[%s2634 + $0x98] sm:$0xff]
      %v2655 = vld [vmem:[%s2634 + $0xa0] sm:$0xff]
      %v2656 = vld [vmem:[%s2634 + $0xa8] sm:$0xff]
      %v2657 = vld [vmem:[%s2634 + $0xb0] sm:$0xff]
      %v2658 = vld [vmem:[%s2634 + $0xb8] sm:$0xff]
      %v2659 = vld [vmem:[%s2634 + $0xc0] sm:$0xff]
      %v2660 = vld [vmem:[%s2634 + $0xc8] sm:$0xff]
      %v2661 = vld [vmem:[%s2634 + $0xd0] sm:$0xff]
      %v2662 = vld [vmem:[%s2634 + $0xd8] sm:$0xff]
      %v2663 = vld [vmem:[%s2634 + $0xe0] sm:$0xff]
      %v2664 = vld [vmem:[%s2634 + $0xe8] sm:$0xff]
      %v2665 = vld [vmem:[%s2634 + $0xf0] sm:$0xff]
      %v2666 = vld [vmem:[%s2634 + $0xf8] sm:$0xff]
      %v2667 = vld [vmem:[%s2634 + $0x100] sm:$0xff]
      %v2668 = vld [vmem:[%s2634 + $0x108] sm:$0xff]
      %v2669 = vld [vmem:[%s2634 + $0x110] sm:$0xff]
      %v2670 = vld [vmem:[%s2634 + $0x118] sm:$0xff]
      %v2671 = vld [vmem:[%s2634 + $0x120] sm:$0xff]
      %v2672 = vld [vmem:[%s2634 + $0x128] sm:$0xff]
      %v2673 = vld [vmem:[%s2634 + $0x130] sm:$0xff]
      %v2674 = vld [vmem:[%s2634 + $0x138] sm:$0xff]
      %v2675 = vld [vmem:[%s2634 + $0x140] sm:$0xff]
      %v2676 = vld [vmem:[%s2634 + $0x148] sm:$0xff]
      %v2677 = vld [vmem:[%s2634 + $0x150] sm:$0xff]
      %v2678 = vld [vmem:[%s2634 + $0x158] sm:$0xff]
      %v2679 = vld [vmem:[%s2634 + $0x160] sm:$0xff]
      %v2680 = vld [vmem:[%s2634 + $0x168] sm:$0xff]
      %v2681 = vld [vmem:[%s2634 + $0x170] sm:$0xff]
      %v2682 = vld [vmem:[%s2634 + $0x178] sm:$0xff]
      %2683 = vmatprep.subr.mxu0 0.0
      %2684 = vmatpush1.msra.mxu0 %v2650
      %2685 = vmatprep.subr.mxu0 0.0
      %2686 = vmatpush1.msra.mxu0 %v2649
      %2687 = vmatprep.subr.mxu0 0.0
      %2688 = vmatpush1.msra.mxu0 %v2648
      %2689 = vmatprep.subr.mxu0 0.0
      %2690 = vmatpush1.msra.mxu0 %v2647
      %2691 = vmatprep.subr.mxu0 0.0
      %2692 = vmatpush1.msra.mxu0 %v2646
      %2693 = vmatprep.subr.mxu0 0.0
      %2694 = vmatpush1.msra.mxu0 %v2645
      %2695 = vmatprep.subr.mxu0 0.0
      %2696 = vmatpush1.msra.mxu0 %v2644
      %2697 = vmatprep.subr.mxu0 0.0
      %2698 = vmatpush1.msra.mxu0 %v2643
      %2699 = vmatprep.subr.mxu0 0.0
      %2700 = vmatpush1.msra.mxu0 %v2642
      %2701 = vmatprep.subr.mxu0 0.0
      %2702 = vmatpush1.msra.mxu0 %v2641
      %2703 = vmatprep.subr.mxu0 0.0
      %2704 = vmatpush1.msra.mxu0 %v2640
      %2705 = vmatprep.subr.mxu0 0.0
      %2706 = vmatpush1.msra.mxu0 %v2639
      %2707 = vmatprep.subr.mxu0 0.0
      %2708 = vmatpush1.msra.mxu0 %v2638
      %2709 = vmatprep.subr.mxu0 0.0
      %2710 = vmatpush1.msra.mxu0 %v2637
      %2711 = vmatprep.subr.mxu0 0.0
      %2712 = vmatpush1.msra.mxu0 %v2636
      %2713 = vmatprep.subr.mxu0 0.0
      %2714 = vmatpush1.msra.mxu0 %v2635
      %2715 = vmatprep.subr.mxu0 0.0
      %2716 = vmatpush2.msra.mxu0 %v2666
      %2717 = vmatprep.subr.mxu0 0.0
      %2718 = vmatpush2.msra.mxu0 %v2665
      %2719 = vmatprep.subr.mxu0 0.0
      %2720 = vmatpush2.msra.mxu0 %v2664
      %2721 = vmatprep.subr.mxu0 0.0
      %2722 = vmatpush2.msra.mxu0 %v2663
      %2723 = vmatprep.subr.mxu0 0.0
      %2724 = vmatpush2.msra.mxu0 %v2662
      %2725 = vmatprep.subr.mxu0 0.0
      %2726 = vmatpush2.msra.mxu0 %v2661
      %2727 = vmatprep.subr.mxu0 0.0
      %2728 = vmatpush2.msra.mxu0 %v2660
      %2729 = vmatprep.subr.mxu0 0.0
      %2730 = vmatpush2.msra.mxu0 %v2659
      %2731 = vmatprep.subr.mxu0 0.0
      %2732 = vmatpush2.msra.mxu0 %v2658
      %2733 = vmatprep.subr.mxu0 0.0
      %2734 = vmatpush2.msra.mxu0 %v2657
      %2735 = vmatprep.subr.mxu0 0.0
      %2736 = vmatpush2.msra.mxu0 %v2656
      %2737 = vmatprep.subr.mxu0 0.0
      %2738 = vmatpush2.msra.mxu0 %v2655
      %2739 = vmatprep.subr.mxu0 0.0
      %2740 = vmatpush2.msra.mxu0 %v2654
      %2741 = vmatprep.subr.mxu0 0.0
      %2742 = vmatpush2.msra.mxu0 %v2653
      %2743 = vmatprep.subr.mxu0 0.0
      %2744 = vmatpush2.msra.mxu0 %v2652
      %2745 = vmatprep.subr.mxu0 0.0
      %2746 = vmatpush2.msra.mxu0 %v2651
      %2747 = vmatprep.mubr.f32.mxu0 %v2539
      %2748 = vmatmul.mubr.f32.gmra.mxu0 %v2538
      %v2749 = vpop.f32.mrf.mxu0
      %v2750 = vadd.f32 0.0, %v2749
      %v2751 = vpop.f32.mrf.mxu0
      %2752 = vmatprep.mubr.f32.mxu0 %v2542
      %2753 = vmatmul.mubr.f32.gmra.mxu0 %v2541
      %v2754 = vpop.f32.mrf.mxu0
      %v2755 = vadd.f32 0.0, %v2754
      %v2756 = vpop.f32.mrf.mxu0
      %2757 = vmatprep.mubr.f32.mxu0 %v2545
      %2758 = vmatmul.mubr.f32.gmra.mxu0 %v2544
      %v2759 = vpop.f32.mrf.mxu0
      %v2760 = vadd.f32 0.0, %v2759
      %v2761 = vpop.f32.mrf.mxu0
      %2762 = vmatprep.mubr.f32.mxu0 %v2548
      %2763 = vmatmul.mubr.f32.gmra.mxu0 %v2547
      %v2764 = vpop.f32.mrf.mxu0
      %v2765 = vadd.f32 0.0, %v2764
      %v2766 = vpop.f32.mrf.mxu0
      %2767 = vmatprep.mubr.f32.mxu0 %v2551
      %2768 = vmatmul.mubr.f32.gmra.mxu0 %v2550
      %v2769 = vpop.f32.mrf.mxu0
      %v2770 = vadd.f32 0.0, %v2769
      %v2771 = vpop.f32.mrf.mxu0
      %2772 = vmatprep.mubr.f32.mxu0 %v2554
      %2773 = vmatmul.mubr.f32.gmra.mxu0 %v2553
      %v2774 = vpop.f32.mrf.mxu0
      %v2775 = vadd.f32 0.0, %v2774
      %v2776 = vpop.f32.mrf.mxu0
      %2777 = vmatprep.mubr.f32.mxu0 %v2557
      %2778 = vmatmul.mubr.f32.gmra.mxu0 %v2556
      %v2779 = vpop.f32.mrf.mxu0
      %v2780 = vadd.f32 0.0, %v2779
      %v2781 = vpop.f32.mrf.mxu0
      %2782 = vmatprep.mubr.f32.mxu0 %v2560
      %2783 = vmatmul.mubr.f32.gmra.mxu0 %v2559
      %v2784 = vpop.f32.mrf.mxu0
      %v2785 = vadd.f32 0.0, %v2784
      %v2786 = vpop.f32.mrf.mxu0
      %2787 = vmatprep.mubr.f32.mxu0 %v2563
      %2788 = vmatmul.mubr.f32.gmra.mxu0 %v2562
      %v2789 = vpop.f32.mrf.mxu0
      %v2790 = vadd.f32 0.0, %v2789
      %v2791 = vpop.f32.mrf.mxu0
      %2792 = vmatprep.mubr.f32.mxu0 %v2566
      %2793 = vmatmul.mubr.f32.gmra.mxu0 %v2565
      %v2794 = vpop.f32.mrf.mxu0
      %v2795 = vadd.f32 0.0, %v2794
      %v2796 = vpop.f32.mrf.mxu0
      %2797 = vmatprep.mubr.f32.mxu0 %v2569
      %2798 = vmatmul.mubr.f32.gmra.mxu0 %v2568
      %v2799 = vpop.f32.mrf.mxu0
      %v2800 = vadd.f32 0.0, %v2799
      %v2801 = vpop.f32.mrf.mxu0
      %2802 = vmatprep.mubr.f32.mxu0 %v2572
      %2803 = vmatmul.mubr.f32.gmra.mxu0 %v2571
      %v2804 = vpop.f32.mrf.mxu0
      %v2805 = vadd.f32 0.0, %v2804
      %v2806 = vpop.f32.mrf.mxu0
      %2807 = vmatprep.mubr.f32.mxu0 %v2575
      %2808 = vmatmul.mubr.f32.gmra.mxu0 %v2574
      %v2809 = vpop.f32.mrf.mxu0
      %v2810 = vadd.f32 0.0, %v2809
      %v2811 = vpop.f32.mrf.mxu0
      %2812 = vmatprep.mubr.f32.mxu0 %v2578
      %2813 = vmatmul.mubr.f32.gmra.mxu0 %v2577
      %v2814 = vpop.f32.mrf.mxu0
      %v2815 = vadd.f32 0.0, %v2814
      %v2816 = vpop.f32.mrf.mxu0
      %2817 = vmatprep.mubr.f32.mxu0 %v2581
      %2818 = vmatmul.mubr.f32.gmra.mxu0 %v2580
      %v2819 = vpop.f32.mrf.mxu0
      %v2820 = vadd.f32 0.0, %v2819
      %v2821 = vpop.f32.mrf.mxu0
      %2822 = vmatprep.mubr.f32.mxu0 %v2584
      %2823 = vmatmul.mubr.f32.gmra.mxu0 %v2583
      %v2824 = vpop.f32.mrf.mxu0
      %v2825 = vadd.f32 0.0, %v2824
      %v2826 = vpop.f32.mrf.mxu0
      %2827 = vmatprep.mubr.f32.mxu0 %v2587
      %2828 = vmatmul.mubr.f32.gmra.mxu0 %v2586
      %v2829 = vpop.f32.mrf.mxu0
      %v2830 = vadd.f32 0.0, %v2829
      %v2831 = vpop.f32.mrf.mxu0
      %2832 = vmatprep.mubr.f32.mxu0 %v2590
      %2833 = vmatmul.mubr.f32.gmra.mxu0 %v2589
      %v2834 = vpop.f32.mrf.mxu0
      %v2835 = vadd.f32 0.0, %v2834
      %v2836 = vpop.f32.mrf.mxu0
      %2837 = vmatprep.mubr.f32.mxu0 %v2593
      %2838 = vmatmul.mubr.f32.gmra.mxu0 %v2592
      %v2839 = vpop.f32.mrf.mxu0
      %v2840 = vadd.f32 0.0, %v2839
      %v2841 = vpop.f32.mrf.mxu0
      %2842 = vmatprep.mubr.f32.mxu0 %v2596
      %2843 = vmatmul.mubr.f32.gmra.mxu0 %v2595
      %v2844 = vpop.f32.mrf.mxu0
      %v2845 = vadd.f32 0.0, %v2844
      %v2846 = vpop.f32.mrf.mxu0
      %2847 = vmatprep.mubr.f32.mxu0 %v2599
      %2848 = vmatmul.mubr.f32.gmra.mxu0 %v2598
      %v2849 = vpop.f32.mrf.mxu0
      %v2850 = vadd.f32 0.0, %v2849
      %v2851 = vpop.f32.mrf.mxu0
      %2852 = vmatprep.mubr.f32.mxu0 %v2602
      %2853 = vmatmul.mubr.f32.gmra.mxu0 %v2601
      %v2854 = vpop.f32.mrf.mxu0
      %v2855 = vadd.f32 0.0, %v2854
      %v2856 = vpop.f32.mrf.mxu0
      %2857 = vmatprep.mubr.f32.mxu0 %v2605
      %2858 = vmatmul.mubr.f32.gmra.mxu0 %v2604
      %v2859 = vpop.f32.mrf.mxu0
      %v2860 = vadd.f32 0.0, %v2859
      %v2861 = vpop.f32.mrf.mxu0
      %2862 = vmatprep.mubr.f32.mxu0 %v2608
      %2863 = vmatmul.mubr.f32.gmra.mxu0 %v2607
      %v2864 = vpop.f32.mrf.mxu0
      %v2865 = vadd.f32 0.0, %v2864
      %v2866 = vpop.f32.mrf.mxu0
      %2867 = vmatprep.mubr.f32.mxu0 %v2611
      %2868 = vmatmul.mubr.f32.gmra.mxu0 %v2610
      %v2869 = vpop.f32.mrf.mxu0
      %v2870 = vadd.f32 0.0, %v2869
      %v2871 = vpop.f32.mrf.mxu0
      %2872 = vmatprep.mubr.f32.mxu0 %v2614
      %2873 = vmatmul.mubr.f32.gmra.mxu0 %v2613
      %v2874 = vpop.f32.mrf.mxu0
      %v2875 = vadd.f32 0.0, %v2874
      %v2876 = vpop.f32.mrf.mxu0
      %2877 = vmatprep.mubr.f32.mxu0 %v2617
      %2878 = vmatmul.mubr.f32.gmra.mxu0 %v2616
      %v2879 = vpop.f32.mrf.mxu0
      %v2880 = vadd.f32 0.0, %v2879
      %v2881 = vpop.f32.mrf.mxu0
      %2882 = vmatprep.mubr.f32.mxu0 %v2620
      %2883 = vmatmul.mubr.f32.gmra.mxu0 %v2619
      %v2884 = vpop.f32.mrf.mxu0
      %v2885 = vadd.f32 0.0, %v2884
      %v2886 = vpop.f32.mrf.mxu0
      %2887 = vmatprep.mubr.f32.mxu0 %v2623
      %2888 = vmatmul.mubr.f32.gmra.mxu0 %v2622
      %v2889 = vpop.f32.mrf.mxu0
      %v2890 = vadd.f32 0.0, %v2889
      %v2891 = vpop.f32.mrf.mxu0
      %2892 = vmatprep.mubr.f32.mxu0 %v2626
      %2893 = vmatmul.mubr.f32.gmra.mxu0 %v2625
      %v2894 = vpop.f32.mrf.mxu0
      %v2895 = vadd.f32 0.0, %v2894
      %v2896 = vpop.f32.mrf.mxu0
      %2897 = vmatprep.mubr.f32.mxu0 %v2629
      %2898 = vmatmul.mubr.f32.gmra.mxu0 %v2628
      %v2899 = vpop.f32.mrf.mxu0
      %v2900 = vadd.f32 0.0, %v2899
      %v2901 = vpop.f32.mrf.mxu0
      %2902 = vmatprep.mubr.f32.mxu0 %v2632
      %2903 = vmatmul.mubr.f32.gmra.mxu0 %v2631
      %v2904 = vpop.f32.mrf.mxu0
      %v2905 = vadd.f32 0.0, %v2904
      %v2906 = vpop.f32.mrf.mxu0
      %2907 = vdwg.mxu0
      %2908 = vmatprep.subr.mxu0 0.0
      %2909 = vmatpush1.msra.mxu0 %v2682
      %2910 = vmatprep.subr.mxu0 0.0
      %2911 = vmatpush1.msra.mxu0 %v2681
      %2912 = vmatprep.subr.mxu0 0.0
      %2913 = vmatpush1.msra.mxu0 %v2680
      %2914 = vmatprep.subr.mxu0 0.0
      %2915 = vmatpush1.msra.mxu0 %v2679
      %2916 = vmatprep.subr.mxu0 0.0
      %2917 = vmatpush1.msra.mxu0 %v2678
      %2918 = vmatprep.subr.mxu0 0.0
      %2919 = vmatpush1.msra.mxu0 %v2677
      %2920 = vmatprep.subr.mxu0 0.0
      %2921 = vmatpush1.msra.mxu0 %v2676
      %2922 = vmatprep.subr.mxu0 0.0
      %2923 = vmatpush1.msra.mxu0 %v2675
      %2924 = vmatprep.subr.mxu0 0.0
      %2925 = vmatpush1.msra.mxu0 %v2674
      %2926 = vmatprep.subr.mxu0 0.0
      %2927 = vmatpush1.msra.mxu0 %v2673
      %2928 = vmatprep.subr.mxu0 0.0
      %2929 = vmatpush1.msra.mxu0 %v2672
      %2930 = vmatprep.subr.mxu0 0.0
      %2931 = vmatpush1.msra.mxu0 %v2671
      %2932 = vmatprep.subr.mxu0 0.0
      %2933 = vmatpush1.msra.mxu0 %v2670
      %2934 = vmatprep.subr.mxu0 0.0
      %2935 = vmatpush1.msra.mxu0 %v2669
      %2936 = vmatprep.subr.mxu0 0.0
      %2937 = vmatpush1.msra.mxu0 %v2668
      %2938 = vmatprep.subr.mxu0 0.0
      %2939 = vmatpush1.msra.mxu0 %v2667
      %2940 = vmatprep.subr.mxu0 0.0
      %2941 = vmatpush2.msra.mxu0 0.0
      %2942 = vmatprep.subr.mxu0 0.0
      %2943 = vmatpush2.msra.mxu0 0.0
      %2944 = vmatprep.subr.mxu0 0.0
      %2945 = vmatpush2.msra.mxu0 0.0
      %2946 = vmatprep.subr.mxu0 0.0
      %2947 = vmatpush2.msra.mxu0 0.0
      %2948 = vmatprep.subr.mxu0 0.0
      %2949 = vmatpush2.msra.mxu0 0.0
      %2950 = vmatprep.subr.mxu0 0.0
      %2951 = vmatpush2.msra.mxu0 0.0
      %2952 = vmatprep.subr.mxu0 0.0
      %2953 = vmatpush2.msra.mxu0 0.0
      %2954 = vmatprep.subr.mxu0 0.0
      %2955 = vmatpush2.msra.mxu0 0.0
      %2956 = vmatprep.subr.mxu0 0.0
      %2957 = vmatpush2.msra.mxu0 0.0
      %2958 = vmatprep.subr.mxu0 0.0
      %2959 = vmatpush2.msra.mxu0 0.0
      %2960 = vmatprep.subr.mxu0 0.0
      %2961 = vmatpush2.msra.mxu0 0.0
      %2962 = vmatprep.subr.mxu0 0.0
      %2963 = vmatpush2.msra.mxu0 0.0
      %2964 = vmatprep.subr.mxu0 0.0
      %2965 = vmatpush2.msra.mxu0 0.0
      %2966 = vmatprep.subr.mxu0 0.0
      %2967 = vmatpush2.msra.mxu0 0.0
      %2968 = vmatprep.subr.mxu0 0.0
      %2969 = vmatpush2.msra.mxu0 0.0
      %2970 = vmatprep.subr.mxu0 0.0
      %2971 = vmatpush2.msra.mxu0 0.0
      %2972 = vmatprep.mubr.f32.mxu0 0.0
      %2973 = vmatmul.mubr.f32.gmra.mxu0 %v2540
      %v2974 = vpop.f32.mrf.mxu0
      %v2975 = vadd.f32 %v2750, %v2974
      %v2976 = vpop.f32.mrf.mxu0
      %2977 = vmatprep.mubr.f32.mxu0 0.0
      %2978 = vmatmul.mubr.f32.gmra.mxu0 %v2543
      %v2979 = vpop.f32.mrf.mxu0
      %v2980 = vadd.f32 %v2755, %v2979
      %v2981 = vpop.f32.mrf.mxu0
      %2982 = vmatprep.mubr.f32.mxu0 0.0
      %2983 = vmatmul.mubr.f32.gmra.mxu0 %v2546
      %v2984 = vpop.f32.mrf.mxu0
      %v2985 = vadd.f32 %v2760, %v2984
      %v2986 = vpop.f32.mrf.mxu0
      %2987 = vmatprep.mubr.f32.mxu0 0.0
      %2988 = vmatmul.mubr.f32.gmra.mxu0 %v2549
      %v2989 = vpop.f32.mrf.mxu0
      %v2990 = vadd.f32 %v2765, %v2989
      %v2991 = vpop.f32.mrf.mxu0
      %2992 = vmatprep.mubr.f32.mxu0 0.0
      %2993 = vmatmul.mubr.f32.gmra.mxu0 %v2552
      %v2994 = vpop.f32.mrf.mxu0
      %v2995 = vadd.f32 %v2770, %v2994
      %v2996 = vpop.f32.mrf.mxu0
      %2997 = vmatprep.mubr.f32.mxu0 0.0
      %2998 = vmatmul.mubr.f32.gmra.mxu0 %v2555
      %v2999 = vpop.f32.mrf.mxu0
      %v3000 = vadd.f32 %v2775, %v2999
      %v3001 = vpop.f32.mrf.mxu0
      %3002 = vmatprep.mubr.f32.mxu0 0.0
      %3003 = vmatmul.mubr.f32.gmra.mxu0 %v2558
      %v3004 = vpop.f32.mrf.mxu0
      %v3005 = vadd.f32 %v2780, %v3004
      %v3006 = vpop.f32.mrf.mxu0
      %3007 = vmatprep.mubr.f32.mxu0 0.0
      %3008 = vmatmul.mubr.f32.gmra.mxu0 %v2561
      %v3009 = vpop.f32.mrf.mxu0
      %v3010 = vadd.f32 %v2785, %v3009
      %v3011 = vpop.f32.mrf.mxu0
      %3012 = vmatprep.mubr.f32.mxu0 0.0
      %3013 = vmatmul.mubr.f32.gmra.mxu0 %v2564
      %v3014 = vpop.f32.mrf.mxu0
      %v3015 = vadd.f32 %v2790, %v3014
      %v3016 = vpop.f32.mrf.mxu0
      %3017 = vmatprep.mubr.f32.mxu0 0.0
      %3018 = vmatmul.mubr.f32.gmra.mxu0 %v2567
      %v3019 = vpop.f32.mrf.mxu0
      %v3020 = vadd.f32 %v2795, %v3019
      %v3021 = vpop.f32.mrf.mxu0
      %3022 = vmatprep.mubr.f32.mxu0 0.0
      %3023 = vmatmul.mubr.f32.gmra.mxu0 %v2570
      %v3024 = vpop.f32.mrf.mxu0
      %v3025 = vadd.f32 %v2800, %v3024
      %v3026 = vpop.f32.mrf.mxu0
      %3027 = vmatprep.mubr.f32.mxu0 0.0
      %3028 = vmatmul.mubr.f32.gmra.mxu0 %v2573
      %v3029 = vpop.f32.mrf.mxu0
      %v3030 = vadd.f32 %v2805, %v3029
      %v3031 = vpop.f32.mrf.mxu0
      %3032 = vmatprep.mubr.f32.mxu0 0.0
      %3033 = vmatmul.mubr.f32.gmra.mxu0 %v2576
      %v3034 = vpop.f32.mrf.mxu0
      %v3035 = vadd.f32 %v2810, %v3034
      %v3036 = vpop.f32.mrf.mxu0
      %3037 = vmatprep.mubr.f32.mxu0 0.0
      %3038 = vmatmul.mubr.f32.gmra.mxu0 %v2579
      %v3039 = vpop.f32.mrf.mxu0
      %v3040 = vadd.f32 %v2815, %v3039
      %v3041 = vpop.f32.mrf.mxu0
      %3042 = vmatprep.mubr.f32.mxu0 0.0
      %3043 = vmatmul.mubr.f32.gmra.mxu0 %v2582
      %v3044 = vpop.f32.mrf.mxu0
      %v3045 = vadd.f32 %v2820, %v3044
      %v3046 = vpop.f32.mrf.mxu0
      %3047 = vmatprep.mubr.f32.mxu0 0.0
      %3048 = vmatmul.mubr.f32.gmra.mxu0 %v2585
      %v3049 = vpop.f32.mrf.mxu0
      %v3050 = vadd.f32 %v2825, %v3049
      %v3051 = vpop.f32.mrf.mxu0
      %3052 = vmatprep.mubr.f32.mxu0 0.0
      %3053 = vmatmul.mubr.f32.gmra.mxu0 %v2588
      %v3054 = vpop.f32.mrf.mxu0
      %v3055 = vadd.f32 %v2830, %v3054
      %v3056 = vpop.f32.mrf.mxu0
      %3057 = vmatprep.mubr.f32.mxu0 0.0
      %3058 = vmatmul.mubr.f32.gmra.mxu0 %v2591
      %v3059 = vpop.f32.mrf.mxu0
      %v3060 = vadd.f32 %v2835, %v3059
      %v3061 = vpop.f32.mrf.mxu0
      %3062 = vmatprep.mubr.f32.mxu0 0.0
      %3063 = vmatmul.mubr.f32.gmra.mxu0 %v2594
      %v3064 = vpop.f32.mrf.mxu0
      %v3065 = vadd.f32 %v2840, %v3064
      %v3066 = vpop.f32.mrf.mxu0
      %3067 = vmatprep.mubr.f32.mxu0 0.0
      %3068 = vmatmul.mubr.f32.gmra.mxu0 %v2597
      %v3069 = vpop.f32.mrf.mxu0
      %v3070 = vadd.f32 %v2845, %v3069
      %v3071 = vpop.f32.mrf.mxu0
      %3072 = vmatprep.mubr.f32.mxu0 0.0
      %3073 = vmatmul.mubr.f32.gmra.mxu0 %v2600
      %v3074 = vpop.f32.mrf.mxu0
      %v3075 = vadd.f32 %v2850, %v3074
      %v3076 = vpop.f32.mrf.mxu0
      %3077 = vmatprep.mubr.f32.mxu0 0.0
      %3078 = vmatmul.mubr.f32.gmra.mxu0 %v2603
      %v3079 = vpop.f32.mrf.mxu0
      %v3080 = vadd.f32 %v2855, %v3079
      %v3081 = vpop.f32.mrf.mxu0
      %3082 = vmatprep.mubr.f32.mxu0 0.0
      %3083 = vmatmul.mubr.f32.gmra.mxu0 %v2606
      %v3084 = vpop.f32.mrf.mxu0
      %v3085 = vadd.f32 %v2860, %v3084
      %v3086 = vpop.f32.mrf.mxu0
      %3087 = vmatprep.mubr.f32.mxu0 0.0
      %3088 = vmatmul.mubr.f32.gmra.mxu0 %v2609
      %v3089 = vpop.f32.mrf.mxu0
      %v3090 = vadd.f32 %v2865, %v3089
      %v3091 = vpop.f32.mrf.mxu0
      %3092 = vmatprep.mubr.f32.mxu0 0.0
      %3093 = vmatmul.mubr.f32.gmra.mxu0 %v2612
      %v3094 = vpop.f32.mrf.mxu0
      %v3095 = vadd.f32 %v2870, %v3094
      %v3096 = vpop.f32.mrf.mxu0
      %3097 = vmatprep.mubr.f32.mxu0 0.0
      %3098 = vmatmul.mubr.f32.gmra.mxu0 %v2615
      %v3099 = vpop.f32.mrf.mxu0
      %v3100 = vadd.f32 %v2875, %v3099
      %v3101 = vpop.f32.mrf.mxu0
      %3102 = vmatprep.mubr.f32.mxu0 0.0
      %3103 = vmatmul.mubr.f32.gmra.mxu0 %v2618
      %v3104 = vpop.f32.mrf.mxu0
      %v3105 = vadd.f32 %v2880, %v3104
      %v3106 = vpop.f32.mrf.mxu0
      %3107 = vmatprep.mubr.f32.mxu0 0.0
      %3108 = vmatmul.mubr.f32.gmra.mxu0 %v2621
      %v3109 = vpop.f32.mrf.mxu0
      %v3110 = vadd.f32 %v2885, %v3109
      %v3111 = vpop.f32.mrf.mxu0
      %3112 = vmatprep.mubr.f32.mxu0 0.0
      %3113 = vmatmul.mubr.f32.gmra.mxu0 %v2624
      %v3114 = vpop.f32.mrf.mxu0
      %v3115 = vadd.f32 %v2890, %v3114
      %v3116 = vpop.f32.mrf.mxu0
      %3117 = vmatprep.mubr.f32.mxu0 0.0
      %3118 = vmatmul.mubr.f32.gmra.mxu0 %v2627
      %v3119 = vpop.f32.mrf.mxu0
      %v3120 = vadd.f32 %v2895, %v3119
      %v3121 = vpop.f32.mrf.mxu0
      %3122 = vmatprep.mubr.f32.mxu0 0.0
      %3123 = vmatmul.mubr.f32.gmra.mxu0 %v2630
      %v3124 = vpop.f32.mrf.mxu0
      %v3125 = vadd.f32 %v2900, %v3124
      %v3126 = vpop.f32.mrf.mxu0
      %3127 = vmatprep.mubr.f32.mxu0 0.0
      %3128 = vmatmul.mubr.f32.gmra.mxu0 %v2633
      %v3129 = vpop.f32.mrf.mxu0
      %v3130 = vadd.f32 %v2905, %v3129
      %v3131 = vpop.f32.mrf.mxu0
      %3132 = vdwg.mxu0
      %v3133 = vadd.f32 %v2380, %v2975
      %v3134 = vadd.f32 %v2385, %v2980
      %v3135 = vadd.f32 %v2390, %v2985
      %v3136 = vadd.f32 %v2395, %v2990
      %v3137 = vadd.f32 %v2400, %v2995
      %v3138 = vadd.f32 %v2405, %v3000
      %v3139 = vadd.f32 %v2410, %v3005
      %v3140 = vadd.f32 %v2415, %v3010
      %v3141 = vadd.f32 %v2420, %v3015
      %v3142 = vadd.f32 %v2425, %v3020
      %v3143 = vadd.f32 %v2430, %v3025
      %v3144 = vadd.f32 %v2435, %v3030
      %v3145 = vadd.f32 %v2440, %v3035
      %v3146 = vadd.f32 %v2445, %v3040
      %v3147 = vadd.f32 %v2450, %v3045
      %v3148 = vadd.f32 %v2455, %v3050
      %v3149 = vadd.f32 %v2460, %v3055
      %v3150 = vadd.f32 %v2465, %v3060
      %v3151 = vadd.f32 %v2470, %v3065
      %v3152 = vadd.f32 %v2475, %v3070
      %v3153 = vadd.f32 %v2480, %v3075
      %v3154 = vadd.f32 %v2485, %v3080
      %v3155 = vadd.f32 %v2490, %v3085
      %v3156 = vadd.f32 %v2495, %v3090
      %v3157 = vadd.f32 %v2500, %v3095
      %v3158 = vadd.f32 %v2505, %v3100
      %v3159 = vadd.f32 %v2510, %v3105
      %v3160 = vadd.f32 %v2515, %v3110
      %v3161 = vadd.f32 %v2520, %v3115
      %v3162 = vadd.f32 %v2525, %v3120
      %v3163 = vadd.f32 %v2530, %v3125
      %v3164 = vadd.f32 %v2535, %v3130
      %v3165 = vld [vmem:[%s4] sm:$0x1]
      %v3167 = vlaneseq
      %v3168 = vshrl.u32 %v3167, 7
      %v3169 = vsub.s32 0, %v3168
      %v3170 = vrot.slane %v3165, %v3169
      %v3172 = vadd.f32 %v3133, %v3170
      %v3173 = vadd.f32 %v3134, %v3170
      %v3174 = vadd.f32 %v3135, %v3170
      %v3175 = vadd.f32 %v3136, %v3170
      %v3176 = vadd.f32 %v3137, %v3170
      %v3177 = vadd.f32 %v3138, %v3170
      %v3178 = vadd.f32 %v3139, %v3170
      %v3179 = vadd.f32 %v3140, %v3170
      %v3180 = vadd.f32 %v3141, %v3170
      %v3181 = vadd.f32 %v3142, %v3170
      %v3182 = vadd.f32 %v3143, %v3170
      %v3183 = vadd.f32 %v3144, %v3170
      %v3184 = vadd.f32 %v3145, %v3170
      %v3185 = vadd.f32 %v3146, %v3170
      %v3186 = vadd.f32 %v3147, %v3170
      %v3187 = vadd.f32 %v3148, %v3170
      %v3188 = vadd.f32 %v3149, %v3170
      %v3189 = vadd.f32 %v3150, %v3170
      %v3190 = vadd.f32 %v3151, %v3170
      %v3191 = vadd.f32 %v3152, %v3170
      %v3192 = vadd.f32 %v3153, %v3170
      %v3193 = vadd.f32 %v3154, %v3170
      %v3194 = vadd.f32 %v3155, %v3170
      %v3195 = vadd.f32 %v3156, %v3170
      %v3196 = vadd.f32 %v3157, %v3170
      %v3197 = vadd.f32 %v3158, %v3170
      %v3198 = vadd.f32 %v3159, %v3170
      %v3199 = vadd.f32 %v3160, %v3170
      %v3200 = vadd.f32 %v3161, %v3170
      %v3201 = vadd.f32 %v3162, %v3170
      %v3202 = vadd.f32 %v3163, %v3170
      %v3203 = vadd.f32 %v3164, %v3170
      %v3204 = vadd.f32 %v3172, %v3173
      %v3205 = vadd.f32 %v3204, %v3174
      %v3206 = vadd.f32 %v3205, %v3175
      %v3207 = vadd.f32 %v3206, %v3176
      %v3208 = vadd.f32 %v3207, %v3177
      %v3209 = vadd.f32 %v3208, %v3178
      %v3210 = vadd.f32 %v3209, %v3179
      %v3211 = vadd.f32 %v3210, %v3180
      %v3212 = vadd.f32 %v3211, %v3181
      %v3213 = vadd.f32 %v3212, %v3182
      %v3214 = vadd.f32 %v3213, %v3183
      %v3215 = vadd.f32 %v3214, %v3184
      %v3216 = vadd.f32 %v3215, %v3185
      %v3217 = vadd.f32 %v3216, %v3186
      %v3218 = vadd.f32 %v3217, %v3187
      %v3219 = vadd.f32 %v3218, %v3188
      %v3220 = vadd.f32 %v3219, %v3189
      %v3221 = vadd.f32 %v3220, %v3190
      %v3222 = vadd.f32 %v3221, %v3191
      %v3223 = vadd.f32 %v3222, %v3192
      %v3224 = vadd.f32 %v3223, %v3193
      %v3225 = vadd.f32 %v3224, %v3194
      %v3226 = vadd.f32 %v3225, %v3195
      %v3227 = vadd.f32 %v3226, %v3196
      %v3228 = vadd.f32 %v3227, %v3197
      %v3229 = vadd.f32 %v3228, %v3198
      %v3230 = vadd.f32 %v3229, %v3199
      %v3231 = vadd.f32 %v3230, %v3200
      %v3232 = vadd.f32 %v3231, %v3201
      %v3233 = vadd.f32 %v3232, %v3202
      %v3234 = vadd.f32 %v3233, %v3203
      %v3235 = vrot.slane %v3234, 4
      %v3236 = vadd.f32 %v3234, %v3235
      %v3237 = vrot.slane %v3236, 2
      %v3238 = vadd.f32 %v3236, %v3237
      %v3239 = vrot.slane %v3238, 1
      %v3240 = vadd.f32 %v3238, %v3239
      %v3241 = vld [vmem:[%s13] sm:$0xff]
      %v3242 = vld [vmem:[%s13 + $0x8] sm:$0xff]
      %v3243 = vld [vmem:[%s13 + $0x10] sm:$0xff]
      %v3244 = vld [vmem:[%s13 + $0x18] sm:$0xff]
      %v3245 = vld [vmem:[%s13 + $0x20] sm:$0xff]
      %v3246 = vld [vmem:[%s13 + $0x28] sm:$0xff]
      %v3247 = vld [vmem:[%s13 + $0x30] sm:$0xff]
      %v3248 = vld [vmem:[%s13 + $0x38] sm:$0xff]
      %v3249 = vld [vmem:[%s13 + $0x40] sm:$0xff]
      %v3250 = vld [vmem:[%s13 + $0x48] sm:$0xff]
      %v3251 = vld [vmem:[%s13 + $0x50] sm:$0xff]
      %v3252 = vld [vmem:[%s13 + $0x58] sm:$0xff]
      %v3253 = vld [vmem:[%s13 + $0x60] sm:$0xff]
      %v3254 = vld [vmem:[%s13 + $0x68] sm:$0xff]
      %v3255 = vld [vmem:[%s13 + $0x70] sm:$0xff]
      %v3256 = vld [vmem:[%s13 + $0x78] sm:$0xff]
      %3257 = vmatprep.subr.mxu0 0.0
      %3258 = vmatpush1.msra.mxu0 %v3256
      %3259 = vmatprep.subr.mxu0 0.0
      %3260 = vmatpush1.msra.mxu0 %v3255
      %3261 = vmatprep.subr.mxu0 0.0
      %3262 = vmatpush1.msra.mxu0 %v3254
      %3263 = vmatprep.subr.mxu0 0.0
      %3264 = vmatpush1.msra.mxu0 %v3253
      %3265 = vmatprep.subr.mxu0 0.0
      %3266 = vmatpush1.msra.mxu0 %v3252
      %3267 = vmatprep.subr.mxu0 0.0
      %3268 = vmatpush1.msra.mxu0 %v3251
      %3269 = vmatprep.subr.mxu0 0.0
      %3270 = vmatpush1.msra.mxu0 %v3250
      %3271 = vmatprep.subr.mxu0 0.0
      %3272 = vmatpush1.msra.mxu0 %v3249
      %3273 = vmatprep.subr.mxu0 0.0
      %3274 = vmatpush1.msra.mxu0 %v3248
      %3275 = vmatprep.subr.mxu0 0.0
      %3276 = vmatpush1.msra.mxu0 %v3247
      %3277 = vmatprep.subr.mxu0 0.0
      %3278 = vmatpush1.msra.mxu0 %v3246
      %3279 = vmatprep.subr.mxu0 0.0
      %3280 = vmatpush1.msra.mxu0 %v3245
      %3281 = vmatprep.subr.mxu0 0.0
      %3282 = vmatpush1.msra.mxu0 %v3244
      %3283 = vmatprep.subr.mxu0 0.0
      %3284 = vmatpush1.msra.mxu0 %v3243
      %3285 = vmatprep.subr.mxu0 0.0
      %3286 = vmatpush1.msra.mxu0 %v3242
      %3287 = vmatprep.subr.mxu0 0.0
      %3288 = vmatpush1.msra.mxu0 %v3241
      %3289 = vmatprep.subr.mxu0 0.0
      %3290 = vmatpush2.msra.mxu0 0.0
      %3291 = vmatprep.subr.mxu0 0.0
      %3292 = vmatpush2.msra.mxu0 0.0
      %3293 = vmatprep.subr.mxu0 0.0
      %3294 = vmatpush2.msra.mxu0 0.0
      %3295 = vmatprep.subr.mxu0 0.0
      %3296 = vmatpush2.msra.mxu0 0.0
      %3297 = vmatprep.subr.mxu0 0.0
      %3298 = vmatpush2.msra.mxu0 0.0
      %3299 = vmatprep.subr.mxu0 0.0
      %3300 = vmatpush2.msra.mxu0 0.0
      %3301 = vmatprep.subr.mxu0 0.0
      %3302 = vmatpush2.msra.mxu0 0.0
      %3303 = vmatprep.subr.mxu0 0.0
      %3304 = vmatpush2.msra.mxu0 0.0
      %3305 = vmatprep.subr.mxu0 0.0
      %3306 = vmatpush2.msra.mxu0 0.0
      %3307 = vmatprep.subr.mxu0 0.0
      %3308 = vmatpush2.msra.mxu0 0.0
      %3309 = vmatprep.subr.mxu0 0.0
      %3310 = vmatpush2.msra.mxu0 0.0
      %3311 = vmatprep.subr.mxu0 0.0
      %3312 = vmatpush2.msra.mxu0 0.0
      %3313 = vmatprep.subr.mxu0 0.0
      %3314 = vmatpush2.msra.mxu0 0.0
      %3315 = vmatprep.subr.mxu0 0.0
      %3316 = vmatpush2.msra.mxu0 0.0
      %3317 = vmatprep.subr.mxu0 0.0
      %3318 = vmatpush2.msra.mxu0 0.0
      %3319 = vmatprep.subr.mxu0 0.0
      %3320 = vmatpush2.msra.mxu0 0.0
      %3321 = vmatprep.mubr.f32.mxu0 0.0
      %3322 = vmatmul.mubr.f32.gmra.mxu0 %v3240
      %v3323 = vpop.f32.mrf.mxu0
      %v3324 = vadd.f32 0.0, %v3323
      %v3325 = vpop.f32.mrf.mxu0
      %3326 = vdwg.mxu0
      %v3327 = vlaneseq
      %v3328 = vshrl.u32 %v3327, 7
      %v3329 = vsub.s32 0, %v3328
      %v3330 = vrot.slane %v3324, %v3329
      %v3331 = vsub.f32 %v3172, %v3330
      %v3332 = vsub.f32 %v3173, %v3330
      %v3333 = vsub.f32 %v3174, %v3330
      %v3334 = vsub.f32 %v3175, %v3330
      %v3335 = vsub.f32 %v3176, %v3330
      %v3336 = vsub.f32 %v3177, %v3330
      %v3337 = vsub.f32 %v3178, %v3330
      %v3338 = vsub.f32 %v3179, %v3330
      %v3339 = vsub.f32 %v3180, %v3330
      %v3340 = vsub.f32 %v3181, %v3330
      %v3341 = vsub.f32 %v3182, %v3330
      %v3342 = vsub.f32 %v3183, %v3330
      %v3343 = vsub.f32 %v3184, %v3330
      %v3344 = vsub.f32 %v3185, %v3330
      %v3345 = vsub.f32 %v3186, %v3330
      %v3346 = vsub.f32 %v3187, %v3330
      %v3347 = vsub.f32 %v3188, %v3330
      %v3348 = vsub.f32 %v3189, %v3330
      %v3349 = vsub.f32 %v3190, %v3330
      %v3350 = vsub.f32 %v3191, %v3330
      %v3351 = vsub.f32 %v3192, %v3330
      %v3352 = vsub.f32 %v3193, %v3330
      %v3353 = vsub.f32 %v3194, %v3330
      %v3354 = vsub.f32 %v3195, %v3330
      %v3355 = vsub.f32 %v3196, %v3330
      %v3356 = vsub.f32 %v3197, %v3330
      %v3357 = vsub.f32 %v3198, %v3330
      %v3358 = vsub.f32 %v3199, %v3330
      %v3359 = vsub.f32 %v3200, %v3330
      %v3360 = vsub.f32 %v3201, %v3330
      %v3361 = vsub.f32 %v3202, %v3330
      %v3362 = vsub.f32 %v3203, %v3330
      %v3363 = vmul.f32 %v3331, %v3331
      %v3364 = vmul.f32 %v3332, %v3332
      %v3365 = vmul.f32 %v3333, %v3333
      %v3366 = vmul.f32 %v3334, %v3334
      %v3367 = vmul.f32 %v3335, %v3335
      %v3368 = vmul.f32 %v3336, %v3336
      %v3369 = vmul.f32 %v3337, %v3337
      %v3370 = vmul.f32 %v3338, %v3338
      %v3371 = vmul.f32 %v3339, %v3339
      %v3372 = vmul.f32 %v3340, %v3340
      %v3373 = vmul.f32 %v3341, %v3341
      %v3374 = vmul.f32 %v3342, %v3342
      %v3375 = vmul.f32 %v3343, %v3343
      %v3376 = vmul.f32 %v3344, %v3344
      %v3377 = vmul.f32 %v3345, %v3345
      %v3378 = vmul.f32 %v3346, %v3346
      %v3379 = vmul.f32 %v3347, %v3347
      %v3380 = vmul.f32 %v3348, %v3348
      %v3381 = vmul.f32 %v3349, %v3349
      %v3382 = vmul.f32 %v3350, %v3350
      %v3383 = vmul.f32 %v3351, %v3351
      %v3384 = vmul.f32 %v3352, %v3352
      %v3385 = vmul.f32 %v3353, %v3353
      %v3386 = vmul.f32 %v3354, %v3354
      %v3387 = vmul.f32 %v3355, %v3355
      %v3388 = vmul.f32 %v3356, %v3356
      %v3389 = vmul.f32 %v3357, %v3357
      %v3390 = vmul.f32 %v3358, %v3358
      %v3391 = vmul.f32 %v3359, %v3359
      %v3392 = vmul.f32 %v3360, %v3360
      %v3393 = vmul.f32 %v3361, %v3361
      %v3394 = vmul.f32 %v3362, %v3362
      %v3395 = vadd.f32 %v3363, %v3364
      %v3396 = vadd.f32 %v3395, %v3365
      %v3397 = vadd.f32 %v3396, %v3366
      %v3398 = vadd.f32 %v3397, %v3367
      %v3399 = vadd.f32 %v3398, %v3368
      %v3400 = vadd.f32 %v3399, %v3369
      %v3401 = vadd.f32 %v3400, %v3370
      %v3402 = vadd.f32 %v3401, %v3371
      %v3403 = vadd.f32 %v3402, %v3372
      %v3404 = vadd.f32 %v3403, %v3373
      %v3405 = vadd.f32 %v3404, %v3374
      %v3406 = vadd.f32 %v3405, %v3375
      %v3407 = vadd.f32 %v3406, %v3376
      %v3408 = vadd.f32 %v3407, %v3377
      %v3409 = vadd.f32 %v3408, %v3378
      %v3410 = vadd.f32 %v3409, %v3379
      %v3411 = vadd.f32 %v3410, %v3380
      %v3412 = vadd.f32 %v3411, %v3381
      %v3413 = vadd.f32 %v3412, %v3382
      %v3414 = vadd.f32 %v3413, %v3383
      %v3415 = vadd.f32 %v3414, %v3384
      %v3416 = vadd.f32 %v3415, %v3385
      %v3417 = vadd.f32 %v3416, %v3386
      %v3418 = vadd.f32 %v3417, %v3387
      %v3419 = vadd.f32 %v3418, %v3388
      %v3420 = vadd.f32 %v3419, %v3389
      %v3421 = vadd.f32 %v3420, %v3390
      %v3422 = vadd.f32 %v3421, %v3391
      %v3423 = vadd.f32 %v3422, %v3392
      %v3424 = vadd.f32 %v3423, %v3393
      %v3425 = vadd.f32 %v3424, %v3394
      %v3426 = vrot.slane %v3425, 4
      %v3427 = vadd.f32 %v3425, %v3426
      %v3428 = vrot.slane %v3427, 2
      %v3429 = vadd.f32 %v3427, %v3428
      %v3430 = vrot.slane %v3429, 1
      %v3431 = vadd.f32 %v3429, %v3430
      %3432 = vmatprep.subr.mxu0 0.0
      %3433 = vmatpush1.msra.mxu0 %v3256
      %3434 = vmatprep.subr.mxu0 0.0
      %3435 = vmatpush1.msra.mxu0 %v3255
      %3436 = vmatprep.subr.mxu0 0.0
      %3437 = vmatpush1.msra.mxu0 %v3254
      %3438 = vmatprep.subr.mxu0 0.0
      %3439 = vmatpush1.msra.mxu0 %v3253
      %3440 = vmatprep.subr.mxu0 0.0
      %3441 = vmatpush1.msra.mxu0 %v3252
      %3442 = vmatprep.subr.mxu0 0.0
      %3443 = vmatpush1.msra.mxu0 %v3251
      %3444 = vmatprep.subr.mxu0 0.0
      %3445 = vmatpush1.msra.mxu0 %v3250
      %3446 = vmatprep.subr.mxu0 0.0
      %3447 = vmatpush1.msra.mxu0 %v3249
      %3448 = vmatprep.subr.mxu0 0.0
      %3449 = vmatpush1.msra.mxu0 %v3248
      %3450 = vmatprep.subr.mxu0 0.0
      %3451 = vmatpush1.msra.mxu0 %v3247
      %3452 = vmatprep.subr.mxu0 0.0
      %3453 = vmatpush1.msra.mxu0 %v3246
      %3454 = vmatprep.subr.mxu0 0.0
      %3455 = vmatpush1.msra.mxu0 %v3245
      %3456 = vmatprep.subr.mxu0 0.0
      %3457 = vmatpush1.msra.mxu0 %v3244
      %3458 = vmatprep.subr.mxu0 0.0
      %3459 = vmatpush1.msra.mxu0 %v3243
      %3460 = vmatprep.subr.mxu0 0.0
      %3461 = vmatpush1.msra.mxu0 %v3242
      %3462 = vmatprep.subr.mxu0 0.0
      %3463 = vmatpush1.msra.mxu0 %v3241
      %3464 = vmatprep.subr.mxu0 0.0
      %3465 = vmatpush2.msra.mxu0 0.0
      %3466 = vmatprep.subr.mxu0 0.0
      %3467 = vmatpush2.msra.mxu0 0.0
      %3468 = vmatprep.subr.mxu0 0.0
      %3469 = vmatpush2.msra.mxu0 0.0
      %3470 = vmatprep.subr.mxu0 0.0
      %3471 = vmatpush2.msra.mxu0 0.0
      %3472 = vmatprep.subr.mxu0 0.0
      %3473 = vmatpush2.msra.mxu0 0.0
      %3474 = vmatprep.subr.mxu0 0.0
      %3475 = vmatpush2.msra.mxu0 0.0
      %3476 = vmatprep.subr.mxu0 0.0
      %3477 = vmatpush2.msra.mxu0 0.0
      %3478 = vmatprep.subr.mxu0 0.0
      %3479 = vmatpush2.msra.mxu0 0.0
      %3480 = vmatprep.subr.mxu0 0.0
      %3481 = vmatpush2.msra.mxu0 0.0
      %3482 = vmatprep.subr.mxu0 0.0
      %3483 = vmatpush2.msra.mxu0 0.0
      %3484 = vmatprep.subr.mxu0 0.0
      %3485 = vmatpush2.msra.mxu0 0.0
      %3486 = vmatprep.subr.mxu0 0.0
      %3487 = vmatpush2.msra.mxu0 0.0
      %3488 = vmatprep.subr.mxu0 0.0
      %3489 = vmatpush2.msra.mxu0 0.0
      %3490 = vmatprep.subr.mxu0 0.0
      %3491 = vmatpush2.msra.mxu0 0.0
      %3492 = vmatprep.subr.mxu0 0.0
      %3493 = vmatpush2.msra.mxu0 0.0
      %3494 = vmatprep.subr.mxu0 0.0
      %3495 = vmatpush2.msra.mxu0 0.0
      %3496 = vmatprep.mubr.f32.mxu0 0.0
      %3497 = vmatmul.mubr.f32.gmra.mxu0 %v3431
      %v3498 = vpop.f32.mrf.mxu0
      %v3499 = vadd.f32 1e-05, %v3498
      %v3500 = vpop.f32.mrf.mxu0
      %3501 = vdwg.mxu0
      %v3502 = vrsqrt.pop %v3499
      %v3503 = vld [vmem:[%s5] sm:$0x1]
      %v3504 = vmul.f32 %v3502, %v3503
      %v3505 = vlaneseq
      %v3506 = vshrl.u32 %v3505, 7
      %v3507 = vsub.s32 0, %v3506
      %v3508 = vrot.slane %v3504, %v3507
      %v3509 = vmul.f32 %v3331, %v3508
      %v3510 = vmul.f32 %v3332, %v3508
      %v3511 = vmul.f32 %v3333, %v3508
      %v3512 = vmul.f32 %v3334, %v3508
      %v3513 = vmul.f32 %v3335, %v3508
      %v3514 = vmul.f32 %v3336, %v3508
      %v3515 = vmul.f32 %v3337, %v3508
      %v3516 = vmul.f32 %v3338, %v3508
      %v3517 = vmul.f32 %v3339, %v3508
      %v3518 = vmul.f32 %v3340, %v3508
      %v3519 = vmul.f32 %v3341, %v3508
      %v3520 = vmul.f32 %v3342, %v3508
      %v3521 = vmul.f32 %v3343, %v3508
      %v3522 = vmul.f32 %v3344, %v3508
      %v3523 = vmul.f32 %v3345, %v3508
      %v3524 = vmul.f32 %v3346, %v3508
      %v3525 = vmul.f32 %v3347, %v3508
      %v3526 = vmul.f32 %v3348, %v3508
      %v3527 = vmul.f32 %v3349, %v3508
      %v3528 = vmul.f32 %v3350, %v3508
      %v3529 = vmul.f32 %v3351, %v3508
      %v3530 = vmul.f32 %v3352, %v3508
      %v3531 = vmul.f32 %v3353, %v3508
      %v3532 = vmul.f32 %v3354, %v3508
      %v3533 = vmul.f32 %v3355, %v3508
      %v3534 = vmul.f32 %v3356, %v3508
      %v3535 = vmul.f32 %v3357, %v3508
      %v3536 = vmul.f32 %v3358, %v3508
      %v3537 = vmul.f32 %v3359, %v3508
      %v3538 = vmul.f32 %v3360, %v3508
      %v3539 = vmul.f32 %v3361, %v3508
      %v3540 = vmul.f32 %v3362, %v3508
      %v3541 = vld [vmem:[%s6] sm:$0x1]
      %v3543 = vlaneseq
      %v3544 = vshrl.u32 %v3543, 7
      %v3545 = vsub.s32 0, %v3544
      %v3546 = vrot.slane %v3541, %v3545
      %v3548 = vadd.f32 %v3509, %v3546
      %v3549 = vadd.f32 %v3510, %v3546
      %v3550 = vadd.f32 %v3511, %v3546
      %v3551 = vadd.f32 %v3512, %v3546
      %v3552 = vadd.f32 %v3513, %v3546
      %v3553 = vadd.f32 %v3514, %v3546
      %v3554 = vadd.f32 %v3515, %v3546
      %v3555 = vadd.f32 %v3516, %v3546
      %v3556 = vadd.f32 %v3517, %v3546
      %v3557 = vadd.f32 %v3518, %v3546
      %v3558 = vadd.f32 %v3519, %v3546
      %v3559 = vadd.f32 %v3520, %v3546
      %v3560 = vadd.f32 %v3521, %v3546
      %v3561 = vadd.f32 %v3522, %v3546
      %v3562 = vadd.f32 %v3523, %v3546
      %v3563 = vadd.f32 %v3524, %v3546
      %v3564 = vadd.f32 %v3525, %v3546
      %v3565 = vadd.f32 %v3526, %v3546
      %v3566 = vadd.f32 %v3527, %v3546
      %v3567 = vadd.f32 %v3528, %v3546
      %v3568 = vadd.f32 %v3529, %v3546
      %v3569 = vadd.f32 %v3530, %v3546
      %v3570 = vadd.f32 %v3531, %v3546
      %v3571 = vadd.f32 %v3532, %v3546
      %v3572 = vadd.f32 %v3533, %v3546
      %v3573 = vadd.f32 %v3534, %v3546
      %v3574 = vadd.f32 %v3535, %v3546
      %v3575 = vadd.f32 %v3536, %v3546
      %v3576 = vadd.f32 %v3537, %v3546
      %v3577 = vadd.f32 %v3538, %v3546
      %v3578 = vadd.f32 %v3539, %v3546
      %v3579 = vadd.f32 %v3540, %v3546
      %v3580 = vld [vmem:[%s487] sm:$0x1]
      %v3581 = vadd.f32 %v3580, 1.0
      %v3583 = vlaneseq
      %v3584 = vshrl.u32 %v3583, 7
      %v3585 = vsub.s32 0, %v3584
      %v3586 = vrot.slane %v3581, %v3585
      %v3588 = vmul.f32 %v3548, %v3586
      %v3589 = vmul.f32 %v3549, %v3586
      %v3590 = vmul.f32 %v3550, %v3586
      %v3591 = vmul.f32 %v3551, %v3586
      %v3592 = vmul.f32 %v3552, %v3586
      %v3593 = vmul.f32 %v3553, %v3586
      %v3594 = vmul.f32 %v3554, %v3586
      %v3595 = vmul.f32 %v3555, %v3586
      %v3596 = vmul.f32 %v3556, %v3586
      %v3597 = vmul.f32 %v3557, %v3586
      %v3598 = vmul.f32 %v3558, %v3586
      %v3599 = vmul.f32 %v3559, %v3586
      %v3600 = vmul.f32 %v3560, %v3586
      %v3601 = vmul.f32 %v3561, %v3586
      %v3602 = vmul.f32 %v3562, %v3586
      %v3603 = vmul.f32 %v3563, %v3586
      %v3604 = vmul.f32 %v3564, %v3586
      %v3605 = vmul.f32 %v3565, %v3586
      %v3606 = vmul.f32 %v3566, %v3586
      %v3607 = vmul.f32 %v3567, %v3586
      %v3608 = vmul.f32 %v3568, %v3586
      %v3609 = vmul.f32 %v3569, %v3586
      %v3610 = vmul.f32 %v3570, %v3586
      %v3611 = vmul.f32 %v3571, %v3586
      %v3612 = vmul.f32 %v3572, %v3586
      %v3613 = vmul.f32 %v3573, %v3586
      %v3614 = vmul.f32 %v3574, %v3586
      %v3615 = vmul.f32 %v3575, %v3586
      %v3616 = vmul.f32 %v3576, %v3586
      %v3617 = vmul.f32 %v3577, %v3586
      %v3618 = vmul.f32 %v3578, %v3586
      %v3619 = vmul.f32 %v3579, %v3586
      %v3620 = vld [vmem:[%s490] sm:$0x1]
      %v3622 = vlaneseq
      %v3623 = vshrl.u32 %v3622, 7
      %v3624 = vsub.s32 0, %v3623
      %v3625 = vrot.slane %v3620, %v3624
      %v3627 = vadd.f32 %v3588, %v3625
      %v3628 = vadd.f32 %v3589, %v3625
      %v3629 = vadd.f32 %v3590, %v3625
      %v3630 = vadd.f32 %v3591, %v3625
      %v3631 = vadd.f32 %v3592, %v3625
      %v3632 = vadd.f32 %v3593, %v3625
      %v3633 = vadd.f32 %v3594, %v3625
      %v3634 = vadd.f32 %v3595, %v3625
      %v3635 = vadd.f32 %v3596, %v3625
      %v3636 = vadd.f32 %v3597, %v3625
      %v3637 = vadd.f32 %v3598, %v3625
      %v3638 = vadd.f32 %v3599, %v3625
      %v3639 = vadd.f32 %v3600, %v3625
      %v3640 = vadd.f32 %v3601, %v3625
      %v3641 = vadd.f32 %v3602, %v3625
      %v3642 = vadd.f32 %v3603, %v3625
      %v3643 = vadd.f32 %v3604, %v3625
      %v3644 = vadd.f32 %v3605, %v3625
      %v3645 = vadd.f32 %v3606, %v3625
      %v3646 = vadd.f32 %v3607, %v3625
      %v3647 = vadd.f32 %v3608, %v3625
      %v3648 = vadd.f32 %v3609, %v3625
      %v3649 = vadd.f32 %v3610, %v3625
      %v3650 = vadd.f32 %v3611, %v3625
      %v3651 = vadd.f32 %v3612, %v3625
      %v3652 = vadd.f32 %v3613, %v3625
      %v3653 = vadd.f32 %v3614, %v3625
      %v3654 = vadd.f32 %v3615, %v3625
      %v3655 = vadd.f32 %v3616, %v3625
      %v3656 = vadd.f32 %v3617, %v3625
      %v3657 = vadd.f32 %v3618, %v3625
      %v3658 = vadd.f32 %v3619, %v3625
      %v3659 = vxor.u32 %v3627, 2147483648
      %v3660 = vxor.u32 %v3628, 2147483648
      %v3661 = vxor.u32 %v3629, 2147483648
      %v3662 = vxor.u32 %v3630, 2147483648
      %v3663 = vxor.u32 %v3631, 2147483648
      %v3664 = vxor.u32 %v3632, 2147483648
      %v3665 = vxor.u32 %v3633, 2147483648
      %v3666 = vxor.u32 %v3634, 2147483648
      %v3667 = vxor.u32 %v3635, 2147483648
      %v3668 = vxor.u32 %v3636, 2147483648
      %v3669 = vxor.u32 %v3637, 2147483648
      %v3670 = vxor.u32 %v3638, 2147483648
      %v3671 = vxor.u32 %v3639, 2147483648
      %v3672 = vxor.u32 %v3640, 2147483648
      %v3673 = vxor.u32 %v3641, 2147483648
      %v3674 = vxor.u32 %v3642, 2147483648
      %v3675 = vxor.u32 %v3643, 2147483648
      %v3676 = vxor.u32 %v3644, 2147483648
      %v3677 = vxor.u32 %v3645, 2147483648
      %v3678 = vxor.u32 %v3646, 2147483648
      %v3679 = vxor.u32 %v3647, 2147483648
      %v3680 = vxor.u32 %v3648, 2147483648
      %v3681 = vxor.u32 %v3649, 2147483648
      %v3682 = vxor.u32 %v3650, 2147483648
      %v3683 = vxor.u32 %v3651, 2147483648
      %v3684 = vxor.u32 %v3652, 2147483648
      %v3685 = vxor.u32 %v3653, 2147483648
      %v3686 = vxor.u32 %v3654, 2147483648
      %v3687 = vxor.u32 %v3655, 2147483648
      %v3688 = vxor.u32 %v3656, 2147483648
      %v3689 = vxor.u32 %v3657, 2147483648
      %v3690 = vxor.u32 %v3658, 2147483648
      %v3691 = vmul.f32 %v3659, 1.442695
      %v3692 = vpow.pop %v3691
      %v3693 = vmul.f32 %v3660, 1.442695
      %v3694 = vpow.pop %v3693
      %v3695 = vmul.f32 %v3661, 1.442695
      %v3696 = vpow.pop %v3695
      %v3697 = vmul.f32 %v3662, 1.442695
      %v3698 = vpow.pop %v3697
      %v3699 = vmul.f32 %v3663, 1.442695
      %v3700 = vpow.pop %v3699
      %v3701 = vmul.f32 %v3664, 1.442695
      %v3702 = vpow.pop %v3701
      %v3703 = vmul.f32 %v3665, 1.442695
      %v3704 = vpow.pop %v3703
      %v3705 = vmul.f32 %v3666, 1.442695
      %v3706 = vpow.pop %v3705
      %v3707 = vmul.f32 %v3667, 1.442695
      %v3708 = vpow.pop %v3707
      %v3709 = vmul.f32 %v3668, 1.442695
      %v3710 = vpow.pop %v3709
      %v3711 = vmul.f32 %v3669, 1.442695
      %v3712 = vpow.pop %v3711
      %v3713 = vmul.f32 %v3670, 1.442695
      %v3714 = vpow.pop %v3713
      %v3715 = vmul.f32 %v3671, 1.442695
      %v3716 = vpow.pop %v3715
      %v3717 = vmul.f32 %v3672, 1.442695
      %v3718 = vpow.pop %v3717
      %v3719 = vmul.f32 %v3673, 1.442695
      %v3720 = vpow.pop %v3719
      %v3721 = vmul.f32 %v3674, 1.442695
      %v3722 = vpow.pop %v3721
      %v3723 = vmul.f32 %v3675, 1.442695
      %v3724 = vpow.pop %v3723
      %v3725 = vmul.f32 %v3676, 1.442695
      %v3726 = vpow.pop %v3725
      %v3727 = vmul.f32 %v3677, 1.442695
      %v3728 = vpow.pop %v3727
      %v3729 = vmul.f32 %v3678, 1.442695
      %v3730 = vpow.pop %v3729
      %v3731 = vmul.f32 %v3679, 1.442695
      %v3732 = vpow.pop %v3731
      %v3733 = vmul.f32 %v3680, 1.442695
      %v3734 = vpow.pop %v3733
      %v3735 = vmul.f32 %v3681, 1.442695
      %v3736 = vpow.pop %v3735
      %v3737 = vmul.f32 %v3682, 1.442695
      %v3738 = vpow.pop %v3737
      %v3739 = vmul.f32 %v3683, 1.442695
      %v3740 = vpow.pop %v3739
      %v3741 = vmul.f32 %v3684, 1.442695
      %v3742 = vpow.pop %v3741
      %v3743 = vmul.f32 %v3685, 1.442695
      %v3744 = vpow.pop %v3743
      %v3745 = vmul.f32 %v3686, 1.442695
      %v3746 = vpow.pop %v3745
      %v3747 = vmul.f32 %v3687, 1.442695
      %v3748 = vpow.pop %v3747
      %v3749 = vmul.f32 %v3688, 1.442695
      %v3750 = vpow.pop %v3749
      %v3751 = vmul.f32 %v3689, 1.442695
      %v3752 = vpow.pop %v3751
      %v3753 = vmul.f32 %v3690, 1.442695
      %v3754 = vpow.pop %v3753
      %v3755 = vadd.f32 %v3692, 1.0
      %v3756 = vadd.f32 %v3694, 1.0
      %v3757 = vadd.f32 %v3696, 1.0
      %v3758 = vadd.f32 %v3698, 1.0
      %v3759 = vadd.f32 %v3700, 1.0
      %v3760 = vadd.f32 %v3702, 1.0
      %v3761 = vadd.f32 %v3704, 1.0
      %v3762 = vadd.f32 %v3706, 1.0
      %v3763 = vadd.f32 %v3708, 1.0
      %v3764 = vadd.f32 %v3710, 1.0
      %v3765 = vadd.f32 %v3712, 1.0
      %v3766 = vadd.f32 %v3714, 1.0
      %v3767 = vadd.f32 %v3716, 1.0
      %v3768 = vadd.f32 %v3718, 1.0
      %v3769 = vadd.f32 %v3720, 1.0
      %v3770 = vadd.f32 %v3722, 1.0
      %v3771 = vadd.f32 %v3724, 1.0
      %v3772 = vadd.f32 %v3726, 1.0
      %v3773 = vadd.f32 %v3728, 1.0
      %v3774 = vadd.f32 %v3730, 1.0
      %v3775 = vadd.f32 %v3732, 1.0
      %v3776 = vadd.f32 %v3734, 1.0
      %v3777 = vadd.f32 %v3736, 1.0
      %v3778 = vadd.f32 %v3738, 1.0
      %v3779 = vadd.f32 %v3740, 1.0
      %v3780 = vadd.f32 %v3742, 1.0
      %v3781 = vadd.f32 %v3744, 1.0
      %v3782 = vadd.f32 %v3746, 1.0
      %v3783 = vadd.f32 %v3748, 1.0
      %v3784 = vadd.f32 %v3750, 1.0
      %v3785 = vadd.f32 %v3752, 1.0
      %v3786 = vadd.f32 %v3754, 1.0
      %v3787 = vrcp.pop %v3755
      %v3788 = vmul.f32 1.0, %v3787
      %v3789 = vrcp.pop %v3756
      %v3790 = vmul.f32 1.0, %v3789
      %v3791 = vrcp.pop %v3757
      %v3792 = vmul.f32 1.0, %v3791
      %v3793 = vrcp.pop %v3758
      %v3794 = vmul.f32 1.0, %v3793
      %v3795 = vrcp.pop %v3759
      %v3796 = vmul.f32 1.0, %v3795
      %v3797 = vrcp.pop %v3760
      %v3798 = vmul.f32 1.0, %v3797
      %v3799 = vrcp.pop %v3761
      %v3800 = vmul.f32 1.0, %v3799
      %v3801 = vrcp.pop %v3762
      %v3802 = vmul.f32 1.0, %v3801
      %v3803 = vrcp.pop %v3763
      %v3804 = vmul.f32 1.0, %v3803
      %v3805 = vrcp.pop %v3764
      %v3806 = vmul.f32 1.0, %v3805
      %v3807 = vrcp.pop %v3765
      %v3808 = vmul.f32 1.0, %v3807
      %v3809 = vrcp.pop %v3766
      %v3810 = vmul.f32 1.0, %v3809
      %v3811 = vrcp.pop %v3767
      %v3812 = vmul.f32 1.0, %v3811
      %v3813 = vrcp.pop %v3768
      %v3814 = vmul.f32 1.0, %v3813
      %v3815 = vrcp.pop %v3769
      %v3816 = vmul.f32 1.0, %v3815
      %v3817 = vrcp.pop %v3770
      %v3818 = vmul.f32 1.0, %v3817
      %v3819 = vrcp.pop %v3771
      %v3820 = vmul.f32 1.0, %v3819
      %v3821 = vrcp.pop %v3772
      %v3822 = vmul.f32 1.0, %v3821
      %v3823 = vrcp.pop %v3773
      %v3824 = vmul.f32 1.0, %v3823
      %v3825 = vrcp.pop %v3774
      %v3826 = vmul.f32 1.0, %v3825
      %v3827 = vrcp.pop %v3775
      %v3828 = vmul.f32 1.0, %v3827
      %v3829 = vrcp.pop %v3776
      %v3830 = vmul.f32 1.0, %v3829
      %v3831 = vrcp.pop %v3777
      %v3832 = vmul.f32 1.0, %v3831
      %v3833 = vrcp.pop %v3778
      %v3834 = vmul.f32 1.0, %v3833
      %v3835 = vrcp.pop %v3779
      %v3836 = vmul.f32 1.0, %v3835
      %v3837 = vrcp.pop %v3780
      %v3838 = vmul.f32 1.0, %v3837
      %v3839 = vrcp.pop %v3781
      %v3840 = vmul.f32 1.0, %v3839
      %v3841 = vrcp.pop %v3782
      %v3842 = vmul.f32 1.0, %v3841
      %v3843 = vrcp.pop %v3783
      %v3844 = vmul.f32 1.0, %v3843
      %v3845 = vrcp.pop %v3784
      %v3846 = vmul.f32 1.0, %v3845
      %v3847 = vrcp.pop %v3785
      %v3848 = vmul.f32 1.0, %v3847
      %v3849 = vrcp.pop %v3786
      %v3850 = vmul.f32 1.0, %v3849
      %v3851 = vmul.f32 %v3627, %v3788
      %v3852 = vmul.f32 %v3628, %v3790
      %v3853 = vmul.f32 %v3629, %v3792
      %v3854 = vmul.f32 %v3630, %v3794
      %v3855 = vmul.f32 %v3631, %v3796
      %v3856 = vmul.f32 %v3632, %v3798
      %v3857 = vmul.f32 %v3633, %v3800
      %v3858 = vmul.f32 %v3634, %v3802
      %v3859 = vmul.f32 %v3635, %v3804
      %v3860 = vmul.f32 %v3636, %v3806
      %v3861 = vmul.f32 %v3637, %v3808
      %v3862 = vmul.f32 %v3638, %v3810
      %v3863 = vmul.f32 %v3639, %v3812
      %v3864 = vmul.f32 %v3640, %v3814
      %v3865 = vmul.f32 %v3641, %v3816
      %v3866 = vmul.f32 %v3642, %v3818
      %v3867 = vmul.f32 %v3643, %v3820
      %v3868 = vmul.f32 %v3644, %v3822
      %v3869 = vmul.f32 %v3645, %v3824
      %v3870 = vmul.f32 %v3646, %v3826
      %v3871 = vmul.f32 %v3647, %v3828
      %v3872 = vmul.f32 %v3648, %v3830
      %v3873 = vmul.f32 %v3649, %v3832
      %v3874 = vmul.f32 %v3650, %v3834
      %v3875 = vmul.f32 %v3651, %v3836
      %v3876 = vmul.f32 %v3652, %v3838
      %v3877 = vmul.f32 %v3653, %v3840
      %v3878 = vmul.f32 %v3654, %v3842
      %v3879 = vmul.f32 %v3655, %v3844
      %v3880 = vmul.f32 %v3656, %v3846
      %v3881 = vmul.f32 %v3657, %v3848
      %v3882 = vmul.f32 %v3658, %v3850
      %v3883 = vmul.f32 %v3851, %v977
      %v3884 = vmul.f32 %v3852, %v978
      %v3885 = vmul.f32 %v3853, %v979
      %v3886 = vmul.f32 %v3854, %v980
      %v3887 = vmul.f32 %v3855, %v981
      %v3888 = vmul.f32 %v3856, %v982
      %v3889 = vmul.f32 %v3857, %v983
      %v3890 = vmul.f32 %v3858, %v984
      %v3891 = vmul.f32 %v3859, %v985
      %v3892 = vmul.f32 %v3860, %v986
      %v3893 = vmul.f32 %v3861, %v987
      %v3894 = vmul.f32 %v3862, %v988
      %v3895 = vmul.f32 %v3863, %v989
      %v3896 = vmul.f32 %v3864, %v990
      %v3897 = vmul.f32 %v3865, %v991
      %v3898 = vmul.f32 %v3866, %v992
      %v3899 = vmul.f32 %v3867, %v993
      %v3900 = vmul.f32 %v3868, %v994
      %v3901 = vmul.f32 %v3869, %v995
      %v3902 = vmul.f32 %v3870, %v996
      %v3903 = vmul.f32 %v3871, %v997
      %v3904 = vmul.f32 %v3872, %v998
      %v3905 = vmul.f32 %v3873, %v999
      %v3906 = vmul.f32 %v3874, %v1000
      %v3907 = vmul.f32 %v3875, %v1001
      %v3908 = vmul.f32 %v3876, %v1002
      %v3909 = vmul.f32 %v3877, %v1003
      %v3910 = vmul.f32 %v3878, %v1004
      %v3911 = vmul.f32 %v3879, %v1005
      %v3912 = vmul.f32 %v3880, %v1006
      %v3913 = vmul.f32 %v3881, %v1007
      %v3914 = vmul.f32 %v3882, %v1008
      %v3915 = vrot.slane %v3883, 7
      %v3916 = vrot.slane %v3884, 7
      %v3917 = vrot.slane %v3885, 7
      %v3918 = vrot.slane %v3886, 7
      %v3919 = vrot.slane %v3887, 7
      %v3920 = vrot.slane %v3888, 7
      %v3921 = vrot.slane %v3889, 7
      %v3922 = vrot.slane %v3890, 7
      %v3923 = vrot.slane %v3891, 7
      %v3924 = vrot.slane %v3892, 7
      %v3925 = vrot.slane %v3893, 7
      %v3926 = vrot.slane %v3894, 7
      %v3927 = vrot.slane %v3895, 7
      %v3928 = vrot.slane %v3896, 7
      %v3929 = vrot.slane %v3897, 7
      %v3930 = vrot.slane %v3898, 7
      %v3931 = vrot.slane %v3899, 7
      %v3932 = vrot.slane %v3900, 7
      %v3933 = vrot.slane %v3901, 7
      %v3934 = vrot.slane %v3902, 7
      %v3935 = vrot.slane %v3903, 7
      %v3936 = vrot.slane %v3904, 7
      %v3937 = vrot.slane %v3905, 7
      %v3938 = vrot.slane %v3906, 7
      %v3939 = vrot.slane %v3907, 7
      %v3940 = vrot.slane %v3908, 7
      %v3941 = vrot.slane %v3909, 7
      %v3942 = vrot.slane %v3910, 7
      %v3943 = vrot.slane %v3911, 7
      %v3944 = vrot.slane %v3912, 7
      %v3945 = vrot.slane %v3913, 7
      %v3946 = vrot.slane %v3914, 7
      %v3947 = vsel %vm1213, %v3945, %v3946
      %v3948 = vsel %vm1213, %v3944, %v3945
      %v3949 = vsel %vm1213, %v3943, %v3944
      %v3950 = vsel %vm1213, %v3942, %v3943
      %v3951 = vsel %vm1213, %v3941, %v3942
      %v3952 = vsel %vm1213, %v3940, %v3941
      %v3953 = vsel %vm1213, %v3939, %v3940
      %v3954 = vsel %vm1213, %v3938, %v3939
      %v3955 = vsel %vm1213, %v3937, %v3938
      %v3956 = vsel %vm1213, %v3936, %v3937
      %v3957 = vsel %vm1213, %v3935, %v3936
      %v3958 = vsel %vm1213, %v3934, %v3935
      %v3959 = vsel %vm1213, %v3933, %v3934
      %v3960 = vsel %vm1213, %v3932, %v3933
      %v3961 = vsel %vm1213, %v3931, %v3932
      %v3962 = vsel %vm1213, %v3930, %v3931
      %v3963 = vsel %vm1213, %v3929, %v3930
      %v3964 = vsel %vm1213, %v3928, %v3929
      %v3965 = vsel %vm1213, %v3927, %v3928
      %v3966 = vsel %vm1213, %v3926, %v3927
      %v3967 = vsel %vm1213, %v3925, %v3926
      %v3968 = vsel %vm1213, %v3924, %v3925
      %v3969 = vsel %vm1213, %v3923, %v3924
      %v3970 = vsel %vm1213, %v3922, %v3923
      %v3971 = vsel %vm1213, %v3921, %v3922
      %v3972 = vsel %vm1213, %v3920, %v3921
      %v3973 = vsel %vm1213, %v3919, %v3920
      %v3974 = vsel %vm1213, %v3918, %v3919
      %v3975 = vsel %vm1213, %v3917, %v3918
      %v3976 = vsel %vm1213, %v3916, %v3917
      %v3977 = vsel %vm1213, %v3915, %v3916
      %v3978 = vsel %vm1213, %v3946, %v3915
      %v3979 = vmul.f32 %v3851, %v1073
      %v3980 = vmul.f32 %v3852, %v1074
      %v3981 = vmul.f32 %v3853, %v1075
      %v3982 = vmul.f32 %v3854, %v1076
      %v3983 = vmul.f32 %v3855, %v1077
      %v3984 = vmul.f32 %v3856, %v1078
      %v3985 = vmul.f32 %v3857, %v1079
      %v3986 = vmul.f32 %v3858, %v1080
      %v3987 = vmul.f32 %v3859, %v1081
      %v3988 = vmul.f32 %v3860, %v1082
      %v3989 = vmul.f32 %v3861, %v1083
      %v3990 = vmul.f32 %v3862, %v1084
      %v3991 = vmul.f32 %v3863, %v1085
      %v3992 = vmul.f32 %v3864, %v1086
      %v3993 = vmul.f32 %v3865, %v1087
      %v3994 = vmul.f32 %v3866, %v1088
      %v3995 = vmul.f32 %v3867, %v1089
      %v3996 = vmul.f32 %v3868, %v1090
      %v3997 = vmul.f32 %v3869, %v1091
      %v3998 = vmul.f32 %v3870, %v1092
      %v3999 = vmul.f32 %v3871, %v1093
      %v4000 = vmul.f32 %v3872, %v1094
      %v4001 = vmul.f32 %v3873, %v1095
      %v4002 = vmul.f32 %v3874, %v1096
      %v4003 = vmul.f32 %v3875, %v1097
      %v4004 = vmul.f32 %v3876, %v1098
      %v4005 = vmul.f32 %v3877, %v1099
      %v4006 = vmul.f32 %v3878, %v1100
      %v4007 = vmul.f32 %v3879, %v1101
      %v4008 = vmul.f32 %v3880, %v1102
      %v4009 = vmul.f32 %v3881, %v1103
      %v4010 = vmul.f32 %v3882, %v1104
      %v4011 = vrot.slane %v3979, 1
      %v4012 = vrot.slane %v3980, 1
      %v4013 = vrot.slane %v3981, 1
      %v4014 = vrot.slane %v3982, 1
      %v4015 = vrot.slane %v3983, 1
      %v4016 = vrot.slane %v3984, 1
      %v4017 = vrot.slane %v3985, 1
      %v4018 = vrot.slane %v3986, 1
      %v4019 = vrot.slane %v3987, 1
      %v4020 = vrot.slane %v3988, 1
      %v4021 = vrot.slane %v3989, 1
      %v4022 = vrot.slane %v3990, 1
      %v4023 = vrot.slane %v3991, 1
      %v4024 = vrot.slane %v3992, 1
      %v4025 = vrot.slane %v3993, 1
      %v4026 = vrot.slane %v3994, 1
      %v4027 = vrot.slane %v3995, 1
      %v4028 = vrot.slane %v3996, 1
      %v4029 = vrot.slane %v3997, 1
      %v4030 = vrot.slane %v3998, 1
      %v4031 = vrot.slane %v3999, 1
      %v4032 = vrot.slane %v4000, 1
      %v4033 = vrot.slane %v4001, 1
      %v4034 = vrot.slane %v4002, 1
      %v4035 = vrot.slane %v4003, 1
      %v4036 = vrot.slane %v4004, 1
      %v4037 = vrot.slane %v4005, 1
      %v4038 = vrot.slane %v4006, 1
      %v4039 = vrot.slane %v4007, 1
      %v4040 = vrot.slane %v4008, 1
      %v4041 = vrot.slane %v4009, 1
      %v4042 = vrot.slane %v4010, 1
      %v4043 = vsel %vm1310, %v4041, %v4042
      %v4044 = vsel %vm1310, %v4040, %v4041
      %v4045 = vsel %vm1310, %v4039, %v4040
      %v4046 = vsel %vm1310, %v4038, %v4039
      %v4047 = vsel %vm1310, %v4037, %v4038
      %v4048 = vsel %vm1310, %v4036, %v4037
      %v4049 = vsel %vm1310, %v4035, %v4036
      %v4050 = vsel %vm1310, %v4034, %v4035
      %v4051 = vsel %vm1310, %v4033, %v4034
      %v4052 = vsel %vm1310, %v4032, %v4033
      %v4053 = vsel %vm1310, %v4031, %v4032
      %v4054 = vsel %vm1310, %v4030, %v4031
      %v4055 = vsel %vm1310, %v4029, %v4030
      %v4056 = vsel %vm1310, %v4028, %v4029
      %v4057 = vsel %vm1310, %v4027, %v4028
      %v4058 = vsel %vm1310, %v4026, %v4027
      %v4059 = vsel %vm1310, %v4025, %v4026
      %v4060 = vsel %vm1310, %v4024, %v4025
      %v4061 = vsel %vm1310, %v4023, %v4024
      %v4062 = vsel %vm1310, %v4022, %v4023
      %v4063 = vsel %vm1310, %v4021, %v4022
      %v4064 = vsel %vm1310, %v4020, %v4021
      %v4065 = vsel %vm1310, %v4019, %v4020
      %v4066 = vsel %vm1310, %v4018, %v4019
      %v4067 = vsel %vm1310, %v4017, %v4018
      %v4068 = vsel %vm1310, %v4016, %v4017
      %v4069 = vsel %vm1310, %v4015, %v4016
      %v4070 = vsel %vm1310, %v4014, %v4015
      %v4071 = vsel %vm1310, %v4013, %v4014
      %v4072 = vsel %vm1310, %v4012, %v4013
      %v4073 = vsel %vm1310, %v4011, %v4012
      %v4074 = vsel %vm1310, %v4042, %v4011
      %4075 = vst [vmem:[#allocation2 + $0x30] sm:$0xff] %v3978
      %4076 = vst [vmem:[#allocation2 + $0x48] sm:$0xff] %v3977
      %4077 = vst [vmem:[#allocation2 + $0x60] sm:$0xff] %v3976
      %4078 = vst [vmem:[#allocation2 + $0x78] sm:$0xff] %v3975
      %4079 = vst [vmem:[#allocation2 + $0x90] sm:$0xff] %v3974
      %4080 = vst [vmem:[#allocation2 + $0xa8] sm:$0xff] %v3973
      %4081 = vst [vmem:[#allocation2 + $0xc0] sm:$0xff] %v3972
      %4082 = vst [vmem:[#allocation2 + $0xd8] sm:$0xff] %v3971
      %4083 = vst [vmem:[#allocation2 + $0xf0] sm:$0xff] %v3970
      %4084 = vst [vmem:[#allocation2 + $0x108] sm:$0xff] %v3969
      %4085 = vst [vmem:[#allocation2 + $0x120] sm:$0xff] %v3968
      %4086 = vst [vmem:[#allocation2 + $0x138] sm:$0xff] %v3967
      %4087 = vst [vmem:[#allocation2 + $0x150] sm:$0xff] %v3966
      %4088 = vst [vmem:[#allocation2 + $0x168] sm:$0xff] %v3965
      %4089 = vst [vmem:[#allocation2 + $0x180] sm:$0xff] %v3964
      %4090 = vst [vmem:[#allocation2 + $0x198] sm:$0xff] %v3963
      %4091 = vst [vmem:[#allocation2 + $0x1b0] sm:$0xff] %v3962
      %4092 = vst [vmem:[#allocation2 + $0x1c8] sm:$0xff] %v3961
      %4093 = vst [vmem:[#allocation2 + $0x1e0] sm:$0xff] %v3960
      %4094 = vst [vmem:[#allocation2 + $0x1f8] sm:$0xff] %v3959
      %4095 = vst [vmem:[#allocation2 + $0x210] sm:$0xff] %v3958
      %4096 = vst [vmem:[#allocation2 + $0x228] sm:$0xff] %v3957
      %4097 = vst [vmem:[#allocation2 + $0x240] sm:$0xff] %v3956
      %4098 = vst [vmem:[#allocation2 + $0x258] sm:$0xff] %v3955
      %4099 = vst [vmem:[#allocation2 + $0x270] sm:$0xff] %v3954
      %4100 = vst [vmem:[#allocation2 + $0x288] sm:$0xff] %v3953
      %4101 = vst [vmem:[#allocation2 + $0x2a0] sm:$0xff] %v3952
      %4102 = vst [vmem:[#allocation2 + $0x2b8] sm:$0xff] %v3951
      %4103 = vst [vmem:[#allocation2 + $0x2d0] sm:$0xff] %v3950
      %4104 = vst [vmem:[#allocation2 + $0x2e8] sm:$0xff] %v3949
      %4105 = vst [vmem:[#allocation2 + $0x300] sm:$0xff] %v3948
      %4106 = vst [vmem:[#allocation2 + $0x318] sm:$0xff] %v3947
      %4107 = vst [vmem:[#allocation2 + $0x38] sm:$0xff] %v3851
      %4108 = vst [vmem:[#allocation2 + $0x50] sm:$0xff] %v3852
      %4109 = vst [vmem:[#allocation2 + $0x68] sm:$0xff] %v3853
      %4110 = vst [vmem:[#allocation2 + $0x80] sm:$0xff] %v3854
      %4111 = vst [vmem:[#allocation2 + $0x98] sm:$0xff] %v3855
      %4112 = vst [vmem:[#allocation2 + $0xb0] sm:$0xff] %v3856
      %4113 = vst [vmem:[#allocation2 + $0xc8] sm:$0xff] %v3857
      %4114 = vst [vmem:[#allocation2 + $0xe0] sm:$0xff] %v3858
      %4115 = vst [vmem:[#allocation2 + $0xf8] sm:$0xff] %v3859
      %4116 = vst [vmem:[#allocation2 + $0x110] sm:$0xff] %v3860
      %4117 = vst [vmem:[#allocation2 + $0x128] sm:$0xff] %v3861
      %4118 = vst [vmem:[#allocation2 + $0x140] sm:$0xff] %v3862
      %4119 = vst [vmem:[#allocation2 + $0x158] sm:$0xff] %v3863
      %4120 = vst [vmem:[#allocation2 + $0x170] sm:$0xff] %v3864
      %4121 = vst [vmem:[#allocation2 + $0x188] sm:$0xff] %v3865
      %4122 = vst [vmem:[#allocation2 + $0x1a0] sm:$0xff] %v3866
      %4123 = vst [vmem:[#allocation2 + $0x1b8] sm:$0xff] %v3867
      %4124 = vst [vmem:[#allocation2 + $0x1d0] sm:$0xff] %v3868
      %4125 = vst [vmem:[#allocation2 + $0x1e8] sm:$0xff] %v3869
      %4126 = vst [vmem:[#allocation2 + $0x200] sm:$0xff] %v3870
      %4127 = vst [vmem:[#allocation2 + $0x218] sm:$0xff] %v3871
      %4128 = vst [vmem:[#allocation2 + $0x230] sm:$0xff] %v3872
      %4129 = vst [vmem:[#allocation2 + $0x248] sm:$0xff] %v3873
      %4130 = vst [vmem:[#allocation2 + $0x260] sm:$0xff] %v3874
      %4131 = vst [vmem:[#allocation2 + $0x278] sm:$0xff] %v3875
      %4132 = vst [vmem:[#allocation2 + $0x290] sm:$0xff] %v3876
      %4133 = vst [vmem:[#allocation2 + $0x2a8] sm:$0xff] %v3877
      %4134 = vst [vmem:[#allocation2 + $0x2c0] sm:$0xff] %v3878
      %4135 = vst [vmem:[#allocation2 + $0x2d8] sm:$0xff] %v3879
      %4136 = vst [vmem:[#allocation2 + $0x2f0] sm:$0xff] %v3880
      %4137 = vst [vmem:[#allocation2 + $0x308] sm:$0xff] %v3881
      %4138 = vst [vmem:[#allocation2 + $0x320] sm:$0xff] %v3882
      %4139 = vst [vmem:[#allocation2 + $0x40] sm:$0xff] %v4073
      %4140 = vst [vmem:[#allocation2 + $0x58] sm:$0xff] %v4072
      %4141 = vst [vmem:[#allocation2 + $0x70] sm:$0xff] %v4071
      %4142 = vst [vmem:[#allocation2 + $0x88] sm:$0xff] %v4070
      %4143 = vst [vmem:[#allocation2 + $0xa0] sm:$0xff] %v4069
      %4144 = vst [vmem:[#allocation2 + $0xb8] sm:$0xff] %v4068
      %4145 = vst [vmem:[#allocation2 + $0xd0] sm:$0xff] %v4067
      %4146 = vst [vmem:[#allocation2 + $0xe8] sm:$0xff] %v4066
      %4147 = vst [vmem:[#allocation2 + $0x100] sm:$0xff] %v4065
      %4148 = vst [vmem:[#allocation2 + $0x118] sm:$0xff] %v4064
      %4149 = vst [vmem:[#allocation2 + $0x130] sm:$0xff] %v4063
      %4150 = vst [vmem:[#allocation2 + $0x148] sm:$0xff] %v4062
      %4151 = vst [vmem:[#allocation2 + $0x160] sm:$0xff] %v4061
      %4152 = vst [vmem:[#allocation2 + $0x178] sm:$0xff] %v4060
      %4153 = vst [vmem:[#allocation2 + $0x190] sm:$0xff] %v4059
      %4154 = vst [vmem:[#allocation2 + $0x1a8] sm:$0xff] %v4058
      %4155 = vst [vmem:[#allocation2 + $0x1c0] sm:$0xff] %v4057
      %4156 = vst [vmem:[#allocation2 + $0x1d8] sm:$0xff] %v4056
      %4157 = vst [vmem:[#allocation2 + $0x1f0] sm:$0xff] %v4055
      %4158 = vst [vmem:[#allocation2 + $0x208] sm:$0xff] %v4054
      %4159 = vst [vmem:[#allocation2 + $0x220] sm:$0xff] %v4053
      %4160 = vst [vmem:[#allocation2 + $0x238] sm:$0xff] %v4052
      %4161 = vst [vmem:[#allocation2 + $0x250] sm:$0xff] %v4051
      %4162 = vst [vmem:[#allocation2 + $0x268] sm:$0xff] %v4050
      %4163 = vst [vmem:[#allocation2 + $0x280] sm:$0xff] %v4049
      %4164 = vst [vmem:[#allocation2 + $0x298] sm:$0xff] %v4048
      %4165 = vst [vmem:[#allocation2 + $0x2b0] sm:$0xff] %v4047
      %4166 = vst [vmem:[#allocation2 + $0x2c8] sm:$0xff] %v4046
      %4167 = vst [vmem:[#allocation2 + $0x2e0] sm:$0xff] %v4045
      %4168 = vst [vmem:[#allocation2 + $0x2f8] sm:$0xff] %v4044
      %4169 = vst [vmem:[#allocation2 + $0x310] sm:$0xff] %v4043
      %4170 = vst [vmem:[#allocation2 + $0x328] sm:$0xff] %v4074
      %v4171 = vld [vmem:[#allocation2] sm:$0xff]
      %v4172 = vld [vmem:[#allocation2 + $0x8] sm:$0xff]
      %v4173 = vld [vmem:[#allocation2 + $0x10] sm:$0xff]
      %v4174 = vld [vmem:[#allocation2 + $0x18] sm:$0xff]
      %v4175 = vld [vmem:[#allocation2 + $0x20] sm:$0xff]
      %v4176 = vld [vmem:[#allocation2 + $0x28] sm:$0xff]
      %v4177 = vld [vmem:[#allocation2 + $0x30] sm:$0xff]
      %v4178 = vld [vmem:[#allocation2 + $0x38] sm:$0xff]
      %v4179 = vld [vmem:[#allocation2 + $0x40] sm:$0xff]
      %v4180 = vld [vmem:[#allocation2 + $0x48] sm:$0xff]
      %v4181 = vld [vmem:[#allocation2 + $0x50] sm:$0xff]
      %v4182 = vld [vmem:[#allocation2 + $0x58] sm:$0xff]
      %v4183 = vld [vmem:[#allocation2 + $0x60] sm:$0xff]
      %v4184 = vld [vmem:[#allocation2 + $0x68] sm:$0xff]
      %v4185 = vld [vmem:[#allocation2 + $0x70] sm:$0xff]
      %v4186 = vld [vmem:[#allocation2 + $0x78] sm:$0xff]
      %v4187 = vld [vmem:[#allocation2 + $0x80] sm:$0xff]
      %v4188 = vld [vmem:[#allocation2 + $0x88] sm:$0xff]
      %v4189 = vld [vmem:[#allocation2 + $0x90] sm:$0xff]
      %v4190 = vld [vmem:[#allocation2 + $0x98] sm:$0xff]
      %v4191 = vld [vmem:[#allocation2 + $0xa0] sm:$0xff]
      %v4192 = vld [vmem:[#allocation2 + $0xa8] sm:$0xff]
      %v4193 = vld [vmem:[#allocation2 + $0xb0] sm:$0xff]
      %v4194 = vld [vmem:[#allocation2 + $0xb8] sm:$0xff]
      %v4195 = vld [vmem:[#allocation2 + $0xc0] sm:$0xff]
      %v4196 = vld [vmem:[#allocation2 + $0xc8] sm:$0xff]
      %v4197 = vld [vmem:[#allocation2 + $0xd0] sm:$0xff]
      %v4198 = vld [vmem:[#allocation2 + $0xd8] sm:$0xff]
      %v4199 = vld [vmem:[#allocation2 + $0xe0] sm:$0xff]
      %v4200 = vld [vmem:[#allocation2 + $0xe8] sm:$0xff]
      %v4201 = vld [vmem:[#allocation2 + $0xf0] sm:$0xff]
      %v4202 = vld [vmem:[#allocation2 + $0xf8] sm:$0xff]
      %v4203 = vld [vmem:[#allocation2 + $0x100] sm:$0xff]
      %v4204 = vld [vmem:[#allocation2 + $0x108] sm:$0xff]
      %v4205 = vld [vmem:[#allocation2 + $0x110] sm:$0xff]
      %v4206 = vld [vmem:[#allocation2 + $0x118] sm:$0xff]
      %v4207 = vld [vmem:[#allocation2 + $0x120] sm:$0xff]
      %v4208 = vld [vmem:[#allocation2 + $0x128] sm:$0xff]
      %v4209 = vld [vmem:[#allocation2 + $0x130] sm:$0xff]
      %v4210 = vld [vmem:[#allocation2 + $0x138] sm:$0xff]
      %v4211 = vld [vmem:[#allocation2 + $0x140] sm:$0xff]
      %v4212 = vld [vmem:[#allocation2 + $0x148] sm:$0xff]
      %v4213 = vld [vmem:[#allocation2 + $0x150] sm:$0xff]
      %v4214 = vld [vmem:[#allocation2 + $0x158] sm:$0xff]
      %v4215 = vld [vmem:[#allocation2 + $0x160] sm:$0xff]
      %v4216 = vld [vmem:[#allocation2 + $0x168] sm:$0xff]
      %v4217 = vld [vmem:[#allocation2 + $0x170] sm:$0xff]
      %v4218 = vld [vmem:[#allocation2 + $0x178] sm:$0xff]
      %v4219 = vld [vmem:[#allocation2 + $0x180] sm:$0xff]
      %v4220 = vld [vmem:[#allocation2 + $0x188] sm:$0xff]
      %v4221 = vld [vmem:[#allocation2 + $0x190] sm:$0xff]
      %v4222 = vld [vmem:[#allocation2 + $0x198] sm:$0xff]
      %v4223 = vld [vmem:[#allocation2 + $0x1a0] sm:$0xff]
      %v4224 = vld [vmem:[#allocation2 + $0x1a8] sm:$0xff]
      %v4225 = vld [vmem:[#allocation2 + $0x1b0] sm:$0xff]
      %v4226 = vld [vmem:[#allocation2 + $0x1b8] sm:$0xff]
      %v4227 = vld [vmem:[#allocation2 + $0x1c0] sm:$0xff]
      %v4228 = vld [vmem:[#allocation2 + $0x1c8] sm:$0xff]
      %v4229 = vld [vmem:[#allocation2 + $0x1d0] sm:$0xff]
      %v4230 = vld [vmem:[#allocation2 + $0x1d8] sm:$0xff]
      %v4231 = vld [vmem:[#allocation2 + $0x1e0] sm:$0xff]
      %v4232 = vld [vmem:[#allocation2 + $0x1e8] sm:$0xff]
      %v4233 = vld [vmem:[#allocation2 + $0x1f0] sm:$0xff]
      %v4234 = vld [vmem:[#allocation2 + $0x1f8] sm:$0xff]
      %v4235 = vld [vmem:[#allocation2 + $0x200] sm:$0xff]
      %v4236 = vld [vmem:[#allocation2 + $0x208] sm:$0xff]
      %v4237 = vld [vmem:[#allocation2 + $0x210] sm:$0xff]
      %v4238 = vld [vmem:[#allocation2 + $0x218] sm:$0xff]
      %v4239 = vld [vmem:[#allocation2 + $0x220] sm:$0xff]
      %v4240 = vld [vmem:[#allocation2 + $0x228] sm:$0xff]
      %v4241 = vld [vmem:[#allocation2 + $0x230] sm:$0xff]
      %v4242 = vld [vmem:[#allocation2 + $0x238] sm:$0xff]
      %v4243 = vld [vmem:[#allocation2 + $0x240] sm:$0xff]
      %v4244 = vld [vmem:[#allocation2 + $0x248] sm:$0xff]
      %v4245 = vld [vmem:[#allocation2 + $0x250] sm:$0xff]
      %v4246 = vld [vmem:[#allocation2 + $0x258] sm:$0xff]
      %v4247 = vld [vmem:[#allocation2 + $0x260] sm:$0xff]
      %v4248 = vld [vmem:[#allocation2 + $0x268] sm:$0xff]
      %v4249 = vld [vmem:[#allocation2 + $0x270] sm:$0xff]
      %v4250 = vld [vmem:[#allocation2 + $0x278] sm:$0xff]
      %v4251 = vld [vmem:[#allocation2 + $0x280] sm:$0xff]
      %v4252 = vld [vmem:[#allocation2 + $0x288] sm:$0xff]
      %v4253 = vld [vmem:[#allocation2 + $0x290] sm:$0xff]
      %v4254 = vld [vmem:[#allocation2 + $0x298] sm:$0xff]
      %v4255 = vld [vmem:[#allocation2 + $0x2a0] sm:$0xff]
      %v4256 = vld [vmem:[#allocation2 + $0x2a8] sm:$0xff]
      %v4257 = vld [vmem:[#allocation2 + $0x2b0] sm:$0xff]
      %v4258 = vld [vmem:[#allocation2 + $0x2b8] sm:$0xff]
      %v4259 = vld [vmem:[#allocation2 + $0x2c0] sm:$0xff]
      %v4260 = vld [vmem:[#allocation2 + $0x2c8] sm:$0xff]
      %v4261 = vld [vmem:[#allocation2 + $0x2d0] sm:$0xff]
      %v4262 = vld [vmem:[#allocation2 + $0x2d8] sm:$0xff]
      %v4263 = vld [vmem:[#allocation2 + $0x2e0] sm:$0xff]
      %v4264 = vld [vmem:[#allocation2 + $0x2e8] sm:$0xff]
      %v4265 = vld [vmem:[#allocation2 + $0x2f0] sm:$0xff]
      %v4266 = vld [vmem:[#allocation2 + $0x2f8] sm:$0xff]
      %v4267 = vld [vmem:[%s7] sm:$0xff]
      %v4268 = vld [vmem:[%s7 + $0x8] sm:$0xff]
      %v4269 = vld [vmem:[%s7 + $0x10] sm:$0xff]
      %v4270 = vld [vmem:[%s7 + $0x18] sm:$0xff]
      %v4271 = vld [vmem:[%s7 + $0x20] sm:$0xff]
      %v4272 = vld [vmem:[%s7 + $0x28] sm:$0xff]
      %v4273 = vld [vmem:[%s7 + $0x30] sm:$0xff]
      %v4274 = vld [vmem:[%s7 + $0x38] sm:$0xff]
      %v4275 = vld [vmem:[%s7 + $0x40] sm:$0xff]
      %v4276 = vld [vmem:[%s7 + $0x48] sm:$0xff]
      %v4277 = vld [vmem:[%s7 + $0x50] sm:$0xff]
      %v4278 = vld [vmem:[%s7 + $0x58] sm:$0xff]
      %v4279 = vld [vmem:[%s7 + $0x60] sm:$0xff]
      %v4280 = vld [vmem:[%s7 + $0x68] sm:$0xff]
      %v4281 = vld [vmem:[%s7 + $0x70] sm:$0xff]
      %v4282 = vld [vmem:[%s7 + $0x78] sm:$0xff]
      %v4283 = vld [vmem:[%s7 + $0x80] sm:$0xff]
      %v4284 = vld [vmem:[%s7 + $0x88] sm:$0xff]
      %v4285 = vld [vmem:[%s7 + $0x90] sm:$0xff]
      %v4286 = vld [vmem:[%s7 + $0x98] sm:$0xff]
      %v4287 = vld [vmem:[%s7 + $0xa0] sm:$0xff]
      %v4288 = vld [vmem:[%s7 + $0xa8] sm:$0xff]
      %v4289 = vld [vmem:[%s7 + $0xb0] sm:$0xff]
      %v4290 = vld [vmem:[%s7 + $0xb8] sm:$0xff]
      %v4291 = vld [vmem:[%s7 + $0xc0] sm:$0xff]
      %v4292 = vld [vmem:[%s7 + $0xc8] sm:$0xff]
      %v4293 = vld [vmem:[%s7 + $0xd0] sm:$0xff]
      %v4294 = vld [vmem:[%s7 + $0xd8] sm:$0xff]
      %v4295 = vld [vmem:[%s7 + $0xe0] sm:$0xff]
      %v4296 = vld [vmem:[%s7 + $0xe8] sm:$0xff]
      %v4297 = vld [vmem:[%s7 + $0xf0] sm:$0xff]
      %v4298 = vld [vmem:[%s7 + $0xf8] sm:$0xff]
      %v4299 = vld [vmem:[%s7 + $0x100] sm:$0xff]
      %v4300 = vld [vmem:[%s7 + $0x108] sm:$0xff]
      %v4301 = vld [vmem:[%s7 + $0x110] sm:$0xff]
      %v4302 = vld [vmem:[%s7 + $0x118] sm:$0xff]
      %v4303 = vld [vmem:[%s7 + $0x120] sm:$0xff]
      %v4304 = vld [vmem:[%s7 + $0x128] sm:$0xff]
      %v4305 = vld [vmem:[%s7 + $0x130] sm:$0xff]
      %v4306 = vld [vmem:[%s7 + $0x138] sm:$0xff]
      %v4307 = vld [vmem:[%s7 + $0x140] sm:$0xff]
      %v4308 = vld [vmem:[%s7 + $0x148] sm:$0xff]
      %v4309 = vld [vmem:[%s7 + $0x150] sm:$0xff]
      %v4310 = vld [vmem:[%s7 + $0x158] sm:$0xff]
      %v4311 = vld [vmem:[%s7 + $0x160] sm:$0xff]
      %v4312 = vld [vmem:[%s7 + $0x168] sm:$0xff]
      %v4313 = vld [vmem:[%s7 + $0x170] sm:$0xff]
      %v4314 = vld [vmem:[%s7 + $0x178] sm:$0xff]
      %v4315 = vld [vmem:[#allocation2 + $0x300] sm:$0xff]
      %v4316 = vld [vmem:[#allocation2 + $0x308] sm:$0xff]
      %v4317 = vld [vmem:[#allocation2 + $0x310] sm:$0xff]
      %v4318 = vld [vmem:[#allocation2 + $0x318] sm:$0xff]
      %v4319 = vld [vmem:[#allocation2 + $0x320] sm:$0xff]
      %v4320 = vld [vmem:[#allocation2 + $0x328] sm:$0xff]
      %s4321 = scalar_lea.vmem %s7, 384
      %v4322 = vld [vmem:[%s4321] sm:$0xff]
      %v4323 = vld [vmem:[%s4321 + $0x8] sm:$0xff]
      %v4324 = vld [vmem:[%s4321 + $0x10] sm:$0xff]
      %v4325 = vld [vmem:[%s4321 + $0x18] sm:$0xff]
      %v4326 = vld [vmem:[%s4321 + $0x20] sm:$0xff]
      %v4327 = vld [vmem:[%s4321 + $0x28] sm:$0xff]
      %v4328 = vld [vmem:[%s4321 + $0x30] sm:$0xff]
      %v4329 = vld [vmem:[%s4321 + $0x38] sm:$0xff]
      %v4330 = vld [vmem:[%s4321 + $0x40] sm:$0xff]
      %v4331 = vld [vmem:[%s4321 + $0x48] sm:$0xff]
      %v4332 = vld [vmem:[%s4321 + $0x50] sm:$0xff]
      %v4333 = vld [vmem:[%s4321 + $0x58] sm:$0xff]
      %v4334 = vld [vmem:[%s4321 + $0x60] sm:$0xff]
      %v4335 = vld [vmem:[%s4321 + $0x68] sm:$0xff]
      %v4336 = vld [vmem:[%s4321 + $0x70] sm:$0xff]
      %v4337 = vld [vmem:[%s4321 + $0x78] sm:$0xff]
      %v4338 = vld [vmem:[%s4321 + $0x80] sm:$0xff]
      %v4339 = vld [vmem:[%s4321 + $0x88] sm:$0xff]
      %v4340 = vld [vmem:[%s4321 + $0x90] sm:$0xff]
      %v4341 = vld [vmem:[%s4321 + $0x98] sm:$0xff]
      %v4342 = vld [vmem:[%s4321 + $0xa0] sm:$0xff]
      %v4343 = vld [vmem:[%s4321 + $0xa8] sm:$0xff]
      %v4344 = vld [vmem:[%s4321 + $0xb0] sm:$0xff]
      %v4345 = vld [vmem:[%s4321 + $0xb8] sm:$0xff]
      %v4346 = vld [vmem:[%s4321 + $0xc0] sm:$0xff]
      %v4347 = vld [vmem:[%s4321 + $0xc8] sm:$0xff]
      %v4348 = vld [vmem:[%s4321 + $0xd0] sm:$0xff]
      %v4349 = vld [vmem:[%s4321 + $0xd8] sm:$0xff]
      %v4350 = vld [vmem:[%s4321 + $0xe0] sm:$0xff]
      %v4351 = vld [vmem:[%s4321 + $0xe8] sm:$0xff]
      %v4352 = vld [vmem:[%s4321 + $0xf0] sm:$0xff]
      %v4353 = vld [vmem:[%s4321 + $0xf8] sm:$0xff]
      %v4354 = vld [vmem:[%s4321 + $0x100] sm:$0xff]
      %v4355 = vld [vmem:[%s4321 + $0x108] sm:$0xff]
      %v4356 = vld [vmem:[%s4321 + $0x110] sm:$0xff]
      %v4357 = vld [vmem:[%s4321 + $0x118] sm:$0xff]
      %v4358 = vld [vmem:[%s4321 + $0x120] sm:$0xff]
      %v4359 = vld [vmem:[%s4321 + $0x128] sm:$0xff]
      %v4360 = vld [vmem:[%s4321 + $0x130] sm:$0xff]
      %v4361 = vld [vmem:[%s4321 + $0x138] sm:$0xff]
      %v4362 = vld [vmem:[%s4321 + $0x140] sm:$0xff]
      %v4363 = vld [vmem:[%s4321 + $0x148] sm:$0xff]
      %v4364 = vld [vmem:[%s4321 + $0x150] sm:$0xff]
      %v4365 = vld [vmem:[%s4321 + $0x158] sm:$0xff]
      %v4366 = vld [vmem:[%s4321 + $0x160] sm:$0xff]
      %v4367 = vld [vmem:[%s4321 + $0x168] sm:$0xff]
      %v4368 = vld [vmem:[%s4321 + $0x170] sm:$0xff]
      %v4369 = vld [vmem:[%s4321 + $0x178] sm:$0xff]
      %4370 = vmatprep.subr.mxu0 0.0
      %4371 = vmatpush1.msra.mxu0 %v4337
      %4372 = vmatprep.subr.mxu0 0.0
      %4373 = vmatpush1.msra.mxu0 %v4336
      %4374 = vmatprep.subr.mxu0 0.0
      %4375 = vmatpush1.msra.mxu0 %v4335
      %4376 = vmatprep.subr.mxu0 0.0
      %4377 = vmatpush1.msra.mxu0 %v4334
      %4378 = vmatprep.subr.mxu0 0.0
      %4379 = vmatpush1.msra.mxu0 %v4333
      %4380 = vmatprep.subr.mxu0 0.0
      %4381 = vmatpush1.msra.mxu0 %v4332
      %4382 = vmatprep.subr.mxu0 0.0
      %4383 = vmatpush1.msra.mxu0 %v4331
      %4384 = vmatprep.subr.mxu0 0.0
      %4385 = vmatpush1.msra.mxu0 %v4330
      %4386 = vmatprep.subr.mxu0 0.0
      %4387 = vmatpush1.msra.mxu0 %v4329
      %4388 = vmatprep.subr.mxu0 0.0
      %4389 = vmatpush1.msra.mxu0 %v4328
      %4390 = vmatprep.subr.mxu0 0.0
      %4391 = vmatpush1.msra.mxu0 %v4327
      %4392 = vmatprep.subr.mxu0 0.0
      %4393 = vmatpush1.msra.mxu0 %v4326
      %4394 = vmatprep.subr.mxu0 0.0
      %4395 = vmatpush1.msra.mxu0 %v4325
      %4396 = vmatprep.subr.mxu0 0.0
      %4397 = vmatpush1.msra.mxu0 %v4324
      %4398 = vmatprep.subr.mxu0 0.0
      %4399 = vmatpush1.msra.mxu0 %v4323
      %4400 = vmatprep.subr.mxu0 0.0
      %4401 = vmatpush1.msra.mxu0 %v4322
      %4402 = vmatprep.subr.mxu0 0.0
      %4403 = vmatpush2.msra.mxu0 %v4353
      %4404 = vmatprep.subr.mxu0 0.0
      %4405 = vmatpush2.msra.mxu0 %v4352
      %4406 = vmatprep.subr.mxu0 0.0
      %4407 = vmatpush2.msra.mxu0 %v4351
      %4408 = vmatprep.subr.mxu0 0.0
      %4409 = vmatpush2.msra.mxu0 %v4350
      %4410 = vmatprep.subr.mxu0 0.0
      %4411 = vmatpush2.msra.mxu0 %v4349
      %4412 = vmatprep.subr.mxu0 0.0
      %4413 = vmatpush2.msra.mxu0 %v4348
      %4414 = vmatprep.subr.mxu0 0.0
      %4415 = vmatpush2.msra.mxu0 %v4347
      %4416 = vmatprep.subr.mxu0 0.0
      %4417 = vmatpush2.msra.mxu0 %v4346
      %4418 = vmatprep.subr.mxu0 0.0
      %4419 = vmatpush2.msra.mxu0 %v4345
      %4420 = vmatprep.subr.mxu0 0.0
      %4421 = vmatpush2.msra.mxu0 %v4344
      %4422 = vmatprep.subr.mxu0 0.0
      %4423 = vmatpush2.msra.mxu0 %v4343
      %4424 = vmatprep.subr.mxu0 0.0
      %4425 = vmatpush2.msra.mxu0 %v4342
      %4426 = vmatprep.subr.mxu0 0.0
      %4427 = vmatpush2.msra.mxu0 %v4341
      %4428 = vmatprep.subr.mxu0 0.0
      %4429 = vmatpush2.msra.mxu0 %v4340
      %4430 = vmatprep.subr.mxu0 0.0
      %4431 = vmatpush2.msra.mxu0 %v4339
      %4432 = vmatprep.subr.mxu0 0.0
      %4433 = vmatpush2.msra.mxu0 %v4338
      %4434 = vmatprep.mubr.f32.mxu0 %v4178
      %4435 = vmatmul.mubr.f32.gmra.mxu0 %v4177
      %v4436 = vpop.f32.mrf.mxu0
      %v4437 = vadd.f32 0.0, %v4436
      %v4438 = vpop.f32.mrf.mxu0
      %4439 = vmatprep.mubr.f32.mxu0 %v4181
      %4440 = vmatmul.mubr.f32.gmra.mxu0 %v4180
      %v4441 = vpop.f32.mrf.mxu0
      %v4442 = vadd.f32 0.0, %v4441
      %v4443 = vpop.f32.mrf.mxu0
      %4444 = vmatprep.mubr.f32.mxu0 %v4184
      %4445 = vmatmul.mubr.f32.gmra.mxu0 %v4183
      %v4446 = vpop.f32.mrf.mxu0
      %v4447 = vadd.f32 0.0, %v4446
      %v4448 = vpop.f32.mrf.mxu0
      %4449 = vmatprep.mubr.f32.mxu0 %v4187
      %4450 = vmatmul.mubr.f32.gmra.mxu0 %v4186
      %v4451 = vpop.f32.mrf.mxu0
      %v4452 = vadd.f32 0.0, %v4451
      %v4453 = vpop.f32.mrf.mxu0
      %4454 = vmatprep.mubr.f32.mxu0 %v4190
      %4455 = vmatmul.mubr.f32.gmra.mxu0 %v4189
      %v4456 = vpop.f32.mrf.mxu0
      %v4457 = vadd.f32 0.0, %v4456
      %v4458 = vpop.f32.mrf.mxu0
      %4459 = vmatprep.mubr.f32.mxu0 %v4193
      %4460 = vmatmul.mubr.f32.gmra.mxu0 %v4192
      %v4461 = vpop.f32.mrf.mxu0
      %v4462 = vadd.f32 0.0, %v4461
      %v4463 = vpop.f32.mrf.mxu0
      %4464 = vmatprep.mubr.f32.mxu0 %v4196
      %4465 = vmatmul.mubr.f32.gmra.mxu0 %v4195
      %v4466 = vpop.f32.mrf.mxu0
      %v4467 = vadd.f32 0.0, %v4466
      %v4468 = vpop.f32.mrf.mxu0
      %4469 = vmatprep.mubr.f32.mxu0 %v4199
      %4470 = vmatmul.mubr.f32.gmra.mxu0 %v4198
      %v4471 = vpop.f32.mrf.mxu0
      %v4472 = vadd.f32 0.0, %v4471
      %v4473 = vpop.f32.mrf.mxu0
      %4474 = vmatprep.mubr.f32.mxu0 %v4202
      %4475 = vmatmul.mubr.f32.gmra.mxu0 %v4201
      %v4476 = vpop.f32.mrf.mxu0
      %v4477 = vadd.f32 0.0, %v4476
      %v4478 = vpop.f32.mrf.mxu0
      %4479 = vmatprep.mubr.f32.mxu0 %v4205
      %4480 = vmatmul.mubr.f32.gmra.mxu0 %v4204
      %v4481 = vpop.f32.mrf.mxu0
      %v4482 = vadd.f32 0.0, %v4481
      %v4483 = vpop.f32.mrf.mxu0
      %4484 = vmatprep.mubr.f32.mxu0 %v4208
      %4485 = vmatmul.mubr.f32.gmra.mxu0 %v4207
      %v4486 = vpop.f32.mrf.mxu0
      %v4487 = vadd.f32 0.0, %v4486
      %v4488 = vpop.f32.mrf.mxu0
      %4489 = vmatprep.mubr.f32.mxu0 %v4211
      %4490 = vmatmul.mubr.f32.gmra.mxu0 %v4210
      %v4491 = vpop.f32.mrf.mxu0
      %v4492 = vadd.f32 0.0, %v4491
      %v4493 = vpop.f32.mrf.mxu0
      %4494 = vmatprep.mubr.f32.mxu0 %v4214
      %4495 = vmatmul.mubr.f32.gmra.mxu0 %v4213
      %v4496 = vpop.f32.mrf.mxu0
      %v4497 = vadd.f32 0.0, %v4496
      %v4498 = vpop.f32.mrf.mxu0
      %4499 = vmatprep.mubr.f32.mxu0 %v4217
      %4500 = vmatmul.mubr.f32.gmra.mxu0 %v4216
      %v4501 = vpop.f32.mrf.mxu0
      %v4502 = vadd.f32 0.0, %v4501
      %v4503 = vpop.f32.mrf.mxu0
      %4504 = vmatprep.mubr.f32.mxu0 %v4220
      %4505 = vmatmul.mubr.f32.gmra.mxu0 %v4219
      %v4506 = vpop.f32.mrf.mxu0
      %v4507 = vadd.f32 0.0, %v4506
      %v4508 = vpop.f32.mrf.mxu0
      %4509 = vmatprep.mubr.f32.mxu0 %v4223
      %4510 = vmatmul.mubr.f32.gmra.mxu0 %v4222
      %v4511 = vpop.f32.mrf.mxu0
      %v4512 = vadd.f32 0.0, %v4511
      %v4513 = vpop.f32.mrf.mxu0
      %4514 = vmatprep.mubr.f32.mxu0 %v4226
      %4515 = vmatmul.mubr.f32.gmra.mxu0 %v4225
      %v4516 = vpop.f32.mrf.mxu0
      %v4517 = vadd.f32 0.0, %v4516
      %v4518 = vpop.f32.mrf.mxu0
      %4519 = vmatprep.mubr.f32.mxu0 %v4229
      %4520 = vmatmul.mubr.f32.gmra.mxu0 %v4228
      %v4521 = vpop.f32.mrf.mxu0
      %v4522 = vadd.f32 0.0, %v4521
      %v4523 = vpop.f32.mrf.mxu0
      %4524 = vmatprep.mubr.f32.mxu0 %v4232
      %4525 = vmatmul.mubr.f32.gmra.mxu0 %v4231
      %v4526 = vpop.f32.mrf.mxu0
      %v4527 = vadd.f32 0.0, %v4526
      %v4528 = vpop.f32.mrf.mxu0
      %4529 = vmatprep.mubr.f32.mxu0 %v4235
      %4530 = vmatmul.mubr.f32.gmra.mxu0 %v4234
      %v4531 = vpop.f32.mrf.mxu0
      %v4532 = vadd.f32 0.0, %v4531
      %v4533 = vpop.f32.mrf.mxu0
      %4534 = vmatprep.mubr.f32.mxu0 %v4238
      %4535 = vmatmul.mubr.f32.gmra.mxu0 %v4237
      %v4536 = vpop.f32.mrf.mxu0
      %v4537 = vadd.f32 0.0, %v4536
      %v4538 = vpop.f32.mrf.mxu0
      %4539 = vmatprep.mubr.f32.mxu0 %v4241
      %4540 = vmatmul.mubr.f32.gmra.mxu0 %v4240
      %v4541 = vpop.f32.mrf.mxu0
      %v4542 = vadd.f32 0.0, %v4541
      %v4543 = vpop.f32.mrf.mxu0
      %4544 = vmatprep.mubr.f32.mxu0 %v4244
      %4545 = vmatmul.mubr.f32.gmra.mxu0 %v4243
      %v4546 = vpop.f32.mrf.mxu0
      %v4547 = vadd.f32 0.0, %v4546
      %v4548 = vpop.f32.mrf.mxu0
      %4549 = vmatprep.mubr.f32.mxu0 %v4247
      %4550 = vmatmul.mubr.f32.gmra.mxu0 %v4246
      %v4551 = vpop.f32.mrf.mxu0
      %v4552 = vadd.f32 0.0, %v4551
      %v4553 = vpop.f32.mrf.mxu0
      %4554 = vmatprep.mubr.f32.mxu0 %v4250
      %4555 = vmatmul.mubr.f32.gmra.mxu0 %v4249
      %v4556 = vpop.f32.mrf.mxu0
      %v4557 = vadd.f32 0.0, %v4556
      %v4558 = vpop.f32.mrf.mxu0
      %4559 = vmatprep.mubr.f32.mxu0 %v4253
      %4560 = vmatmul.mubr.f32.gmra.mxu0 %v4252
      %v4561 = vpop.f32.mrf.mxu0
      %v4562 = vadd.f32 0.0, %v4561
      %v4563 = vpop.f32.mrf.mxu0
      %4564 = vmatprep.mubr.f32.mxu0 %v4256
      %4565 = vmatmul.mubr.f32.gmra.mxu0 %v4255
      %v4566 = vpop.f32.mrf.mxu0
      %v4567 = vadd.f32 0.0, %v4566
      %v4568 = vpop.f32.mrf.mxu0
      %4569 = vmatprep.mubr.f32.mxu0 %v4259
      %4570 = vmatmul.mubr.f32.gmra.mxu0 %v4258
      %v4571 = vpop.f32.mrf.mxu0
      %v4572 = vadd.f32 0.0, %v4571
      %v4573 = vpop.f32.mrf.mxu0
      %4574 = vmatprep.mubr.f32.mxu0 %v4262
      %4575 = vmatmul.mubr.f32.gmra.mxu0 %v4261
      %v4576 = vpop.f32.mrf.mxu0
      %v4577 = vadd.f32 0.0, %v4576
      %v4578 = vpop.f32.mrf.mxu0
      %4579 = vmatprep.mubr.f32.mxu0 %v4265
      %4580 = vmatmul.mubr.f32.gmra.mxu0 %v4264
      %v4581 = vpop.f32.mrf.mxu0
      %v4582 = vadd.f32 0.0, %v4581
      %v4583 = vpop.f32.mrf.mxu0
      %4584 = vmatprep.mubr.f32.mxu0 %v4316
      %4585 = vmatmul.mubr.f32.gmra.mxu0 %v4315
      %v4586 = vpop.f32.mrf.mxu0
      %v4587 = vadd.f32 0.0, %v4586
      %v4588 = vpop.f32.mrf.mxu0
      %4589 = vmatprep.mubr.f32.mxu0 %v4319
      %4590 = vmatmul.mubr.f32.gmra.mxu0 %v4318
      %v4591 = vpop.f32.mrf.mxu0
      %v4592 = vadd.f32 0.0, %v4591
      %v4593 = vpop.f32.mrf.mxu0
      %4594 = vdwg.mxu0
      %4595 = vmatprep.subr.mxu0 0.0
      %4596 = vmatpush1.msra.mxu0 %v4369
      %4597 = vmatprep.subr.mxu0 0.0
      %4598 = vmatpush1.msra.mxu0 %v4368
      %4599 = vmatprep.subr.mxu0 0.0
      %4600 = vmatpush1.msra.mxu0 %v4367
      %4601 = vmatprep.subr.mxu0 0.0
      %4602 = vmatpush1.msra.mxu0 %v4366
      %4603 = vmatprep.subr.mxu0 0.0
      %4604 = vmatpush1.msra.mxu0 %v4365
      %4605 = vmatprep.subr.mxu0 0.0
      %4606 = vmatpush1.msra.mxu0 %v4364
      %4607 = vmatprep.subr.mxu0 0.0
      %4608 = vmatpush1.msra.mxu0 %v4363
      %4609 = vmatprep.subr.mxu0 0.0
      %4610 = vmatpush1.msra.mxu0 %v4362
      %4611 = vmatprep.subr.mxu0 0.0
      %4612 = vmatpush1.msra.mxu0 %v4361
      %4613 = vmatprep.subr.mxu0 0.0
      %4614 = vmatpush1.msra.mxu0 %v4360
      %4615 = vmatprep.subr.mxu0 0.0
      %4616 = vmatpush1.msra.mxu0 %v4359
      %4617 = vmatprep.subr.mxu0 0.0
      %4618 = vmatpush1.msra.mxu0 %v4358
      %4619 = vmatprep.subr.mxu0 0.0
      %4620 = vmatpush1.msra.mxu0 %v4357
      %4621 = vmatprep.subr.mxu0 0.0
      %4622 = vmatpush1.msra.mxu0 %v4356
      %4623 = vmatprep.subr.mxu0 0.0
      %4624 = vmatpush1.msra.mxu0 %v4355
      %4625 = vmatprep.subr.mxu0 0.0
      %4626 = vmatpush1.msra.mxu0 %v4354
      %4627 = vmatprep.subr.mxu0 0.0
      %4628 = vmatpush2.msra.mxu0 0.0
      %4629 = vmatprep.subr.mxu0 0.0
      %4630 = vmatpush2.msra.mxu0 0.0
      %4631 = vmatprep.subr.mxu0 0.0
      %4632 = vmatpush2.msra.mxu0 0.0
      %4633 = vmatprep.subr.mxu0 0.0
      %4634 = vmatpush2.msra.mxu0 0.0
      %4635 = vmatprep.subr.mxu0 0.0
      %4636 = vmatpush2.msra.mxu0 0.0
      %4637 = vmatprep.subr.mxu0 0.0
      %4638 = vmatpush2.msra.mxu0 0.0
      %4639 = vmatprep.subr.mxu0 0.0
      %4640 = vmatpush2.msra.mxu0 0.0
      %4641 = vmatprep.subr.mxu0 0.0
      %4642 = vmatpush2.msra.mxu0 0.0
      %4643 = vmatprep.subr.mxu0 0.0
      %4644 = vmatpush2.msra.mxu0 0.0
      %4645 = vmatprep.subr.mxu0 0.0
      %4646 = vmatpush2.msra.mxu0 0.0
      %4647 = vmatprep.subr.mxu0 0.0
      %4648 = vmatpush2.msra.mxu0 0.0
      %4649 = vmatprep.subr.mxu0 0.0
      %4650 = vmatpush2.msra.mxu0 0.0
      %4651 = vmatprep.subr.mxu0 0.0
      %4652 = vmatpush2.msra.mxu0 0.0
      %4653 = vmatprep.subr.mxu0 0.0
      %4654 = vmatpush2.msra.mxu0 0.0
      %4655 = vmatprep.subr.mxu0 0.0
      %4656 = vmatpush2.msra.mxu0 0.0
      %4657 = vmatprep.subr.mxu0 0.0
      %4658 = vmatpush2.msra.mxu0 0.0
      %4659 = vmatprep.mubr.f32.mxu0 0.0
      %4660 = vmatmul.mubr.f32.gmra.mxu0 %v4179
      %v4661 = vpop.f32.mrf.mxu0
      %v4662 = vadd.f32 %v4437, %v4661
      %v4663 = vpop.f32.mrf.mxu0
      %4664 = vmatprep.mubr.f32.mxu0 0.0
      %4665 = vmatmul.mubr.f32.gmra.mxu0 %v4182
      %v4666 = vpop.f32.mrf.mxu0
      %v4667 = vadd.f32 %v4442, %v4666
      %v4668 = vpop.f32.mrf.mxu0
      %4669 = vmatprep.mubr.f32.mxu0 0.0
      %4670 = vmatmul.mubr.f32.gmra.mxu0 %v4185
      %v4671 = vpop.f32.mrf.mxu0
      %v4672 = vadd.f32 %v4447, %v4671
      %v4673 = vpop.f32.mrf.mxu0
      %4674 = vmatprep.mubr.f32.mxu0 0.0
      %4675 = vmatmul.mubr.f32.gmra.mxu0 %v4188
      %v4676 = vpop.f32.mrf.mxu0
      %v4677 = vadd.f32 %v4452, %v4676
      %v4678 = vpop.f32.mrf.mxu0
      %4679 = vmatprep.mubr.f32.mxu0 0.0
      %4680 = vmatmul.mubr.f32.gmra.mxu0 %v4191
      %v4681 = vpop.f32.mrf.mxu0
      %v4682 = vadd.f32 %v4457, %v4681
      %v4683 = vpop.f32.mrf.mxu0
      %4684 = vmatprep.mubr.f32.mxu0 0.0
      %4685 = vmatmul.mubr.f32.gmra.mxu0 %v4194
      %v4686 = vpop.f32.mrf.mxu0
      %v4687 = vadd.f32 %v4462, %v4686
      %v4688 = vpop.f32.mrf.mxu0
      %4689 = vmatprep.mubr.f32.mxu0 0.0
      %4690 = vmatmul.mubr.f32.gmra.mxu0 %v4197
      %v4691 = vpop.f32.mrf.mxu0
      %v4692 = vadd.f32 %v4467, %v4691
      %v4693 = vpop.f32.mrf.mxu0
      %4694 = vmatprep.mubr.f32.mxu0 0.0
      %4695 = vmatmul.mubr.f32.gmra.mxu0 %v4200
      %v4696 = vpop.f32.mrf.mxu0
      %v4697 = vadd.f32 %v4472, %v4696
      %v4698 = vpop.f32.mrf.mxu0
      %4699 = vmatprep.mubr.f32.mxu0 0.0
      %4700 = vmatmul.mubr.f32.gmra.mxu0 %v4203
      %v4701 = vpop.f32.mrf.mxu0
      %v4702 = vadd.f32 %v4477, %v4701
      %v4703 = vpop.f32.mrf.mxu0
      %4704 = vmatprep.mubr.f32.mxu0 0.0
      %4705 = vmatmul.mubr.f32.gmra.mxu0 %v4206
      %v4706 = vpop.f32.mrf.mxu0
      %v4707 = vadd.f32 %v4482, %v4706
      %v4708 = vpop.f32.mrf.mxu0
      %4709 = vmatprep.mubr.f32.mxu0 0.0
      %4710 = vmatmul.mubr.f32.gmra.mxu0 %v4209
      %v4711 = vpop.f32.mrf.mxu0
      %v4712 = vadd.f32 %v4487, %v4711
      %v4713 = vpop.f32.mrf.mxu0
      %4714 = vmatprep.mubr.f32.mxu0 0.0
      %4715 = vmatmul.mubr.f32.gmra.mxu0 %v4212
      %v4716 = vpop.f32.mrf.mxu0
      %v4717 = vadd.f32 %v4492, %v4716
      %v4718 = vpop.f32.mrf.mxu0
      %4719 = vmatprep.mubr.f32.mxu0 0.0
      %4720 = vmatmul.mubr.f32.gmra.mxu0 %v4215
      %v4721 = vpop.f32.mrf.mxu0
      %v4722 = vadd.f32 %v4497, %v4721
      %v4723 = vpop.f32.mrf.mxu0
      %4724 = vmatprep.mubr.f32.mxu0 0.0
      %4725 = vmatmul.mubr.f32.gmra.mxu0 %v4218
      %v4726 = vpop.f32.mrf.mxu0
      %v4727 = vadd.f32 %v4502, %v4726
      %v4728 = vpop.f32.mrf.mxu0
      %4729 = vmatprep.mubr.f32.mxu0 0.0
      %4730 = vmatmul.mubr.f32.gmra.mxu0 %v4221
      %v4731 = vpop.f32.mrf.mxu0
      %v4732 = vadd.f32 %v4507, %v4731
      %v4733 = vpop.f32.mrf.mxu0
      %4734 = vmatprep.mubr.f32.mxu0 0.0
      %4735 = vmatmul.mubr.f32.gmra.mxu0 %v4224
      %v4736 = vpop.f32.mrf.mxu0
      %v4737 = vadd.f32 %v4512, %v4736
      %v4738 = vpop.f32.mrf.mxu0
      %4739 = vmatprep.mubr.f32.mxu0 0.0
      %4740 = vmatmul.mubr.f32.gmra.mxu0 %v4227
      %v4741 = vpop.f32.mrf.mxu0
      %v4742 = vadd.f32 %v4517, %v4741
      %v4743 = vpop.f32.mrf.mxu0
      %4744 = vmatprep.mubr.f32.mxu0 0.0
      %4745 = vmatmul.mubr.f32.gmra.mxu0 %v4230
      %v4746 = vpop.f32.mrf.mxu0
      %v4747 = vadd.f32 %v4522, %v4746
      %v4748 = vpop.f32.mrf.mxu0
      %4749 = vmatprep.mubr.f32.mxu0 0.0
      %4750 = vmatmul.mubr.f32.gmra.mxu0 %v4233
      %v4751 = vpop.f32.mrf.mxu0
      %v4752 = vadd.f32 %v4527, %v4751
      %v4753 = vpop.f32.mrf.mxu0
      %4754 = vmatprep.mubr.f32.mxu0 0.0
      %4755 = vmatmul.mubr.f32.gmra.mxu0 %v4236
      %v4756 = vpop.f32.mrf.mxu0
      %v4757 = vadd.f32 %v4532, %v4756
      %v4758 = vpop.f32.mrf.mxu0
      %4759 = vmatprep.mubr.f32.mxu0 0.0
      %4760 = vmatmul.mubr.f32.gmra.mxu0 %v4239
      %v4761 = vpop.f32.mrf.mxu0
      %v4762 = vadd.f32 %v4537, %v4761
      %v4763 = vpop.f32.mrf.mxu0
      %4764 = vmatprep.mubr.f32.mxu0 0.0
      %4765 = vmatmul.mubr.f32.gmra.mxu0 %v4242
      %v4766 = vpop.f32.mrf.mxu0
      %v4767 = vadd.f32 %v4542, %v4766
      %v4768 = vpop.f32.mrf.mxu0
      %4769 = vmatprep.mubr.f32.mxu0 0.0
      %4770 = vmatmul.mubr.f32.gmra.mxu0 %v4245
      %v4771 = vpop.f32.mrf.mxu0
      %v4772 = vadd.f32 %v4547, %v4771
      %v4773 = vpop.f32.mrf.mxu0
      %4774 = vmatprep.mubr.f32.mxu0 0.0
      %4775 = vmatmul.mubr.f32.gmra.mxu0 %v4248
      %v4776 = vpop.f32.mrf.mxu0
      %v4777 = vadd.f32 %v4552, %v4776
      %v4778 = vpop.f32.mrf.mxu0
      %4779 = vmatprep.mubr.f32.mxu0 0.0
      %4780 = vmatmul.mubr.f32.gmra.mxu0 %v4251
      %v4781 = vpop.f32.mrf.mxu0
      %v4782 = vadd.f32 %v4557, %v4781
      %v4783 = vpop.f32.mrf.mxu0
      %4784 = vmatprep.mubr.f32.mxu0 0.0
      %4785 = vmatmul.mubr.f32.gmra.mxu0 %v4254
      %v4786 = vpop.f32.mrf.mxu0
      %v4787 = vadd.f32 %v4562, %v4786
      %v4788 = vpop.f32.mrf.mxu0
      %4789 = vmatprep.mubr.f32.mxu0 0.0
      %4790 = vmatmul.mubr.f32.gmra.mxu0 %v4257
      %v4791 = vpop.f32.mrf.mxu0
      %v4792 = vadd.f32 %v4567, %v4791
      %v4793 = vpop.f32.mrf.mxu0
      %4794 = vmatprep.mubr.f32.mxu0 0.0
      %4795 = vmatmul.mubr.f32.gmra.mxu0 %v4260
      %v4796 = vpop.f32.mrf.mxu0
      %v4797 = vadd.f32 %v4572, %v4796
      %v4798 = vpop.f32.mrf.mxu0
      %4799 = vmatprep.mubr.f32.mxu0 0.0
      %4800 = vmatmul.mubr.f32.gmra.mxu0 %v4263
      %v4801 = vpop.f32.mrf.mxu0
      %v4802 = vadd.f32 %v4577, %v4801
      %v4803 = vpop.f32.mrf.mxu0
      %4804 = vmatprep.mubr.f32.mxu0 0.0
      %4805 = vmatmul.mubr.f32.gmra.mxu0 %v4266
      %v4806 = vpop.f32.mrf.mxu0
      %v4807 = vadd.f32 %v4582, %v4806
      %v4808 = vpop.f32.mrf.mxu0
      %4809 = vmatprep.mubr.f32.mxu0 0.0
      %4810 = vmatmul.mubr.f32.gmra.mxu0 %v4317
      %v4811 = vpop.f32.mrf.mxu0
      %v4812 = vadd.f32 %v4587, %v4811
      %v4813 = vpop.f32.mrf.mxu0
      %4814 = vmatprep.mubr.f32.mxu0 0.0
      %4815 = vmatmul.mubr.f32.gmra.mxu0 %v4320
      %v4816 = vpop.f32.mrf.mxu0
      %v4817 = vadd.f32 %v4592, %v4816
      %v4818 = vpop.f32.mrf.mxu0
      %4819 = vdwg.mxu0
      %4820 = vmatprep.subr.mxu0 0.0
      %4821 = vmatpush1.msra.mxu0 %v4282
      %4822 = vmatprep.subr.mxu0 0.0
      %4823 = vmatpush1.msra.mxu0 %v4281
      %4824 = vmatprep.subr.mxu0 0.0
      %4825 = vmatpush1.msra.mxu0 %v4280
      %4826 = vmatprep.subr.mxu0 0.0
      %4827 = vmatpush1.msra.mxu0 %v4279
      %4828 = vmatprep.subr.mxu0 0.0
      %4829 = vmatpush1.msra.mxu0 %v4278
      %4830 = vmatprep.subr.mxu0 0.0
      %4831 = vmatpush1.msra.mxu0 %v4277
      %4832 = vmatprep.subr.mxu0 0.0
      %4833 = vmatpush1.msra.mxu0 %v4276
      %4834 = vmatprep.subr.mxu0 0.0
      %4835 = vmatpush1.msra.mxu0 %v4275
      %4836 = vmatprep.subr.mxu0 0.0
      %4837 = vmatpush1.msra.mxu0 %v4274
      %4838 = vmatprep.subr.mxu0 0.0
      %4839 = vmatpush1.msra.mxu0 %v4273
      %4840 = vmatprep.subr.mxu0 0.0
      %4841 = vmatpush1.msra.mxu0 %v4272
      %4842 = vmatprep.subr.mxu0 0.0
      %4843 = vmatpush1.msra.mxu0 %v4271
      %4844 = vmatprep.subr.mxu0 0.0
      %4845 = vmatpush1.msra.mxu0 %v4270
      %4846 = vmatprep.subr.mxu0 0.0
      %4847 = vmatpush1.msra.mxu0 %v4269
      %4848 = vmatprep.subr.mxu0 0.0
      %4849 = vmatpush1.msra.mxu0 %v4268
      %4850 = vmatprep.subr.mxu0 0.0
      %4851 = vmatpush1.msra.mxu0 %v4267
      %4852 = vmatprep.subr.mxu0 0.0
      %4853 = vmatpush2.msra.mxu0 %v4298
      %4854 = vmatprep.subr.mxu0 0.0
      %4855 = vmatpush2.msra.mxu0 %v4297
      %4856 = vmatprep.subr.mxu0 0.0
      %4857 = vmatpush2.msra.mxu0 %v4296
      %4858 = vmatprep.subr.mxu0 0.0
      %4859 = vmatpush2.msra.mxu0 %v4295
      %4860 = vmatprep.subr.mxu0 0.0
      %4861 = vmatpush2.msra.mxu0 %v4294
      %4862 = vmatprep.subr.mxu0 0.0
      %4863 = vmatpush2.msra.mxu0 %v4293
      %4864 = vmatprep.subr.mxu0 0.0
      %4865 = vmatpush2.msra.mxu0 %v4292
      %4866 = vmatprep.subr.mxu0 0.0
      %4867 = vmatpush2.msra.mxu0 %v4291
      %4868 = vmatprep.subr.mxu0 0.0
      %4869 = vmatpush2.msra.mxu0 %v4290
      %4870 = vmatprep.subr.mxu0 0.0
      %4871 = vmatpush2.msra.mxu0 %v4289
      %4872 = vmatprep.subr.mxu0 0.0
      %4873 = vmatpush2.msra.mxu0 %v4288
      %4874 = vmatprep.subr.mxu0 0.0
      %4875 = vmatpush2.msra.mxu0 %v4287
      %4876 = vmatprep.subr.mxu0 0.0
      %4877 = vmatpush2.msra.mxu0 %v4286
      %4878 = vmatprep.subr.mxu0 0.0
      %4879 = vmatpush2.msra.mxu0 %v4285
      %4880 = vmatprep.subr.mxu0 0.0
      %4881 = vmatpush2.msra.mxu0 %v4284
      %4882 = vmatprep.subr.mxu0 0.0
      %4883 = vmatpush2.msra.mxu0 %v4283
      %4884 = vmatprep.mubr.f32.mxu0 %v4172
      %4885 = vmatmul.mubr.f32.gmra.mxu0 %v4171
      %v4886 = vpop.f32.mrf.mxu0
      %v4887 = vadd.f32 %v4662, %v4886
      %v4888 = vpop.f32.mrf.mxu0
      %4889 = vmatprep.mubr.f32.mxu0 %v4175
      %4890 = vmatmul.mubr.f32.gmra.mxu0 %v4174
      %v4891 = vpop.f32.mrf.mxu0
      %v4892 = vadd.f32 %v4667, %v4891
      %v4893 = vpop.f32.mrf.mxu0
      %4894 = vmatprep.mubr.f32.mxu0 %v4178
      %4895 = vmatmul.mubr.f32.gmra.mxu0 %v4177
      %v4896 = vpop.f32.mrf.mxu0
      %v4897 = vadd.f32 %v4672, %v4896
      %v4898 = vpop.f32.mrf.mxu0
      %4899 = vmatprep.mubr.f32.mxu0 %v4181
      %4900 = vmatmul.mubr.f32.gmra.mxu0 %v4180
      %v4901 = vpop.f32.mrf.mxu0
      %v4902 = vadd.f32 %v4677, %v4901
      %v4903 = vpop.f32.mrf.mxu0
      %4904 = vmatprep.mubr.f32.mxu0 %v4184
      %4905 = vmatmul.mubr.f32.gmra.mxu0 %v4183
      %v4906 = vpop.f32.mrf.mxu0
      %v4907 = vadd.f32 %v4682, %v4906
      %v4908 = vpop.f32.mrf.mxu0
      %4909 = vmatprep.mubr.f32.mxu0 %v4187
      %4910 = vmatmul.mubr.f32.gmra.mxu0 %v4186
      %v4911 = vpop.f32.mrf.mxu0
      %v4912 = vadd.f32 %v4687, %v4911
      %v4913 = vpop.f32.mrf.mxu0
      %4914 = vmatprep.mubr.f32.mxu0 %v4190
      %4915 = vmatmul.mubr.f32.gmra.mxu0 %v4189
      %v4916 = vpop.f32.mrf.mxu0
      %v4917 = vadd.f32 %v4692, %v4916
      %v4918 = vpop.f32.mrf.mxu0
      %4919 = vmatprep.mubr.f32.mxu0 %v4193
      %4920 = vmatmul.mubr.f32.gmra.mxu0 %v4192
      %v4921 = vpop.f32.mrf.mxu0
      %v4922 = vadd.f32 %v4697, %v4921
      %v4923 = vpop.f32.mrf.mxu0
      %4924 = vmatprep.mubr.f32.mxu0 %v4196
      %4925 = vmatmul.mubr.f32.gmra.mxu0 %v4195
      %v4926 = vpop.f32.mrf.mxu0
      %v4927 = vadd.f32 %v4702, %v4926
      %v4928 = vpop.f32.mrf.mxu0
      %4929 = vmatprep.mubr.f32.mxu0 %v4199
      %4930 = vmatmul.mubr.f32.gmra.mxu0 %v4198
      %v4931 = vpop.f32.mrf.mxu0
      %v4932 = vadd.f32 %v4707, %v4931
      %v4933 = vpop.f32.mrf.mxu0
      %4934 = vmatprep.mubr.f32.mxu0 %v4202
      %4935 = vmatmul.mubr.f32.gmra.mxu0 %v4201
      %v4936 = vpop.f32.mrf.mxu0
      %v4937 = vadd.f32 %v4712, %v4936
      %v4938 = vpop.f32.mrf.mxu0
      %4939 = vmatprep.mubr.f32.mxu0 %v4205
      %4940 = vmatmul.mubr.f32.gmra.mxu0 %v4204
      %v4941 = vpop.f32.mrf.mxu0
      %v4942 = vadd.f32 %v4717, %v4941
      %v4943 = vpop.f32.mrf.mxu0
      %4944 = vmatprep.mubr.f32.mxu0 %v4208
      %4945 = vmatmul.mubr.f32.gmra.mxu0 %v4207
      %v4946 = vpop.f32.mrf.mxu0
      %v4947 = vadd.f32 %v4722, %v4946
      %v4948 = vpop.f32.mrf.mxu0
      %4949 = vmatprep.mubr.f32.mxu0 %v4211
      %4950 = vmatmul.mubr.f32.gmra.mxu0 %v4210
      %v4951 = vpop.f32.mrf.mxu0
      %v4952 = vadd.f32 %v4727, %v4951
      %v4953 = vpop.f32.mrf.mxu0
      %4954 = vmatprep.mubr.f32.mxu0 %v4214
      %4955 = vmatmul.mubr.f32.gmra.mxu0 %v4213
      %v4956 = vpop.f32.mrf.mxu0
      %v4957 = vadd.f32 %v4732, %v4956
      %v4958 = vpop.f32.mrf.mxu0
      %4959 = vmatprep.mubr.f32.mxu0 %v4217
      %4960 = vmatmul.mubr.f32.gmra.mxu0 %v4216
      %v4961 = vpop.f32.mrf.mxu0
      %v4962 = vadd.f32 %v4737, %v4961
      %v4963 = vpop.f32.mrf.mxu0
      %4964 = vmatprep.mubr.f32.mxu0 %v4220
      %4965 = vmatmul.mubr.f32.gmra.mxu0 %v4219
      %v4966 = vpop.f32.mrf.mxu0
      %v4967 = vadd.f32 %v4742, %v4966
      %v4968 = vpop.f32.mrf.mxu0
      %4969 = vmatprep.mubr.f32.mxu0 %v4223
      %4970 = vmatmul.mubr.f32.gmra.mxu0 %v4222
      %v4971 = vpop.f32.mrf.mxu0
      %v4972 = vadd.f32 %v4747, %v4971
      %v4973 = vpop.f32.mrf.mxu0
      %4974 = vmatprep.mubr.f32.mxu0 %v4226
      %4975 = vmatmul.mubr.f32.gmra.mxu0 %v4225
      %v4976 = vpop.f32.mrf.mxu0
      %v4977 = vadd.f32 %v4752, %v4976
      %v4978 = vpop.f32.mrf.mxu0
      %4979 = vmatprep.mubr.f32.mxu0 %v4229
      %4980 = vmatmul.mubr.f32.gmra.mxu0 %v4228
      %v4981 = vpop.f32.mrf.mxu0
      %v4982 = vadd.f32 %v4757, %v4981
      %v4983 = vpop.f32.mrf.mxu0
      %4984 = vmatprep.mubr.f32.mxu0 %v4232
      %4985 = vmatmul.mubr.f32.gmra.mxu0 %v4231
      %v4986 = vpop.f32.mrf.mxu0
      %v4987 = vadd.f32 %v4762, %v4986
      %v4988 = vpop.f32.mrf.mxu0
      %4989 = vmatprep.mubr.f32.mxu0 %v4235
      %4990 = vmatmul.mubr.f32.gmra.mxu0 %v4234
      %v4991 = vpop.f32.mrf.mxu0
      %v4992 = vadd.f32 %v4767, %v4991
      %v4993 = vpop.f32.mrf.mxu0
      %4994 = vmatprep.mubr.f32.mxu0 %v4238
      %4995 = vmatmul.mubr.f32.gmra.mxu0 %v4237
      %v4996 = vpop.f32.mrf.mxu0
      %v4997 = vadd.f32 %v4772, %v4996
      %v4998 = vpop.f32.mrf.mxu0
      %4999 = vmatprep.mubr.f32.mxu0 %v4241
      %5000 = vmatmul.mubr.f32.gmra.mxu0 %v4240
      %v5001 = vpop.f32.mrf.mxu0
      %v5002 = vadd.f32 %v4777, %v5001
      %v5003 = vpop.f32.mrf.mxu0
      %5004 = vmatprep.mubr.f32.mxu0 %v4244
      %5005 = vmatmul.mubr.f32.gmra.mxu0 %v4243
      %v5006 = vpop.f32.mrf.mxu0
      %v5007 = vadd.f32 %v4782, %v5006
      %v5008 = vpop.f32.mrf.mxu0
      %5009 = vmatprep.mubr.f32.mxu0 %v4247
      %5010 = vmatmul.mubr.f32.gmra.mxu0 %v4246
      %v5011 = vpop.f32.mrf.mxu0
      %v5012 = vadd.f32 %v4787, %v5011
      %v5013 = vpop.f32.mrf.mxu0
      %5014 = vmatprep.mubr.f32.mxu0 %v4250
      %5015 = vmatmul.mubr.f32.gmra.mxu0 %v4249
      %v5016 = vpop.f32.mrf.mxu0
      %v5017 = vadd.f32 %v4792, %v5016
      %v5018 = vpop.f32.mrf.mxu0
      %5019 = vmatprep.mubr.f32.mxu0 %v4253
      %5020 = vmatmul.mubr.f32.gmra.mxu0 %v4252
      %v5021 = vpop.f32.mrf.mxu0
      %v5022 = vadd.f32 %v4797, %v5021
      %v5023 = vpop.f32.mrf.mxu0
      %5024 = vmatprep.mubr.f32.mxu0 %v4256
      %5025 = vmatmul.mubr.f32.gmra.mxu0 %v4255
      %v5026 = vpop.f32.mrf.mxu0
      %v5027 = vadd.f32 %v4802, %v5026
      %v5028 = vpop.f32.mrf.mxu0
      %5029 = vmatprep.mubr.f32.mxu0 %v4259
      %5030 = vmatmul.mubr.f32.gmra.mxu0 %v4258
      %v5031 = vpop.f32.mrf.mxu0
      %v5032 = vadd.f32 %v4807, %v5031
      %v5033 = vpop.f32.mrf.mxu0
      %5034 = vmatprep.mubr.f32.mxu0 %v4262
      %5035 = vmatmul.mubr.f32.gmra.mxu0 %v4261
      %v5036 = vpop.f32.mrf.mxu0
      %v5037 = vadd.f32 %v4812, %v5036
      %v5038 = vpop.f32.mrf.mxu0
      %5039 = vmatprep.mubr.f32.mxu0 %v4265
      %5040 = vmatmul.mubr.f32.gmra.mxu0 %v4264
      %v5041 = vpop.f32.mrf.mxu0
      %v5042 = vadd.f32 %v4817, %v5041
      %v5043 = vpop.f32.mrf.mxu0
      %5044 = vdwg.mxu0
      %5045 = vmatprep.subr.mxu0 0.0
      %5046 = vmatpush1.msra.mxu0 %v4314
      %5047 = vmatprep.subr.mxu0 0.0
      %5048 = vmatpush1.msra.mxu0 %v4313
      %5049 = vmatprep.subr.mxu0 0.0
      %5050 = vmatpush1.msra.mxu0 %v4312
      %5051 = vmatprep.subr.mxu0 0.0
      %5052 = vmatpush1.msra.mxu0 %v4311
      %5053 = vmatprep.subr.mxu0 0.0
      %5054 = vmatpush1.msra.mxu0 %v4310
      %5055 = vmatprep.subr.mxu0 0.0
      %5056 = vmatpush1.msra.mxu0 %v4309
      %5057 = vmatprep.subr.mxu0 0.0
      %5058 = vmatpush1.msra.mxu0 %v4308
      %5059 = vmatprep.subr.mxu0 0.0
      %5060 = vmatpush1.msra.mxu0 %v4307
      %5061 = vmatprep.subr.mxu0 0.0
      %5062 = vmatpush1.msra.mxu0 %v4306
      %5063 = vmatprep.subr.mxu0 0.0
      %5064 = vmatpush1.msra.mxu0 %v4305
      %5065 = vmatprep.subr.mxu0 0.0
      %5066 = vmatpush1.msra.mxu0 %v4304
      %5067 = vmatprep.subr.mxu0 0.0
      %5068 = vmatpush1.msra.mxu0 %v4303
      %5069 = vmatprep.subr.mxu0 0.0
      %5070 = vmatpush1.msra.mxu0 %v4302
      %5071 = vmatprep.subr.mxu0 0.0
      %5072 = vmatpush1.msra.mxu0 %v4301
      %5073 = vmatprep.subr.mxu0 0.0
      %5074 = vmatpush1.msra.mxu0 %v4300
      %5075 = vmatprep.subr.mxu0 0.0
      %5076 = vmatpush1.msra.mxu0 %v4299
      %5077 = vmatprep.subr.mxu0 0.0
      %5078 = vmatpush2.msra.mxu0 0.0
      %5079 = vmatprep.subr.mxu0 0.0
      %5080 = vmatpush2.msra.mxu0 0.0
      %5081 = vmatprep.subr.mxu0 0.0
      %5082 = vmatpush2.msra.mxu0 0.0
      %5083 = vmatprep.subr.mxu0 0.0
      %5084 = vmatpush2.msra.mxu0 0.0
      %5085 = vmatprep.subr.mxu0 0.0
      %5086 = vmatpush2.msra.mxu0 0.0
      %5087 = vmatprep.subr.mxu0 0.0
      %5088 = vmatpush2.msra.mxu0 0.0
      %5089 = vmatprep.subr.mxu0 0.0
      %5090 = vmatpush2.msra.mxu0 0.0
      %5091 = vmatprep.subr.mxu0 0.0
      %5092 = vmatpush2.msra.mxu0 0.0
      %5093 = vmatprep.subr.mxu0 0.0
      %5094 = vmatpush2.msra.mxu0 0.0
      %5095 = vmatprep.subr.mxu0 0.0
      %5096 = vmatpush2.msra.mxu0 0.0
      %5097 = vmatprep.subr.mxu0 0.0
      %5098 = vmatpush2.msra.mxu0 0.0
      %5099 = vmatprep.subr.mxu0 0.0
      %5100 = vmatpush2.msra.mxu0 0.0
      %5101 = vmatprep.subr.mxu0 0.0
      %5102 = vmatpush2.msra.mxu0 0.0
      %5103 = vmatprep.subr.mxu0 0.0
      %5104 = vmatpush2.msra.mxu0 0.0
      %5105 = vmatprep.subr.mxu0 0.0
      %5106 = vmatpush2.msra.mxu0 0.0
      %5107 = vmatprep.subr.mxu0 0.0
      %5108 = vmatpush2.msra.mxu0 0.0
      %5109 = vmatprep.mubr.f32.mxu0 0.0
      %5110 = vmatmul.mubr.f32.gmra.mxu0 %v4173
      %v5111 = vpop.f32.mrf.mxu0
      %v5112 = vadd.f32 %v4887, %v5111
      %v5113 = vpop.f32.mrf.mxu0
      %5114 = vmatprep.mubr.f32.mxu0 0.0
      %5115 = vmatmul.mubr.f32.gmra.mxu0 %v4176
      %v5116 = vpop.f32.mrf.mxu0
      %v5117 = vadd.f32 %v4892, %v5116
      %v5118 = vpop.f32.mrf.mxu0
      %5119 = vmatprep.mubr.f32.mxu0 0.0
      %5120 = vmatmul.mubr.f32.gmra.mxu0 %v4179
      %v5121 = vpop.f32.mrf.mxu0
      %v5122 = vadd.f32 %v4897, %v5121
      %v5123 = vpop.f32.mrf.mxu0
      %5124 = vmatprep.mubr.f32.mxu0 0.0
      %5125 = vmatmul.mubr.f32.gmra.mxu0 %v4182
      %v5126 = vpop.f32.mrf.mxu0
      %v5127 = vadd.f32 %v4902, %v5126
      %v5128 = vpop.f32.mrf.mxu0
      %5129 = vmatprep.mubr.f32.mxu0 0.0
      %5130 = vmatmul.mubr.f32.gmra.mxu0 %v4185
      %v5131 = vpop.f32.mrf.mxu0
      %v5132 = vadd.f32 %v4907, %v5131
      %v5133 = vpop.f32.mrf.mxu0
      %5134 = vmatprep.mubr.f32.mxu0 0.0
      %5135 = vmatmul.mubr.f32.gmra.mxu0 %v4188
      %v5136 = vpop.f32.mrf.mxu0
      %v5137 = vadd.f32 %v4912, %v5136
      %v5138 = vpop.f32.mrf.mxu0
      %5139 = vmatprep.mubr.f32.mxu0 0.0
      %5140 = vmatmul.mubr.f32.gmra.mxu0 %v4191
      %v5141 = vpop.f32.mrf.mxu0
      %v5142 = vadd.f32 %v4917, %v5141
      %v5143 = vpop.f32.mrf.mxu0
      %5144 = vmatprep.mubr.f32.mxu0 0.0
      %5145 = vmatmul.mubr.f32.gmra.mxu0 %v4194
      %v5146 = vpop.f32.mrf.mxu0
      %v5147 = vadd.f32 %v4922, %v5146
      %v5148 = vpop.f32.mrf.mxu0
      %5149 = vmatprep.mubr.f32.mxu0 0.0
      %5150 = vmatmul.mubr.f32.gmra.mxu0 %v4197
      %v5151 = vpop.f32.mrf.mxu0
      %v5152 = vadd.f32 %v4927, %v5151
      %v5153 = vpop.f32.mrf.mxu0
      %5154 = vmatprep.mubr.f32.mxu0 0.0
      %5155 = vmatmul.mubr.f32.gmra.mxu0 %v4200
      %v5156 = vpop.f32.mrf.mxu0
      %v5157 = vadd.f32 %v4932, %v5156
      %v5158 = vpop.f32.mrf.mxu0
      %5159 = vmatprep.mubr.f32.mxu0 0.0
      %5160 = vmatmul.mubr.f32.gmra.mxu0 %v4203
      %v5161 = vpop.f32.mrf.mxu0
      %v5162 = vadd.f32 %v4937, %v5161
      %v5163 = vpop.f32.mrf.mxu0
      %5164 = vmatprep.mubr.f32.mxu0 0.0
      %5165 = vmatmul.mubr.f32.gmra.mxu0 %v4206
      %v5166 = vpop.f32.mrf.mxu0
      %v5167 = vadd.f32 %v4942, %v5166
      %v5168 = vpop.f32.mrf.mxu0
      %5169 = vmatprep.mubr.f32.mxu0 0.0
      %5170 = vmatmul.mubr.f32.gmra.mxu0 %v4209
      %v5171 = vpop.f32.mrf.mxu0
      %v5172 = vadd.f32 %v4947, %v5171
      %v5173 = vpop.f32.mrf.mxu0
      %5174 = vmatprep.mubr.f32.mxu0 0.0
      %5175 = vmatmul.mubr.f32.gmra.mxu0 %v4212
      %v5176 = vpop.f32.mrf.mxu0
      %v5177 = vadd.f32 %v4952, %v5176
      %v5178 = vpop.f32.mrf.mxu0
      %5179 = vmatprep.mubr.f32.mxu0 0.0
      %5180 = vmatmul.mubr.f32.gmra.mxu0 %v4215
      %v5181 = vpop.f32.mrf.mxu0
      %v5182 = vadd.f32 %v4957, %v5181
      %v5183 = vpop.f32.mrf.mxu0
      %5184 = vmatprep.mubr.f32.mxu0 0.0
      %5185 = vmatmul.mubr.f32.gmra.mxu0 %v4218
      %v5186 = vpop.f32.mrf.mxu0
      %v5187 = vadd.f32 %v4962, %v5186
      %v5188 = vpop.f32.mrf.mxu0
      %5189 = vmatprep.mubr.f32.mxu0 0.0
      %5190 = vmatmul.mubr.f32.gmra.mxu0 %v4221
      %v5191 = vpop.f32.mrf.mxu0
      %v5192 = vadd.f32 %v4967, %v5191
      %v5193 = vpop.f32.mrf.mxu0
      %5194 = vmatprep.mubr.f32.mxu0 0.0
      %5195 = vmatmul.mubr.f32.gmra.mxu0 %v4224
      %v5196 = vpop.f32.mrf.mxu0
      %v5197 = vadd.f32 %v4972, %v5196
      %v5198 = vpop.f32.mrf.mxu0
      %5199 = vmatprep.mubr.f32.mxu0 0.0
      %5200 = vmatmul.mubr.f32.gmra.mxu0 %v4227
      %v5201 = vpop.f32.mrf.mxu0
      %v5202 = vadd.f32 %v4977, %v5201
      %v5203 = vpop.f32.mrf.mxu0
      %5204 = vmatprep.mubr.f32.mxu0 0.0
      %5205 = vmatmul.mubr.f32.gmra.mxu0 %v4230
      %v5206 = vpop.f32.mrf.mxu0
      %v5207 = vadd.f32 %v4982, %v5206
      %v5208 = vpop.f32.mrf.mxu0
      %5209 = vmatprep.mubr.f32.mxu0 0.0
      %5210 = vmatmul.mubr.f32.gmra.mxu0 %v4233
      %v5211 = vpop.f32.mrf.mxu0
      %v5212 = vadd.f32 %v4987, %v5211
      %v5213 = vpop.f32.mrf.mxu0
      %5214 = vmatprep.mubr.f32.mxu0 0.0
      %5215 = vmatmul.mubr.f32.gmra.mxu0 %v4236
      %v5216 = vpop.f32.mrf.mxu0
      %v5217 = vadd.f32 %v4992, %v5216
      %v5218 = vpop.f32.mrf.mxu0
      %5219 = vmatprep.mubr.f32.mxu0 0.0
      %5220 = vmatmul.mubr.f32.gmra.mxu0 %v4239
      %v5221 = vpop.f32.mrf.mxu0
      %v5222 = vadd.f32 %v4997, %v5221
      %v5223 = vpop.f32.mrf.mxu0
      %5224 = vmatprep.mubr.f32.mxu0 0.0
      %5225 = vmatmul.mubr.f32.gmra.mxu0 %v4242
      %v5226 = vpop.f32.mrf.mxu0
      %v5227 = vadd.f32 %v5002, %v5226
      %v5228 = vpop.f32.mrf.mxu0
      %5229 = vmatprep.mubr.f32.mxu0 0.0
      %5230 = vmatmul.mubr.f32.gmra.mxu0 %v4245
      %v5231 = vpop.f32.mrf.mxu0
      %v5232 = vadd.f32 %v5007, %v5231
      %v5233 = vpop.f32.mrf.mxu0
      %5234 = vmatprep.mubr.f32.mxu0 0.0
      %5235 = vmatmul.mubr.f32.gmra.mxu0 %v4248
      %v5236 = vpop.f32.mrf.mxu0
      %v5237 = vadd.f32 %v5012, %v5236
      %v5238 = vpop.f32.mrf.mxu0
      %5239 = vmatprep.mubr.f32.mxu0 0.0
      %5240 = vmatmul.mubr.f32.gmra.mxu0 %v4251
      %v5241 = vpop.f32.mrf.mxu0
      %v5242 = vadd.f32 %v5017, %v5241
      %v5243 = vpop.f32.mrf.mxu0
      %5244 = vmatprep.mubr.f32.mxu0 0.0
      %5245 = vmatmul.mubr.f32.gmra.mxu0 %v4254
      %v5246 = vpop.f32.mrf.mxu0
      %v5247 = vadd.f32 %v5022, %v5246
      %v5248 = vpop.f32.mrf.mxu0
      %5249 = vmatprep.mubr.f32.mxu0 0.0
      %5250 = vmatmul.mubr.f32.gmra.mxu0 %v4257
      %v5251 = vpop.f32.mrf.mxu0
      %v5252 = vadd.f32 %v5027, %v5251
      %v5253 = vpop.f32.mrf.mxu0
      %5254 = vmatprep.mubr.f32.mxu0 0.0
      %5255 = vmatmul.mubr.f32.gmra.mxu0 %v4260
      %v5256 = vpop.f32.mrf.mxu0
      %v5257 = vadd.f32 %v5032, %v5256
      %v5258 = vpop.f32.mrf.mxu0
      %5259 = vmatprep.mubr.f32.mxu0 0.0
      %5260 = vmatmul.mubr.f32.gmra.mxu0 %v4263
      %v5261 = vpop.f32.mrf.mxu0
      %v5262 = vadd.f32 %v5037, %v5261
      %v5263 = vpop.f32.mrf.mxu0
      %5264 = vmatprep.mubr.f32.mxu0 0.0
      %5265 = vmatmul.mubr.f32.gmra.mxu0 %v4266
      %v5266 = vpop.f32.mrf.mxu0
      %v5267 = vadd.f32 %v5042, %v5266
      %v5268 = vpop.f32.mrf.mxu0
      %5269 = vdwg.mxu0
      %v5270 = vld [vmem:[#allocation2 + $0x60] sm:$0xff]
      %v5271 = vld [vmem:[#allocation2 + $0x68] sm:$0xff]
      %v5272 = vld [vmem:[#allocation2 + $0x70] sm:$0xff]
      %v5273 = vld [vmem:[#allocation2 + $0x78] sm:$0xff]
      %v5274 = vld [vmem:[#allocation2 + $0x80] sm:$0xff]
      %v5275 = vld [vmem:[#allocation2 + $0x88] sm:$0xff]
      %v5276 = vld [vmem:[#allocation2 + $0x90] sm:$0xff]
      %v5277 = vld [vmem:[#allocation2 + $0x98] sm:$0xff]
      %v5278 = vld [vmem:[#allocation2 + $0xa0] sm:$0xff]
      %v5279 = vld [vmem:[#allocation2 + $0xa8] sm:$0xff]
      %v5280 = vld [vmem:[#allocation2 + $0xb0] sm:$0xff]
      %v5281 = vld [vmem:[#allocation2 + $0xb8] sm:$0xff]
      %v5282 = vld [vmem:[#allocation2 + $0xc0] sm:$0xff]
      %v5283 = vld [vmem:[#allocation2 + $0xc8] sm:$0xff]
      %v5284 = vld [vmem:[#allocation2 + $0xd0] sm:$0xff]
      %v5285 = vld [vmem:[#allocation2 + $0xd8] sm:$0xff]
      %v5286 = vld [vmem:[#allocation2 + $0xe0] sm:$0xff]
      %v5287 = vld [vmem:[#allocation2 + $0xe8] sm:$0xff]
      %v5288 = vld [vmem:[#allocation2 + $0xf0] sm:$0xff]
      %v5289 = vld [vmem:[#allocation2 + $0xf8] sm:$0xff]
      %v5290 = vld [vmem:[#allocation2 + $0x100] sm:$0xff]
      %v5291 = vld [vmem:[#allocation2 + $0x108] sm:$0xff]
      %v5292 = vld [vmem:[#allocation2 + $0x110] sm:$0xff]
      %v5293 = vld [vmem:[#allocation2 + $0x118] sm:$0xff]
      %v5294 = vld [vmem:[#allocation2 + $0x120] sm:$0xff]
      %v5295 = vld [vmem:[#allocation2 + $0x128] sm:$0xff]
      %v5296 = vld [vmem:[#allocation2 + $0x130] sm:$0xff]
      %v5297 = vld [vmem:[#allocation2 + $0x138] sm:$0xff]
      %v5298 = vld [vmem:[#allocation2 + $0x140] sm:$0xff]
      %v5299 = vld [vmem:[#allocation2 + $0x148] sm:$0xff]
      %v5300 = vld [vmem:[#allocation2 + $0x150] sm:$0xff]
      %v5301 = vld [vmem:[#allocation2 + $0x158] sm:$0xff]
      %v5302 = vld [vmem:[#allocation2 + $0x160] sm:$0xff]
      %v5303 = vld [vmem:[#allocation2 + $0x168] sm:$0xff]
      %v5304 = vld [vmem:[#allocation2 + $0x170] sm:$0xff]
      %v5305 = vld [vmem:[#allocation2 + $0x178] sm:$0xff]
      %v5306 = vld [vmem:[#allocation2 + $0x180] sm:$0xff]
      %v5307 = vld [vmem:[#allocation2 + $0x188] sm:$0xff]
      %v5308 = vld [vmem:[#allocation2 + $0x190] sm:$0xff]
      %v5309 = vld [vmem:[#allocation2 + $0x198] sm:$0xff]
      %v5310 = vld [vmem:[#allocation2 + $0x1a0] sm:$0xff]
      %v5311 = vld [vmem:[#allocation2 + $0x1a8] sm:$0xff]
      %v5312 = vld [vmem:[#allocation2 + $0x1b0] sm:$0xff]
      %v5313 = vld [vmem:[#allocation2 + $0x1b8] sm:$0xff]
      %v5314 = vld [vmem:[#allocation2 + $0x1c0] sm:$0xff]
      %v5315 = vld [vmem:[#allocation2 + $0x1c8] sm:$0xff]
      %v5316 = vld [vmem:[#allocation2 + $0x1d0] sm:$0xff]
      %v5317 = vld [vmem:[#allocation2 + $0x1d8] sm:$0xff]
      %v5318 = vld [vmem:[#allocation2 + $0x1e0] sm:$0xff]
      %v5319 = vld [vmem:[#allocation2 + $0x1e8] sm:$0xff]
      %v5320 = vld [vmem:[#allocation2 + $0x1f0] sm:$0xff]
      %v5321 = vld [vmem:[#allocation2 + $0x1f8] sm:$0xff]
      %v5322 = vld [vmem:[#allocation2 + $0x200] sm:$0xff]
      %v5323 = vld [vmem:[#allocation2 + $0x208] sm:$0xff]
      %v5324 = vld [vmem:[#allocation2 + $0x210] sm:$0xff]
      %v5325 = vld [vmem:[#allocation2 + $0x218] sm:$0xff]
      %v5326 = vld [vmem:[#allocation2 + $0x220] sm:$0xff]
      %v5327 = vld [vmem:[#allocation2 + $0x228] sm:$0xff]
      %v5328 = vld [vmem:[#allocation2 + $0x230] sm:$0xff]
      %v5329 = vld [vmem:[#allocation2 + $0x238] sm:$0xff]
      %v5330 = vld [vmem:[#allocation2 + $0x240] sm:$0xff]
      %v5331 = vld [vmem:[#allocation2 + $0x248] sm:$0xff]
      %v5332 = vld [vmem:[#allocation2 + $0x250] sm:$0xff]
      %v5333 = vld [vmem:[#allocation2 + $0x258] sm:$0xff]
      %v5334 = vld [vmem:[#allocation2 + $0x260] sm:$0xff]
      %v5335 = vld [vmem:[#allocation2 + $0x268] sm:$0xff]
      %v5336 = vld [vmem:[#allocation2 + $0x270] sm:$0xff]
      %v5337 = vld [vmem:[#allocation2 + $0x278] sm:$0xff]
      %v5338 = vld [vmem:[#allocation2 + $0x280] sm:$0xff]
      %v5339 = vld [vmem:[#allocation2 + $0x288] sm:$0xff]
      %v5340 = vld [vmem:[#allocation2 + $0x290] sm:$0xff]
      %v5341 = vld [vmem:[#allocation2 + $0x298] sm:$0xff]
      %v5342 = vld [vmem:[#allocation2 + $0x2a0] sm:$0xff]
      %v5343 = vld [vmem:[#allocation2 + $0x2a8] sm:$0xff]
      %v5344 = vld [vmem:[#allocation2 + $0x2b0] sm:$0xff]
      %v5345 = vld [vmem:[#allocation2 + $0x2b8] sm:$0xff]
      %v5346 = vld [vmem:[#allocation2 + $0x2c0] sm:$0xff]
      %v5347 = vld [vmem:[#allocation2 + $0x2c8] sm:$0xff]
      %v5348 = vld [vmem:[#allocation2 + $0x2d0] sm:$0xff]
      %v5349 = vld [vmem:[#allocation2 + $0x2d8] sm:$0xff]
      %v5350 = vld [vmem:[#allocation2 + $0x2e0] sm:$0xff]
      %v5351 = vld [vmem:[#allocation2 + $0x2e8] sm:$0xff]
      %v5352 = vld [vmem:[#allocation2 + $0x2f0] sm:$0xff]
      %v5353 = vld [vmem:[#allocation2 + $0x2f8] sm:$0xff]
      %v5354 = vld [vmem:[#allocation2 + $0x300] sm:$0xff]
      %v5355 = vld [vmem:[#allocation2 + $0x308] sm:$0xff]
      %v5356 = vld [vmem:[#allocation2 + $0x310] sm:$0xff]
      %v5357 = vld [vmem:[#allocation2 + $0x318] sm:$0xff]
      %v5358 = vld [vmem:[#allocation2 + $0x320] sm:$0xff]
      %v5359 = vld [vmem:[#allocation2 + $0x328] sm:$0xff]
      %v5360 = vld [vmem:[#allocation2 + $0x330] sm:$0xff]
      %v5361 = vld [vmem:[#allocation2 + $0x338] sm:$0xff]
      %v5362 = vld [vmem:[#allocation2 + $0x340] sm:$0xff]
      %v5363 = vld [vmem:[#allocation2 + $0x348] sm:$0xff]
      %v5364 = vld [vmem:[#allocation2 + $0x350] sm:$0xff]
      %v5365 = vld [vmem:[#allocation2 + $0x358] sm:$0xff]
      %s5366 = scalar_lea.vmem %s7, 768
      %v5367 = vld [vmem:[%s5366] sm:$0xff]
      %v5368 = vld [vmem:[%s5366 + $0x8] sm:$0xff]
      %v5369 = vld [vmem:[%s5366 + $0x10] sm:$0xff]
      %v5370 = vld [vmem:[%s5366 + $0x18] sm:$0xff]
      %v5371 = vld [vmem:[%s5366 + $0x20] sm:$0xff]
      %v5372 = vld [vmem:[%s5366 + $0x28] sm:$0xff]
      %v5373 = vld [vmem:[%s5366 + $0x30] sm:$0xff]
      %v5374 = vld [vmem:[%s5366 + $0x38] sm:$0xff]
      %v5375 = vld [vmem:[%s5366 + $0x40] sm:$0xff]
      %v5376 = vld [vmem:[%s5366 + $0x48] sm:$0xff]
      %v5377 = vld [vmem:[%s5366 + $0x50] sm:$0xff]
      %v5378 = vld [vmem:[%s5366 + $0x58] sm:$0xff]
      %v5379 = vld [vmem:[%s5366 + $0x60] sm:$0xff]
      %v5380 = vld [vmem:[%s5366 + $0x68] sm:$0xff]
      %v5381 = vld [vmem:[%s5366 + $0x70] sm:$0xff]
      %v5382 = vld [vmem:[%s5366 + $0x78] sm:$0xff]
      %v5383 = vld [vmem:[%s5366 + $0x80] sm:$0xff]
      %v5384 = vld [vmem:[%s5366 + $0x88] sm:$0xff]
      %v5385 = vld [vmem:[%s5366 + $0x90] sm:$0xff]
      %v5386 = vld [vmem:[%s5366 + $0x98] sm:$0xff]
      %v5387 = vld [vmem:[%s5366 + $0xa0] sm:$0xff]
      %v5388 = vld [vmem:[%s5366 + $0xa8] sm:$0xff]
      %v5389 = vld [vmem:[%s5366 + $0xb0] sm:$0xff]
      %v5390 = vld [vmem:[%s5366 + $0xb8] sm:$0xff]
      %v5391 = vld [vmem:[%s5366 + $0xc0] sm:$0xff]
      %v5392 = vld [vmem:[%s5366 + $0xc8] sm:$0xff]
      %v5393 = vld [vmem:[%s5366 + $0xd0] sm:$0xff]
      %v5394 = vld [vmem:[%s5366 + $0xd8] sm:$0xff]
      %v5395 = vld [vmem:[%s5366 + $0xe0] sm:$0xff]
      %v5396 = vld [vmem:[%s5366 + $0xe8] sm:$0xff]
      %v5397 = vld [vmem:[%s5366 + $0xf0] sm:$0xff]
      %v5398 = vld [vmem:[%s5366 + $0xf8] sm:$0xff]
      %v5399 = vld [vmem:[%s5366 + $0x100] sm:$0xff]
      %v5400 = vld [vmem:[%s5366 + $0x108] sm:$0xff]
      %v5401 = vld [vmem:[%s5366 + $0x110] sm:$0xff]
      %v5402 = vld [vmem:[%s5366 + $0x118] sm:$0xff]
      %v5403 = vld [vmem:[%s5366 + $0x120] sm:$0xff]
      %v5404 = vld [vmem:[%s5366 + $0x128] sm:$0xff]
      %v5405 = vld [vmem:[%s5366 + $0x130] sm:$0xff]
      %v5406 = vld [vmem:[%s5366 + $0x138] sm:$0xff]
      %v5407 = vld [vmem:[%s5366 + $0x140] sm:$0xff]
      %v5408 = vld [vmem:[%s5366 + $0x148] sm:$0xff]
      %v5409 = vld [vmem:[%s5366 + $0x150] sm:$0xff]
      %v5410 = vld [vmem:[%s5366 + $0x158] sm:$0xff]
      %v5411 = vld [vmem:[%s5366 + $0x160] sm:$0xff]
      %v5412 = vld [vmem:[%s5366 + $0x168] sm:$0xff]
      %v5413 = vld [vmem:[%s5366 + $0x170] sm:$0xff]
      %v5414 = vld [vmem:[%s5366 + $0x178] sm:$0xff]
      %5415 = vmatprep.subr.mxu0 0.0
      %5416 = vmatpush1.msra.mxu0 %v5382
      %5417 = vmatprep.subr.mxu0 0.0
      %5418 = vmatpush1.msra.mxu0 %v5381
      %5419 = vmatprep.subr.mxu0 0.0
      %5420 = vmatpush1.msra.mxu0 %v5380
      %5421 = vmatprep.subr.mxu0 0.0
      %5422 = vmatpush1.msra.mxu0 %v5379
      %5423 = vmatprep.subr.mxu0 0.0
      %5424 = vmatpush1.msra.mxu0 %v5378
      %5425 = vmatprep.subr.mxu0 0.0
      %5426 = vmatpush1.msra.mxu0 %v5377
      %5427 = vmatprep.subr.mxu0 0.0
      %5428 = vmatpush1.msra.mxu0 %v5376
      %5429 = vmatprep.subr.mxu0 0.0
      %5430 = vmatpush1.msra.mxu0 %v5375
      %5431 = vmatprep.subr.mxu0 0.0
      %5432 = vmatpush1.msra.mxu0 %v5374
      %5433 = vmatprep.subr.mxu0 0.0
      %5434 = vmatpush1.msra.mxu0 %v5373
      %5435 = vmatprep.subr.mxu0 0.0
      %5436 = vmatpush1.msra.mxu0 %v5372
      %5437 = vmatprep.subr.mxu0 0.0
      %5438 = vmatpush1.msra.mxu0 %v5371
      %5439 = vmatprep.subr.mxu0 0.0
      %5440 = vmatpush1.msra.mxu0 %v5370
      %5441 = vmatprep.subr.mxu0 0.0
      %5442 = vmatpush1.msra.mxu0 %v5369
      %5443 = vmatprep.subr.mxu0 0.0
      %5444 = vmatpush1.msra.mxu0 %v5368
      %5445 = vmatprep.subr.mxu0 0.0
      %5446 = vmatpush1.msra.mxu0 %v5367
      %5447 = vmatprep.subr.mxu0 0.0
      %5448 = vmatpush2.msra.mxu0 %v5398
      %5449 = vmatprep.subr.mxu0 0.0
      %5450 = vmatpush2.msra.mxu0 %v5397
      %5451 = vmatprep.subr.mxu0 0.0
      %5452 = vmatpush2.msra.mxu0 %v5396
      %5453 = vmatprep.subr.mxu0 0.0
      %5454 = vmatpush2.msra.mxu0 %v5395
      %5455 = vmatprep.subr.mxu0 0.0
      %5456 = vmatpush2.msra.mxu0 %v5394
      %5457 = vmatprep.subr.mxu0 0.0
      %5458 = vmatpush2.msra.mxu0 %v5393
      %5459 = vmatprep.subr.mxu0 0.0
      %5460 = vmatpush2.msra.mxu0 %v5392
      %5461 = vmatprep.subr.mxu0 0.0
      %5462 = vmatpush2.msra.mxu0 %v5391
      %5463 = vmatprep.subr.mxu0 0.0
      %5464 = vmatpush2.msra.mxu0 %v5390
      %5465 = vmatprep.subr.mxu0 0.0
      %5466 = vmatpush2.msra.mxu0 %v5389
      %5467 = vmatprep.subr.mxu0 0.0
      %5468 = vmatpush2.msra.mxu0 %v5388
      %5469 = vmatprep.subr.mxu0 0.0
      %5470 = vmatpush2.msra.mxu0 %v5387
      %5471 = vmatprep.subr.mxu0 0.0
      %5472 = vmatpush2.msra.mxu0 %v5386
      %5473 = vmatprep.subr.mxu0 0.0
      %5474 = vmatpush2.msra.mxu0 %v5385
      %5475 = vmatprep.subr.mxu0 0.0
      %5476 = vmatpush2.msra.mxu0 %v5384
      %5477 = vmatprep.subr.mxu0 0.0
      %5478 = vmatpush2.msra.mxu0 %v5383
      %5479 = vmatprep.mubr.f32.mxu0 %v5271
      %5480 = vmatmul.mubr.f32.gmra.mxu0 %v5270
      %v5481 = vpop.f32.mrf.mxu0
      %v5482 = vadd.f32 0.0, %v5481
      %v5483 = vpop.f32.mrf.mxu0
      %5484 = vmatprep.mubr.f32.mxu0 %v5274
      %5485 = vmatmul.mubr.f32.gmra.mxu0 %v5273
      %v5486 = vpop.f32.mrf.mxu0
      %v5487 = vadd.f32 0.0, %v5486
      %v5488 = vpop.f32.mrf.mxu0
      %5489 = vmatprep.mubr.f32.mxu0 %v5277
      %5490 = vmatmul.mubr.f32.gmra.mxu0 %v5276
      %v5491 = vpop.f32.mrf.mxu0
      %v5492 = vadd.f32 0.0, %v5491
      %v5493 = vpop.f32.mrf.mxu0
      %5494 = vmatprep.mubr.f32.mxu0 %v5280
      %5495 = vmatmul.mubr.f32.gmra.mxu0 %v5279
      %v5496 = vpop.f32.mrf.mxu0
      %v5497 = vadd.f32 0.0, %v5496
      %v5498 = vpop.f32.mrf.mxu0
      %5499 = vmatprep.mubr.f32.mxu0 %v5283
      %5500 = vmatmul.mubr.f32.gmra.mxu0 %v5282
      %v5501 = vpop.f32.mrf.mxu0
      %v5502 = vadd.f32 0.0, %v5501
      %v5503 = vpop.f32.mrf.mxu0
      %5504 = vmatprep.mubr.f32.mxu0 %v5286
      %5505 = vmatmul.mubr.f32.gmra.mxu0 %v5285
      %v5506 = vpop.f32.mrf.mxu0
      %v5507 = vadd.f32 0.0, %v5506
      %v5508 = vpop.f32.mrf.mxu0
      %5509 = vmatprep.mubr.f32.mxu0 %v5289
      %5510 = vmatmul.mubr.f32.gmra.mxu0 %v5288
      %v5511 = vpop.f32.mrf.mxu0
      %v5512 = vadd.f32 0.0, %v5511
      %v5513 = vpop.f32.mrf.mxu0
      %5514 = vmatprep.mubr.f32.mxu0 %v5292
      %5515 = vmatmul.mubr.f32.gmra.mxu0 %v5291
      %v5516 = vpop.f32.mrf.mxu0
      %v5517 = vadd.f32 0.0, %v5516
      %v5518 = vpop.f32.mrf.mxu0
      %5519 = vmatprep.mubr.f32.mxu0 %v5295
      %5520 = vmatmul.mubr.f32.gmra.mxu0 %v5294
      %v5521 = vpop.f32.mrf.mxu0
      %v5522 = vadd.f32 0.0, %v5521
      %v5523 = vpop.f32.mrf.mxu0
      %5524 = vmatprep.mubr.f32.mxu0 %v5298
      %5525 = vmatmul.mubr.f32.gmra.mxu0 %v5297
      %v5526 = vpop.f32.mrf.mxu0
      %v5527 = vadd.f32 0.0, %v5526
      %v5528 = vpop.f32.mrf.mxu0
      %5529 = vmatprep.mubr.f32.mxu0 %v5301
      %5530 = vmatmul.mubr.f32.gmra.mxu0 %v5300
      %v5531 = vpop.f32.mrf.mxu0
      %v5532 = vadd.f32 0.0, %v5531
      %v5533 = vpop.f32.mrf.mxu0
      %5534 = vmatprep.mubr.f32.mxu0 %v5304
      %5535 = vmatmul.mubr.f32.gmra.mxu0 %v5303
      %v5536 = vpop.f32.mrf.mxu0
      %v5537 = vadd.f32 0.0, %v5536
      %v5538 = vpop.f32.mrf.mxu0
      %5539 = vmatprep.mubr.f32.mxu0 %v5307
      %5540 = vmatmul.mubr.f32.gmra.mxu0 %v5306
      %v5541 = vpop.f32.mrf.mxu0
      %v5542 = vadd.f32 0.0, %v5541
      %v5543 = vpop.f32.mrf.mxu0
      %5544 = vmatprep.mubr.f32.mxu0 %v5310
      %5545 = vmatmul.mubr.f32.gmra.mxu0 %v5309
      %v5546 = vpop.f32.mrf.mxu0
      %v5547 = vadd.f32 0.0, %v5546
      %v5548 = vpop.f32.mrf.mxu0
      %5549 = vmatprep.mubr.f32.mxu0 %v5313
      %5550 = vmatmul.mubr.f32.gmra.mxu0 %v5312
      %v5551 = vpop.f32.mrf.mxu0
      %v5552 = vadd.f32 0.0, %v5551
      %v5553 = vpop.f32.mrf.mxu0
      %5554 = vmatprep.mubr.f32.mxu0 %v5316
      %5555 = vmatmul.mubr.f32.gmra.mxu0 %v5315
      %v5556 = vpop.f32.mrf.mxu0
      %v5557 = vadd.f32 0.0, %v5556
      %v5558 = vpop.f32.mrf.mxu0
      %5559 = vmatprep.mubr.f32.mxu0 %v5319
      %5560 = vmatmul.mubr.f32.gmra.mxu0 %v5318
      %v5561 = vpop.f32.mrf.mxu0
      %v5562 = vadd.f32 0.0, %v5561
      %v5563 = vpop.f32.mrf.mxu0
      %5564 = vmatprep.mubr.f32.mxu0 %v5322
      %5565 = vmatmul.mubr.f32.gmra.mxu0 %v5321
      %v5566 = vpop.f32.mrf.mxu0
      %v5567 = vadd.f32 0.0, %v5566
      %v5568 = vpop.f32.mrf.mxu0
      %5569 = vmatprep.mubr.f32.mxu0 %v5325
      %5570 = vmatmul.mubr.f32.gmra.mxu0 %v5324
      %v5571 = vpop.f32.mrf.mxu0
      %v5572 = vadd.f32 0.0, %v5571
      %v5573 = vpop.f32.mrf.mxu0
      %5574 = vmatprep.mubr.f32.mxu0 %v5328
      %5575 = vmatmul.mubr.f32.gmra.mxu0 %v5327
      %v5576 = vpop.f32.mrf.mxu0
      %v5577 = vadd.f32 0.0, %v5576
      %v5578 = vpop.f32.mrf.mxu0
      %5579 = vmatprep.mubr.f32.mxu0 %v5331
      %5580 = vmatmul.mubr.f32.gmra.mxu0 %v5330
      %v5581 = vpop.f32.mrf.mxu0
      %v5582 = vadd.f32 0.0, %v5581
      %v5583 = vpop.f32.mrf.mxu0
      %5584 = vmatprep.mubr.f32.mxu0 %v5334
      %5585 = vmatmul.mubr.f32.gmra.mxu0 %v5333
      %v5586 = vpop.f32.mrf.mxu0
      %v5587 = vadd.f32 0.0, %v5586
      %v5588 = vpop.f32.mrf.mxu0
      %5589 = vmatprep.mubr.f32.mxu0 %v5337
      %5590 = vmatmul.mubr.f32.gmra.mxu0 %v5336
      %v5591 = vpop.f32.mrf.mxu0
      %v5592 = vadd.f32 0.0, %v5591
      %v5593 = vpop.f32.mrf.mxu0
      %5594 = vmatprep.mubr.f32.mxu0 %v5340
      %5595 = vmatmul.mubr.f32.gmra.mxu0 %v5339
      %v5596 = vpop.f32.mrf.mxu0
      %v5597 = vadd.f32 0.0, %v5596
      %v5598 = vpop.f32.mrf.mxu0
      %5599 = vmatprep.mubr.f32.mxu0 %v5343
      %5600 = vmatmul.mubr.f32.gmra.mxu0 %v5342
      %v5601 = vpop.f32.mrf.mxu0
      %v5602 = vadd.f32 0.0, %v5601
      %v5603 = vpop.f32.mrf.mxu0
      %5604 = vmatprep.mubr.f32.mxu0 %v5346
      %5605 = vmatmul.mubr.f32.gmra.mxu0 %v5345
      %v5606 = vpop.f32.mrf.mxu0
      %v5607 = vadd.f32 0.0, %v5606
      %v5608 = vpop.f32.mrf.mxu0
      %5609 = vmatprep.mubr.f32.mxu0 %v5349
      %5610 = vmatmul.mubr.f32.gmra.mxu0 %v5348
      %v5611 = vpop.f32.mrf.mxu0
      %v5612 = vadd.f32 0.0, %v5611
      %v5613 = vpop.f32.mrf.mxu0
      %5614 = vmatprep.mubr.f32.mxu0 %v5352
      %5615 = vmatmul.mubr.f32.gmra.mxu0 %v5351
      %v5616 = vpop.f32.mrf.mxu0
      %v5617 = vadd.f32 0.0, %v5616
      %v5618 = vpop.f32.mrf.mxu0
      %5619 = vmatprep.mubr.f32.mxu0 %v5355
      %5620 = vmatmul.mubr.f32.gmra.mxu0 %v5354
      %v5621 = vpop.f32.mrf.mxu0
      %v5622 = vadd.f32 0.0, %v5621
      %v5623 = vpop.f32.mrf.mxu0
      %5624 = vmatprep.mubr.f32.mxu0 %v5358
      %5625 = vmatmul.mubr.f32.gmra.mxu0 %v5357
      %v5626 = vpop.f32.mrf.mxu0
      %v5627 = vadd.f32 0.0, %v5626
      %v5628 = vpop.f32.mrf.mxu0
      %5629 = vmatprep.mubr.f32.mxu0 %v5361
      %5630 = vmatmul.mubr.f32.gmra.mxu0 %v5360
      %v5631 = vpop.f32.mrf.mxu0
      %v5632 = vadd.f32 0.0, %v5631
      %v5633 = vpop.f32.mrf.mxu0
      %5634 = vmatprep.mubr.f32.mxu0 %v5364
      %5635 = vmatmul.mubr.f32.gmra.mxu0 %v5363
      %v5636 = vpop.f32.mrf.mxu0
      %v5637 = vadd.f32 0.0, %v5636
      %v5638 = vpop.f32.mrf.mxu0
      %5639 = vdwg.mxu0
      %5640 = vmatprep.subr.mxu0 0.0
      %5641 = vmatpush1.msra.mxu0 %v5414
      %5642 = vmatprep.subr.mxu0 0.0
      %5643 = vmatpush1.msra.mxu0 %v5413
      %5644 = vmatprep.subr.mxu0 0.0
      %5645 = vmatpush1.msra.mxu0 %v5412
      %5646 = vmatprep.subr.mxu0 0.0
      %5647 = vmatpush1.msra.mxu0 %v5411
      %5648 = vmatprep.subr.mxu0 0.0
      %5649 = vmatpush1.msra.mxu0 %v5410
      %5650 = vmatprep.subr.mxu0 0.0
      %5651 = vmatpush1.msra.mxu0 %v5409
      %5652 = vmatprep.subr.mxu0 0.0
      %5653 = vmatpush1.msra.mxu0 %v5408
      %5654 = vmatprep.subr.mxu0 0.0
      %5655 = vmatpush1.msra.mxu0 %v5407
      %5656 = vmatprep.subr.mxu0 0.0
      %5657 = vmatpush1.msra.mxu0 %v5406
      %5658 = vmatprep.subr.mxu0 0.0
      %5659 = vmatpush1.msra.mxu0 %v5405
      %5660 = vmatprep.subr.mxu0 0.0
      %5661 = vmatpush1.msra.mxu0 %v5404
      %5662 = vmatprep.subr.mxu0 0.0
      %5663 = vmatpush1.msra.mxu0 %v5403
      %5664 = vmatprep.subr.mxu0 0.0
      %5665 = vmatpush1.msra.mxu0 %v5402
      %5666 = vmatprep.subr.mxu0 0.0
      %5667 = vmatpush1.msra.mxu0 %v5401
      %5668 = vmatprep.subr.mxu0 0.0
      %5669 = vmatpush1.msra.mxu0 %v5400
      %5670 = vmatprep.subr.mxu0 0.0
      %5671 = vmatpush1.msra.mxu0 %v5399
      %5672 = vmatprep.subr.mxu0 0.0
      %5673 = vmatpush2.msra.mxu0 0.0
      %5674 = vmatprep.subr.mxu0 0.0
      %5675 = vmatpush2.msra.mxu0 0.0
      %5676 = vmatprep.subr.mxu0 0.0
      %5677 = vmatpush2.msra.mxu0 0.0
      %5678 = vmatprep.subr.mxu0 0.0
      %5679 = vmatpush2.msra.mxu0 0.0
      %5680 = vmatprep.subr.mxu0 0.0
      %5681 = vmatpush2.msra.mxu0 0.0
      %5682 = vmatprep.subr.mxu0 0.0
      %5683 = vmatpush2.msra.mxu0 0.0
      %5684 = vmatprep.subr.mxu0 0.0
      %5685 = vmatpush2.msra.mxu0 0.0
      %5686 = vmatprep.subr.mxu0 0.0
      %5687 = vmatpush2.msra.mxu0 0.0
      %5688 = vmatprep.subr.mxu0 0.0
      %5689 = vmatpush2.msra.mxu0 0.0
      %5690 = vmatprep.subr.mxu0 0.0
      %5691 = vmatpush2.msra.mxu0 0.0
      %5692 = vmatprep.subr.mxu0 0.0
      %5693 = vmatpush2.msra.mxu0 0.0
      %5694 = vmatprep.subr.mxu0 0.0
      %5695 = vmatpush2.msra.mxu0 0.0
      %5696 = vmatprep.subr.mxu0 0.0
      %5697 = vmatpush2.msra.mxu0 0.0
      %5698 = vmatprep.subr.mxu0 0.0
      %5699 = vmatpush2.msra.mxu0 0.0
      %5700 = vmatprep.subr.mxu0 0.0
      %5701 = vmatpush2.msra.mxu0 0.0
      %5702 = vmatprep.subr.mxu0 0.0
      %5703 = vmatpush2.msra.mxu0 0.0
      %5704 = vmatprep.mubr.f32.mxu0 0.0
      %5705 = vmatmul.mubr.f32.gmra.mxu0 %v5272
      %v5706 = vpop.f32.mrf.mxu0
      %v5707 = vadd.f32 %v5482, %v5706
      %v5708 = vpop.f32.mrf.mxu0
      %5709 = vmatprep.mubr.f32.mxu0 0.0
      %5710 = vmatmul.mubr.f32.gmra.mxu0 %v5275
      %v5711 = vpop.f32.mrf.mxu0
      %v5712 = vadd.f32 %v5487, %v5711
      %v5713 = vpop.f32.mrf.mxu0
      %5714 = vmatprep.mubr.f32.mxu0 0.0
      %5715 = vmatmul.mubr.f32.gmra.mxu0 %v5278
      %v5716 = vpop.f32.mrf.mxu0
      %v5717 = vadd.f32 %v5492, %v5716
      %v5718 = vpop.f32.mrf.mxu0
      %5719 = vmatprep.mubr.f32.mxu0 0.0
      %5720 = vmatmul.mubr.f32.gmra.mxu0 %v5281
      %v5721 = vpop.f32.mrf.mxu0
      %v5722 = vadd.f32 %v5497, %v5721
      %v5723 = vpop.f32.mrf.mxu0
      %5724 = vmatprep.mubr.f32.mxu0 0.0
      %5725 = vmatmul.mubr.f32.gmra.mxu0 %v5284
      %v5726 = vpop.f32.mrf.mxu0
      %v5727 = vadd.f32 %v5502, %v5726
      %v5728 = vpop.f32.mrf.mxu0
      %5729 = vmatprep.mubr.f32.mxu0 0.0
      %5730 = vmatmul.mubr.f32.gmra.mxu0 %v5287
      %v5731 = vpop.f32.mrf.mxu0
      %v5732 = vadd.f32 %v5507, %v5731
      %v5733 = vpop.f32.mrf.mxu0
      %5734 = vmatprep.mubr.f32.mxu0 0.0
      %5735 = vmatmul.mubr.f32.gmra.mxu0 %v5290
      %v5736 = vpop.f32.mrf.mxu0
      %v5737 = vadd.f32 %v5512, %v5736
      %v5738 = vpop.f32.mrf.mxu0
      %5739 = vmatprep.mubr.f32.mxu0 0.0
      %5740 = vmatmul.mubr.f32.gmra.mxu0 %v5293
      %v5741 = vpop.f32.mrf.mxu0
      %v5742 = vadd.f32 %v5517, %v5741
      %v5743 = vpop.f32.mrf.mxu0
      %5744 = vmatprep.mubr.f32.mxu0 0.0
      %5745 = vmatmul.mubr.f32.gmra.mxu0 %v5296
      %v5746 = vpop.f32.mrf.mxu0
      %v5747 = vadd.f32 %v5522, %v5746
      %v5748 = vpop.f32.mrf.mxu0
      %5749 = vmatprep.mubr.f32.mxu0 0.0
      %5750 = vmatmul.mubr.f32.gmra.mxu0 %v5299
      %v5751 = vpop.f32.mrf.mxu0
      %v5752 = vadd.f32 %v5527, %v5751
      %v5753 = vpop.f32.mrf.mxu0
      %5754 = vmatprep.mubr.f32.mxu0 0.0
      %5755 = vmatmul.mubr.f32.gmra.mxu0 %v5302
      %v5756 = vpop.f32.mrf.mxu0
      %v5757 = vadd.f32 %v5532, %v5756
      %v5758 = vpop.f32.mrf.mxu0
      %5759 = vmatprep.mubr.f32.mxu0 0.0
      %5760 = vmatmul.mubr.f32.gmra.mxu0 %v5305
      %v5761 = vpop.f32.mrf.mxu0
      %v5762 = vadd.f32 %v5537, %v5761
      %v5763 = vpop.f32.mrf.mxu0
      %5764 = vmatprep.mubr.f32.mxu0 0.0
      %5765 = vmatmul.mubr.f32.gmra.mxu0 %v5308
      %v5766 = vpop.f32.mrf.mxu0
      %v5767 = vadd.f32 %v5542, %v5766
      %v5768 = vpop.f32.mrf.mxu0
      %5769 = vmatprep.mubr.f32.mxu0 0.0
      %5770 = vmatmul.mubr.f32.gmra.mxu0 %v5311
      %v5771 = vpop.f32.mrf.mxu0
      %v5772 = vadd.f32 %v5547, %v5771
      %v5773 = vpop.f32.mrf.mxu0
      %5774 = vmatprep.mubr.f32.mxu0 0.0
      %5775 = vmatmul.mubr.f32.gmra.mxu0 %v5314
      %v5776 = vpop.f32.mrf.mxu0
      %v5777 = vadd.f32 %v5552, %v5776
      %v5778 = vpop.f32.mrf.mxu0
      %5779 = vmatprep.mubr.f32.mxu0 0.0
      %5780 = vmatmul.mubr.f32.gmra.mxu0 %v5317
      %v5781 = vpop.f32.mrf.mxu0
      %v5782 = vadd.f32 %v5557, %v5781
      %v5783 = vpop.f32.mrf.mxu0
      %5784 = vmatprep.mubr.f32.mxu0 0.0
      %5785 = vmatmul.mubr.f32.gmra.mxu0 %v5320
      %v5786 = vpop.f32.mrf.mxu0
      %v5787 = vadd.f32 %v5562, %v5786
      %v5788 = vpop.f32.mrf.mxu0
      %5789 = vmatprep.mubr.f32.mxu0 0.0
      %5790 = vmatmul.mubr.f32.gmra.mxu0 %v5323
      %v5791 = vpop.f32.mrf.mxu0
      %v5792 = vadd.f32 %v5567, %v5791
      %v5793 = vpop.f32.mrf.mxu0
      %5794 = vmatprep.mubr.f32.mxu0 0.0
      %5795 = vmatmul.mubr.f32.gmra.mxu0 %v5326
      %v5796 = vpop.f32.mrf.mxu0
      %v5797 = vadd.f32 %v5572, %v5796
      %v5798 = vpop.f32.mrf.mxu0
      %5799 = vmatprep.mubr.f32.mxu0 0.0
      %5800 = vmatmul.mubr.f32.gmra.mxu0 %v5329
      %v5801 = vpop.f32.mrf.mxu0
      %v5802 = vadd.f32 %v5577, %v5801
      %v5803 = vpop.f32.mrf.mxu0
      %5804 = vmatprep.mubr.f32.mxu0 0.0
      %5805 = vmatmul.mubr.f32.gmra.mxu0 %v5332
      %v5806 = vpop.f32.mrf.mxu0
      %v5807 = vadd.f32 %v5582, %v5806
      %v5808 = vpop.f32.mrf.mxu0
      %5809 = vmatprep.mubr.f32.mxu0 0.0
      %5810 = vmatmul.mubr.f32.gmra.mxu0 %v5335
      %v5811 = vpop.f32.mrf.mxu0
      %v5812 = vadd.f32 %v5587, %v5811
      %v5813 = vpop.f32.mrf.mxu0
      %5814 = vmatprep.mubr.f32.mxu0 0.0
      %5815 = vmatmul.mubr.f32.gmra.mxu0 %v5338
      %v5816 = vpop.f32.mrf.mxu0
      %v5817 = vadd.f32 %v5592, %v5816
      %v5818 = vpop.f32.mrf.mxu0
      %5819 = vmatprep.mubr.f32.mxu0 0.0
      %5820 = vmatmul.mubr.f32.gmra.mxu0 %v5341
      %v5821 = vpop.f32.mrf.mxu0
      %v5822 = vadd.f32 %v5597, %v5821
      %v5823 = vpop.f32.mrf.mxu0
      %5824 = vmatprep.mubr.f32.mxu0 0.0
      %5825 = vmatmul.mubr.f32.gmra.mxu0 %v5344
      %v5826 = vpop.f32.mrf.mxu0
      %v5827 = vadd.f32 %v5602, %v5826
      %v5828 = vpop.f32.mrf.mxu0
      %5829 = vmatprep.mubr.f32.mxu0 0.0
      %5830 = vmatmul.mubr.f32.gmra.mxu0 %v5347
      %v5831 = vpop.f32.mrf.mxu0
      %v5832 = vadd.f32 %v5607, %v5831
      %v5833 = vpop.f32.mrf.mxu0
      %5834 = vmatprep.mubr.f32.mxu0 0.0
      %5835 = vmatmul.mubr.f32.gmra.mxu0 %v5350
      %v5836 = vpop.f32.mrf.mxu0
      %v5837 = vadd.f32 %v5612, %v5836
      %v5838 = vpop.f32.mrf.mxu0
      %5839 = vmatprep.mubr.f32.mxu0 0.0
      %5840 = vmatmul.mubr.f32.gmra.mxu0 %v5353
      %v5841 = vpop.f32.mrf.mxu0
      %v5842 = vadd.f32 %v5617, %v5841
      %v5843 = vpop.f32.mrf.mxu0
      %5844 = vmatprep.mubr.f32.mxu0 0.0
      %5845 = vmatmul.mubr.f32.gmra.mxu0 %v5356
      %v5846 = vpop.f32.mrf.mxu0
      %v5847 = vadd.f32 %v5622, %v5846
      %v5848 = vpop.f32.mrf.mxu0
      %5849 = vmatprep.mubr.f32.mxu0 0.0
      %5850 = vmatmul.mubr.f32.gmra.mxu0 %v5359
      %v5851 = vpop.f32.mrf.mxu0
      %v5852 = vadd.f32 %v5627, %v5851
      %v5853 = vpop.f32.mrf.mxu0
      %5854 = vmatprep.mubr.f32.mxu0 0.0
      %5855 = vmatmul.mubr.f32.gmra.mxu0 %v5362
      %v5856 = vpop.f32.mrf.mxu0
      %v5857 = vadd.f32 %v5632, %v5856
      %v5858 = vpop.f32.mrf.mxu0
      %5859 = vmatprep.mubr.f32.mxu0 0.0
      %5860 = vmatmul.mubr.f32.gmra.mxu0 %v5365
      %v5861 = vpop.f32.mrf.mxu0
      %v5862 = vadd.f32 %v5637, %v5861
      %v5863 = vpop.f32.mrf.mxu0
      %5864 = vdwg.mxu0
      %v5865 = vadd.f32 %v5112, %v5707
      %v5866 = vadd.f32 %v5117, %v5712
      %v5867 = vadd.f32 %v5122, %v5717
      %v5868 = vadd.f32 %v5127, %v5722
      %v5869 = vadd.f32 %v5132, %v5727
      %v5870 = vadd.f32 %v5137, %v5732
      %v5871 = vadd.f32 %v5142, %v5737
      %v5872 = vadd.f32 %v5147, %v5742
      %v5873 = vadd.f32 %v5152, %v5747
      %v5874 = vadd.f32 %v5157, %v5752
      %v5875 = vadd.f32 %v5162, %v5757
      %v5876 = vadd.f32 %v5167, %v5762
      %v5877 = vadd.f32 %v5172, %v5767
      %v5878 = vadd.f32 %v5177, %v5772
      %v5879 = vadd.f32 %v5182, %v5777
      %v5880 = vadd.f32 %v5187, %v5782
      %v5881 = vadd.f32 %v5192, %v5787
      %v5882 = vadd.f32 %v5197, %v5792
      %v5883 = vadd.f32 %v5202, %v5797
      %v5884 = vadd.f32 %v5207, %v5802
      %v5885 = vadd.f32 %v5212, %v5807
      %v5886 = vadd.f32 %v5217, %v5812
      %v5887 = vadd.f32 %v5222, %v5817
      %v5888 = vadd.f32 %v5227, %v5822
      %v5889 = vadd.f32 %v5232, %v5827
      %v5890 = vadd.f32 %v5237, %v5832
      %v5891 = vadd.f32 %v5242, %v5837
      %v5892 = vadd.f32 %v5247, %v5842
      %v5893 = vadd.f32 %v5252, %v5847
      %v5894 = vadd.f32 %v5257, %v5852
      %v5895 = vadd.f32 %v5262, %v5857
      %v5896 = vadd.f32 %v5267, %v5862
      %v5897 = vld [vmem:[%s8] sm:$0x1]
      %v5899 = vlaneseq
      %v5900 = vshrl.u32 %v5899, 7
      %v5901 = vsub.s32 0, %v5900
      %v5902 = vrot.slane %v5897, %v5901
      %v5904 = vadd.f32 %v5865, %v5902
      %v5905 = vadd.f32 %v5866, %v5902
      %v5906 = vadd.f32 %v5867, %v5902
      %v5907 = vadd.f32 %v5868, %v5902
      %v5908 = vadd.f32 %v5869, %v5902
      %v5909 = vadd.f32 %v5870, %v5902
      %v5910 = vadd.f32 %v5871, %v5902
      %v5911 = vadd.f32 %v5872, %v5902
      %v5912 = vadd.f32 %v5873, %v5902
      %v5913 = vadd.f32 %v5874, %v5902
      %v5914 = vadd.f32 %v5875, %v5902
      %v5915 = vadd.f32 %v5876, %v5902
      %v5916 = vadd.f32 %v5877, %v5902
      %v5917 = vadd.f32 %v5878, %v5902
      %v5918 = vadd.f32 %v5879, %v5902
      %v5919 = vadd.f32 %v5880, %v5902
      %v5920 = vadd.f32 %v5881, %v5902
      %v5921 = vadd.f32 %v5882, %v5902
      %v5922 = vadd.f32 %v5883, %v5902
      %v5923 = vadd.f32 %v5884, %v5902
      %v5924 = vadd.f32 %v5885, %v5902
      %v5925 = vadd.f32 %v5886, %v5902
      %v5926 = vadd.f32 %v5887, %v5902
      %v5927 = vadd.f32 %v5888, %v5902
      %v5928 = vadd.f32 %v5889, %v5902
      %v5929 = vadd.f32 %v5890, %v5902
      %v5930 = vadd.f32 %v5891, %v5902
      %v5931 = vadd.f32 %v5892, %v5902
      %v5932 = vadd.f32 %v5893, %v5902
      %v5933 = vadd.f32 %v5894, %v5902
      %v5934 = vadd.f32 %v5895, %v5902
      %v5935 = vadd.f32 %v5896, %v5902
      %v5936 = vadd.f32 %v5904, %v5905
      %v5937 = vadd.f32 %v5936, %v5906
      %v5938 = vadd.f32 %v5937, %v5907
      %v5939 = vadd.f32 %v5938, %v5908
      %v5940 = vadd.f32 %v5939, %v5909
      %v5941 = vadd.f32 %v5940, %v5910
      %v5942 = vadd.f32 %v5941, %v5911
      %v5943 = vadd.f32 %v5942, %v5912
      %v5944 = vadd.f32 %v5943, %v5913
      %v5945 = vadd.f32 %v5944, %v5914
      %v5946 = vadd.f32 %v5945, %v5915
      %v5947 = vadd.f32 %v5946, %v5916
      %v5948 = vadd.f32 %v5947, %v5917
      %v5949 = vadd.f32 %v5948, %v5918
      %v5950 = vadd.f32 %v5949, %v5919
      %v5951 = vadd.f32 %v5950, %v5920
      %v5952 = vadd.f32 %v5951, %v5921
      %v5953 = vadd.f32 %v5952, %v5922
      %v5954 = vadd.f32 %v5953, %v5923
      %v5955 = vadd.f32 %v5954, %v5924
      %v5956 = vadd.f32 %v5955, %v5925
      %v5957 = vadd.f32 %v5956, %v5926
      %v5958 = vadd.f32 %v5957, %v5927
      %v5959 = vadd.f32 %v5958, %v5928
      %v5960 = vadd.f32 %v5959, %v5929
      %v5961 = vadd.f32 %v5960, %v5930
      %v5962 = vadd.f32 %v5961, %v5931
      %v5963 = vadd.f32 %v5962, %v5932
      %v5964 = vadd.f32 %v5963, %v5933
      %v5965 = vadd.f32 %v5964, %v5934
      %v5966 = vadd.f32 %v5965, %v5935
      %v5967 = vrot.slane %v5966, 4
      %v5968 = vadd.f32 %v5966, %v5967
      %v5969 = vrot.slane %v5968, 2
      %v5970 = vadd.f32 %v5968, %v5969
      %v5971 = vrot.slane %v5970, 1
      %v5972 = vadd.f32 %v5970, %v5971
      %v5973 = vld [vmem:[%s13] sm:$0xff]
      %v5974 = vld [vmem:[%s13 + $0x8] sm:$0xff]
      %v5975 = vld [vmem:[%s13 + $0x10] sm:$0xff]
      %v5976 = vld [vmem:[%s13 + $0x18] sm:$0xff]
      %v5977 = vld [vmem:[%s13 + $0x20] sm:$0xff]
      %v5978 = vld [vmem:[%s13 + $0x28] sm:$0xff]
      %v5979 = vld [vmem:[%s13 + $0x30] sm:$0xff]
      %v5980 = vld [vmem:[%s13 + $0x38] sm:$0xff]
      %v5981 = vld [vmem:[%s13 + $0x40] sm:$0xff]
      %v5982 = vld [vmem:[%s13 + $0x48] sm:$0xff]
      %v5983 = vld [vmem:[%s13 + $0x50] sm:$0xff]
      %v5984 = vld [vmem:[%s13 + $0x58] sm:$0xff]
      %v5985 = vld [vmem:[%s13 + $0x60] sm:$0xff]
      %v5986 = vld [vmem:[%s13 + $0x68] sm:$0xff]
      %v5987 = vld [vmem:[%s13 + $0x70] sm:$0xff]
      %v5988 = vld [vmem:[%s13 + $0x78] sm:$0xff]
      %5989 = vmatprep.subr.mxu0 0.0
      %5990 = vmatpush1.msra.mxu0 %v5988
      %5991 = vmatprep.subr.mxu0 0.0
      %5992 = vmatpush1.msra.mxu0 %v5987
      %5993 = vmatprep.subr.mxu0 0.0
      %5994 = vmatpush1.msra.mxu0 %v5986
      %5995 = vmatprep.subr.mxu0 0.0
      %5996 = vmatpush1.msra.mxu0 %v5985
      %5997 = vmatprep.subr.mxu0 0.0
      %5998 = vmatpush1.msra.mxu0 %v5984
      %5999 = vmatprep.subr.mxu0 0.0
      %6000 = vmatpush1.msra.mxu0 %v5983
      %6001 = vmatprep.subr.mxu0 0.0
      %6002 = vmatpush1.msra.mxu0 %v5982
      %6003 = vmatprep.subr.mxu0 0.0
      %6004 = vmatpush1.msra.mxu0 %v5981
      %6005 = vmatprep.subr.mxu0 0.0
      %6006 = vmatpush1.msra.mxu0 %v5980
      %6007 = vmatprep.subr.mxu0 0.0
      %6008 = vmatpush1.msra.mxu0 %v5979
      %6009 = vmatprep.subr.mxu0 0.0
      %6010 = vmatpush1.msra.mxu0 %v5978
      %6011 = vmatprep.subr.mxu0 0.0
      %6012 = vmatpush1.msra.mxu0 %v5977
      %6013 = vmatprep.subr.mxu0 0.0
      %6014 = vmatpush1.msra.mxu0 %v5976
      %6015 = vmatprep.subr.mxu0 0.0
      %6016 = vmatpush1.msra.mxu0 %v5975
      %6017 = vmatprep.subr.mxu0 0.0
      %6018 = vmatpush1.msra.mxu0 %v5974
      %6019 = vmatprep.subr.mxu0 0.0
      %6020 = vmatpush1.msra.mxu0 %v5973
      %6021 = vmatprep.subr.mxu0 0.0
      %6022 = vmatpush2.msra.mxu0 0.0
      %6023 = vmatprep.subr.mxu0 0.0
      %6024 = vmatpush2.msra.mxu0 0.0
      %6025 = vmatprep.subr.mxu0 0.0
      %6026 = vmatpush2.msra.mxu0 0.0
      %6027 = vmatprep.subr.mxu0 0.0
      %6028 = vmatpush2.msra.mxu0 0.0
      %6029 = vmatprep.subr.mxu0 0.0
      %6030 = vmatpush2.msra.mxu0 0.0
      %6031 = vmatprep.subr.mxu0 0.0
      %6032 = vmatpush2.msra.mxu0 0.0
      %6033 = vmatprep.subr.mxu0 0.0
      %6034 = vmatpush2.msra.mxu0 0.0
      %6035 = vmatprep.subr.mxu0 0.0
      %6036 = vmatpush2.msra.mxu0 0.0
      %6037 = vmatprep.subr.mxu0 0.0
      %6038 = vmatpush2.msra.mxu0 0.0
      %6039 = vmatprep.subr.mxu0 0.0
      %6040 = vmatpush2.msra.mxu0 0.0
      %6041 = vmatprep.subr.mxu0 0.0
      %6042 = vmatpush2.msra.mxu0 0.0
      %6043 = vmatprep.subr.mxu0 0.0
      %6044 = vmatpush2.msra.mxu0 0.0
      %6045 = vmatprep.subr.mxu0 0.0
      %6046 = vmatpush2.msra.mxu0 0.0
      %6047 = vmatprep.subr.mxu0 0.0
      %6048 = vmatpush2.msra.mxu0 0.0
      %6049 = vmatprep.subr.mxu0 0.0
      %6050 = vmatpush2.msra.mxu0 0.0
      %6051 = vmatprep.subr.mxu0 0.0
      %6052 = vmatpush2.msra.mxu0 0.0
      %6053 = vmatprep.mubr.f32.mxu0 0.0
      %6054 = vmatmul.mubr.f32.gmra.mxu0 %v5972
      %v6055 = vpop.f32.mrf.mxu0
      %v6056 = vadd.f32 0.0, %v6055
      %v6057 = vpop.f32.mrf.mxu0
      %6058 = vdwg.mxu0
      %v6059 = vlaneseq
      %v6060 = vshrl.u32 %v6059, 7
      %v6061 = vsub.s32 0, %v6060
      %v6062 = vrot.slane %v6056, %v6061
      %v6063 = vsub.f32 %v5904, %v6062
      %v6064 = vsub.f32 %v5905, %v6062
      %v6065 = vsub.f32 %v5906, %v6062
      %v6066 = vsub.f32 %v5907, %v6062
      %v6067 = vsub.f32 %v5908, %v6062
      %v6068 = vsub.f32 %v5909, %v6062
      %v6069 = vsub.f32 %v5910, %v6062
      %v6070 = vsub.f32 %v5911, %v6062
      %v6071 = vsub.f32 %v5912, %v6062
      %v6072 = vsub.f32 %v5913, %v6062
      %v6073 = vsub.f32 %v5914, %v6062
      %v6074 = vsub.f32 %v5915, %v6062
      %v6075 = vsub.f32 %v5916, %v6062
      %v6076 = vsub.f32 %v5917, %v6062
      %v6077 = vsub.f32 %v5918, %v6062
      %v6078 = vsub.f32 %v5919, %v6062
      %v6079 = vsub.f32 %v5920, %v6062
      %v6080 = vsub.f32 %v5921, %v6062
      %v6081 = vsub.f32 %v5922, %v6062
      %v6082 = vsub.f32 %v5923, %v6062
      %v6083 = vsub.f32 %v5924, %v6062
      %v6084 = vsub.f32 %v5925, %v6062
      %v6085 = vsub.f32 %v5926, %v6062
      %v6086 = vsub.f32 %v5927, %v6062
      %v6087 = vsub.f32 %v5928, %v6062
      %v6088 = vsub.f32 %v5929, %v6062
      %v6089 = vsub.f32 %v5930, %v6062
      %v6090 = vsub.f32 %v5931, %v6062
      %v6091 = vsub.f32 %v5932, %v6062
      %v6092 = vsub.f32 %v5933, %v6062
      %v6093 = vsub.f32 %v5934, %v6062
      %v6094 = vsub.f32 %v5935, %v6062
      %v6095 = vmul.f32 %v6063, %v6063
      %v6096 = vmul.f32 %v6064, %v6064
      %v6097 = vmul.f32 %v6065, %v6065
      %v6098 = vmul.f32 %v6066, %v6066
      %v6099 = vmul.f32 %v6067, %v6067
      %v6100 = vmul.f32 %v6068, %v6068
      %v6101 = vmul.f32 %v6069, %v6069
      %v6102 = vmul.f32 %v6070, %v6070
      %v6103 = vmul.f32 %v6071, %v6071
      %v6104 = vmul.f32 %v6072, %v6072
      %v6105 = vmul.f32 %v6073, %v6073
      %v6106 = vmul.f32 %v6074, %v6074
      %v6107 = vmul.f32 %v6075, %v6075
      %v6108 = vmul.f32 %v6076, %v6076
      %v6109 = vmul.f32 %v6077, %v6077
      %v6110 = vmul.f32 %v6078, %v6078
      %v6111 = vmul.f32 %v6079, %v6079
      %v6112 = vmul.f32 %v6080, %v6080
      %v6113 = vmul.f32 %v6081, %v6081
      %v6114 = vmul.f32 %v6082, %v6082
      %v6115 = vmul.f32 %v6083, %v6083
      %v6116 = vmul.f32 %v6084, %v6084
      %v6117 = vmul.f32 %v6085, %v6085
      %v6118 = vmul.f32 %v6086, %v6086
      %v6119 = vmul.f32 %v6087, %v6087
      %v6120 = vmul.f32 %v6088, %v6088
      %v6121 = vmul.f32 %v6089, %v6089
      %v6122 = vmul.f32 %v6090, %v6090
      %v6123 = vmul.f32 %v6091, %v6091
      %v6124 = vmul.f32 %v6092, %v6092
      %v6125 = vmul.f32 %v6093, %v6093
      %v6126 = vmul.f32 %v6094, %v6094
      %v6127 = vadd.f32 %v6095, %v6096
      %v6128 = vadd.f32 %v6127, %v6097
      %v6129 = vadd.f32 %v6128, %v6098
      %v6130 = vadd.f32 %v6129, %v6099
      %v6131 = vadd.f32 %v6130, %v6100
      %v6132 = vadd.f32 %v6131, %v6101
      %v6133 = vadd.f32 %v6132, %v6102
      %v6134 = vadd.f32 %v6133, %v6103
      %v6135 = vadd.f32 %v6134, %v6104
      %v6136 = vadd.f32 %v6135, %v6105
      %v6137 = vadd.f32 %v6136, %v6106
      %v6138 = vadd.f32 %v6137, %v6107
      %v6139 = vadd.f32 %v6138, %v6108
      %v6140 = vadd.f32 %v6139, %v6109
      %v6141 = vadd.f32 %v6140, %v6110
      %v6142 = vadd.f32 %v6141, %v6111
      %v6143 = vadd.f32 %v6142, %v6112
      %v6144 = vadd.f32 %v6143, %v6113
      %v6145 = vadd.f32 %v6144, %v6114
      %v6146 = vadd.f32 %v6145, %v6115
      %v6147 = vadd.f32 %v6146, %v6116
      %v6148 = vadd.f32 %v6147, %v6117
      %v6149 = vadd.f32 %v6148, %v6118
      %v6150 = vadd.f32 %v6149, %v6119
      %v6151 = vadd.f32 %v6150, %v6120
      %v6152 = vadd.f32 %v6151, %v6121
      %v6153 = vadd.f32 %v6152, %v6122
      %v6154 = vadd.f32 %v6153, %v6123
      %v6155 = vadd.f32 %v6154, %v6124
      %v6156 = vadd.f32 %v6155, %v6125
      %v6157 = vadd.f32 %v6156, %v6126
      %v6158 = vrot.slane %v6157, 4
      %v6159 = vadd.f32 %v6157, %v6158
      %v6160 = vrot.slane %v6159, 2
      %v6161 = vadd.f32 %v6159, %v6160
      %v6162 = vrot.slane %v6161, 1
      %v6163 = vadd.f32 %v6161, %v6162
      %6164 = vmatprep.subr.mxu0 0.0
      %6165 = vmatpush1.msra.mxu0 %v5988
      %6166 = vmatprep.subr.mxu0 0.0
      %6167 = vmatpush1.msra.mxu0 %v5987
      %6168 = vmatprep.subr.mxu0 0.0
      %6169 = vmatpush1.msra.mxu0 %v5986
      %6170 = vmatprep.subr.mxu0 0.0
      %6171 = vmatpush1.msra.mxu0 %v5985
      %6172 = vmatprep.subr.mxu0 0.0
      %6173 = vmatpush1.msra.mxu0 %v5984
      %6174 = vmatprep.subr.mxu0 0.0
      %6175 = vmatpush1.msra.mxu0 %v5983
      %6176 = vmatprep.subr.mxu0 0.0
      %6177 = vmatpush1.msra.mxu0 %v5982
      %6178 = vmatprep.subr.mxu0 0.0
      %6179 = vmatpush1.msra.mxu0 %v5981
      %6180 = vmatprep.subr.mxu0 0.0
      %6181 = vmatpush1.msra.mxu0 %v5980
      %6182 = vmatprep.subr.mxu0 0.0
      %6183 = vmatpush1.msra.mxu0 %v5979
      %6184 = vmatprep.subr.mxu0 0.0
      %6185 = vmatpush1.msra.mxu0 %v5978
      %6186 = vmatprep.subr.mxu0 0.0
      %6187 = vmatpush1.msra.mxu0 %v5977
      %6188 = vmatprep.subr.mxu0 0.0
      %6189 = vmatpush1.msra.mxu0 %v5976
      %6190 = vmatprep.subr.mxu0 0.0
      %6191 = vmatpush1.msra.mxu0 %v5975
      %6192 = vmatprep.subr.mxu0 0.0
      %6193 = vmatpush1.msra.mxu0 %v5974
      %6194 = vmatprep.subr.mxu0 0.0
      %6195 = vmatpush1.msra.mxu0 %v5973
      %6196 = vmatprep.subr.mxu0 0.0
      %6197 = vmatpush2.msra.mxu0 0.0
      %6198 = vmatprep.subr.mxu0 0.0
      %6199 = vmatpush2.msra.mxu0 0.0
      %6200 = vmatprep.subr.mxu0 0.0
      %6201 = vmatpush2.msra.mxu0 0.0
      %6202 = vmatprep.subr.mxu0 0.0
      %6203 = vmatpush2.msra.mxu0 0.0
      %6204 = vmatprep.subr.mxu0 0.0
      %6205 = vmatpush2.msra.mxu0 0.0
      %6206 = vmatprep.subr.mxu0 0.0
      %6207 = vmatpush2.msra.mxu0 0.0
      %6208 = vmatprep.subr.mxu0 0.0
      %6209 = vmatpush2.msra.mxu0 0.0
      %6210 = vmatprep.subr.mxu0 0.0
      %6211 = vmatpush2.msra.mxu0 0.0
      %6212 = vmatprep.subr.mxu0 0.0
      %6213 = vmatpush2.msra.mxu0 0.0
      %6214 = vmatprep.subr.mxu0 0.0
      %6215 = vmatpush2.msra.mxu0 0.0
      %6216 = vmatprep.subr.mxu0 0.0
      %6217 = vmatpush2.msra.mxu0 0.0
      %6218 = vmatprep.subr.mxu0 0.0
      %6219 = vmatpush2.msra.mxu0 0.0
      %6220 = vmatprep.subr.mxu0 0.0
      %6221 = vmatpush2.msra.mxu0 0.0
      %6222 = vmatprep.subr.mxu0 0.0
      %6223 = vmatpush2.msra.mxu0 0.0
      %6224 = vmatprep.subr.mxu0 0.0
      %6225 = vmatpush2.msra.mxu0 0.0
      %6226 = vmatprep.subr.mxu0 0.0
      %6227 = vmatpush2.msra.mxu0 0.0
      %6228 = vmatprep.mubr.f32.mxu0 0.0
      %6229 = vmatmul.mubr.f32.gmra.mxu0 %v6163
      %v6230 = vpop.f32.mrf.mxu0
      %v6231 = vadd.f32 1e-05, %v6230
      %v6232 = vpop.f32.mrf.mxu0
      %6233 = vdwg.mxu0
      %v6234 = vrsqrt.pop %v6231
      %v6235 = vld [vmem:[%s9] sm:$0x1]
      %v6236 = vmul.f32 %v6234, %v6235
      %v6237 = vlaneseq
      %v6238 = vshrl.u32 %v6237, 7
      %v6239 = vsub.s32 0, %v6238
      %v6240 = vrot.slane %v6236, %v6239
      %v6241 = vmul.f32 %v6063, %v6240
      %v6242 = vmul.f32 %v6064, %v6240
      %v6243 = vmul.f32 %v6065, %v6240
      %v6244 = vmul.f32 %v6066, %v6240
      %v6245 = vmul.f32 %v6067, %v6240
      %v6246 = vmul.f32 %v6068, %v6240
      %v6247 = vmul.f32 %v6069, %v6240
      %v6248 = vmul.f32 %v6070, %v6240
      %v6249 = vmul.f32 %v6071, %v6240
      %v6250 = vmul.f32 %v6072, %v6240
      %v6251 = vmul.f32 %v6073, %v6240
      %v6252 = vmul.f32 %v6074, %v6240
      %v6253 = vmul.f32 %v6075, %v6240
      %v6254 = vmul.f32 %v6076, %v6240
      %v6255 = vmul.f32 %v6077, %v6240
      %v6256 = vmul.f32 %v6078, %v6240
      %v6257 = vmul.f32 %v6079, %v6240
      %v6258 = vmul.f32 %v6080, %v6240
      %v6259 = vmul.f32 %v6081, %v6240
      %v6260 = vmul.f32 %v6082, %v6240
      %v6261 = vmul.f32 %v6083, %v6240
      %v6262 = vmul.f32 %v6084, %v6240
      %v6263 = vmul.f32 %v6085, %v6240
      %v6264 = vmul.f32 %v6086, %v6240
      %v6265 = vmul.f32 %v6087, %v6240
      %v6266 = vmul.f32 %v6088, %v6240
      %v6267 = vmul.f32 %v6089, %v6240
      %v6268 = vmul.f32 %v6090, %v6240
      %v6269 = vmul.f32 %v6091, %v6240
      %v6270 = vmul.f32 %v6092, %v6240
      %v6271 = vmul.f32 %v6093, %v6240
      %v6272 = vmul.f32 %v6094, %v6240
      %v6273 = vld [vmem:[%s10] sm:$0x1]
      %v6275 = vlaneseq
      %v6276 = vshrl.u32 %v6275, 7
      %v6277 = vsub.s32 0, %v6276
      %v6278 = vrot.slane %v6273, %v6277
      %v6280 = vadd.f32 %v6241, %v6278
      %v6281 = vadd.f32 %v6242, %v6278
      %v6282 = vadd.f32 %v6243, %v6278
      %v6283 = vadd.f32 %v6244, %v6278
      %v6284 = vadd.f32 %v6245, %v6278
      %v6285 = vadd.f32 %v6246, %v6278
      %v6286 = vadd.f32 %v6247, %v6278
      %v6287 = vadd.f32 %v6248, %v6278
      %v6288 = vadd.f32 %v6249, %v6278
      %v6289 = vadd.f32 %v6250, %v6278
      %v6290 = vadd.f32 %v6251, %v6278
      %v6291 = vadd.f32 %v6252, %v6278
      %v6292 = vadd.f32 %v6253, %v6278
      %v6293 = vadd.f32 %v6254, %v6278
      %v6294 = vadd.f32 %v6255, %v6278
      %v6295 = vadd.f32 %v6256, %v6278
      %v6296 = vadd.f32 %v6257, %v6278
      %v6297 = vadd.f32 %v6258, %v6278
      %v6298 = vadd.f32 %v6259, %v6278
      %v6299 = vadd.f32 %v6260, %v6278
      %v6300 = vadd.f32 %v6261, %v6278
      %v6301 = vadd.f32 %v6262, %v6278
      %v6302 = vadd.f32 %v6263, %v6278
      %v6303 = vadd.f32 %v6264, %v6278
      %v6304 = vadd.f32 %v6265, %v6278
      %v6305 = vadd.f32 %v6266, %v6278
      %v6306 = vadd.f32 %v6267, %v6278
      %v6307 = vadd.f32 %v6268, %v6278
      %v6308 = vadd.f32 %v6269, %v6278
      %v6309 = vadd.f32 %v6270, %v6278
      %v6310 = vadd.f32 %v6271, %v6278
      %v6311 = vadd.f32 %v6272, %v6278
      %v6312 = vxor.u32 %v6280, 2147483648
      %v6313 = vxor.u32 %v6281, 2147483648
      %v6314 = vxor.u32 %v6282, 2147483648
      %v6315 = vxor.u32 %v6283, 2147483648
      %v6316 = vxor.u32 %v6284, 2147483648
      %v6317 = vxor.u32 %v6285, 2147483648
      %v6318 = vxor.u32 %v6286, 2147483648
      %v6319 = vxor.u32 %v6287, 2147483648
      %v6320 = vxor.u32 %v6288, 2147483648
      %v6321 = vxor.u32 %v6289, 2147483648
      %v6322 = vxor.u32 %v6290, 2147483648
      %v6323 = vxor.u32 %v6291, 2147483648
      %v6324 = vxor.u32 %v6292, 2147483648
      %v6325 = vxor.u32 %v6293, 2147483648
      %v6326 = vxor.u32 %v6294, 2147483648
      %v6327 = vxor.u32 %v6295, 2147483648
      %v6328 = vxor.u32 %v6296, 2147483648
      %v6329 = vxor.u32 %v6297, 2147483648
      %v6330 = vxor.u32 %v6298, 2147483648
      %v6331 = vxor.u32 %v6299, 2147483648
      %v6332 = vxor.u32 %v6300, 2147483648
      %v6333 = vxor.u32 %v6301, 2147483648
      %v6334 = vxor.u32 %v6302, 2147483648
      %v6335 = vxor.u32 %v6303, 2147483648
      %v6336 = vxor.u32 %v6304, 2147483648
      %v6337 = vxor.u32 %v6305, 2147483648
      %v6338 = vxor.u32 %v6306, 2147483648
      %v6339 = vxor.u32 %v6307, 2147483648
      %v6340 = vxor.u32 %v6308, 2147483648
      %v6341 = vxor.u32 %v6309, 2147483648
      %v6342 = vxor.u32 %v6310, 2147483648
      %v6343 = vxor.u32 %v6311, 2147483648
      %v6344 = vmul.f32 %v6312, 1.442695
      %v6345 = vpow.pop %v6344
      %v6346 = vmul.f32 %v6313, 1.442695
      %v6347 = vpow.pop %v6346
      %v6348 = vmul.f32 %v6314, 1.442695
      %v6349 = vpow.pop %v6348
      %v6350 = vmul.f32 %v6315, 1.442695
      %v6351 = vpow.pop %v6350
      %v6352 = vmul.f32 %v6316, 1.442695
      %v6353 = vpow.pop %v6352
      %v6354 = vmul.f32 %v6317, 1.442695
      %v6355 = vpow.pop %v6354
      %v6356 = vmul.f32 %v6318, 1.442695
      %v6357 = vpow.pop %v6356
      %v6358 = vmul.f32 %v6319, 1.442695
      %v6359 = vpow.pop %v6358
      %v6360 = vmul.f32 %v6320, 1.442695
      %v6361 = vpow.pop %v6360
      %v6362 = vmul.f32 %v6321, 1.442695
      %v6363 = vpow.pop %v6362
      %v6364 = vmul.f32 %v6322, 1.442695
      %v6365 = vpow.pop %v6364
      %v6366 = vmul.f32 %v6323, 1.442695
      %v6367 = vpow.pop %v6366
      %v6368 = vmul.f32 %v6324, 1.442695
      %v6369 = vpow.pop %v6368
      %v6370 = vmul.f32 %v6325, 1.442695
      %v6371 = vpow.pop %v6370
      %v6372 = vmul.f32 %v6326, 1.442695
      %v6373 = vpow.pop %v6372
      %v6374 = vmul.f32 %v6327, 1.442695
      %v6375 = vpow.pop %v6374
      %v6376 = vmul.f32 %v6328, 1.442695
      %v6377 = vpow.pop %v6376
      %v6378 = vmul.f32 %v6329, 1.442695
      %v6379 = vpow.pop %v6378
      %v6380 = vmul.f32 %v6330, 1.442695
      %v6381 = vpow.pop %v6380
      %v6382 = vmul.f32 %v6331, 1.442695
      %v6383 = vpow.pop %v6382
      %v6384 = vmul.f32 %v6332, 1.442695
      %v6385 = vpow.pop %v6384
      %v6386 = vmul.f32 %v6333, 1.442695
      %v6387 = vpow.pop %v6386
      %v6388 = vmul.f32 %v6334, 1.442695
      %v6389 = vpow.pop %v6388
      %v6390 = vmul.f32 %v6335, 1.442695
      %v6391 = vpow.pop %v6390
      %v6392 = vmul.f32 %v6336, 1.442695
      %v6393 = vpow.pop %v6392
      %v6394 = vmul.f32 %v6337, 1.442695
      %v6395 = vpow.pop %v6394
      %v6396 = vmul.f32 %v6338, 1.442695
      %v6397 = vpow.pop %v6396
      %v6398 = vmul.f32 %v6339, 1.442695
      %v6399 = vpow.pop %v6398
      %v6400 = vmul.f32 %v6340, 1.442695
      %v6401 = vpow.pop %v6400
      %v6402 = vmul.f32 %v6341, 1.442695
      %v6403 = vpow.pop %v6402
      %v6404 = vmul.f32 %v6342, 1.442695
      %v6405 = vpow.pop %v6404
      %v6406 = vmul.f32 %v6343, 1.442695
      %v6407 = vpow.pop %v6406
      %v6408 = vadd.f32 %v6345, 1.0
      %v6409 = vadd.f32 %v6347, 1.0
      %v6410 = vadd.f32 %v6349, 1.0
      %v6411 = vadd.f32 %v6351, 1.0
      %v6412 = vadd.f32 %v6353, 1.0
      %v6413 = vadd.f32 %v6355, 1.0
      %v6414 = vadd.f32 %v6357, 1.0
      %v6415 = vadd.f32 %v6359, 1.0
      %v6416 = vadd.f32 %v6361, 1.0
      %v6417 = vadd.f32 %v6363, 1.0
      %v6418 = vadd.f32 %v6365, 1.0
      %v6419 = vadd.f32 %v6367, 1.0
      %v6420 = vadd.f32 %v6369, 1.0
      %v6421 = vadd.f32 %v6371, 1.0
      %v6422 = vadd.f32 %v6373, 1.0
      %v6423 = vadd.f32 %v6375, 1.0
      %v6424 = vadd.f32 %v6377, 1.0
      %v6425 = vadd.f32 %v6379, 1.0
      %v6426 = vadd.f32 %v6381, 1.0
      %v6427 = vadd.f32 %v6383, 1.0
      %v6428 = vadd.f32 %v6385, 1.0
      %v6429 = vadd.f32 %v6387, 1.0
      %v6430 = vadd.f32 %v6389, 1.0
      %v6431 = vadd.f32 %v6391, 1.0
      %v6432 = vadd.f32 %v6393, 1.0
      %v6433 = vadd.f32 %v6395, 1.0
      %v6434 = vadd.f32 %v6397, 1.0
      %v6435 = vadd.f32 %v6399, 1.0
      %v6436 = vadd.f32 %v6401, 1.0
      %v6437 = vadd.f32 %v6403, 1.0
      %v6438 = vadd.f32 %v6405, 1.0
      %v6439 = vadd.f32 %v6407, 1.0
      %v6440 = vrcp.pop %v6408
      %v6441 = vmul.f32 1.0, %v6440
      %v6442 = vrcp.pop %v6409
      %v6443 = vmul.f32 1.0, %v6442
      %v6444 = vrcp.pop %v6410
      %v6445 = vmul.f32 1.0, %v6444
      %v6446 = vrcp.pop %v6411
      %v6447 = vmul.f32 1.0, %v6446
      %v6448 = vrcp.pop %v6412
      %v6449 = vmul.f32 1.0, %v6448
      %v6450 = vrcp.pop %v6413
      %v6451 = vmul.f32 1.0, %v6450
      %v6452 = vrcp.pop %v6414
      %v6453 = vmul.f32 1.0, %v6452
      %v6454 = vrcp.pop %v6415
      %v6455 = vmul.f32 1.0, %v6454
      %v6456 = vrcp.pop %v6416
      %v6457 = vmul.f32 1.0, %v6456
      %v6458 = vrcp.pop %v6417
      %v6459 = vmul.f32 1.0, %v6458
      %v6460 = vrcp.pop %v6418
      %v6461 = vmul.f32 1.0, %v6460
      %v6462 = vrcp.pop %v6419
      %v6463 = vmul.f32 1.0, %v6462
      %v6464 = vrcp.pop %v6420
      %v6465 = vmul.f32 1.0, %v6464
      %v6466 = vrcp.pop %v6421
      %v6467 = vmul.f32 1.0, %v6466
      %v6468 = vrcp.pop %v6422
      %v6469 = vmul.f32 1.0, %v6468
      %v6470 = vrcp.pop %v6423
      %v6471 = vmul.f32 1.0, %v6470
      %v6472 = vrcp.pop %v6424
      %v6473 = vmul.f32 1.0, %v6472
      %v6474 = vrcp.pop %v6425
      %v6475 = vmul.f32 1.0, %v6474
      %v6476 = vrcp.pop %v6426
      %v6477 = vmul.f32 1.0, %v6476
      %v6478 = vrcp.pop %v6427
      %v6479 = vmul.f32 1.0, %v6478
      %v6480 = vrcp.pop %v6428
      %v6481 = vmul.f32 1.0, %v6480
      %v6482 = vrcp.pop %v6429
      %v6483 = vmul.f32 1.0, %v6482
      %v6484 = vrcp.pop %v6430
      %v6485 = vmul.f32 1.0, %v6484
      %v6486 = vrcp.pop %v6431
      %v6487 = vmul.f32 1.0, %v6486
      %v6488 = vrcp.pop %v6432
      %v6489 = vmul.f32 1.0, %v6488
      %v6490 = vrcp.pop %v6433
      %v6491 = vmul.f32 1.0, %v6490
      %v6492 = vrcp.pop %v6434
      %v6493 = vmul.f32 1.0, %v6492
      %v6494 = vrcp.pop %v6435
      %v6495 = vmul.f32 1.0, %v6494
      %v6496 = vrcp.pop %v6436
      %v6497 = vmul.f32 1.0, %v6496
      %v6498 = vrcp.pop %v6437
      %v6499 = vmul.f32 1.0, %v6498
      %v6500 = vrcp.pop %v6438
      %v6501 = vmul.f32 1.0, %v6500
      %v6502 = vrcp.pop %v6439
      %v6503 = vmul.f32 1.0, %v6502
      %v6504 = vmul.f32 %v6280, %v6441
      %v6505 = vmul.f32 %v6281, %v6443
      %v6506 = vmul.f32 %v6282, %v6445
      %v6507 = vmul.f32 %v6283, %v6447
      %v6508 = vmul.f32 %v6284, %v6449
      %v6509 = vmul.f32 %v6285, %v6451
      %v6510 = vmul.f32 %v6286, %v6453
      %v6511 = vmul.f32 %v6287, %v6455
      %v6512 = vmul.f32 %v6288, %v6457
      %v6513 = vmul.f32 %v6289, %v6459
      %v6514 = vmul.f32 %v6290, %v6461
      %v6515 = vmul.f32 %v6291, %v6463
      %v6516 = vmul.f32 %v6292, %v6465
      %v6517 = vmul.f32 %v6293, %v6467
      %v6518 = vmul.f32 %v6294, %v6469
      %v6519 = vmul.f32 %v6295, %v6471
      %v6520 = vmul.f32 %v6296, %v6473
      %v6521 = vmul.f32 %v6297, %v6475
      %v6522 = vmul.f32 %v6298, %v6477
      %v6523 = vmul.f32 %v6299, %v6479
      %v6524 = vmul.f32 %v6300, %v6481
      %v6525 = vmul.f32 %v6301, %v6483
      %v6526 = vmul.f32 %v6302, %v6485
      %v6527 = vmul.f32 %v6303, %v6487
      %v6528 = vmul.f32 %v6304, %v6489
      %v6529 = vmul.f32 %v6305, %v6491
      %v6530 = vmul.f32 %v6306, %v6493
      %v6531 = vmul.f32 %v6307, %v6495
      %v6532 = vmul.f32 %v6308, %v6497
      %v6533 = vmul.f32 %v6309, %v6499
      %v6534 = vmul.f32 %v6310, %v6501
      %v6535 = vmul.f32 %v6311, %v6503
      %v6536 = vld [vmem:[%s11] sm:$0xff]
      %v6537 = vld [vmem:[%s11 + $0x8] sm:$0xff]
      %v6538 = vld [vmem:[%s11 + $0x10] sm:$0xff]
      %v6539 = vld [vmem:[%s11 + $0x18] sm:$0xff]
      %v6540 = vld [vmem:[%s11 + $0x20] sm:$0xff]
      %v6541 = vld [vmem:[%s11 + $0x28] sm:$0xff]
      %v6542 = vld [vmem:[%s11 + $0x30] sm:$0xff]
      %v6543 = vld [vmem:[%s11 + $0x38] sm:$0xff]
      %v6544 = vld [vmem:[%s11 + $0x40] sm:$0xff]
      %v6545 = vld [vmem:[%s11 + $0x48] sm:$0xff]
      %v6546 = vld [vmem:[%s11 + $0x50] sm:$0xff]
      %v6547 = vld [vmem:[%s11 + $0x58] sm:$0xff]
      %v6548 = vld [vmem:[%s11 + $0x60] sm:$0xff]
      %v6549 = vld [vmem:[%s11 + $0x68] sm:$0xff]
      %v6550 = vld [vmem:[%s11 + $0x70] sm:$0xff]
      %v6551 = vld [vmem:[%s11 + $0x78] sm:$0xff]
      %v6552 = vld [vmem:[%s12] sm:$0x1]
      %v6554 = vlaneseq
      %v6555 = vshrl.u32 %v6554, 7
      %v6556 = vsub.s32 0, %v6555
      %v6557 = vrot.slane %v6552, %v6556
      %6559 = vmatprep.subr.mxu0 0.0
      %6560 = vmatpush1.msra.mxu0 %v6551
      %6561 = vmatprep.subr.mxu0 0.0
      %6562 = vmatpush1.msra.mxu0 %v6550
      %6563 = vmatprep.subr.mxu0 0.0
      %6564 = vmatpush1.msra.mxu0 %v6549
      %6565 = vmatprep.subr.mxu0 0.0
      %6566 = vmatpush1.msra.mxu0 %v6548
      %6567 = vmatprep.subr.mxu0 0.0
      %6568 = vmatpush1.msra.mxu0 %v6547
      %6569 = vmatprep.subr.mxu0 0.0
      %6570 = vmatpush1.msra.mxu0 %v6546
      %6571 = vmatprep.subr.mxu0 0.0
      %6572 = vmatpush1.msra.mxu0 %v6545
      %6573 = vmatprep.subr.mxu0 0.0
      %6574 = vmatpush1.msra.mxu0 %v6544
      %6575 = vmatprep.subr.mxu0 0.0
      %6576 = vmatpush1.msra.mxu0 %v6543
      %6577 = vmatprep.subr.mxu0 0.0
      %6578 = vmatpush1.msra.mxu0 %v6542
      %6579 = vmatprep.subr.mxu0 0.0
      %6580 = vmatpush1.msra.mxu0 %v6541
      %6581 = vmatprep.subr.mxu0 0.0
      %6582 = vmatpush1.msra.mxu0 %v6540
      %6583 = vmatprep.subr.mxu0 0.0
      %6584 = vmatpush1.msra.mxu0 %v6539
      %6585 = vmatprep.subr.mxu0 0.0
      %6586 = vmatpush1.msra.mxu0 %v6538
      %6587 = vmatprep.subr.mxu0 0.0
      %6588 = vmatpush1.msra.mxu0 %v6537
      %6589 = vmatprep.subr.mxu0 0.0
      %6590 = vmatpush1.msra.mxu0 %v6536
      %6591 = vmatprep.subr.mxu0 0.0
      %6592 = vmatpush2.msra.mxu0 0.0
      %6593 = vmatprep.subr.mxu0 0.0
      %6594 = vmatpush2.msra.mxu0 0.0
      %6595 = vmatprep.subr.mxu0 0.0
      %6596 = vmatpush2.msra.mxu0 0.0
      %6597 = vmatprep.subr.mxu0 0.0
      %6598 = vmatpush2.msra.mxu0 0.0
      %6599 = vmatprep.subr.mxu0 0.0
      %6600 = vmatpush2.msra.mxu0 0.0
      %6601 = vmatprep.subr.mxu0 0.0
      %6602 = vmatpush2.msra.mxu0 0.0
      %6603 = vmatprep.subr.mxu0 0.0
      %6604 = vmatpush2.msra.mxu0 0.0
      %6605 = vmatprep.subr.mxu0 0.0
      %6606 = vmatpush2.msra.mxu0 0.0
      %6607 = vmatprep.subr.mxu0 0.0
      %6608 = vmatpush2.msra.mxu0 0.0
      %6609 = vmatprep.subr.mxu0 0.0
      %6610 = vmatpush2.msra.mxu0 0.0
      %6611 = vmatprep.subr.mxu0 0.0
      %6612 = vmatpush2.msra.mxu0 0.0
      %6613 = vmatprep.subr.mxu0 0.0
      %6614 = vmatpush2.msra.mxu0 0.0
      %6615 = vmatprep.subr.mxu0 0.0
      %6616 = vmatpush2.msra.mxu0 0.0
      %6617 = vmatprep.subr.mxu0 0.0
      %6618 = vmatpush2.msra.mxu0 0.0
      %6619 = vmatprep.subr.mxu0 0.0
      %6620 = vmatpush2.msra.mxu0 0.0
      %6621 = vmatprep.subr.mxu0 0.0
      %6622 = vmatpush2.msra.mxu0 0.0
      %6623 = vmatprep.mubr.f32.mxu0 0.0
      %6624 = vmatmul.mubr.f32.gmra.mxu0 %v1117
      %v6625 = vpop.f32.mrf.mxu0
      %v6626 = vadd.f32 %v6557, %v6625
      %v6627 = vpop.f32.mrf.mxu0
      %6628 = vmatprep.mubr.f32.mxu0 0.0
      %6629 = vmatmul.mubr.f32.gmra.mxu0 %v1118
      %v6630 = vpop.f32.mrf.mxu0
      %v6631 = vadd.f32 %v6557, %v6630
      %v6632 = vpop.f32.mrf.mxu0
      %6633 = vmatprep.mubr.f32.mxu0 0.0
      %6634 = vmatmul.mubr.f32.gmra.mxu0 %v1119
      %v6635 = vpop.f32.mrf.mxu0
      %v6636 = vadd.f32 %v6557, %v6635
      %v6637 = vpop.f32.mrf.mxu0
      %6638 = vmatprep.mubr.f32.mxu0 0.0
      %6639 = vmatmul.mubr.f32.gmra.mxu0 %v1120
      %v6640 = vpop.f32.mrf.mxu0
      %v6641 = vadd.f32 %v6557, %v6640
      %v6642 = vpop.f32.mrf.mxu0
      %6643 = vmatprep.mubr.f32.mxu0 0.0
      %6644 = vmatmul.mubr.f32.gmra.mxu0 %v1121
      %v6645 = vpop.f32.mrf.mxu0
      %v6646 = vadd.f32 %v6557, %v6645
      %v6647 = vpop.f32.mrf.mxu0
      %6648 = vmatprep.mubr.f32.mxu0 0.0
      %6649 = vmatmul.mubr.f32.gmra.mxu0 %v1122
      %v6650 = vpop.f32.mrf.mxu0
      %v6651 = vadd.f32 %v6557, %v6650
      %v6652 = vpop.f32.mrf.mxu0
      %6653 = vmatprep.mubr.f32.mxu0 0.0
      %6654 = vmatmul.mubr.f32.gmra.mxu0 %v1123
      %v6655 = vpop.f32.mrf.mxu0
      %v6656 = vadd.f32 %v6557, %v6655
      %v6657 = vpop.f32.mrf.mxu0
      %6658 = vmatprep.mubr.f32.mxu0 0.0
      %6659 = vmatmul.mubr.f32.gmra.mxu0 %v1124
      %v6660 = vpop.f32.mrf.mxu0
      %v6661 = vadd.f32 %v6557, %v6660
      %v6662 = vpop.f32.mrf.mxu0
      %6663 = vmatprep.mubr.f32.mxu0 0.0
      %6664 = vmatmul.mubr.f32.gmra.mxu0 %v1125
      %v6665 = vpop.f32.mrf.mxu0
      %v6666 = vadd.f32 %v6557, %v6665
      %v6667 = vpop.f32.mrf.mxu0
      %6668 = vmatprep.mubr.f32.mxu0 0.0
      %6669 = vmatmul.mubr.f32.gmra.mxu0 %v1126
      %v6670 = vpop.f32.mrf.mxu0
      %v6671 = vadd.f32 %v6557, %v6670
      %v6672 = vpop.f32.mrf.mxu0
      %6673 = vmatprep.mubr.f32.mxu0 0.0
      %6674 = vmatmul.mubr.f32.gmra.mxu0 %v1127
      %v6675 = vpop.f32.mrf.mxu0
      %v6676 = vadd.f32 %v6557, %v6675
      %v6677 = vpop.f32.mrf.mxu0
      %6678 = vmatprep.mubr.f32.mxu0 0.0
      %6679 = vmatmul.mubr.f32.gmra.mxu0 %v1128
      %v6680 = vpop.f32.mrf.mxu0
      %v6681 = vadd.f32 %v6557, %v6680
      %v6682 = vpop.f32.mrf.mxu0
      %6683 = vmatprep.mubr.f32.mxu0 0.0
      %6684 = vmatmul.mubr.f32.gmra.mxu0 %v1129
      %v6685 = vpop.f32.mrf.mxu0
      %v6686 = vadd.f32 %v6557, %v6685
      %v6687 = vpop.f32.mrf.mxu0
      %6688 = vmatprep.mubr.f32.mxu0 0.0
      %6689 = vmatmul.mubr.f32.gmra.mxu0 %v1130
      %v6690 = vpop.f32.mrf.mxu0
      %v6691 = vadd.f32 %v6557, %v6690
      %v6692 = vpop.f32.mrf.mxu0
      %6693 = vmatprep.mubr.f32.mxu0 0.0
      %6694 = vmatmul.mubr.f32.gmra.mxu0 %v1131
      %v6695 = vpop.f32.mrf.mxu0
      %v6696 = vadd.f32 %v6557, %v6695
      %v6697 = vpop.f32.mrf.mxu0
      %6698 = vmatprep.mubr.f32.mxu0 0.0
      %6699 = vmatmul.mubr.f32.gmra.mxu0 %v1132
      %v6700 = vpop.f32.mrf.mxu0
      %v6701 = vadd.f32 %v6557, %v6700
      %v6702 = vpop.f32.mrf.mxu0
      %6703 = vmatprep.mubr.f32.mxu0 0.0
      %6704 = vmatmul.mubr.f32.gmra.mxu0 %v1133
      %v6705 = vpop.f32.mrf.mxu0
      %v6706 = vadd.f32 %v6557, %v6705
      %v6707 = vpop.f32.mrf.mxu0
      %6708 = vmatprep.mubr.f32.mxu0 0.0
      %6709 = vmatmul.mubr.f32.gmra.mxu0 %v1134
      %v6710 = vpop.f32.mrf.mxu0
      %v6711 = vadd.f32 %v6557, %v6710
      %v6712 = vpop.f32.mrf.mxu0
      %6713 = vmatprep.mubr.f32.mxu0 0.0
      %6714 = vmatmul.mubr.f32.gmra.mxu0 %v1135
      %v6715 = vpop.f32.mrf.mxu0
      %v6716 = vadd.f32 %v6557, %v6715
      %v6717 = vpop.f32.mrf.mxu0
      %6718 = vmatprep.mubr.f32.mxu0 0.0
      %6719 = vmatmul.mubr.f32.gmra.mxu0 %v1136
      %v6720 = vpop.f32.mrf.mxu0
      %v6721 = vadd.f32 %v6557, %v6720
      %v6722 = vpop.f32.mrf.mxu0
      %6723 = vmatprep.mubr.f32.mxu0 0.0
      %6724 = vmatmul.mubr.f32.gmra.mxu0 %v1137
      %v6725 = vpop.f32.mrf.mxu0
      %v6726 = vadd.f32 %v6557, %v6725
      %v6727 = vpop.f32.mrf.mxu0
      %6728 = vmatprep.mubr.f32.mxu0 0.0
      %6729 = vmatmul.mubr.f32.gmra.mxu0 %v1138
      %v6730 = vpop.f32.mrf.mxu0
      %v6731 = vadd.f32 %v6557, %v6730
      %v6732 = vpop.f32.mrf.mxu0
      %6733 = vmatprep.mubr.f32.mxu0 0.0
      %6734 = vmatmul.mubr.f32.gmra.mxu0 %v1139
      %v6735 = vpop.f32.mrf.mxu0
      %v6736 = vadd.f32 %v6557, %v6735
      %v6737 = vpop.f32.mrf.mxu0
      %6738 = vmatprep.mubr.f32.mxu0 0.0
      %6739 = vmatmul.mubr.f32.gmra.mxu0 %v1140
      %v6740 = vpop.f32.mrf.mxu0
      %v6741 = vadd.f32 %v6557, %v6740
      %v6742 = vpop.f32.mrf.mxu0
      %6743 = vmatprep.mubr.f32.mxu0 0.0
      %6744 = vmatmul.mubr.f32.gmra.mxu0 %v1141
      %v6745 = vpop.f32.mrf.mxu0
      %v6746 = vadd.f32 %v6557, %v6745
      %v6747 = vpop.f32.mrf.mxu0
      %6748 = vmatprep.mubr.f32.mxu0 0.0
      %6749 = vmatmul.mubr.f32.gmra.mxu0 %v1142
      %v6750 = vpop.f32.mrf.mxu0
      %v6751 = vadd.f32 %v6557, %v6750
      %v6752 = vpop.f32.mrf.mxu0
      %6753 = vmatprep.mubr.f32.mxu0 0.0
      %6754 = vmatmul.mubr.f32.gmra.mxu0 %v1143
      %v6755 = vpop.f32.mrf.mxu0
      %v6756 = vadd.f32 %v6557, %v6755
      %v6757 = vpop.f32.mrf.mxu0
      %6758 = vmatprep.mubr.f32.mxu0 0.0
      %6759 = vmatmul.mubr.f32.gmra.mxu0 %v1144
      %v6760 = vpop.f32.mrf.mxu0
      %v6761 = vadd.f32 %v6557, %v6760
      %v6762 = vpop.f32.mrf.mxu0
      %6763 = vmatprep.mubr.f32.mxu0 0.0
      %6764 = vmatmul.mubr.f32.gmra.mxu0 %v1145
      %v6765 = vpop.f32.mrf.mxu0
      %v6766 = vadd.f32 %v6557, %v6765
      %v6767 = vpop.f32.mrf.mxu0
      %6768 = vmatprep.mubr.f32.mxu0 0.0
      %6769 = vmatmul.mubr.f32.gmra.mxu0 %v1146
      %v6770 = vpop.f32.mrf.mxu0
      %v6771 = vadd.f32 %v6557, %v6770
      %v6772 = vpop.f32.mrf.mxu0
      %6773 = vmatprep.mubr.f32.mxu0 0.0
      %6774 = vmatmul.mubr.f32.gmra.mxu0 %v1147
      %v6775 = vpop.f32.mrf.mxu0
      %v6776 = vadd.f32 %v6557, %v6775
      %v6777 = vpop.f32.mrf.mxu0
      %6778 = vmatprep.mubr.f32.mxu0 0.0
      %6779 = vmatmul.mubr.f32.gmra.mxu0 %v1148
      %v6780 = vpop.f32.mrf.mxu0
      %v6781 = vadd.f32 %v6557, %v6780
      %v6782 = vpop.f32.mrf.mxu0
      %6783 = vdwg.mxu0
      %v6784 = vadd.f32 %v6504, %v6626
      %v6785 = vadd.f32 %v6505, %v6631
      %v6786 = vadd.f32 %v6506, %v6636
      %v6787 = vadd.f32 %v6507, %v6641
      %v6788 = vadd.f32 %v6508, %v6646
      %v6789 = vadd.f32 %v6509, %v6651
      %v6790 = vadd.f32 %v6510, %v6656
      %v6791 = vadd.f32 %v6511, %v6661
      %v6792 = vadd.f32 %v6512, %v6666
      %v6793 = vadd.f32 %v6513, %v6671
      %v6794 = vadd.f32 %v6514, %v6676
      %v6795 = vadd.f32 %v6515, %v6681
      %v6796 = vadd.f32 %v6516, %v6686
      %v6797 = vadd.f32 %v6517, %v6691
      %v6798 = vadd.f32 %v6518, %v6696
      %v6799 = vadd.f32 %v6519, %v6701
      %v6800 = vadd.f32 %v6520, %v6706
      %v6801 = vadd.f32 %v6521, %v6711
      %v6802 = vadd.f32 %v6522, %v6716
      %v6803 = vadd.f32 %v6523, %v6721
      %v6804 = vadd.f32 %v6524, %v6726
      %v6805 = vadd.f32 %v6525, %v6731
      %v6806 = vadd.f32 %v6526, %v6736
      %v6807 = vadd.f32 %v6527, %v6741
      %v6808 = vadd.f32 %v6528, %v6746
      %v6809 = vadd.f32 %v6529, %v6751
      %v6810 = vadd.f32 %v6530, %v6756
      %v6811 = vadd.f32 %v6531, %v6761
      %v6812 = vadd.f32 %v6532, %v6766
      %v6813 = vadd.f32 %v6533, %v6771
      %v6814 = vadd.f32 %v6534, %v6776
      %v6815 = vadd.f32 %v6535, %v6781
      %6816 = vst [vmem:[%s495] sm:$0xff] %v6784
      %6817 = vst [vmem:[%s495 + $0x8] sm:$0xff] %v6785
      %6818 = vst [vmem:[%s495 + $0x10] sm:$0xff] %v6786
      %6819 = vst [vmem:[%s495 + $0x18] sm:$0xff] %v6787
      %6820 = vst [vmem:[%s495 + $0x20] sm:$0xff] %v6788
      %6821 = vst [vmem:[%s495 + $0x28] sm:$0xff] %v6789
      %6822 = vst [vmem:[%s495 + $0x30] sm:$0xff] %v6790
      %6823 = vst [vmem:[%s495 + $0x38] sm:$0xff] %v6791
      %6824 = vst [vmem:[%s495 + $0x40] sm:$0xff] %v6792
      %6825 = vst [vmem:[%s495 + $0x48] sm:$0xff] %v6793
      %6826 = vst [vmem:[%s495 + $0x50] sm:$0xff] %v6794
      %6827 = vst [vmem:[%s495 + $0x58] sm:$0xff] %v6795
      %6828 = vst [vmem:[%s495 + $0x60] sm:$0xff] %v6796
      %6829 = vst [vmem:[%s495 + $0x68] sm:$0xff] %v6797
      %6830 = vst [vmem:[%s495 + $0x70] sm:$0xff] %v6798
      %6831 = vst [vmem:[%s495 + $0x78] sm:$0xff] %v6799
      %6832 = vst [vmem:[%s495 + $0x80] sm:$0xff] %v6800
      %6833 = vst [vmem:[%s495 + $0x88] sm:$0xff] %v6801
      %6834 = vst [vmem:[%s495 + $0x90] sm:$0xff] %v6802
      %6835 = vst [vmem:[%s495 + $0x98] sm:$0xff] %v6803
      %6836 = vst [vmem:[%s495 + $0xa0] sm:$0xff] %v6804
      %6837 = vst [vmem:[%s495 + $0xa8] sm:$0xff] %v6805
      %6838 = vst [vmem:[%s495 + $0xb0] sm:$0xff] %v6806
      %6839 = vst [vmem:[%s495 + $0xb8] sm:$0xff] %v6807
      %6840 = vst [vmem:[%s495 + $0xc0] sm:$0xff] %v6808
      %6841 = vst [vmem:[%s495 + $0xc8] sm:$0xff] %v6809
      %6842 = vst [vmem:[%s495 + $0xd0] sm:$0xff] %v6810
      %6843 = vst [vmem:[%s495 + $0xd8] sm:$0xff] %v6811
      %6844 = vst [vmem:[%s495 + $0xe0] sm:$0xff] %v6812
      %6845 = vst [vmem:[%s495 + $0xe8] sm:$0xff] %v6813
      %6846 = vst [vmem:[%s495 + $0xf0] sm:$0xff] %v6814
      %6847 = vst [vmem:[%s495 + $0xf8] sm:$0xff] %v6815
      %p6848 = scmp.lt.s32.totalorder %s25, 1
      %s6849 = scalar_select %p6848, %s25, 1
      %s6850 = smul.addr %s6849, 32
      %s6851 = smul.addr %s6850, 8
      %s6852 = scalar_lea.vmem %s14, %s6851
      // Predicated region
      $region77: #{resnet_block_forward.1} parent=75 // pred_check
        %p6853 = pneg %p352
      $region78: #{resnet_block_forward.1} parent=75 // pred_check_branch
        %6855 = sbr.rel (%p6853) target = $region80
      $region79: #{resnet_block_forward.1} parent=75 // pred_region
        _
      $region80: #{resnet_block_forward.1} parent=75 // pred_fallthru
        _
    $region76: #{resnet_block_forward.1} parent=5 // pred_fallthru
      _
    %p6856 = scmp.le.s32.totalorder 2, %s20
    // Predicated region
    $region81: #{resnet_block_forward.1} parent=5 // pred_check
      %p6857 = pneg %p6856
    $region82: #{resnet_block_forward.1} parent=5 // pred_check_branch
      %6859 = sbr.rel (%p6857) target = $region84
    $region83: #{resnet_block_forward.1} parent=5 // pred_region
      %s6860 = ssub.s32 %s20, 2
      // Predicated region
      $region85: #{resnet_block_forward.1} parent=83 // pred_check
        %p6861 = pneg %p358
      $region86: #{resnet_block_forward.1} parent=83 // pred_check_branch
        %6863 = sbr.rel (%p6861) target = $region88
      $region87: #{resnet_block_forward.1} parent=83 // pred_region
        %p6864 = scmp.lt.s32.totalorder %s26, 1
        %s6865 = scalar_select %p6864, %s26, 1
        %s6866 = smul.addr %s6865, 32
        %s6867 = smul.addr %s6866, 8
        %s6868 = scalar_lea.vmem %s14, %s6867
      $region88: #{resnet_block_forward.1} parent=83 // pred_fallthru
        _
    $region84: #{resnet_block_forward.1} parent=5 // pred_fallthru
      _
  $region6: #{resnet_block_forward.1} parent=0 // loop_footer
    %s24 = sadd.s32 1, %s20
  $region7: #{resnet_block_forward.1} parent=0 // loop_footer_branch
    %19 = sbr.rel target = $region3
  $region8: #{resnet_block_forward.1} parent=0 // loop_exit
    _

</llo_original>
